<compile_context>
chip_gen: v6e
topology: v6e:2x2x1
jax: 0.10.0
libtpu: 0.0.40
codegen_flags: <defaults>
</compile_context>

<pallas_src>
import jax
import jax.numpy as jnp
from jax import lax
from jax.experimental import pallas as pl
from jax.experimental.pallas import tpu as pltpu


# ---------------------------------------------------------------------------
# Fused kernel: whole layer4 (3 bottleneck blocks), TB images per grid step
# ---------------------------------------------------------------------------
def _make_fused_kernel(TB, Ho, Wo, Cin, P, Cout):
    M = TB * Ho * Wo
    TAPS = [(ky, kx) for ky in range(3) for kx in range(3)]
    BF16, F32 = jnp.bfloat16, jnp.float32

    def mm(a, w_ref):                          # bf16 MXU, f32 accumulation
        return jnp.dot(a.astype(BF16), w_ref[...], preferred_element_type=F32)

    def kernel(*refs):
        x_ref = refs[0]                                   # (TB,Ho,Wo,4Cin) bf16
        w1bd, b1_0, w2_0, b2_0, w3_0, b3_0, wd_r, bd_r = refs[1:9]
        blk = (refs[9:15], refs[15:21])                   # blocks 1 and 2
        o_ref = refs[21]                                  # (TB,Ho,Wo,Cout)
        pad_ref, col_ref = refs[22], refs[23]             # bf16 VMEM scratch

        # Zero only the 2-row / 2-col border strips of the pad scratch: the
        # interior is fully overwritten by every conv below; the even offsets
        # keep the bf16 packed-sublane stores aligned.  Done every grid step
        # (each megacore owns its own scratch copy, so a once-only init under
        # program_id==0 would be unsafe).
        pad_ref[:, pl.ds(0, 2), :, :] = jnp.zeros((TB, 2, Wo + 4, 4 * P), BF16)
        pad_ref[:, pl.ds(Ho + 2, 2), :, :] = jnp.zeros((TB, 2, Wo + 4, 4 * P), BF16)
        pad_ref[:, :, pl.ds(0, 2), :] = jnp.zeros((TB, Ho + 4, 2, 4 * P), BF16)
        pad_ref[:, :, pl.ds(Wo + 2, 2), :] = jnp.zeros((TB, Ho + 4, 2, 4 * P), BF16)

        # ================= block 0: stride 2, fused downsample ===============
        # x is 2x2 space-to-depth (channel layout (hp, wp, cin)).  conv1 uses a
        # block-diagonal (4Cin, 4P) weight so t1 comes out directly in the same
        # space-to-depth layout; every stride-2 access becomes a contiguous
        # slice (superrow/supercol offset in {-1,0} + a P-wide channel group).
        x2d = x_ref[...].reshape(M, 4 * Cin)                          # bf16
        t1 = jnp.maximum(
            jnp.dot(x2d, w1bd[...], preferred_element_type=F32) + b1_0[...], 0.0)
        pad_ref[:, pl.ds(2, Ho), pl.ds(2, Wo), :] = (
            t1.astype(BF16).reshape(TB, Ho, Wo, 4 * P))
        # im2col: output (i,j), tap (ky,kx) reads input pixel (2i+ky-1, 2j+kx-1)
        for t, (ky, kx) in enumerate(TAPS):
            ry, hp = (-1, 1) if ky == 0 else (0, ky - 1)
            rx, wp = (-1, 1) if kx == 0 else (0, kx - 1)
            col_ref[:, :, :, pl.ds(t * P, P)] = pad_ref[
                :, pl.ds(2 + ry, Ho), pl.ds(2 + rx, Wo),
                pl.ds((hp * 2 + wp) * P, P)]
        t2 = jnp.maximum(
            jnp.dot(col_ref[...].reshape(M, 9 * P), w2_0[...],
                    preferred_element_type=F32) + b2_0[...], 0.0)
        t3 = mm(t2, w3_0) + b3_0[...]
        # 1x1 stride-2 downsample == even-row/even-col pixels == s2d group 0
        ident = jnp.dot(x2d[:, :Cin], wd_r[...],
                        preferred_element_type=F32) + bd_r[...]
        y = jnp.maximum(t3 + ident, 0.0)                   # (M, Cout) f32

        # ================= blocks 1, 2: stride 1, identity residual ==========
        for w1, b1, w2, b2, w3, b3 in blk:
            t1 = jnp.maximum(mm(y, w1) + b1[...], 0.0)     # (M, P)
            pad_ref[:, pl.ds(2, Ho), pl.ds(2, Wo), pl.ds(0, P)] = (
                t1.astype(BF16).reshape(TB, Ho, Wo, P))
            for t, (ky, kx) in enumerate(TAPS):
                col_ref[:, :, :, pl.ds(t * P, P)] = pad_ref[
                    :, pl.ds(ky + 1, Ho), pl.ds(kx + 1, Wo), pl.ds(0, P)]
            t2 = jnp.maximum(
                jnp.dot(col_ref[...].reshape(M, 9 * P), w2[...],
                        preferred_element_type=F32) + b2[...], 0.0)
            t3 = mm(t2, w3) + b3[...]
            y = jnp.maximum(t3 + y, 0.0)

        o_ref[...] = y.reshape(TB, Ho, Wo, Cout).astype(o_ref.dtype)

    return kernel


# ---------------------------------------------------------------------------
# Wrapper: NCHW in / NCHW out, one pallas_call for the whole feat_head
# ---------------------------------------------------------------------------
def faster_rcnn_feat_head(x_nchw, flat_params, tb, planes, cout):
    n, cin, h, w = x_nchw.shape
    ho, wo = h // 2, w // 2
    assert n % tb == 0 and h % 2 == 0 and w % 2 == 0

    # NCHW -> NHWC -> 2x2 space-to-depth (N, Ho, Wo, 4*Cin), channel layout
    # (hp, wp, cin); cast to bf16 (x only ever feeds the bf16 MXU).
    x = jnp.transpose(x_nchw, (0, 2, 3, 1))
    x = x.reshape(n, ho, 2, wo, 2, cin).transpose(0, 1, 3, 2, 4, 5)
    x = x.reshape(n, ho, wo, 4 * cin).astype(jnp.bfloat16)

    in_specs = [pl.BlockSpec((tb, ho, wo, 4 * cin), lambda b: (b, 0, 0, 0))]
    # all weight/bias inputs are small 2-D arrays, re-used every grid step
    # TODO(synk): at real layer4 widths add pipeline_mode=pl.Buffered(1) here
    # (single-buffer ~29 MB of weights) and a halo'd row-strip grid axis so
    # everything fits v7x's 64 MiB VMEM.
    in_specs += [pl.BlockSpec(p.shape, lambda b: (0, 0)) for p in flat_params]

    out = pl.pallas_call(
        _make_fused_kernel(tb, ho, wo, cin, planes, cout),
        out_shape=jax.ShapeDtypeStruct((n, ho, wo, cout), jnp.float32),
        grid=(n // tb,),
        in_specs=in_specs,
        out_specs=pl.BlockSpec((tb, ho, wo, cout), lambda b: (b, 0, 0, 0)),
        scratch_shapes=[
            pltpu.VMEM((tb, ho + 4, wo + 4, 4 * planes), jnp.bfloat16),  # pad
            pltpu.VMEM((tb, ho, wo, 9 * planes), jnp.bfloat16),          # im2col
        ],
        compiler_params=pltpu.CompilerParams(
            dimension_semantics=("parallel",),
            vmem_limit_bytes=32 * 1024 * 1024),
    )(x, *flat_params)
    return jnp.transpose(out, (0, 3, 1, 2))                # NHWC -> NCHW


# ---------------------------------------------------------------------------
# Parameter init (synthetic weights, BN folded to scale/bias)
# ---------------------------------------------------------------------------
def init_params(key, cin, planes, cout):
    keys = iter(jax.random.split(key, 64))

    def conv_w(shape, fan_in):
        w = jax.random.normal(next(keys), shape, jnp.float32) / jnp.sqrt(fan_in)
        # round to the bf16 grid so kernel (bf16 MXU) and f32 reference share
        # numerically identical base weights
        return w.astype(jnp.bfloat16).astype(jnp.float32)

    def bn(c):
        gamma = 1.0 + 0.1 * jax.random.normal(next(keys), (c,), jnp.float32)
        beta = 0.1 * jax.random.normal(next(keys), (c,), jnp.float32)
        mean = 0.1 * jax.random.normal(next(keys), (c,), jnp.float32)
        var = 1.0 + jax.random.uniform(next(keys), (c,), jnp.float32)
        scale = gamma / jnp.sqrt(var + 1e-5)
        bias = beta - mean * scale
        return scale, bias

    blocks = []
    in_c = cin
    for b in range(3):
        p = {}
        p['w1'] = conv_w((in_c, planes), in_c)                  # 1x1 as (Cin,P)
        p['s1'], p['b1'] = bn(planes)
        p['w2'] = conv_w((3, 3, planes, planes), 9 * planes)    # HWIO
        p['s2'], p['b2'] = bn(planes)
        p['w3'] = conv_w((planes, cout), planes)
        p['s3'], p['b3'] = bn(cout)
        if b == 0:                                              # downsample
            p['wd'] = conv_w((in_c, cout), in_c)
            p['sd'], p['bd'] = bn(cout)
        blocks.append(p)
        in_c = cout
    return blocks


def pack_params(blocks):
    """Fold BN scale into the conv weights (bf16), keep biases f32, build the
    block-diagonal space-to-depth conv1 weight for block 0, and flatten in
    kernel argument order (all arrays 2-D)."""
    cin = blocks[0]['w1'].shape[0]
    planes = blocks[0]['w1'].shape[1]
    cout = blocks[0]['w3'].shape[1]

    def fold(w, s):
        return (w * s).astype(jnp.bfloat16)

    flat = []
    for bi, p in enumerate(blocks):
        if bi == 0:
            w1e = p['w1'] * p['s1']                         # (cin, planes) f32
            w1bd = jnp.zeros((4 * cin, 4 * planes), jnp.float32)
            for k in range(4):
                w1bd = w1bd.at[k * cin:(k + 1) * cin,
                               k * planes:(k + 1) * planes].set(w1e)
            flat += [w1bd.astype(jnp.bfloat16),
                     jnp.tile(p['b1'], 4).reshape(1, 4 * planes)]
        else:
            flat += [fold(p['w1'], p['s1']), p['b1'].reshape(1, planes)]
        w2e = (p['w2'] * p['s2']).reshape(9 * planes, planes)   # im2col layout
        flat += [w2e.astype(jnp.bfloat16), p['b2'].reshape(1, planes)]
        flat += [fold(p['w3'], p['s3']), p['b3'].reshape(1, cout)]
        if bi == 0:
            flat += [fold(p['wd'], p['sd']), p['bd'].reshape(1, cout)]
    return flat


# ---------------------------------------------------------------------------
# Pure-JAX reference (numerical verification only)
# ---------------------------------------------------------------------------
def _ref_conv(x, w_hwio, stride, padding):
    return lax.conv_general_dilated(
        x, w_hwio, window_strides=(stride, stride), padding=padding,
        dimension_numbers=('NHWC', 'HWIO', 'NHWC'))


def _ref_bottleneck(x, p, stride):
    y = _ref_conv(x, p['w1'][None, None], 1, 'VALID') * p['s1'] + p['b1']
    y = jnp.maximum(y, 0.0)
    y = _ref_conv(y, p['w2'], stride, ((1, 1), (1, 1))) * p['s2'] + p['b2']
    y = jnp.maximum(y, 0.0)
    y = _ref_conv(y, p['w3'][None, None], 1, 'VALID') * p['s3'] + p['b3']
    if 'wd' in p:
        ident = _ref_conv(x, p['wd'][None, None], stride, 'VALID') * p['sd'] + p['bd']
    else:
        ident = x
    return jnp.maximum(y + ident, 0.0)


# ---------------------------------------------------------------------------
if __name__ == "__main__":
    key = jax.random.PRNGKey(0)
    k_x, k_p = jax.random.split(key)

    # Scaled-down stand-in for layer4: (N,1024,H,W) -> (N,2048,H/2,W/2)
    N, C_IN, H, W = 4, 64, 8, 8
    PLANES, C_OUT = 32, 128
    TB = 2                      # batch elements fused per grid step (bigger M)

    x = jax.random.normal(k_x, (N, C_IN, H, W), jnp.float32)   # NCHW like torch
    params = init_params(k_p, C_IN, PLANES, C_OUT)
    flat = pack_params(params)

    fwd = jax.jit(lambda xx: faster_rcnn_feat_head(xx, flat, TB, PLANES, C_OUT))
    out = jax.block_until_ready(fwd(x))
    assert out.shape == (N, C_OUT, H // 2, W // 2), out.shape

    # verify against a pure-JAX f32 reference (same bf16-rounded base weights;
    # remaining delta is bf16 activation / folded-scale rounding in the kernel)
    ref = jnp.transpose(x, (0, 2, 3, 1))
    for i, p in enumerate(params):
        ref = _ref_bottleneck(ref, p, 2 if i == 0 else 1)
    ref = jnp.transpose(ref, (0, 3, 1, 2))
    err = float(jnp.max(jnp.abs(out - ref)))
    mag = float(jnp.max(jnp.abs(ref))) + 1e-6
    assert err / mag < 5e-2, f"kernel/reference mismatch: err={err}, mag={mag}"

    print("KERNEL_OK")
</pallas_src>

<mosaic_0001>
module attributes {stable_mosaic.version = 11 : i64} {
  func.func @kernel(%arg0: i32, %arg1: memref<2x4x4x256xbf16, #tpu.memory_space<vmem>>, %arg2: memref<256x128xbf16, #tpu.memory_space<vmem>>, %arg3: memref<1x128xf32, #tpu.memory_space<vmem>>, %arg4: memref<288x32xbf16, #tpu.memory_space<vmem>>, %arg5: memref<1x32xf32, #tpu.memory_space<vmem>>, %arg6: memref<32x128xbf16, #tpu.memory_space<vmem>>, %arg7: memref<1x128xf32, #tpu.memory_space<vmem>>, %arg8: memref<64x128xbf16, #tpu.memory_space<vmem>>, %arg9: memref<1x128xf32, #tpu.memory_space<vmem>>, %arg10: memref<128x32xbf16, #tpu.memory_space<vmem>>, %arg11: memref<1x32xf32, #tpu.memory_space<vmem>>, %arg12: memref<288x32xbf16, #tpu.memory_space<vmem>>, %arg13: memref<1x32xf32, #tpu.memory_space<vmem>>, %arg14: memref<32x128xbf16, #tpu.memory_space<vmem>>, %arg15: memref<1x128xf32, #tpu.memory_space<vmem>>, %arg16: memref<128x32xbf16, #tpu.memory_space<vmem>>, %arg17: memref<1x32xf32, #tpu.memory_space<vmem>>, %arg18: memref<288x32xbf16, #tpu.memory_space<vmem>>, %arg19: memref<1x32xf32, #tpu.memory_space<vmem>>, %arg20: memref<32x128xbf16, #tpu.memory_space<vmem>>, %arg21: memref<1x128xf32, #tpu.memory_space<vmem>>, %arg22: memref<2x4x4x128xf32, #tpu.memory_space<vmem>>, %arg23: memref<2x8x8x128xbf16, #tpu.memory_space<vmem>>, %arg24: memref<2x4x4x288xbf16, #tpu.memory_space<vmem>>) attributes {dimension_semantics = [#tpu.dimension_semantics<parallel>], iteration_bounds = array<i64: 2>, scalar_prefetch = 0 : i64, scratch_operands = 2 : i64, tpu.core_type = #tpu.core_type<tc>, window_params = [{transform_indices = @transform_0, window_bounds = array<i64: 2, 4, 4, 256>}, {pipeline_mode = #tpu.pipeline_mode<synchronous>, transform_indices = @transform_1, window_bounds = array<i64: 256, 128>}, {pipeline_mode = #tpu.pipeline_mode<synchronous>, transform_indices = @transform_2, window_bounds = array<i64: 1, 128>}, {pipeline_mode = #tpu.pipeline_mode<synchronous>, transform_indices = @transform_3, window_bounds = array<i64: 288, 32>}, {pipeline_mode = #tpu.pipeline_mode<synchronous>, transform_indices = @transform_4, window_bounds = array<i64: 1, 32>}, {pipeline_mode = #tpu.pipeline_mode<synchronous>, transform_indices = @transform_5, window_bounds = array<i64: 32, 128>}, {pipeline_mode = #tpu.pipeline_mode<synchronous>, transform_indices = @transform_6, window_bounds = array<i64: 1, 128>}, {pipeline_mode = #tpu.pipeline_mode<synchronous>, transform_indices = @transform_7, window_bounds = array<i64: 64, 128>}, {pipeline_mode = #tpu.pipeline_mode<synchronous>, transform_indices = @transform_8, window_bounds = array<i64: 1, 128>}, {pipeline_mode = #tpu.pipeline_mode<synchronous>, transform_indices = @transform_9, window_bounds = array<i64: 128, 32>}, {pipeline_mode = #tpu.pipeline_mode<synchronous>, transform_indices = @transform_10, window_bounds = array<i64: 1, 32>}, {pipeline_mode = #tpu.pipeline_mode<synchronous>, transform_indices = @transform_11, window_bounds = array<i64: 288, 32>}, {pipeline_mode = #tpu.pipeline_mode<synchronous>, transform_indices = @transform_12, window_bounds = array<i64: 1, 32>}, {pipeline_mode = #tpu.pipeline_mode<synchronous>, transform_indices = @transform_13, window_bounds = array<i64: 32, 128>}, {pipeline_mode = #tpu.pipeline_mode<synchronous>, transform_indices = @transform_14, window_bounds = array<i64: 1, 128>}, {pipeline_mode = #tpu.pipeline_mode<synchronous>, transform_indices = @transform_15, window_bounds = array<i64: 128, 32>}, {pipeline_mode = #tpu.pipeline_mode<synchronous>, transform_indices = @transform_16, window_bounds = array<i64: 1, 32>}, {pipeline_mode = #tpu.pipeline_mode<synchronous>, transform_indices = @transform_17, window_bounds = array<i64: 288, 32>}, {pipeline_mode = #tpu.pipeline_mode<synchronous>, transform_indices = @transform_18, window_bounds = array<i64: 1, 32>}, {pipeline_mode = #tpu.pipeline_mode<synchronous>, transform_indices = @transform_19, window_bounds = array<i64: 32, 128>}, {pipeline_mode = #tpu.pipeline_mode<synchronous>, transform_indices = @transform_20, window_bounds = array<i64: 1, 128>}, {transform_indices = @transform_21, window_bounds = array<i64: 2, 4, 4, 128>}]} {
    %cst = arith.constant 0.000000e+00 : bf16
    %0 = vector.broadcast %cst : bf16 to vector<2x2x8x128xbf16>
    %c0 = arith.constant 0 : index
    %c0_0 = arith.constant 0 : index
    %c0_1 = arith.constant 0 : index
    %c0_2 = arith.constant 0 : index
    %1 = vector.load %arg23[%c0, %c0_0, %c0_1, %c0_2] : memref<2x8x8x128xbf16, #tpu.memory_space<vmem>>, vector<2x2x8x128xbf16>
    tpu.vector_store %arg23[%c0, %c0_0, %c0_1, %c0_2], %0 {strides = array<i32>} : memref<2x8x8x128xbf16, #tpu.memory_space<vmem>>, vector<2x2x8x128xbf16>,
    %cst_3 = arith.constant 0.000000e+00 : bf16
    %2 = vector.broadcast %cst_3 : bf16 to vector<2x2x8x128xbf16>
    %c0_4 = arith.constant 0 : index
    %c6 = arith.constant 6 : index
    %c0_5 = arith.constant 0 : index
    %c0_6 = arith.constant 0 : index
    %3 = vector.load %arg23[%c0_4, %c6, %c0_5, %c0_6] : memref<2x8x8x128xbf16, #tpu.memory_space<vmem>>, vector<2x2x8x128xbf16>
    tpu.vector_store %arg23[%c0_4, %c6, %c0_5, %c0_6], %2 {strides = array<i32>} : memref<2x8x8x128xbf16, #tpu.memory_space<vmem>>, vector<2x2x8x128xbf16>,
    %cst_7 = arith.constant 0.000000e+00 : bf16
    %4 = vector.broadcast %cst_7 : bf16 to vector<2x8x2x128xbf16>
    %c0_8 = arith.constant 0 : index
    %c0_9 = arith.constant 0 : index
    %c0_10 = arith.constant 0 : index
    %c0_11 = arith.constant 0 : index
    %5 = vector.load %arg23[%c0_8, %c0_9, %c0_10, %c0_11] : memref<2x8x8x128xbf16, #tpu.memory_space<vmem>>, vector<2x8x2x128xbf16>
    tpu.vector_store %arg23[%c0_8, %c0_9, %c0_10, %c0_11], %4 {strides = array<i32>} : memref<2x8x8x128xbf16, #tpu.memory_space<vmem>>, vector<2x8x2x128xbf16>,
    %cst_12 = arith.constant 0.000000e+00 : bf16
    %6 = vector.broadcast %cst_12 : bf16 to vector<2x8x2x128xbf16>
    %c0_13 = arith.constant 0 : index
    %c0_14 = arith.constant 0 : index
    %c6_15 = arith.constant 6 : index
    %c0_16 = arith.constant 0 : index
    %7 = vector.load %arg23[%c0_13, %c0_14, %c6_15, %c0_16] : memref<2x8x8x128xbf16, #tpu.memory_space<vmem>>, vector<2x8x2x128xbf16>
    tpu.vector_store %arg23[%c0_13, %c0_14, %c6_15, %c0_16], %6 {strides = array<i32>} : memref<2x8x8x128xbf16, #tpu.memory_space<vmem>>, vector<2x8x2x128xbf16>,
    %c0_17 = arith.constant 0 : index
    %c0_18 = arith.constant 0 : index
    %c0_19 = arith.constant 0 : index
    %c0_20 = arith.constant 0 : index
    %8 = vector.load %arg1[%c0_17, %c0_18, %c0_19, %c0_20] : memref<2x4x4x256xbf16, #tpu.memory_space<vmem>>, vector<2x4x4x256xbf16>
    %9 = vector.shape_cast %8 : vector<2x4x4x256xbf16> to vector<32x256xbf16>
    %c0_21 = arith.constant 0 : index
    %c0_22 = arith.constant 0 : index
    %10 = vector.load %arg2[%c0_21, %c0_22] : memref<256x128xbf16, #tpu.memory_space<vmem>>, vector<256x128xbf16>
    %cst_23 = arith.constant dense<0.000000e+00> : vector<32x128xf32>
    %11 = tpu.matmul %9, %10, %cst_23 {dimension_numbers = #tpu.dot_dimension_numbers<[1], [0], [0], [1], [0, 0, 1, 1], [], []>} : vector<32x256xbf16>, vector<256x128xbf16>, vector<32x128xf32> -> vector<32x128xf32>
    %c0_24 = arith.constant 0 : index
    %c0_25 = arith.constant 0 : index
    %12 = vector.load %arg3[%c0_24, %c0_25] : memref<1x128xf32, #tpu.memory_space<vmem>>, vector<1x128xf32>
    %13 = vector.broadcast %12 : vector<1x128xf32> to vector<32x128xf32>
    %14 = arith.addf %11, %13 : vector<32x128xf32>
    %cst_26 = arith.constant 0.000000e+00 : f32
    %15 = vector.broadcast %cst_26 : f32 to vector<32x128xf32>
    %16 = arith.maximumf %14, %15 : vector<32x128xf32>
    %17 = arith.truncf %16 : vector<32x128xf32> to vector<32x128xbf16>
    %18 = vector.shape_cast %17 : vector<32x128xbf16> to vector<2x4x4x128xbf16>
    %c0_27 = arith.constant 0 : index
    %c2 = arith.constant 2 : index
    %c2_28 = arith.constant 2 : index
    %c0_29 = arith.constant 0 : index
    %19 = vector.load %arg23[%c0_27, %c2, %c2_28, %c0_29] : memref<2x8x8x128xbf16, #tpu.memory_space<vmem>>, vector<2x4x4x128xbf16>
    tpu.vector_store %arg23[%c0_27, %c2, %c2_28, %c0_29], %18 {strides = array<i32>} : memref<2x8x8x128xbf16, #tpu.memory_space<vmem>>, vector<2x4x4x128xbf16>,
    %c0_30 = arith.constant 0 : index
    %c1 = arith.constant 1 : index
    %c1_31 = arith.constant 1 : index
    %c96 = arith.constant 96 : index
    %20 = vector.load %arg23[%c0_30, %c1, %c1_31, %c96] : memref<2x8x8x128xbf16, #tpu.memory_space<vmem>>, vector<2x4x4x32xbf16>
    %c0_32 = arith.constant 0 : index
    %c0_33 = arith.constant 0 : index
    %c0_34 = arith.constant 0 : index
    %c0_35 = arith.constant 0 : index
    %21 = vector.load %arg24[%c0_32, %c0_33, %c0_34, %c0_35] : memref<2x4x4x288xbf16, #tpu.memory_space<vmem>>, vector<2x4x4x32xbf16>
    tpu.vector_store %arg24[%c0_32, %c0_33, %c0_34, %c0_35], %20 {strides = array<i32>} : memref<2x4x4x288xbf16, #tpu.memory_space<vmem>>, vector<2x4x4x32xbf16>,
    %c0_36 = arith.constant 0 : index
    %c1_37 = arith.constant 1 : index
    %c2_38 = arith.constant 2 : index
    %c64 = arith.constant 64 : index
    %22 = vector.load %arg23[%c0_36, %c1_37, %c2_38, %c64] : memref<2x8x8x128xbf16, #tpu.memory_space<vmem>>, vector<2x4x4x32xbf16>
    %c0_39 = arith.constant 0 : index
    %c0_40 = arith.constant 0 : index
    %c0_41 = arith.constant 0 : index
    %c32 = arith.constant 32 : index
    %23 = vector.load %arg24[%c0_39, %c0_40, %c0_41, %c32] : memref<2x4x4x288xbf16, #tpu.memory_space<vmem>>, vector<2x4x4x32xbf16>
    tpu.vector_store %arg24[%c0_39, %c0_40, %c0_41, %c32], %22 {strides = array<i32>} : memref<2x4x4x288xbf16, #tpu.memory_space<vmem>>, vector<2x4x4x32xbf16>,
    %c0_42 = arith.constant 0 : index
    %c1_43 = arith.constant 1 : index
    %c2_44 = arith.constant 2 : index
    %c96_45 = arith.constant 96 : index
    %24 = vector.load %arg23[%c0_42, %c1_43, %c2_44, %c96_45] : memref<2x8x8x128xbf16, #tpu.memory_space<vmem>>, vector<2x4x4x32xbf16>
    %c0_46 = arith.constant 0 : index
    %c0_47 = arith.constant 0 : index
    %c0_48 = arith.constant 0 : index
    %c64_49 = arith.constant 64 : index
    %25 = vector.load %arg24[%c0_46, %c0_47, %c0_48, %c64_49] : memref<2x4x4x288xbf16, #tpu.memory_space<vmem>>, vector<2x4x4x32xbf16>
    tpu.vector_store %arg24[%c0_46, %c0_47, %c0_48, %c64_49], %24 {strides = array<i32>} : memref<2x4x4x288xbf16, #tpu.memory_space<vmem>>, vector<2x4x4x32xbf16>,
    %c0_50 = arith.constant 0 : index
    %c2_51 = arith.constant 2 : index
    %c1_52 = arith.constant 1 : index
    %c32_53 = arith.constant 32 : index
    %26 = vector.load %arg23[%c0_50, %c2_51, %c1_52, %c32_53] : memref<2x8x8x128xbf16, #tpu.memory_space<vmem>>, vector<2x4x4x32xbf16>
    %c0_54 = arith.constant 0 : index
    %c0_55 = arith.constant 0 : index
    %c0_56 = arith.constant 0 : index
    %c96_57 = arith.constant 96 : index
    %27 = vector.load %arg24[%c0_54, %c0_55, %c0_56, %c96_57] : memref<2x4x4x288xbf16, #tpu.memory_space<vmem>>, vector<2x4x4x32xbf16>
    tpu.vector_store %arg24[%c0_54, %c0_55, %c0_56, %c96_57], %26 {strides = array<i32>} : memref<2x4x4x288xbf16, #tpu.memory_space<vmem>>, vector<2x4x4x32xbf16>,
    %c0_58 = arith.constant 0 : index
    %c2_59 = arith.constant 2 : index
    %c2_60 = arith.constant 2 : index
    %c0_61 = arith.constant 0 : index
    %28 = vector.load %arg23[%c0_58, %c2_59, %c2_60, %c0_61] : memref<2x8x8x128xbf16, #tpu.memory_space<vmem>>, vector<2x4x4x32xbf16>
    %c0_62 = arith.constant 0 : index
    %c0_63 = arith.constant 0 : index
    %c0_64 = arith.constant 0 : index
    %c128 = arith.constant 128 : index
    %29 = vector.load %arg24[%c0_62, %c0_63, %c0_64, %c128] : memref<2x4x4x288xbf16, #tpu.memory_space<vmem>>, vector<2x4x4x32xbf16>
    tpu.vector_store %arg24[%c0_62, %c0_63, %c0_64, %c128], %28 {strides = array<i32>} : memref<2x4x4x288xbf16, #tpu.memory_space<vmem>>, vector<2x4x4x32xbf16>,
    %c0_65 = arith.constant 0 : index
    %c2_66 = arith.constant 2 : index
    %c2_67 = arith.constant 2 : index
    %c32_68 = arith.constant 32 : index
    %30 = vector.load %arg23[%c0_65, %c2_66, %c2_67, %c32_68] : memref<2x8x8x128xbf16, #tpu.memory_space<vmem>>, vector<2x4x4x32xbf16>
    %c0_69 = arith.constant 0 : index
    %c0_70 = arith.constant 0 : index
    %c0_71 = arith.constant 0 : index
    %c160 = arith.constant 160 : index
    %31 = vector.load %arg24[%c0_69, %c0_70, %c0_71, %c160] : memref<2x4x4x288xbf16, #tpu.memory_space<vmem>>, vector<2x4x4x32xbf16>
    tpu.vector_store %arg24[%c0_69, %c0_70, %c0_71, %c160], %30 {strides = array<i32>} : memref<2x4x4x288xbf16, #tpu.memory_space<vmem>>, vector<2x4x4x32xbf16>,
    %c0_72 = arith.constant 0 : index
    %c2_73 = arith.constant 2 : index
    %c1_74 = arith.constant 1 : index
    %c96_75 = arith.constant 96 : index
    %32 = vector.load %arg23[%c0_72, %c2_73, %c1_74, %c96_75] : memref<2x8x8x128xbf16, #tpu.memory_space<vmem>>, vector<2x4x4x32xbf16>
    %c0_76 = arith.constant 0 : index
    %c0_77 = arith.constant 0 : index
    %c0_78 = arith.constant 0 : index
    %c192 = arith.constant 192 : index
    %33 = vector.load %arg24[%c0_76, %c0_77, %c0_78, %c192] : memref<2x4x4x288xbf16, #tpu.memory_space<vmem>>, vector<2x4x4x32xbf16>
    tpu.vector_store %arg24[%c0_76, %c0_77, %c0_78, %c192], %32 {strides = array<i32>} : memref<2x4x4x288xbf16, #tpu.memory_space<vmem>>, vector<2x4x4x32xbf16>,
    %c0_79 = arith.constant 0 : index
    %c2_80 = arith.constant 2 : index
    %c2_81 = arith.constant 2 : index
    %c64_82 = arith.constant 64 : index
    %34 = vector.load %arg23[%c0_79, %c2_80, %c2_81, %c64_82] : memref<2x8x8x128xbf16, #tpu.memory_space<vmem>>, vector<2x4x4x32xbf16>
    %c0_83 = arith.constant 0 : index
    %c0_84 = arith.constant 0 : index
    %c0_85 = arith.constant 0 : index
    %c224 = arith.constant 224 : index
    %35 = vector.load %arg24[%c0_83, %c0_84, %c0_85, %c224] : memref<2x4x4x288xbf16, #tpu.memory_space<vmem>>, vector<2x4x4x32xbf16>
    tpu.vector_store %arg24[%c0_83, %c0_84, %c0_85, %c224], %34 {strides = array<i32>} : memref<2x4x4x288xbf16, #tpu.memory_space<vmem>>, vector<2x4x4x32xbf16>,
    %c0_86 = arith.constant 0 : index
    %c2_87 = arith.constant 2 : index
    %c2_88 = arith.constant 2 : index
    %c96_89 = arith.constant 96 : index
    %36 = vector.load %arg23[%c0_86, %c2_87, %c2_88, %c96_89] : memref<2x8x8x128xbf16, #tpu.memory_space<vmem>>, vector<2x4x4x32xbf16>
    %c0_90 = arith.constant 0 : index
    %c0_91 = arith.constant 0 : index
    %c0_92 = arith.constant 0 : index
    %c256 = arith.constant 256 : index
    %37 = vector.load %arg24[%c0_90, %c0_91, %c0_92, %c256] : memref<2x4x4x288xbf16, #tpu.memory_space<vmem>>, vector<2x4x4x32xbf16>
    tpu.vector_store %arg24[%c0_90, %c0_91, %c0_92, %c256], %36 {strides = array<i32>} : memref<2x4x4x288xbf16, #tpu.memory_space<vmem>>, vector<2x4x4x32xbf16>,
    %c0_93 = arith.constant 0 : index
    %c0_94 = arith.constant 0 : index
    %c0_95 = arith.constant 0 : index
    %c0_96 = arith.constant 0 : index
    %38 = vector.load %arg24[%c0_93, %c0_94, %c0_95, %c0_96] : memref<2x4x4x288xbf16, #tpu.memory_space<vmem>>, vector<2x4x4x288xbf16>
    %39 = vector.shape_cast %38 : vector<2x4x4x288xbf16> to vector<32x288xbf16>
    %c0_97 = arith.constant 0 : index
    %c0_98 = arith.constant 0 : index
    %40 = vector.load %arg4[%c0_97, %c0_98] : memref<288x32xbf16, #tpu.memory_space<vmem>>, vector<288x32xbf16>
    %cst_99 = arith.constant dense<0.000000e+00> : vector<32x32xf32>
    %41 = tpu.matmul %39, %40, %cst_99 {dimension_numbers = #tpu.dot_dimension_numbers<[1], [0], [0], [1], [0, 0, 1, 1], [], []>} : vector<32x288xbf16>, vector<288x32xbf16>, vector<32x32xf32> -> vector<32x32xf32>
    %c0_100 = arith.constant 0 : index
    %c0_101 = arith.constant 0 : index
    %42 = vector.load %arg5[%c0_100, %c0_101] : memref<1x32xf32, #tpu.memory_space<vmem>>, vector<1x32xf32>
    %43 = vector.broadcast %42 : vector<1x32xf32> to vector<32x32xf32>
    %44 = arith.addf %41, %43 : vector<32x32xf32>
    %cst_102 = arith.constant 0.000000e+00 : f32
    %45 = vector.broadcast %cst_102 : f32 to vector<32x32xf32>
    %46 = arith.maximumf %44, %45 : vector<32x32xf32>
    %47 = arith.truncf %46 : vector<32x32xf32> to vector<32x32xbf16>
    %c0_103 = arith.constant 0 : index
    %c0_104 = arith.constant 0 : index
    %48 = vector.load %arg6[%c0_103, %c0_104] : memref<32x128xbf16, #tpu.memory_space<vmem>>, vector<32x128xbf16>
    %cst_105 = arith.constant dense<0.000000e+00> : vector<32x128xf32>
    %49 = tpu.matmul %47, %48, %cst_105 {dimension_numbers = #tpu.dot_dimension_numbers<[1], [0], [0], [1], [0, 0, 1, 1], [], []>} : vector<32x32xbf16>, vector<32x128xbf16>, vector<32x128xf32> -> vector<32x128xf32>
    %c0_106 = arith.constant 0 : index
    %c0_107 = arith.constant 0 : index
    %50 = vector.load %arg7[%c0_106, %c0_107] : memref<1x128xf32, #tpu.memory_space<vmem>>, vector<1x128xf32>
    %51 = vector.broadcast %50 : vector<1x128xf32> to vector<32x128xf32>
    %52 = arith.addf %49, %51 : vector<32x128xf32>
    %53 = vector.extract_strided_slice %9 {offsets = [0, 0], sizes = [32, 64], strides = [1, 1]} : vector<32x256xbf16> to vector<32x64xbf16>
    %c0_108 = arith.constant 0 : index
    %c0_109 = arith.constant 0 : index
    %54 = vector.load %arg8[%c0_108, %c0_109] : memref<64x128xbf16, #tpu.memory_space<vmem>>, vector<64x128xbf16>
    %cst_110 = arith.constant dense<0.000000e+00> : vector<32x128xf32>
    %55 = tpu.matmul %53, %54, %cst_110 {dimension_numbers = #tpu.dot_dimension_numbers<[1], [0], [0], [1], [0, 0, 1, 1], [], []>} : vector<32x64xbf16>, vector<64x128xbf16>, vector<32x128xf32> -> vector<32x128xf32>
    %c0_111 = arith.constant 0 : index
    %c0_112 = arith.constant 0 : index
    %56 = vector.load %arg9[%c0_111, %c0_112] : memref<1x128xf32, #tpu.memory_space<vmem>>, vector<1x128xf32>
    %57 = vector.broadcast %56 : vector<1x128xf32> to vector<32x128xf32>
    %58 = arith.addf %55, %57 : vector<32x128xf32>
    %59 = arith.addf %52, %58 : vector<32x128xf32>
    %cst_113 = arith.constant 0.000000e+00 : f32
    %60 = vector.broadcast %cst_113 : f32 to vector<32x128xf32>
    %61 = arith.maximumf %59, %60 : vector<32x128xf32>
    %62 = arith.truncf %61 : vector<32x128xf32> to vector<32x128xbf16>
    %c0_114 = arith.constant 0 : index
    %c0_115 = arith.constant 0 : index
    %63 = vector.load %arg10[%c0_114, %c0_115] : memref<128x32xbf16, #tpu.memory_space<vmem>>, vector<128x32xbf16>
    %cst_116 = arith.constant dense<0.000000e+00> : vector<32x32xf32>
    %64 = tpu.matmul %62, %63, %cst_116 {dimension_numbers = #tpu.dot_dimension_numbers<[1], [0], [0], [1], [0, 0, 1, 1], [], []>} : vector<32x128xbf16>, vector<128x32xbf16>, vector<32x32xf32> -> vector<32x32xf32>
    %c0_117 = arith.constant 0 : index
    %c0_118 = arith.constant 0 : index
    %65 = vector.load %arg11[%c0_117, %c0_118] : memref<1x32xf32, #tpu.memory_space<vmem>>, vector<1x32xf32>
    %66 = vector.broadcast %65 : vector<1x32xf32> to vector<32x32xf32>
    %67 = arith.addf %64, %66 : vector<32x32xf32>
    %cst_119 = arith.constant 0.000000e+00 : f32
    %68 = vector.broadcast %cst_119 : f32 to vector<32x32xf32>
    %69 = arith.maximumf %67, %68 : vector<32x32xf32>
    %70 = arith.truncf %69 : vector<32x32xf32> to vector<32x32xbf16>
    %71 = vector.shape_cast %70 : vector<32x32xbf16> to vector<2x4x4x32xbf16>
    %c0_120 = arith.constant 0 : index
    %c2_121 = arith.constant 2 : index
    %c2_122 = arith.constant 2 : index
    %c0_123 = arith.constant 0 : index
    %72 = vector.load %arg23[%c0_120, %c2_121, %c2_122, %c0_123] : memref<2x8x8x128xbf16, #tpu.memory_space<vmem>>, vector<2x4x4x32xbf16>
    tpu.vector_store %arg23[%c0_120, %c2_121, %c2_122, %c0_123], %71 {strides = array<i32>} : memref<2x8x8x128xbf16, #tpu.memory_space<vmem>>, vector<2x4x4x32xbf16>,
    %c0_124 = arith.constant 0 : index
    %c1_125 = arith.constant 1 : index
    %c1_126 = arith.constant 1 : index
    %c0_127 = arith.constant 0 : index
    %73 = vector.load %arg23[%c0_124, %c1_125, %c1_126, %c0_127] : memref<2x8x8x128xbf16, #tpu.memory_space<vmem>>, vector<2x4x4x32xbf16>
    %c0_128 = arith.constant 0 : index
    %c0_129 = arith.constant 0 : index
    %c0_130 = arith.constant 0 : index
    %c0_131 = arith.constant 0 : index
    %74 = vector.load %arg24[%c0_128, %c0_129, %c0_130, %c0_131] : memref<2x4x4x288xbf16, #tpu.memory_space<vmem>>, vector<2x4x4x32xbf16>
    tpu.vector_store %arg24[%c0_128, %c0_129, %c0_130, %c0_131], %73 {strides = array<i32>} : memref<2x4x4x288xbf16, #tpu.memory_space<vmem>>, vector<2x4x4x32xbf16>,
    %c0_132 = arith.constant 0 : index
    %c1_133 = arith.constant 1 : index
    %c2_134 = arith.constant 2 : index
    %c0_135 = arith.constant 0 : index
    %75 = vector.load %arg23[%c0_132, %c1_133, %c2_134, %c0_135] : memref<2x8x8x128xbf16, #tpu.memory_space<vmem>>, vector<2x4x4x32xbf16>
    %c0_136 = arith.constant 0 : index
    %c0_137 = arith.constant 0 : index
    %c0_138 = arith.constant 0 : index
    %c32_139 = arith.constant 32 : index
    %76 = vector.load %arg24[%c0_136, %c0_137, %c0_138, %c32_139] : memref<2x4x4x288xbf16, #tpu.memory_space<vmem>>, vector<2x4x4x32xbf16>
    tpu.vector_store %arg24[%c0_136, %c0_137, %c0_138, %c32_139], %75 {strides = array<i32>} : memref<2x4x4x288xbf16, #tpu.memory_space<vmem>>, vector<2x4x4x32xbf16>,
    %c0_140 = arith.constant 0 : index
    %c1_141 = arith.constant 1 : index
    %c3 = arith.constant 3 : index
    %c0_142 = arith.constant 0 : index
    %77 = vector.load %arg23[%c0_140, %c1_141, %c3, %c0_142] : memref<2x8x8x128xbf16, #tpu.memory_space<vmem>>, vector<2x4x4x32xbf16>
    %c0_143 = arith.constant 0 : index
    %c0_144 = arith.constant 0 : index
    %c0_145 = arith.constant 0 : index
    %c64_146 = arith.constant 64 : index
    %78 = vector.load %arg24[%c0_143, %c0_144, %c0_145, %c64_146] : memref<2x4x4x288xbf16, #tpu.memory_space<vmem>>, vector<2x4x4x32xbf16>
    tpu.vector_store %arg24[%c0_143, %c0_144, %c0_145, %c64_146], %77 {strides = array<i32>} : memref<2x4x4x288xbf16, #tpu.memory_space<vmem>>, vector<2x4x4x32xbf16>,
    %c0_147 = arith.constant 0 : index
    %c2_148 = arith.constant 2 : index
    %c1_149 = arith.constant 1 : index
    %c0_150 = arith.constant 0 : index
    %79 = vector.load %arg23[%c0_147, %c2_148, %c1_149, %c0_150] : memref<2x8x8x128xbf16, #tpu.memory_space<vmem>>, vector<2x4x4x32xbf16>
    %c0_151 = arith.constant 0 : index
    %c0_152 = arith.constant 0 : index
    %c0_153 = arith.constant 0 : index
    %c96_154 = arith.constant 96 : index
    %80 = vector.load %arg24[%c0_151, %c0_152, %c0_153, %c96_154] : memref<2x4x4x288xbf16, #tpu.memory_space<vmem>>, vector<2x4x4x32xbf16>
    tpu.vector_store %arg24[%c0_151, %c0_152, %c0_153, %c96_154], %79 {strides = array<i32>} : memref<2x4x4x288xbf16, #tpu.memory_space<vmem>>, vector<2x4x4x32xbf16>,
    %c0_155 = arith.constant 0 : index
    %c2_156 = arith.constant 2 : index
    %c2_157 = arith.constant 2 : index
    %c0_158 = arith.constant 0 : index
    %81 = vector.load %arg23[%c0_155, %c2_156, %c2_157, %c0_158] : memref<2x8x8x128xbf16, #tpu.memory_space<vmem>>, vector<2x4x4x32xbf16>
    %c0_159 = arith.constant 0 : index
    %c0_160 = arith.constant 0 : index
    %c0_161 = arith.constant 0 : index
    %c128_162 = arith.constant 128 : index
    %82 = vector.load %arg24[%c0_159, %c0_160, %c0_161, %c128_162] : memref<2x4x4x288xbf16, #tpu.memory_space<vmem>>, vector<2x4x4x32xbf16>
    tpu.vector_store %arg24[%c0_159, %c0_160, %c0_161, %c128_162], %81 {strides = array<i32>} : memref<2x4x4x288xbf16, #tpu.memory_space<vmem>>, vector<2x4x4x32xbf16>,
    %c0_163 = arith.constant 0 : index
    %c2_164 = arith.constant 2 : index
    %c3_165 = arith.constant 3 : index
    %c0_166 = arith.constant 0 : index
    %83 = vector.load %arg23[%c0_163, %c2_164, %c3_165, %c0_166] : memref<2x8x8x128xbf16, #tpu.memory_space<vmem>>, vector<2x4x4x32xbf16>
    %c0_167 = arith.constant 0 : index
    %c0_168 = arith.constant 0 : index
    %c0_169 = arith.constant 0 : index
    %c160_170 = arith.constant 160 : index
    %84 = vector.load %arg24[%c0_167, %c0_168, %c0_169, %c160_170] : memref<2x4x4x288xbf16, #tpu.memory_space<vmem>>, vector<2x4x4x32xbf16>
    tpu.vector_store %arg24[%c0_167, %c0_168, %c0_169, %c160_170], %83 {strides = array<i32>} : memref<2x4x4x288xbf16, #tpu.memory_space<vmem>>, vector<2x4x4x32xbf16>,
    %c0_171 = arith.constant 0 : index
    %c3_172 = arith.constant 3 : index
    %c1_173 = arith.constant 1 : index
    %c0_174 = arith.constant 0 : index
    %85 = vector.load %arg23[%c0_171, %c3_172, %c1_173, %c0_174] : memref<2x8x8x128xbf16, #tpu.memory_space<vmem>>, vector<2x4x4x32xbf16>
    %c0_175 = arith.constant 0 : index
    %c0_176 = arith.constant 0 : index
    %c0_177 = arith.constant 0 : index
    %c192_178 = arith.constant 192 : index
    %86 = vector.load %arg24[%c0_175, %c0_176, %c0_177, %c192_178] : memref<2x4x4x288xbf16, #tpu.memory_space<vmem>>, vector<2x4x4x32xbf16>
    tpu.vector_store %arg24[%c0_175, %c0_176, %c0_177, %c192_178], %85 {strides = array<i32>} : memref<2x4x4x288xbf16, #tpu.memory_space<vmem>>, vector<2x4x4x32xbf16>,
    %c0_179 = arith.constant 0 : index
    %c3_180 = arith.constant 3 : index
    %c2_181 = arith.constant 2 : index
    %c0_182 = arith.constant 0 : index
    %87 = vector.load %arg23[%c0_179, %c3_180, %c2_181, %c0_182] : memref<2x8x8x128xbf16, #tpu.memory_space<vmem>>, vector<2x4x4x32xbf16>
    %c0_183 = arith.constant 0 : index
    %c0_184 = arith.constant 0 : index
    %c0_185 = arith.constant 0 : index
    %c224_186 = arith.constant 224 : index
    %88 = vector.load %arg24[%c0_183, %c0_184, %c0_185, %c224_186] : memref<2x4x4x288xbf16, #tpu.memory_space<vmem>>, vector<2x4x4x32xbf16>
    tpu.vector_store %arg24[%c0_183, %c0_184, %c0_185, %c224_186], %87 {strides = array<i32>} : memref<2x4x4x288xbf16, #tpu.memory_space<vmem>>, vector<2x4x4x32xbf16>,
    %c0_187 = arith.constant 0 : index
    %c3_188 = arith.constant 3 : index
    %c3_189 = arith.constant 3 : index
    %c0_190 = arith.constant 0 : index
    %89 = vector.load %arg23[%c0_187, %c3_188, %c3_189, %c0_190] : memref<2x8x8x128xbf16, #tpu.memory_space<vmem>>, vector<2x4x4x32xbf16>
    %c0_191 = arith.constant 0 : index
    %c0_192 = arith.constant 0 : index
    %c0_193 = arith.constant 0 : index
    %c256_194 = arith.constant 256 : index
    %90 = vector.load %arg24[%c0_191, %c0_192, %c0_193, %c256_194] : memref<2x4x4x288xbf16, #tpu.memory_space<vmem>>, vector<2x4x4x32xbf16>
    tpu.vector_store %arg24[%c0_191, %c0_192, %c0_193, %c256_194], %89 {strides = array<i32>} : memref<2x4x4x288xbf16, #tpu.memory_space<vmem>>, vector<2x4x4x32xbf16>,
    %c0_195 = arith.constant 0 : index
    %c0_196 = arith.constant 0 : index
    %c0_197 = arith.constant 0 : index
    %c0_198 = arith.constant 0 : index
    %91 = vector.load %arg24[%c0_195, %c0_196, %c0_197, %c0_198] : memref<2x4x4x288xbf16, #tpu.memory_space<vmem>>, vector<2x4x4x288xbf16>
    %92 = vector.shape_cast %91 : vector<2x4x4x288xbf16> to vector<32x288xbf16>
    %c0_199 = arith.constant 0 : index
    %c0_200 = arith.constant 0 : index
    %93 = vector.load %arg12[%c0_199, %c0_200] : memref<288x32xbf16, #tpu.memory_space<vmem>>, vector<288x32xbf16>
    %cst_201 = arith.constant dense<0.000000e+00> : vector<32x32xf32>
    %94 = tpu.matmul %92, %93, %cst_201 {dimension_numbers = #tpu.dot_dimension_numbers<[1], [0], [0], [1], [0, 0, 1, 1], [], []>} : vector<32x288xbf16>, vector<288x32xbf16>, vector<32x32xf32> -> vector<32x32xf32>
    %c0_202 = arith.constant 0 : index
    %c0_203 = arith.constant 0 : index
    %95 = vector.load %arg13[%c0_202, %c0_203] : memref<1x32xf32, #tpu.memory_space<vmem>>, vector<1x32xf32>
    %96 = vector.broadcast %95 : vector<1x32xf32> to vector<32x32xf32>
    %97 = arith.addf %94, %96 : vector<32x32xf32>
    %cst_204 = arith.constant 0.000000e+00 : f32
    %98 = vector.broadcast %cst_204 : f32 to vector<32x32xf32>
    %99 = arith.maximumf %97, %98 : vector<32x32xf32>
    %100 = arith.truncf %99 : vector<32x32xf32> to vector<32x32xbf16>
    %c0_205 = arith.constant 0 : index
    %c0_206 = arith.constant 0 : index
    %101 = vector.load %arg14[%c0_205, %c0_206] : memref<32x128xbf16, #tpu.memory_space<vmem>>, vector<32x128xbf16>
    %cst_207 = arith.constant dense<0.000000e+00> : vector<32x128xf32>
    %102 = tpu.matmul %100, %101, %cst_207 {dimension_numbers = #tpu.dot_dimension_numbers<[1], [0], [0], [1], [0, 0, 1, 1], [], []>} : vector<32x32xbf16>, vector<32x128xbf16>, vector<32x128xf32> -> vector<32x128xf32>
    %c0_208 = arith.constant 0 : index
    %c0_209 = arith.constant 0 : index
    %103 = vector.load %arg15[%c0_208, %c0_209] : memref<1x128xf32, #tpu.memory_space<vmem>>, vector<1x128xf32>
    %104 = vector.broadcast %103 : vector<1x128xf32> to vector<32x128xf32>
    %105 = arith.addf %102, %104 : vector<32x128xf32>
    %106 = arith.addf %105, %61 : vector<32x128xf32>
    %cst_210 = arith.constant 0.000000e+00 : f32
    %107 = vector.broadcast %cst_210 : f32 to vector<32x128xf32>
    %108 = arith.maximumf %106, %107 : vector<32x128xf32>
    %109 = arith.truncf %108 : vector<32x128xf32> to vector<32x128xbf16>
    %c0_211 = arith.constant 0 : index
    %c0_212 = arith.constant 0 : index
    %110 = vector.load %arg16[%c0_211, %c0_212] : memref<128x32xbf16, #tpu.memory_space<vmem>>, vector<128x32xbf16>
    %cst_213 = arith.constant dense<0.000000e+00> : vector<32x32xf32>
    %111 = tpu.matmul %109, %110, %cst_213 {dimension_numbers = #tpu.dot_dimension_numbers<[1], [0], [0], [1], [0, 0, 1, 1], [], []>} : vector<32x128xbf16>, vector<128x32xbf16>, vector<32x32xf32> -> vector<32x32xf32>
    %c0_214 = arith.constant 0 : index
    %c0_215 = arith.constant 0 : index
    %112 = vector.load %arg17[%c0_214, %c0_215] : memref<1x32xf32, #tpu.memory_space<vmem>>, vector<1x32xf32>
    %113 = vector.broadcast %112 : vector<1x32xf32> to vector<32x32xf32>
    %114 = arith.addf %111, %113 : vector<32x32xf32>
    %cst_216 = arith.constant 0.000000e+00 : f32
    %115 = vector.broadcast %cst_216 : f32 to vector<32x32xf32>
    %116 = arith.maximumf %114, %115 : vector<32x32xf32>
    %117 = arith.truncf %116 : vector<32x32xf32> to vector<32x32xbf16>
    %118 = vector.shape_cast %117 : vector<32x32xbf16> to vector<2x4x4x32xbf16>
    %c0_217 = arith.constant 0 : index
    %c2_218 = arith.constant 2 : index
    %c2_219 = arith.constant 2 : index
    %c0_220 = arith.constant 0 : index
    %119 = vector.load %arg23[%c0_217, %c2_218, %c2_219, %c0_220] : memref<2x8x8x128xbf16, #tpu.memory_space<vmem>>, vector<2x4x4x32xbf16>
    tpu.vector_store %arg23[%c0_217, %c2_218, %c2_219, %c0_220], %118 {strides = array<i32>} : memref<2x8x8x128xbf16, #tpu.memory_space<vmem>>, vector<2x4x4x32xbf16>,
    %c0_221 = arith.constant 0 : index
    %c1_222 = arith.constant 1 : index
    %c1_223 = arith.constant 1 : index
    %c0_224 = arith.constant 0 : index
    %120 = vector.load %arg23[%c0_221, %c1_222, %c1_223, %c0_224] : memref<2x8x8x128xbf16, #tpu.memory_space<vmem>>, vector<2x4x4x32xbf16>
    %c0_225 = arith.constant 0 : index
    %c0_226 = arith.constant 0 : index
    %c0_227 = arith.constant 0 : index
    %c0_228 = arith.constant 0 : index
    %121 = vector.load %arg24[%c0_225, %c0_226, %c0_227, %c0_228] : memref<2x4x4x288xbf16, #tpu.memory_space<vmem>>, vector<2x4x4x32xbf16>
    tpu.vector_store %arg24[%c0_225, %c0_226, %c0_227, %c0_228], %120 {strides = array<i32>} : memref<2x4x4x288xbf16, #tpu.memory_space<vmem>>, vector<2x4x4x32xbf16>,
    %c0_229 = arith.constant 0 : index
    %c1_230 = arith.constant 1 : index
    %c2_231 = arith.constant 2 : index
    %c0_232 = arith.constant 0 : index
    %122 = vector.load %arg23[%c0_229, %c1_230, %c2_231, %c0_232] : memref<2x8x8x128xbf16, #tpu.memory_space<vmem>>, vector<2x4x4x32xbf16>
    %c0_233 = arith.constant 0 : index
    %c0_234 = arith.constant 0 : index
    %c0_235 = arith.constant 0 : index
    %c32_236 = arith.constant 32 : index
    %123 = vector.load %arg24[%c0_233, %c0_234, %c0_235, %c32_236] : memref<2x4x4x288xbf16, #tpu.memory_space<vmem>>, vector<2x4x4x32xbf16>
    tpu.vector_store %arg24[%c0_233, %c0_234, %c0_235, %c32_236], %122 {strides = array<i32>} : memref<2x4x4x288xbf16, #tpu.memory_space<vmem>>, vector<2x4x4x32xbf16>,
    %c0_237 = arith.constant 0 : index
    %c1_238 = arith.constant 1 : index
    %c3_239 = arith.constant 3 : index
    %c0_240 = arith.constant 0 : index
    %124 = vector.load %arg23[%c0_237, %c1_238, %c3_239, %c0_240] : memref<2x8x8x128xbf16, #tpu.memory_space<vmem>>, vector<2x4x4x32xbf16>
    %c0_241 = arith.constant 0 : index
    %c0_242 = arith.constant 0 : index
    %c0_243 = arith.constant 0 : index
    %c64_244 = arith.constant 64 : index
    %125 = vector.load %arg24[%c0_241, %c0_242, %c0_243, %c64_244] : memref<2x4x4x288xbf16, #tpu.memory_space<vmem>>, vector<2x4x4x32xbf16>
    tpu.vector_store %arg24[%c0_241, %c0_242, %c0_243, %c64_244], %124 {strides = array<i32>} : memref<2x4x4x288xbf16, #tpu.memory_space<vmem>>, vector<2x4x4x32xbf16>,
    %c0_245 = arith.constant 0 : index
    %c2_246 = arith.constant 2 : index
    %c1_247 = arith.constant 1 : index
    %c0_248 = arith.constant 0 : index
    %126 = vector.load %arg23[%c0_245, %c2_246, %c1_247, %c0_248] : memref<2x8x8x128xbf16, #tpu.memory_space<vmem>>, vector<2x4x4x32xbf16>
    %c0_249 = arith.constant 0 : index
    %c0_250 = arith.constant 0 : index
    %c0_251 = arith.constant 0 : index
    %c96_252 = arith.constant 96 : index
    %127 = vector.load %arg24[%c0_249, %c0_250, %c0_251, %c96_252] : memref<2x4x4x288xbf16, #tpu.memory_space<vmem>>, vector<2x4x4x32xbf16>
    tpu.vector_store %arg24[%c0_249, %c0_250, %c0_251, %c96_252], %126 {strides = array<i32>} : memref<2x4x4x288xbf16, #tpu.memory_space<vmem>>, vector<2x4x4x32xbf16>,
    %c0_253 = arith.constant 0 : index
    %c2_254 = arith.constant 2 : index
    %c2_255 = arith.constant 2 : index
    %c0_256 = arith.constant 0 : index
    %128 = vector.load %arg23[%c0_253, %c2_254, %c2_255, %c0_256] : memref<2x8x8x128xbf16, #tpu.memory_space<vmem>>, vector<2x4x4x32xbf16>
    %c0_257 = arith.constant 0 : index
    %c0_258 = arith.constant 0 : index
    %c0_259 = arith.constant 0 : index
    %c128_260 = arith.constant 128 : index
    %129 = vector.load %arg24[%c0_257, %c0_258, %c0_259, %c128_260] : memref<2x4x4x288xbf16, #tpu.memory_space<vmem>>, vector<2x4x4x32xbf16>
    tpu.vector_store %arg24[%c0_257, %c0_258, %c0_259, %c128_260], %128 {strides = array<i32>} : memref<2x4x4x288xbf16, #tpu.memory_space<vmem>>, vector<2x4x4x32xbf16>,
    %c0_261 = arith.constant 0 : index
    %c2_262 = arith.constant 2 : index
    %c3_263 = arith.constant 3 : index
    %c0_264 = arith.constant 0 : index
    %130 = vector.load %arg23[%c0_261, %c2_262, %c3_263, %c0_264] : memref<2x8x8x128xbf16, #tpu.memory_space<vmem>>, vector<2x4x4x32xbf16>
    %c0_265 = arith.constant 0 : index
    %c0_266 = arith.constant 0 : index
    %c0_267 = arith.constant 0 : index
    %c160_268 = arith.constant 160 : index
    %131 = vector.load %arg24[%c0_265, %c0_266, %c0_267, %c160_268] : memref<2x4x4x288xbf16, #tpu.memory_space<vmem>>, vector<2x4x4x32xbf16>
    tpu.vector_store %arg24[%c0_265, %c0_266, %c0_267, %c160_268], %130 {strides = array<i32>} : memref<2x4x4x288xbf16, #tpu.memory_space<vmem>>, vector<2x4x4x32xbf16>,
    %c0_269 = arith.constant 0 : index
    %c3_270 = arith.constant 3 : index
    %c1_271 = arith.constant 1 : index
    %c0_272 = arith.constant 0 : index
    %132 = vector.load %arg23[%c0_269, %c3_270, %c1_271, %c0_272] : memref<2x8x8x128xbf16, #tpu.memory_space<vmem>>, vector<2x4x4x32xbf16>
    %c0_273 = arith.constant 0 : index
    %c0_274 = arith.constant 0 : index
    %c0_275 = arith.constant 0 : index
    %c192_276 = arith.constant 192 : index
    %133 = vector.load %arg24[%c0_273, %c0_274, %c0_275, %c192_276] : memref<2x4x4x288xbf16, #tpu.memory_space<vmem>>, vector<2x4x4x32xbf16>
    tpu.vector_store %arg24[%c0_273, %c0_274, %c0_275, %c192_276], %132 {strides = array<i32>} : memref<2x4x4x288xbf16, #tpu.memory_space<vmem>>, vector<2x4x4x32xbf16>,
    %c0_277 = arith.constant 0 : index
    %c3_278 = arith.constant 3 : index
    %c2_279 = arith.constant 2 : index
    %c0_280 = arith.constant 0 : index
    %134 = vector.load %arg23[%c0_277, %c3_278, %c2_279, %c0_280] : memref<2x8x8x128xbf16, #tpu.memory_space<vmem>>, vector<2x4x4x32xbf16>
    %c0_281 = arith.constant 0 : index
    %c0_282 = arith.constant 0 : index
    %c0_283 = arith.constant 0 : index
    %c224_284 = arith.constant 224 : index
    %135 = vector.load %arg24[%c0_281, %c0_282, %c0_283, %c224_284] : memref<2x4x4x288xbf16, #tpu.memory_space<vmem>>, vector<2x4x4x32xbf16>
    tpu.vector_store %arg24[%c0_281, %c0_282, %c0_283, %c224_284], %134 {strides = array<i32>} : memref<2x4x4x288xbf16, #tpu.memory_space<vmem>>, vector<2x4x4x32xbf16>,
    %c0_285 = arith.constant 0 : index
    %c3_286 = arith.constant 3 : index
    %c3_287 = arith.constant 3 : index
    %c0_288 = arith.constant 0 : index
    %136 = vector.load %arg23[%c0_285, %c3_286, %c3_287, %c0_288] : memref<2x8x8x128xbf16, #tpu.memory_space<vmem>>, vector<2x4x4x32xbf16>
    %c0_289 = arith.constant 0 : index
    %c0_290 = arith.constant 0 : index
    %c0_291 = arith.constant 0 : index
    %c256_292 = arith.constant 256 : index
    %137 = vector.load %arg24[%c0_289, %c0_290, %c0_291, %c256_292] : memref<2x4x4x288xbf16, #tpu.memory_space<vmem>>, vector<2x4x4x32xbf16>
    tpu.vector_store %arg24[%c0_289, %c0_290, %c0_291, %c256_292], %136 {strides = array<i32>} : memref<2x4x4x288xbf16, #tpu.memory_space<vmem>>, vector<2x4x4x32xbf16>,
    %c0_293 = arith.constant 0 : index
    %c0_294 = arith.constant 0 : index
    %c0_295 = arith.constant 0 : index
    %c0_296 = arith.constant 0 : index
    %138 = vector.load %arg24[%c0_293, %c0_294, %c0_295, %c0_296] : memref<2x4x4x288xbf16, #tpu.memory_space<vmem>>, vector<2x4x4x288xbf16>
    %139 = vector.shape_cast %138 : vector<2x4x4x288xbf16> to vector<32x288xbf16>
    %c0_297 = arith.constant 0 : index
    %c0_298 = arith.constant 0 : index
    %140 = vector.load %arg18[%c0_297, %c0_298] : memref<288x32xbf16, #tpu.memory_space<vmem>>, vector<288x32xbf16>
    %cst_299 = arith.constant dense<0.000000e+00> : vector<32x32xf32>
    %141 = tpu.matmul %139, %140, %cst_299 {dimension_numbers = #tpu.dot_dimension_numbers<[1], [0], [0], [1], [0, 0, 1, 1], [], []>} : vector<32x288xbf16>, vector<288x32xbf16>, vector<32x32xf32> -> vector<32x32xf32>
    %c0_300 = arith.constant 0 : index
    %c0_301 = arith.constant 0 : index
    %142 = vector.load %arg19[%c0_300, %c0_301] : memref<1x32xf32, #tpu.memory_space<vmem>>, vector<1x32xf32>
    %143 = vector.broadcast %142 : vector<1x32xf32> to vector<32x32xf32>
    %144 = arith.addf %141, %143 : vector<32x32xf32>
    %cst_302 = arith.constant 0.000000e+00 : f32
    %145 = vector.broadcast %cst_302 : f32 to vector<32x32xf32>
    %146 = arith.maximumf %144, %145 : vector<32x32xf32>
    %147 = arith.truncf %146 : vector<32x32xf32> to vector<32x32xbf16>
    %c0_303 = arith.constant 0 : index
    %c0_304 = arith.constant 0 : index
    %148 = vector.load %arg20[%c0_303, %c0_304] : memref<32x128xbf16, #tpu.memory_space<vmem>>, vector<32x128xbf16>
    %cst_305 = arith.constant dense<0.000000e+00> : vector<32x128xf32>
    %149 = tpu.matmul %147, %148, %cst_305 {dimension_numbers = #tpu.dot_dimension_numbers<[1], [0], [0], [1], [0, 0, 1, 1], [], []>} : vector<32x32xbf16>, vector<32x128xbf16>, vector<32x128xf32> -> vector<32x128xf32>
    %c0_306 = arith.constant 0 : index
    %c0_307 = arith.constant 0 : index
    %150 = vector.load %arg21[%c0_306, %c0_307] : memref<1x128xf32, #tpu.memory_space<vmem>>, vector<1x128xf32>
    %151 = vector.broadcast %150 : vector<1x128xf32> to vector<32x128xf32>
    %152 = arith.addf %149, %151 : vector<32x128xf32>
    %153 = arith.addf %152, %108 : vector<32x128xf32>
    %cst_308 = arith.constant 0.000000e+00 : f32
    %154 = vector.broadcast %cst_308 : f32 to vector<32x128xf32>
    %155 = arith.maximumf %153, %154 : vector<32x128xf32>
    %156 = vector.shape_cast %155 : vector<32x128xf32> to vector<2x4x4x128xf32>
    %c0_309 = arith.constant 0 : index
    %c0_310 = arith.constant 0 : index
    %c0_311 = arith.constant 0 : index
    %c0_312 = arith.constant 0 : index
    %157 = vector.load %arg22[%c0_309, %c0_310, %c0_311, %c0_312] : memref<2x4x4x128xf32, #tpu.memory_space<vmem>>, vector<2x4x4x128xf32>
    tpu.vector_store %arg22[%c0_309, %c0_310, %c0_311, %c0_312], %156 {strides = array<i32>} : memref<2x4x4x128xf32, #tpu.memory_space<vmem>>, vector<2x4x4x128xf32>,
    return
  }
  func.func @transform_0(%arg0: i32) -> (i32, i32, i32, i32) {
    %c0_i32 = arith.constant 0 : i32
    %c0_i32_0 = arith.constant 0 : i32
    %c0_i32_1 = arith.constant 0 : i32
    %c0_i32_2 = arith.constant 0 : i32
    return %arg0, %c0_i32, %c0_i32_0, %c0_i32_1 : i32, i32, i32, i32
  }
  func.func @transform_1(%arg0: i32) -> (i32, i32) {
    %c0_i32 = arith.constant 0 : i32
    %c0_i32_0 = arith.constant 0 : i32
    %c0_i32_1 = arith.constant 0 : i32
    return %c0_i32, %c0_i32_0 : i32, i32
  }
  func.func @transform_2(%arg0: i32) -> (i32, i32) {
    %c0_i32 = arith.constant 0 : i32
    %c0_i32_0 = arith.constant 0 : i32
    %c0_i32_1 = arith.constant 0 : i32
    return %c0_i32, %c0_i32_0 : i32, i32
  }
  func.func @transform_3(%arg0: i32) -> (i32, i32) {
    %c0_i32 = arith.constant 0 : i32
    %c0_i32_0 = arith.constant 0 : i32
    %c0_i32_1 = arith.constant 0 : i32
    return %c0_i32, %c0_i32_0 : i32, i32
  }
  func.func @transform_4(%arg0: i32) -> (i32, i32) {
    %c0_i32 = arith.constant 0 : i32
    %c0_i32_0 = arith.constant 0 : i32
    %c0_i32_1 = arith.constant 0 : i32
    return %c0_i32, %c0_i32_0 : i32, i32
  }
  func.func @transform_5(%arg0: i32) -> (i32, i32) {
    %c0_i32 = arith.constant 0 : i32
    %c0_i32_0 = arith.constant 0 : i32
    %c0_i32_1 = arith.constant 0 : i32
    return %c0_i32, %c0_i32_0 : i32, i32
  }
  func.func @transform_6(%arg0: i32) -> (i32, i32) {
    %c0_i32 = arith.constant 0 : i32
    %c0_i32_0 = arith.constant 0 : i32
    %c0_i32_1 = arith.constant 0 : i32
    return %c0_i32, %c0_i32_0 : i32, i32
  }
  func.func @transform_7(%arg0: i32) -> (i32, i32) {
    %c0_i32 = arith.constant 0 : i32
    %c0_i32_0 = arith.constant 0 : i32
    %c0_i32_1 = arith.constant 0 : i32
    return %c0_i32, %c0_i32_0 : i32, i32
  }
  func.func @transform_8(%arg0: i32) -> (i32, i32) {
    %c0_i32 = arith.constant 0 : i32
    %c0_i32_0 = arith.constant 0 : i32
    %c0_i32_1 = arith.constant 0 : i32
    return %c0_i32, %c0_i32_0 : i32, i32
  }
  func.func @transform_9(%arg0: i32) -> (i32, i32) {
    %c0_i32 = arith.constant 0 : i32
    %c0_i32_0 = arith.constant 0 : i32
    %c0_i32_1 = arith.constant 0 : i32
    return %c0_i32, %c0_i32_0 : i32, i32
  }
  func.func @transform_10(%arg0: i32) -> (i32, i32) {
    %c0_i32 = arith.constant 0 : i32
    %c0_i32_0 = arith.constant 0 : i32
    %c0_i32_1 = arith.constant 0 : i32
    return %c0_i32, %c0_i32_0 : i32, i32
  }
  func.func @transform_11(%arg0: i32) -> (i32, i32) {
    %c0_i32 = arith.constant 0 : i32
    %c0_i32_0 = arith.constant 0 : i32
    %c0_i32_1 = arith.constant 0 : i32
    return %c0_i32, %c0_i32_0 : i32, i32
  }
  func.func @transform_12(%arg0: i32) -> (i32, i32) {
    %c0_i32 = arith.constant 0 : i32
    %c0_i32_0 = arith.constant 0 : i32
    %c0_i32_1 = arith.constant 0 : i32
    return %c0_i32, %c0_i32_0 : i32, i32
  }
  func.func @transform_13(%arg0: i32) -> (i32, i32) {
    %c0_i32 = arith.constant 0 : i32
    %c0_i32_0 = arith.constant 0 : i32
    %c0_i32_1 = arith.constant 0 : i32
    return %c0_i32, %c0_i32_0 : i32, i32
  }
  func.func @transform_14(%arg0: i32) -> (i32, i32) {
    %c0_i32 = arith.constant 0 : i32
    %c0_i32_0 = arith.constant 0 : i32
    %c0_i32_1 = arith.constant 0 : i32
    return %c0_i32, %c0_i32_0 : i32, i32
  }
  func.func @transform_15(%arg0: i32) -> (i32, i32) {
    %c0_i32 = arith.constant 0 : i32
    %c0_i32_0 = arith.constant 0 : i32
    %c0_i32_1 = arith.constant 0 : i32
    return %c0_i32, %c0_i32_0 : i32, i32
  }
  func.func @transform_16(%arg0: i32) -> (i32, i32) {
    %c0_i32 = arith.constant 0 : i32
    %c0_i32_0 = arith.constant 0 : i32
    %c0_i32_1 = arith.constant 0 : i32
    return %c0_i32, %c0_i32_0 : i32, i32
  }
  func.func @transform_17(%arg0: i32) -> (i32, i32) {
    %c0_i32 = arith.constant 0 : i32
    %c0_i32_0 = arith.constant 0 : i32
    %c0_i32_1 = arith.constant 0 : i32
    return %c0_i32, %c0_i32_0 : i32, i32
  }
  func.func @transform_18(%arg0: i32) -> (i32, i32) {
    %c0_i32 = arith.constant 0 : i32
    %c0_i32_0 = arith.constant 0 : i32
    %c0_i32_1 = arith.constant 0 : i32
    return %c0_i32, %c0_i32_0 : i32, i32
  }
  func.func @transform_19(%arg0: i32) -> (i32, i32) {
    %c0_i32 = arith.constant 0 : i32
    %c0_i32_0 = arith.constant 0 : i32
    %c0_i32_1 = arith.constant 0 : i32
    return %c0_i32, %c0_i32_0 : i32, i32
  }
  func.func @transform_20(%arg0: i32) -> (i32, i32) {
    %c0_i32 = arith.constant 0 : i32
    %c0_i32_0 = arith.constant 0 : i32
    %c0_i32_1 = arith.constant 0 : i32
    return %c0_i32, %c0_i32_0 : i32, i32
  }
  func.func @transform_21(%arg0: i32) -> (i32, i32, i32, i32) {
    %c0_i32 = arith.constant 0 : i32
    %c0_i32_0 = arith.constant 0 : i32
    %c0_i32_1 = arith.constant 0 : i32
    %c0_i32_2 = arith.constant 0 : i32
    return %arg0, %c0_i32, %c0_i32_0, %c0_i32_1 : i32, i32, i32, i32
  }
}

</mosaic_0001>

<llo_original>
// kernel: _lambda_.1
$region0: #{_lambda_.1}
  #allocation0 [shape = 'u32[]', space=smem, size = 0x4, offset = 0x4, fixed_abs, tag = 'smem constant byte address 0x4 - core index']
  #allocation1 [shape = 'u32[144,128]{1,0:T(1,128)}', space=vmem, size = 0x12000, scoped, tag = 'internal scratch']
  #allocation2 [shape = 'bf16[2,8,8,128]{3,2,1,0:T(8,128)(2,1)}', space=vmem, size = 0x8000, scoped, tag = 'scratch operand']
  #allocation3 [shape = 'bf16[2,4,4,288]{3,2,1,0:T(4,128)(2,1)}', space=vmem, size = 0x6000, scoped, tag = 'scratch operand']
  %s0 = inlined_call_operand.vmem [shape: bf16[4,4,4,256], index: 0, kind: input, shape index: {}]
  %s1 = inlined_call_operand.vmem [shape: bf16[256,128], index: 1, kind: input, shape index: {}]
  %s2 = inlined_call_operand.vmem [shape: f32[1,128], index: 2, kind: input, shape index: {}]
  %s3 = inlined_call_operand.vmem [shape: bf16[288,32], index: 3, kind: input, shape index: {}]
  %s4 = inlined_call_operand.vmem [shape: f32[1,32], index: 4, kind: input, shape index: {}]
  %s5 = inlined_call_operand.vmem [shape: bf16[32,128], index: 5, kind: input, shape index: {}]
  %s6 = inlined_call_operand.vmem [shape: f32[1,128], index: 6, kind: input, shape index: {}]
  %s7 = inlined_call_operand.vmem [shape: bf16[64,128], index: 7, kind: input, shape index: {}]
  %s8 = inlined_call_operand.vmem [shape: f32[1,128], index: 8, kind: input, shape index: {}]
  %s9 = inlined_call_operand.vmem [shape: bf16[128,32], index: 9, kind: input, shape index: {}]
  %s10 = inlined_call_operand.vmem [shape: f32[1,32], index: 10, kind: input, shape index: {}]
  %s11 = inlined_call_operand.vmem [shape: bf16[288,32], index: 11, kind: input, shape index: {}]
  %s12 = inlined_call_operand.vmem [shape: f32[1,32], index: 12, kind: input, shape index: {}]
  %s13 = inlined_call_operand.vmem [shape: bf16[32,128], index: 13, kind: input, shape index: {}]
  %s14 = inlined_call_operand.vmem [shape: f32[1,128], index: 14, kind: input, shape index: {}]
  %s15 = inlined_call_operand.vmem [shape: bf16[128,32], index: 15, kind: input, shape index: {}]
  %s16 = inlined_call_operand.vmem [shape: f32[1,32], index: 16, kind: input, shape index: {}]
  %s17 = inlined_call_operand.vmem [shape: bf16[288,32], index: 17, kind: input, shape index: {}]
  %s18 = inlined_call_operand.vmem [shape: f32[1,32], index: 18, kind: input, shape index: {}]
  %s19 = inlined_call_operand.vmem [shape: bf16[32,128], index: 19, kind: input, shape index: {}]
  %s20 = inlined_call_operand.vmem [shape: f32[1,128], index: 20, kind: input, shape index: {}]
  %s21 = inlined_call_operand.hbm [shape: f32[4,4,4,128], index: 21, kind: output, shape index: {}]
  %s22 = sld [smem:[#allocation0]]
  $region117: #{_lambda_.1} parent=0
    _
  %s24 = ssub.s32 1, %s22
  %s25 = scalar_select 0, %s24, %s22
  $region1: #{_lambda_.1} parent=0
    #allocation4 [shape = 'u8[32768]{0}', space=vmem, size = 0x8000, scoped, tag = 'output window, operand 0']
    #allocation5 [shape = 's32[2]{0}', space=sflag, size = 0x8, scoped, tag = 'scoped memory for _lambda_.1']
    %26 = vsyncpa [#allocation5], 0
    %s27 = scalar_lea.sflag [#allocation5], 1
    %28 = vsyncpa %s27, 0
    loop: start=0, step=1, limit=4
    $region2: #{_lambda_.1} parent=1 // loop_pre_header
      _
    $region3: #{_lambda_.1} parent=1 // loop_header
      %s30 = sphi 0, %s34
      %p31 = scmp.ge.s32.totalorder %s30, 4
      %s40 = sphi 0, %s42
      %s43 = sphi 0, %s40
      %s44 = sphi 0, %s43
      %s60 = sphi 0, %s44
      %s64 = sphi 0, %s64
      %s66 = sphi 0, %s64
      %s67 = sphi 0, %s66
      %s81 = sphi 0, %s67
      %s85 = sphi 0, %s85
      %s87 = sphi 0, %s85
      %s88 = sphi 0, %s87
      %s102 = sphi 0, %s88
      %s106 = sphi 0, %s106
      %s108 = sphi 0, %s106
      %s109 = sphi 0, %s108
      %s123 = sphi 0, %s109
      %s127 = sphi 0, %s127
      %s129 = sphi 0, %s127
      %s130 = sphi 0, %s129
      %s144 = sphi 0, %s130
      %s148 = sphi 0, %s148
      %s150 = sphi 0, %s148
      %s151 = sphi 0, %s150
      %s165 = sphi 0, %s151
      %s169 = sphi 0, %s169
      %s171 = sphi 0, %s169
      %s172 = sphi 0, %s171
      %s186 = sphi 0, %s172
      %s190 = sphi 0, %s190
      %s192 = sphi 0, %s190
      %s193 = sphi 0, %s192
      %s207 = sphi 0, %s193
      %s211 = sphi 0, %s211
      %s213 = sphi 0, %s211
      %s214 = sphi 0, %s213
      %s228 = sphi 0, %s214
      %s232 = sphi 0, %s232
      %s234 = sphi 0, %s232
      %s235 = sphi 0, %s234
      %s249 = sphi 0, %s235
      %s253 = sphi 0, %s253
      %s255 = sphi 0, %s253
      %s256 = sphi 0, %s255
      %s270 = sphi 0, %s256
      %s274 = sphi 0, %s274
      %s276 = sphi 0, %s274
      %s277 = sphi 0, %s276
      %s291 = sphi 0, %s277
      %s295 = sphi 0, %s295
      %s297 = sphi 0, %s295
      %s298 = sphi 0, %s297
      %s312 = sphi 0, %s298
      %s316 = sphi 0, %s316
      %s318 = sphi 0, %s316
      %s319 = sphi 0, %s318
      %s333 = sphi 0, %s319
      %s337 = sphi 0, %s337
      %s339 = sphi 0, %s337
      %s340 = sphi 0, %s339
      %s354 = sphi 0, %s340
      %s358 = sphi 0, %s358
      %s360 = sphi 0, %s358
      %s361 = sphi 0, %s360
      %s375 = sphi 0, %s361
      %s379 = sphi 0, %s379
      %s381 = sphi 0, %s379
      %s382 = sphi 0, %s381
      %s396 = sphi 0, %s382
      %s400 = sphi 0, %s400
      %s402 = sphi 0, %s400
      %s403 = sphi 0, %s402
      %s417 = sphi 0, %s403
      %s421 = sphi 0, %s421
      %s423 = sphi 0, %s421
      %s424 = sphi 0, %s423
      %s438 = sphi 0, %s424
      %s442 = sphi 0, %s442
      %s444 = sphi 0, %s442
      %s445 = sphi 0, %s444
      %s459 = sphi 0, %s445
      %s463 = sphi 0, %s463
      %s465 = sphi 0, %s463
      %s466 = sphi 0, %s465
      %s480 = sphi 0, %s466
      %s486 = sphi 0, %s488
      %s489 = sphi 0, %s486
      %s490 = sphi 0, %s489
      %s506 = sphi 0, %s490
    $region4: #{_lambda_.1} parent=1 // loop_header_branch
      %33 = sbr.rel (%p31) target = $region8
    $region5: #{_lambda_.1} parent=1 // loop_body
      %s35 = ssub.s32 %s30, 1
      %s36 = ssub.s32 %s30, 2
      %s37 = sadd.s32 %s30, 1
      %s38 = ssub.s32 %s30, %s37
      %p39 = scmp.eq.s32.totalorder %s38, 0
      %s41 = sadd.s32 %s40, 1
      %s42 = scalar_select %p39, %s40, %s41
      %p45 = pneg %p39
      %p46 = scmp.eq.s32.totalorder %s30, 1
      %p47 = por %p45, %p46
      %p48 = scmp.ne.s32.totalorder %s40, %s43
      %p49 = scmp.eq.s32.totalorder %s30, 0
      %p50 = por %p48, %p49
      %p51 = scmp.ne.s32.totalorder %s40, %s43
      %p52 = scmp.eq.s32.totalorder %s35, 1
      %p53 = por %p51, %p52
      %p54 = scmp.ne.s32.totalorder %s43, %s44
      %p55 = scmp.eq.s32.totalorder %s35, 0
      %p56 = por %p54, %p55
      %p57 = scmp.ne.s32.totalorder %s43, %s44
      %p58 = scmp.eq.s32.totalorder %s36, 1
      %p59 = por %p57, %p58
      %p61 = scmp.ne.s32.totalorder %s44, %s60
      %p62 = scmp.eq.s32.totalorder %s36, 0
      %p63 = por %p61, %p62
      %s65 = sadd.s32 %s64, 1
      %p68 = scmp.eq.s32.totalorder %s30, 1
      %p69 = scmp.ne.s32.totalorder %s64, %s66
      %p70 = scmp.eq.s32.totalorder %s30, 0
      %p71 = por %p69, %p70
      %p72 = scmp.ne.s32.totalorder %s64, %s66
      %p73 = scmp.eq.s32.totalorder %s35, 1
      %p74 = por %p72, %p73
      %p75 = scmp.ne.s32.totalorder %s66, %s67
      %p76 = scmp.eq.s32.totalorder %s35, 0
      %p77 = por %p75, %p76
      %p78 = scmp.ne.s32.totalorder %s66, %s67
      %p79 = scmp.eq.s32.totalorder %s36, 1
      %p80 = por %p78, %p79
      %p82 = scmp.ne.s32.totalorder %s67, %s81
      %p83 = scmp.eq.s32.totalorder %s36, 0
      %p84 = por %p82, %p83
      %s86 = sadd.s32 %s85, 1
      %p89 = scmp.eq.s32.totalorder %s30, 1
      %p90 = scmp.ne.s32.totalorder %s85, %s87
      %p91 = scmp.eq.s32.totalorder %s30, 0
      %p92 = por %p90, %p91
      %p93 = scmp.ne.s32.totalorder %s85, %s87
      %p94 = scmp.eq.s32.totalorder %s35, 1
      %p95 = por %p93, %p94
      %p96 = scmp.ne.s32.totalorder %s87, %s88
      %p97 = scmp.eq.s32.totalorder %s35, 0
      %p98 = por %p96, %p97
      %p99 = scmp.ne.s32.totalorder %s87, %s88
      %p100 = scmp.eq.s32.totalorder %s36, 1
      %p101 = por %p99, %p100
      %p103 = scmp.ne.s32.totalorder %s88, %s102
      %p104 = scmp.eq.s32.totalorder %s36, 0
      %p105 = por %p103, %p104
      %s107 = sadd.s32 %s106, 1
      %p110 = scmp.eq.s32.totalorder %s30, 1
      %p111 = scmp.ne.s32.totalorder %s106, %s108
      %p112 = scmp.eq.s32.totalorder %s30, 0
      %p113 = por %p111, %p112
      %p114 = scmp.ne.s32.totalorder %s106, %s108
      %p115 = scmp.eq.s32.totalorder %s35, 1
      %p116 = por %p114, %p115
      %p117 = scmp.ne.s32.totalorder %s108, %s109
      %p118 = scmp.eq.s32.totalorder %s35, 0
      %p119 = por %p117, %p118
      %p120 = scmp.ne.s32.totalorder %s108, %s109
      %p121 = scmp.eq.s32.totalorder %s36, 1
      %p122 = por %p120, %p121
      %p124 = scmp.ne.s32.totalorder %s109, %s123
      %p125 = scmp.eq.s32.totalorder %s36, 0
      %p126 = por %p124, %p125
      %s128 = sadd.s32 %s127, 1
      %p131 = scmp.eq.s32.totalorder %s30, 1
      %p132 = scmp.ne.s32.totalorder %s127, %s129
      %p133 = scmp.eq.s32.totalorder %s30, 0
      %p134 = por %p132, %p133
      %p135 = scmp.ne.s32.totalorder %s127, %s129
      %p136 = scmp.eq.s32.totalorder %s35, 1
      %p137 = por %p135, %p136
      %p138 = scmp.ne.s32.totalorder %s129, %s130
      %p139 = scmp.eq.s32.totalorder %s35, 0
      %p140 = por %p138, %p139
      %p141 = scmp.ne.s32.totalorder %s129, %s130
      %p142 = scmp.eq.s32.totalorder %s36, 1
      %p143 = por %p141, %p142
      %p145 = scmp.ne.s32.totalorder %s130, %s144
      %p146 = scmp.eq.s32.totalorder %s36, 0
      %p147 = por %p145, %p146
      %s149 = sadd.s32 %s148, 1
      %p152 = scmp.eq.s32.totalorder %s30, 1
      %p153 = scmp.ne.s32.totalorder %s148, %s150
      %p154 = scmp.eq.s32.totalorder %s30, 0
      %p155 = por %p153, %p154
      %p156 = scmp.ne.s32.totalorder %s148, %s150
      %p157 = scmp.eq.s32.totalorder %s35, 1
      %p158 = por %p156, %p157
      %p159 = scmp.ne.s32.totalorder %s150, %s151
      %p160 = scmp.eq.s32.totalorder %s35, 0
      %p161 = por %p159, %p160
      %p162 = scmp.ne.s32.totalorder %s150, %s151
      %p163 = scmp.eq.s32.totalorder %s36, 1
      %p164 = por %p162, %p163
      %p166 = scmp.ne.s32.totalorder %s151, %s165
      %p167 = scmp.eq.s32.totalorder %s36, 0
      %p168 = por %p166, %p167
      %s170 = sadd.s32 %s169, 1
      %p173 = scmp.eq.s32.totalorder %s30, 1
      %p174 = scmp.ne.s32.totalorder %s169, %s171
      %p175 = scmp.eq.s32.totalorder %s30, 0
      %p176 = por %p174, %p175
      %p177 = scmp.ne.s32.totalorder %s169, %s171
      %p178 = scmp.eq.s32.totalorder %s35, 1
      %p179 = por %p177, %p178
      %p180 = scmp.ne.s32.totalorder %s171, %s172
      %p181 = scmp.eq.s32.totalorder %s35, 0
      %p182 = por %p180, %p181
      %p183 = scmp.ne.s32.totalorder %s171, %s172
      %p184 = scmp.eq.s32.totalorder %s36, 1
      %p185 = por %p183, %p184
      %p187 = scmp.ne.s32.totalorder %s172, %s186
      %p188 = scmp.eq.s32.totalorder %s36, 0
      %p189 = por %p187, %p188
      %s191 = sadd.s32 %s190, 1
      %p194 = scmp.eq.s32.totalorder %s30, 1
      %p195 = scmp.ne.s32.totalorder %s190, %s192
      %p196 = scmp.eq.s32.totalorder %s30, 0
      %p197 = por %p195, %p196
      %p198 = scmp.ne.s32.totalorder %s190, %s192
      %p199 = scmp.eq.s32.totalorder %s35, 1
      %p200 = por %p198, %p199
      %p201 = scmp.ne.s32.totalorder %s192, %s193
      %p202 = scmp.eq.s32.totalorder %s35, 0
      %p203 = por %p201, %p202
      %p204 = scmp.ne.s32.totalorder %s192, %s193
      %p205 = scmp.eq.s32.totalorder %s36, 1
      %p206 = por %p204, %p205
      %p208 = scmp.ne.s32.totalorder %s193, %s207
      %p209 = scmp.eq.s32.totalorder %s36, 0
      %p210 = por %p208, %p209
      %s212 = sadd.s32 %s211, 1
      %p215 = scmp.eq.s32.totalorder %s30, 1
      %p216 = scmp.ne.s32.totalorder %s211, %s213
      %p217 = scmp.eq.s32.totalorder %s30, 0
      %p218 = por %p216, %p217
      %p219 = scmp.ne.s32.totalorder %s211, %s213
      %p220 = scmp.eq.s32.totalorder %s35, 1
      %p221 = por %p219, %p220
      %p222 = scmp.ne.s32.totalorder %s213, %s214
      %p223 = scmp.eq.s32.totalorder %s35, 0
      %p224 = por %p222, %p223
      %p225 = scmp.ne.s32.totalorder %s213, %s214
      %p226 = scmp.eq.s32.totalorder %s36, 1
      %p227 = por %p225, %p226
      %p229 = scmp.ne.s32.totalorder %s214, %s228
      %p230 = scmp.eq.s32.totalorder %s36, 0
      %p231 = por %p229, %p230
      %s233 = sadd.s32 %s232, 1
      %p236 = scmp.eq.s32.totalorder %s30, 1
      %p237 = scmp.ne.s32.totalorder %s232, %s234
      %p238 = scmp.eq.s32.totalorder %s30, 0
      %p239 = por %p237, %p238
      %p240 = scmp.ne.s32.totalorder %s232, %s234
      %p241 = scmp.eq.s32.totalorder %s35, 1
      %p242 = por %p240, %p241
      %p243 = scmp.ne.s32.totalorder %s234, %s235
      %p244 = scmp.eq.s32.totalorder %s35, 0
      %p245 = por %p243, %p244
      %p246 = scmp.ne.s32.totalorder %s234, %s235
      %p247 = scmp.eq.s32.totalorder %s36, 1
      %p248 = por %p246, %p247
      %p250 = scmp.ne.s32.totalorder %s235, %s249
      %p251 = scmp.eq.s32.totalorder %s36, 0
      %p252 = por %p250, %p251
      %s254 = sadd.s32 %s253, 1
      %p257 = scmp.eq.s32.totalorder %s30, 1
      %p258 = scmp.ne.s32.totalorder %s253, %s255
      %p259 = scmp.eq.s32.totalorder %s30, 0
      %p260 = por %p258, %p259
      %p261 = scmp.ne.s32.totalorder %s253, %s255
      %p262 = scmp.eq.s32.totalorder %s35, 1
      %p263 = por %p261, %p262
      %p264 = scmp.ne.s32.totalorder %s255, %s256
      %p265 = scmp.eq.s32.totalorder %s35, 0
      %p266 = por %p264, %p265
      %p267 = scmp.ne.s32.totalorder %s255, %s256
      %p268 = scmp.eq.s32.totalorder %s36, 1
      %p269 = por %p267, %p268
      %p271 = scmp.ne.s32.totalorder %s256, %s270
      %p272 = scmp.eq.s32.totalorder %s36, 0
      %p273 = por %p271, %p272
      %s275 = sadd.s32 %s274, 1
      %p278 = scmp.eq.s32.totalorder %s30, 1
      %p279 = scmp.ne.s32.totalorder %s274, %s276
      %p280 = scmp.eq.s32.totalorder %s30, 0
      %p281 = por %p279, %p280
      %p282 = scmp.ne.s32.totalorder %s274, %s276
      %p283 = scmp.eq.s32.totalorder %s35, 1
      %p284 = por %p282, %p283
      %p285 = scmp.ne.s32.totalorder %s276, %s277
      %p286 = scmp.eq.s32.totalorder %s35, 0
      %p287 = por %p285, %p286
      %p288 = scmp.ne.s32.totalorder %s276, %s277
      %p289 = scmp.eq.s32.totalorder %s36, 1
      %p290 = por %p288, %p289
      %p292 = scmp.ne.s32.totalorder %s277, %s291
      %p293 = scmp.eq.s32.totalorder %s36, 0
      %p294 = por %p292, %p293
      %s296 = sadd.s32 %s295, 1
      %p299 = scmp.eq.s32.totalorder %s30, 1
      %p300 = scmp.ne.s32.totalorder %s295, %s297
      %p301 = scmp.eq.s32.totalorder %s30, 0
      %p302 = por %p300, %p301
      %p303 = scmp.ne.s32.totalorder %s295, %s297
      %p304 = scmp.eq.s32.totalorder %s35, 1
      %p305 = por %p303, %p304
      %p306 = scmp.ne.s32.totalorder %s297, %s298
      %p307 = scmp.eq.s32.totalorder %s35, 0
      %p308 = por %p306, %p307
      %p309 = scmp.ne.s32.totalorder %s297, %s298
      %p310 = scmp.eq.s32.totalorder %s36, 1
      %p311 = por %p309, %p310
      %p313 = scmp.ne.s32.totalorder %s298, %s312
      %p314 = scmp.eq.s32.totalorder %s36, 0
      %p315 = por %p313, %p314
      %s317 = sadd.s32 %s316, 1
      %p320 = scmp.eq.s32.totalorder %s30, 1
      %p321 = scmp.ne.s32.totalorder %s316, %s318
      %p322 = scmp.eq.s32.totalorder %s30, 0
      %p323 = por %p321, %p322
      %p324 = scmp.ne.s32.totalorder %s316, %s318
      %p325 = scmp.eq.s32.totalorder %s35, 1
      %p326 = por %p324, %p325
      %p327 = scmp.ne.s32.totalorder %s318, %s319
      %p328 = scmp.eq.s32.totalorder %s35, 0
      %p329 = por %p327, %p328
      %p330 = scmp.ne.s32.totalorder %s318, %s319
      %p331 = scmp.eq.s32.totalorder %s36, 1
      %p332 = por %p330, %p331
      %p334 = scmp.ne.s32.totalorder %s319, %s333
      %p335 = scmp.eq.s32.totalorder %s36, 0
      %p336 = por %p334, %p335
      %s338 = sadd.s32 %s337, 1
      %p341 = scmp.eq.s32.totalorder %s30, 1
      %p342 = scmp.ne.s32.totalorder %s337, %s339
      %p343 = scmp.eq.s32.totalorder %s30, 0
      %p344 = por %p342, %p343
      %p345 = scmp.ne.s32.totalorder %s337, %s339
      %p346 = scmp.eq.s32.totalorder %s35, 1
      %p347 = por %p345, %p346
      %p348 = scmp.ne.s32.totalorder %s339, %s340
      %p349 = scmp.eq.s32.totalorder %s35, 0
      %p350 = por %p348, %p349
      %p351 = scmp.ne.s32.totalorder %s339, %s340
      %p352 = scmp.eq.s32.totalorder %s36, 1
      %p353 = por %p351, %p352
      %p355 = scmp.ne.s32.totalorder %s340, %s354
      %p356 = scmp.eq.s32.totalorder %s36, 0
      %p357 = por %p355, %p356
      %s359 = sadd.s32 %s358, 1
      %p362 = scmp.eq.s32.totalorder %s30, 1
      %p363 = scmp.ne.s32.totalorder %s358, %s360
      %p364 = scmp.eq.s32.totalorder %s30, 0
      %p365 = por %p363, %p364
      %p366 = scmp.ne.s32.totalorder %s358, %s360
      %p367 = scmp.eq.s32.totalorder %s35, 1
      %p368 = por %p366, %p367
      %p369 = scmp.ne.s32.totalorder %s360, %s361
      %p370 = scmp.eq.s32.totalorder %s35, 0
      %p371 = por %p369, %p370
      %p372 = scmp.ne.s32.totalorder %s360, %s361
      %p373 = scmp.eq.s32.totalorder %s36, 1
      %p374 = por %p372, %p373
      %p376 = scmp.ne.s32.totalorder %s361, %s375
      %p377 = scmp.eq.s32.totalorder %s36, 0
      %p378 = por %p376, %p377
      %s380 = sadd.s32 %s379, 1
      %p383 = scmp.eq.s32.totalorder %s30, 1
      %p384 = scmp.ne.s32.totalorder %s379, %s381
      %p385 = scmp.eq.s32.totalorder %s30, 0
      %p386 = por %p384, %p385
      %p387 = scmp.ne.s32.totalorder %s379, %s381
      %p388 = scmp.eq.s32.totalorder %s35, 1
      %p389 = por %p387, %p388
      %p390 = scmp.ne.s32.totalorder %s381, %s382
      %p391 = scmp.eq.s32.totalorder %s35, 0
      %p392 = por %p390, %p391
      %p393 = scmp.ne.s32.totalorder %s381, %s382
      %p394 = scmp.eq.s32.totalorder %s36, 1
      %p395 = por %p393, %p394
      %p397 = scmp.ne.s32.totalorder %s382, %s396
      %p398 = scmp.eq.s32.totalorder %s36, 0
      %p399 = por %p397, %p398
      %s401 = sadd.s32 %s400, 1
      %p404 = scmp.eq.s32.totalorder %s30, 1
      %p405 = scmp.ne.s32.totalorder %s400, %s402
      %p406 = scmp.eq.s32.totalorder %s30, 0
      %p407 = por %p405, %p406
      %p408 = scmp.ne.s32.totalorder %s400, %s402
      %p409 = scmp.eq.s32.totalorder %s35, 1
      %p410 = por %p408, %p409
      %p411 = scmp.ne.s32.totalorder %s402, %s403
      %p412 = scmp.eq.s32.totalorder %s35, 0
      %p413 = por %p411, %p412
      %p414 = scmp.ne.s32.totalorder %s402, %s403
      %p415 = scmp.eq.s32.totalorder %s36, 1
      %p416 = por %p414, %p415
      %p418 = scmp.ne.s32.totalorder %s403, %s417
      %p419 = scmp.eq.s32.totalorder %s36, 0
      %p420 = por %p418, %p419
      %s422 = sadd.s32 %s421, 1
      %p425 = scmp.eq.s32.totalorder %s30, 1
      %p426 = scmp.ne.s32.totalorder %s421, %s423
      %p427 = scmp.eq.s32.totalorder %s30, 0
      %p428 = por %p426, %p427
      %p429 = scmp.ne.s32.totalorder %s421, %s423
      %p430 = scmp.eq.s32.totalorder %s35, 1
      %p431 = por %p429, %p430
      %p432 = scmp.ne.s32.totalorder %s423, %s424
      %p433 = scmp.eq.s32.totalorder %s35, 0
      %p434 = por %p432, %p433
      %p435 = scmp.ne.s32.totalorder %s423, %s424
      %p436 = scmp.eq.s32.totalorder %s36, 1
      %p437 = por %p435, %p436
      %p439 = scmp.ne.s32.totalorder %s424, %s438
      %p440 = scmp.eq.s32.totalorder %s36, 0
      %p441 = por %p439, %p440
      %s443 = sadd.s32 %s442, 1
      %p446 = scmp.eq.s32.totalorder %s30, 1
      %p447 = scmp.ne.s32.totalorder %s442, %s444
      %p448 = scmp.eq.s32.totalorder %s30, 0
      %p449 = por %p447, %p448
      %p450 = scmp.ne.s32.totalorder %s442, %s444
      %p451 = scmp.eq.s32.totalorder %s35, 1
      %p452 = por %p450, %p451
      %p453 = scmp.ne.s32.totalorder %s444, %s445
      %p454 = scmp.eq.s32.totalorder %s35, 0
      %p455 = por %p453, %p454
      %p456 = scmp.ne.s32.totalorder %s444, %s445
      %p457 = scmp.eq.s32.totalorder %s36, 1
      %p458 = por %p456, %p457
      %p460 = scmp.ne.s32.totalorder %s445, %s459
      %p461 = scmp.eq.s32.totalorder %s36, 0
      %p462 = por %p460, %p461
      %s464 = sadd.s32 %s463, 1
      %p467 = scmp.eq.s32.totalorder %s30, 1
      %p468 = scmp.ne.s32.totalorder %s463, %s465
      %p469 = scmp.eq.s32.totalorder %s30, 0
      %p470 = por %p468, %p469
      %p471 = scmp.ne.s32.totalorder %s463, %s465
      %p472 = scmp.eq.s32.totalorder %s35, 1
      %p473 = por %p471, %p472
      %p474 = scmp.ne.s32.totalorder %s465, %s466
      %p475 = scmp.eq.s32.totalorder %s35, 0
      %p476 = por %p474, %p475
      %p477 = scmp.ne.s32.totalorder %s465, %s466
      %p478 = scmp.eq.s32.totalorder %s36, 1
      %p479 = por %p477, %p478
      %p481 = scmp.ne.s32.totalorder %s466, %s480
      %p482 = scmp.eq.s32.totalorder %s36, 0
      %p483 = por %p481, %p482
      %s484 = ssub.s32 %s30, %s37
      %p485 = scmp.eq.s32.totalorder %s484, 0
      %s487 = sadd.s32 %s486, 1
      %s488 = scalar_select %p485, %s486, %s487
      %p491 = pneg %p485
      %p492 = scmp.eq.s32.totalorder %s30, 1
      %p493 = por %p491, %p492
      %p494 = scmp.ne.s32.totalorder %s486, %s489
      %p495 = scmp.eq.s32.totalorder %s30, 0
      %p496 = por %p494, %p495
      %p497 = scmp.ne.s32.totalorder %s486, %s489
      %p498 = scmp.eq.s32.totalorder %s35, 1
      %p499 = por %p497, %p498
      %p500 = scmp.ne.s32.totalorder %s489, %s490
      %p501 = scmp.eq.s32.totalorder %s35, 0
      %p502 = por %p500, %p501
      %p503 = scmp.ne.s32.totalorder %s489, %s490
      %p504 = scmp.eq.s32.totalorder %s36, 1
      %p505 = por %p503, %p504
      %p507 = scmp.ne.s32.totalorder %s490, %s506
      %p508 = scmp.eq.s32.totalorder %s36, 0
      %p509 = por %p507, %p508
      %p510 = scmp.le.s32.totalorder 1, %s30
      %p511 = scmp.lt.s32.totalorder %s30, 3
      %p512 = pnand %p510, %p511
      %p513 = pneg %p512
      // Predicated region
      $region9: #{_lambda_.1} parent=5 // pred_check
        _
      $region10: #{_lambda_.1} parent=5 // pred_check_branch
        %515 = sbr.rel (%p512) target = $region12
      $region11: #{_lambda_.1} parent=5 // pred_region
        %s516 = ssub.s32 %s30, 1
        // Predicated region
        $region13: #{_lambda_.1} parent=11 // pred_check
          %p517 = pneg %p77
        $region14: #{_lambda_.1} parent=11 // pred_check_branch
          %519 = sbr.rel (%p517) target = $region16
        $region15: #{_lambda_.1} parent=11 // pred_region
          _
        $region16: #{_lambda_.1} parent=11 // pred_fallthru
          _
        // Predicated region
        $region17: #{_lambda_.1} parent=11 // pred_check
          %p520 = pneg %p98
        $region18: #{_lambda_.1} parent=11 // pred_check_branch
          %522 = sbr.rel (%p520) target = $region20
        $region19: #{_lambda_.1} parent=11 // pred_region
          _
        $region20: #{_lambda_.1} parent=11 // pred_fallthru
          _
        // Predicated region
        $region21: #{_lambda_.1} parent=11 // pred_check
          %p523 = pneg %p119
        $region22: #{_lambda_.1} parent=11 // pred_check_branch
          %525 = sbr.rel (%p523) target = $region24
        $region23: #{_lambda_.1} parent=11 // pred_region
          _
        $region24: #{_lambda_.1} parent=11 // pred_fallthru
          _
        // Predicated region
        $region25: #{_lambda_.1} parent=11 // pred_check
          %p526 = pneg %p140
        $region26: #{_lambda_.1} parent=11 // pred_check_branch
          %528 = sbr.rel (%p526) target = $region28
        $region27: #{_lambda_.1} parent=11 // pred_region
          _
        $region28: #{_lambda_.1} parent=11 // pred_fallthru
          _
        // Predicated region
        $region29: #{_lambda_.1} parent=11 // pred_check
          %p529 = pneg %p161
        $region30: #{_lambda_.1} parent=11 // pred_check_branch
          %531 = sbr.rel (%p529) target = $region32
        $region31: #{_lambda_.1} parent=11 // pred_region
          _
        $region32: #{_lambda_.1} parent=11 // pred_fallthru
          _
        // Predicated region
        $region33: #{_lambda_.1} parent=11 // pred_check
          %p532 = pneg %p182
        $region34: #{_lambda_.1} parent=11 // pred_check_branch
          %534 = sbr.rel (%p532) target = $region36
        $region35: #{_lambda_.1} parent=11 // pred_region
          _
        $region36: #{_lambda_.1} parent=11 // pred_fallthru
          _
        // Predicated region
        $region37: #{_lambda_.1} parent=11 // pred_check
          %p535 = pneg %p203
        $region38: #{_lambda_.1} parent=11 // pred_check_branch
          %537 = sbr.rel (%p535) target = $region40
        $region39: #{_lambda_.1} parent=11 // pred_region
          _
        $region40: #{_lambda_.1} parent=11 // pred_fallthru
          _
        // Predicated region
        $region41: #{_lambda_.1} parent=11 // pred_check
          %p538 = pneg %p224
        $region42: #{_lambda_.1} parent=11 // pred_check_branch
          %540 = sbr.rel (%p538) target = $region44
        $region43: #{_lambda_.1} parent=11 // pred_region
          _
        $region44: #{_lambda_.1} parent=11 // pred_fallthru
          _
        // Predicated region
        $region45: #{_lambda_.1} parent=11 // pred_check
          %p541 = pneg %p245
        $region46: #{_lambda_.1} parent=11 // pred_check_branch
          %543 = sbr.rel (%p541) target = $region48
        $region47: #{_lambda_.1} parent=11 // pred_region
          _
        $region48: #{_lambda_.1} parent=11 // pred_fallthru
          _
        // Predicated region
        $region49: #{_lambda_.1} parent=11 // pred_check
          %p544 = pneg %p266
        $region50: #{_lambda_.1} parent=11 // pred_check_branch
          %546 = sbr.rel (%p544) target = $region52
        $region51: #{_lambda_.1} parent=11 // pred_region
          _
        $region52: #{_lambda_.1} parent=11 // pred_fallthru
          _
        // Predicated region
        $region53: #{_lambda_.1} parent=11 // pred_check
          %p547 = pneg %p287
        $region54: #{_lambda_.1} parent=11 // pred_check_branch
          %549 = sbr.rel (%p547) target = $region56
        $region55: #{_lambda_.1} parent=11 // pred_region
          _
        $region56: #{_lambda_.1} parent=11 // pred_fallthru
          _
        // Predicated region
        $region57: #{_lambda_.1} parent=11 // pred_check
          %p550 = pneg %p308
        $region58: #{_lambda_.1} parent=11 // pred_check_branch
          %552 = sbr.rel (%p550) target = $region60
        $region59: #{_lambda_.1} parent=11 // pred_region
          _
        $region60: #{_lambda_.1} parent=11 // pred_fallthru
          _
        // Predicated region
        $region61: #{_lambda_.1} parent=11 // pred_check
          %p553 = pneg %p329
        $region62: #{_lambda_.1} parent=11 // pred_check_branch
          %555 = sbr.rel (%p553) target = $region64
        $region63: #{_lambda_.1} parent=11 // pred_region
          _
        $region64: #{_lambda_.1} parent=11 // pred_fallthru
          _
        // Predicated region
        $region65: #{_lambda_.1} parent=11 // pred_check
          %p556 = pneg %p350
        $region66: #{_lambda_.1} parent=11 // pred_check_branch
          %558 = sbr.rel (%p556) target = $region68
        $region67: #{_lambda_.1} parent=11 // pred_region
          _
        $region68: #{_lambda_.1} parent=11 // pred_fallthru
          _
        // Predicated region
        $region69: #{_lambda_.1} parent=11 // pred_check
          %p559 = pneg %p371
        $region70: #{_lambda_.1} parent=11 // pred_check_branch
          %561 = sbr.rel (%p559) target = $region72
        $region71: #{_lambda_.1} parent=11 // pred_region
          _
        $region72: #{_lambda_.1} parent=11 // pred_fallthru
          _
        // Predicated region
        $region73: #{_lambda_.1} parent=11 // pred_check
          %p562 = pneg %p392
        $region74: #{_lambda_.1} parent=11 // pred_check_branch
          %564 = sbr.rel (%p562) target = $region76
        $region75: #{_lambda_.1} parent=11 // pred_region
          _
        $region76: #{_lambda_.1} parent=11 // pred_fallthru
          _
        // Predicated region
        $region77: #{_lambda_.1} parent=11 // pred_check
          %p565 = pneg %p413
        $region78: #{_lambda_.1} parent=11 // pred_check_branch
          %567 = sbr.rel (%p565) target = $region80
        $region79: #{_lambda_.1} parent=11 // pred_region
          _
        $region80: #{_lambda_.1} parent=11 // pred_fallthru
          _
        // Predicated region
        $region81: #{_lambda_.1} parent=11 // pred_check
          %p568 = pneg %p434
        $region82: #{_lambda_.1} parent=11 // pred_check_branch
          %570 = sbr.rel (%p568) target = $region84
        $region83: #{_lambda_.1} parent=11 // pred_region
          _
        $region84: #{_lambda_.1} parent=11 // pred_fallthru
          _
        // Predicated region
        $region85: #{_lambda_.1} parent=11 // pred_check
          %p571 = pneg %p455
        $region86: #{_lambda_.1} parent=11 // pred_check_branch
          %573 = sbr.rel (%p571) target = $region88
        $region87: #{_lambda_.1} parent=11 // pred_region
          _
        $region88: #{_lambda_.1} parent=11 // pred_fallthru
          _
        // Predicated region
        $region89: #{_lambda_.1} parent=11 // pred_check
          %p574 = pneg %p476
        $region90: #{_lambda_.1} parent=11 // pred_check_branch
          %576 = sbr.rel (%p574) target = $region92
        $region91: #{_lambda_.1} parent=11 // pred_region
          _
        $region92: #{_lambda_.1} parent=11 // pred_fallthru
          _
      $region12: #{_lambda_.1} parent=5 // pred_fallthru
        _
      %p577 = scmp.lt.s32.totalorder %s30, 2
      // Predicated region
      $region93: #{_lambda_.1} parent=5 // pred_check
        %p578 = pneg %p577
      $region94: #{_lambda_.1} parent=5 // pred_check_branch
        %580 = sbr.rel (%p578) target = $region96
      $region95: #{_lambda_.1} parent=5 // pred_region
        // Predicated region
        $region97: #{_lambda_.1} parent=95 // pred_check
          %p581 = pneg %p50
        $region98: #{_lambda_.1} parent=95 // pred_check_branch
          %583 = sbr.rel (%p581) target = $region100
        $region99: #{_lambda_.1} parent=95 // pred_region
          %s584 = smul.u32 2, %s30
          %p585 = scmp.lt.s32.totalorder %s584, 3
          %s586 = scalar_select %p585, %s584, 3
          %s587 = smul.addr %s586, 8
          %s588 = smul.addr %s587, 2
          %s589 = scalar_lea.vmem %s0, %s588
          %s590 = smul.u32 2, %s30
        $region100: #{_lambda_.1} parent=95 // pred_fallthru
          _
      $region96: #{_lambda_.1} parent=5 // pred_fallthru
        _
      %p591 = scmp.le.s32.totalorder 1, %s30
      %p592 = scmp.lt.s32.totalorder %s30, 3
      %p593 = pnand %p591, %p592
      %p594 = pneg %p593
      // Predicated region
      $region101: #{_lambda_.1} parent=5 // pred_check
        _
      $region102: #{_lambda_.1} parent=5 // pred_check_branch
        %596 = sbr.rel (%p593) target = $region104
      $region103: #{_lambda_.1} parent=5 // pred_region
        %s597 = ssub.s32 %s30, 1
        %s598 = smul.u32 2, %s35
        %p599 = scmp.lt.s32.totalorder %s598, 3
        %s600 = scalar_select %p599, %s598, 3
        %s601 = smul.addr %s600, 8
        %s602 = smul.addr %s601, 2
        %s603 = scalar_lea.vmem %s0, %s602
        %p604 = pneg %p56
        %p605 = pneg %p53
        %p606 = pneg %p77
        %p607 = pneg %p74
        %p608 = pneg %p98
        %p609 = pneg %p95
        %p610 = pneg %p119
        %p611 = pneg %p116
        %p612 = pneg %p140
        %p613 = pneg %p137
        %p614 = pneg %p161
        %p615 = pneg %p158
        %p616 = pneg %p182
        %p617 = pneg %p179
        %p618 = pneg %p203
        %p619 = pneg %p200
        %p620 = pneg %p224
        %p621 = pneg %p221
        %p622 = pneg %p245
        %p623 = pneg %p242
        %p624 = pneg %p266
        %p625 = pneg %p263
        %p626 = pneg %p287
        %p627 = pneg %p284
        %p628 = pneg %p308
        %p629 = pneg %p305
        %p630 = pneg %p329
        %p631 = pneg %p326
        %p632 = pneg %p350
        %p633 = pneg %p347
        %p634 = pneg %p371
        %p635 = pneg %p368
        %p636 = pneg %p392
        %p637 = pneg %p389
        %p638 = pneg %p413
        %p639 = pneg %p410
        %p640 = pneg %p434
        %p641 = pneg %p431
        %p642 = pneg %p455
        %p643 = pneg %p452
        %p644 = pneg %p476
        %p645 = pneg %p473
        %p646 = pneg %p502
        %p647 = pneg %p499
        %s648 = sand.u32 %s489, 1
        %s649 = scalar_lea.sflag [#allocation5], %s648
        %s650 = sand.u32 %s489, 1
        %s651 = smul.addr %s650, 32
        %s652 = scalar_lea.vmem [#allocation4], %s651
        %s653 = smul.u32 2, %s35
        %p654 = scmp.lt.s32.totalorder %s653, 3
        %s655 = scalar_select %p654, %s653, 3
        %s656 = smul.addr %s655, 8
        %s657 = smul.addr %s656, 2
        %s658 = scalar_lea.vmem %s0, %s657
        %s659 = smul.u32 2, %s35
        %s660 = smul.u32 2, %s35
        %662 = vst [vmem:[#allocation2] sm:$0xf] 0
        %663 = vst [vmem:[#allocation2 + $0x4] sm:$0xf] 0
        %664 = vst [vmem:[#allocation2 + $0x20] sm:$0xf] 0
        %665 = vst [vmem:[#allocation2 + $0x24] sm:$0xf] 0
        %s666 = scalar_lea.vmem [#allocation2], 24
        %667 = vst [vmem:[%s666] sm:$0xf] 0
        %668 = vst [vmem:[%s666 + $0x4] sm:$0xf] 0
        %669 = vst [vmem:[%s666 + $0x20] sm:$0xf] 0
        %670 = vst [vmem:[%s666 + $0x24] sm:$0xf] 0
        %671 = vst [vmem:[#allocation2] sm:$0x1] 0
        %672 = vst [vmem:[#allocation2 + $0x4] sm:$0x1] 0
        %673 = vst [vmem:[#allocation2 + $0x8] sm:$0x1] 0
        %674 = vst [vmem:[#allocation2 + $0xc] sm:$0x1] 0
        %675 = vst [vmem:[#allocation2 + $0x10] sm:$0x1] 0
        %676 = vst [vmem:[#allocation2 + $0x14] sm:$0x1] 0
        %677 = vst [vmem:[#allocation2 + $0x18] sm:$0x1] 0
        %678 = vst [vmem:[#allocation2 + $0x1c] sm:$0x1] 0
        %679 = vst [vmem:[#allocation2 + $0x20] sm:$0x1] 0
        %680 = vst [vmem:[#allocation2 + $0x24] sm:$0x1] 0
        %681 = vst [vmem:[#allocation2 + $0x28] sm:$0x1] 0
        %682 = vst [vmem:[#allocation2 + $0x2c] sm:$0x1] 0
        %683 = vst [vmem:[#allocation2 + $0x30] sm:$0x1] 0
        %684 = vst [vmem:[#allocation2 + $0x34] sm:$0x1] 0
        %685 = vst [vmem:[#allocation2 + $0x38] sm:$0x1] 0
        %686 = vst [vmem:[#allocation2 + $0x3c] sm:$0x1] 0
        %687 = vst [vmem:[#allocation2] sm:$0x8] 0
        %688 = vst [vmem:[#allocation2 + $0x4] sm:$0x8] 0
        %689 = vst [vmem:[#allocation2 + $0x8] sm:$0x8] 0
        %690 = vst [vmem:[#allocation2 + $0xc] sm:$0x8] 0
        %691 = vst [vmem:[#allocation2 + $0x10] sm:$0x8] 0
        %692 = vst [vmem:[#allocation2 + $0x14] sm:$0x8] 0
        %693 = vst [vmem:[#allocation2 + $0x18] sm:$0x8] 0
        %694 = vst [vmem:[#allocation2 + $0x1c] sm:$0x8] 0
        %695 = vst [vmem:[#allocation2 + $0x20] sm:$0x8] 0
        %696 = vst [vmem:[#allocation2 + $0x24] sm:$0x8] 0
        %697 = vst [vmem:[#allocation2 + $0x28] sm:$0x8] 0
        %698 = vst [vmem:[#allocation2 + $0x2c] sm:$0x8] 0
        %699 = vst [vmem:[#allocation2 + $0x30] sm:$0x8] 0
        %700 = vst [vmem:[#allocation2 + $0x34] sm:$0x8] 0
        %701 = vst [vmem:[#allocation2 + $0x38] sm:$0x8] 0
        %702 = vst [vmem:[#allocation2 + $0x3c] sm:$0x8] 0
        %v703 = vld [vmem:[%s658] sm:$0xf]
        %v704 = vld [vmem:[%s658 + $0x4] sm:$0xf]
        %v705 = vld [vmem:[%s658 + $0x8] sm:$0xf]
        %v706 = vld [vmem:[%s658 + $0xc] sm:$0xf]
        %v707 = vld [vmem:[%s658 + $0x10] sm:$0xf]
        %v708 = vld [vmem:[%s658 + $0x14] sm:$0xf]
        %v709 = vld [vmem:[%s658 + $0x18] sm:$0xf]
        %v710 = vld [vmem:[%s658 + $0x1c] sm:$0xf]
        %v711 = vld [vmem:[%s1] sm:$0xf]
        %v712 = vld [vmem:[%s1 + $0x4] sm:$0xf]
        %v713 = vld [vmem:[%s1 + $0x8] sm:$0xf]
        %v714 = vld [vmem:[%s1 + $0xc] sm:$0xf]
        %v715 = vld [vmem:[%s1 + $0x10] sm:$0xf]
        %v716 = vld [vmem:[%s1 + $0x14] sm:$0xf]
        %v717 = vld [vmem:[%s1 + $0x18] sm:$0xf]
        %v718 = vld [vmem:[%s1 + $0x1c] sm:$0xf]
        %v719 = vld [vmem:[%s1 + $0x20] sm:$0xf]
        %v720 = vld [vmem:[%s1 + $0x24] sm:$0xf]
        %v721 = vld [vmem:[%s1 + $0x28] sm:$0xf]
        %v722 = vld [vmem:[%s1 + $0x2c] sm:$0xf]
        %v723 = vld [vmem:[%s1 + $0x30] sm:$0xf]
        %v724 = vld [vmem:[%s1 + $0x34] sm:$0xf]
        %v725 = vld [vmem:[%s1 + $0x38] sm:$0xf]
        %v726 = vld [vmem:[%s1 + $0x3c] sm:$0xf]
        %v727 = vld [vmem:[%s1 + $0x40] sm:$0xf]
        %v728 = vld [vmem:[%s1 + $0x44] sm:$0xf]
        %v729 = vld [vmem:[%s1 + $0x48] sm:$0xf]
        %v730 = vld [vmem:[%s1 + $0x4c] sm:$0xf]
        %v731 = vld [vmem:[%s1 + $0x50] sm:$0xf]
        %v732 = vld [vmem:[%s1 + $0x54] sm:$0xf]
        %v733 = vld [vmem:[%s1 + $0x58] sm:$0xf]
        %v734 = vld [vmem:[%s1 + $0x5c] sm:$0xf]
        %v735 = vld [vmem:[%s1 + $0x60] sm:$0xf]
        %v736 = vld [vmem:[%s1 + $0x64] sm:$0xf]
        %v737 = vld [vmem:[%s1 + $0x68] sm:$0xf]
        %v738 = vld [vmem:[%s1 + $0x6c] sm:$0xf]
        %v739 = vld [vmem:[%s1 + $0x70] sm:$0xf]
        %v740 = vld [vmem:[%s1 + $0x74] sm:$0xf]
        %v741 = vld [vmem:[%s1 + $0x78] sm:$0xf]
        %v742 = vld [vmem:[%s1 + $0x7c] sm:$0xf]
        %v743 = vld [vmem:[%s2] sm:$0x1]
        %v745 = vlaneseq
        %v746 = vshrl.u32 %v745, 7
        %v747 = vsub.s32 0, %v746
        %v748 = vrot.slane %v743, %v747
        %v758 = vcombine.low %v703, %v704
        %v759 = vcombine.low %v705, %v706
        %v761 = vunpack.c.l.s4 1983009808
        %v762 = vunpack.c.0.s8 %v761
        %v763 = vlaneseq
        %v764 = vshrl.u32 %v763, 7
        %v765 = vsub.s32 %v762, %v764
        %v766 = vrot.slane %v758, %v765
        %v768 = vunpack.c.l.s4 1983009808
        %v769 = vunpack.c.0.s8 %v768
        %v770 = vlaneseq
        %v771 = vshrl.u32 %v770, 7
        %v772 = vsub.s32 %v769, %v771
        %v773 = vrot.slane %v759, %v772
        %v774 = vcombine.low %v766, %v773
        %v775 = vcombine.high %v766, %v773
        %v776 = vcombine.low %v707, %v708
        %v777 = vcombine.low %v709, %v710
        %v779 = vunpack.c.l.s4 1983009808
        %v780 = vunpack.c.0.s8 %v779
        %v781 = vlaneseq
        %v782 = vshrl.u32 %v781, 7
        %v783 = vsub.s32 %v780, %v782
        %v784 = vrot.slane %v776, %v783
        %v786 = vunpack.c.l.s4 1983009808
        %v787 = vunpack.c.0.s8 %v786
        %v788 = vlaneseq
        %v789 = vshrl.u32 %v788, 7
        %v790 = vsub.s32 %v787, %v789
        %v791 = vrot.slane %v777, %v790
        %v792 = vcombine.low %v784, %v791
        %v793 = vcombine.high %v784, %v791
        %v830 = vunpack.c.l.b16 %v711
        %v831 = vunpack.c.l.b16 %v712
        %v832 = vunpack.c.l.b16 %v713
        %v833 = vunpack.c.l.b16 %v714
        %v834 = vunpack.c.l.b16 %v715
        %v835 = vunpack.c.l.b16 %v716
        %v836 = vunpack.c.l.b16 %v717
        %v837 = vunpack.c.l.b16 %v718
        %v838 = vunpack.c.l.b16 %v719
        %v839 = vunpack.c.l.b16 %v720
        %v840 = vunpack.c.l.b16 %v721
        %v841 = vunpack.c.l.b16 %v722
        %v842 = vunpack.c.l.b16 %v723
        %v843 = vunpack.c.l.b16 %v724
        %v844 = vunpack.c.l.b16 %v725
        %v845 = vunpack.c.l.b16 %v726
        %v846 = vunpack.c.l.b16 %v727
        %v847 = vunpack.c.l.b16 %v728
        %v848 = vunpack.c.l.b16 %v729
        %v849 = vunpack.c.l.b16 %v730
        %v850 = vunpack.c.l.b16 %v731
        %v851 = vunpack.c.l.b16 %v732
        %v852 = vunpack.c.l.b16 %v733
        %v853 = vunpack.c.l.b16 %v734
        %v854 = vunpack.c.l.b16 %v735
        %v855 = vunpack.c.l.b16 %v736
        %v856 = vunpack.c.l.b16 %v737
        %v857 = vunpack.c.l.b16 %v738
        %v858 = vunpack.c.l.b16 %v739
        %v859 = vunpack.c.l.b16 %v740
        %v860 = vunpack.c.l.b16 %v741
        %v861 = vunpack.c.l.b16 %v742
        %v862 = vpack.c.b16 %v831, %v830
        %v863 = vpack.c.b16 %v833, %v832
        %v864 = vpack.c.b16 %v835, %v834
        %v865 = vpack.c.b16 %v837, %v836
        %v866 = vpack.c.b16 %v839, %v838
        %v867 = vpack.c.b16 %v841, %v840
        %v868 = vpack.c.b16 %v843, %v842
        %v869 = vpack.c.b16 %v845, %v844
        %v870 = vpack.c.b16 %v847, %v846
        %v871 = vpack.c.b16 %v849, %v848
        %v872 = vpack.c.b16 %v851, %v850
        %v873 = vpack.c.b16 %v853, %v852
        %v874 = vpack.c.b16 %v855, %v854
        %v875 = vpack.c.b16 %v857, %v856
        %v876 = vpack.c.b16 %v859, %v858
        %v877 = vpack.c.b16 %v861, %v860
        %894 = vmatprep.subr.bf16.mxu0 0
        %895 = vmatpush1.bf16.msra.mxu0 %v869
        %896 = vmatprep.subr.bf16.mxu0 0
        %897 = vmatpush1.bf16.msra.mxu0 %v868
        %898 = vmatprep.subr.bf16.mxu0 0
        %899 = vmatpush1.bf16.msra.mxu0 %v867
        %900 = vmatprep.subr.bf16.mxu0 0
        %901 = vmatpush1.bf16.msra.mxu0 %v866
        %902 = vmatprep.subr.bf16.mxu0 0
        %903 = vmatpush1.bf16.msra.mxu0 %v865
        %904 = vmatprep.subr.bf16.mxu0 0
        %905 = vmatpush1.bf16.msra.mxu0 %v864
        %906 = vmatprep.subr.bf16.mxu0 0
        %907 = vmatpush1.bf16.msra.mxu0 %v863
        %908 = vmatprep.subr.bf16.mxu0 0
        %909 = vmatpush1.bf16.msra.mxu0 %v862
        %910 = vmatprep.subr.bf16.mxu0 0
        %911 = vmatpush2.bf16.msra.mxu0 %v877
        %912 = vmatprep.subr.bf16.mxu0 0
        %913 = vmatpush2.bf16.msra.mxu0 %v876
        %914 = vmatprep.subr.bf16.mxu0 0
        %915 = vmatpush2.bf16.msra.mxu0 %v875
        %916 = vmatprep.subr.bf16.mxu0 0
        %917 = vmatpush2.bf16.msra.mxu0 %v874
        %918 = vmatprep.subr.bf16.mxu0 0
        %919 = vmatpush2.bf16.msra.mxu0 %v873
        %920 = vmatprep.subr.bf16.mxu0 0
        %921 = vmatpush2.bf16.msra.mxu0 %v872
        %922 = vmatprep.subr.bf16.mxu0 0
        %923 = vmatpush2.bf16.msra.mxu0 %v871
        %924 = vmatprep.subr.bf16.mxu0 0
        %925 = vmatpush2.bf16.msra.mxu0 %v870
        %926 = vmatprep.mubr.bf16.mxu0 %v775
        %927 = vmatmul.mubr.bf16.gmra.mxu0 %v774
        %v928 = vpop.f32.mrf.mxu0
        %v929 = vadd.f32 %v748, %v928
        %v930 = vpop.f32.mrf.mxu0
        %v931 = vpop.f32.mrf.mxu0
        %v932 = vadd.f32 %v748, %v931
        %v933 = vpop.f32.mrf.mxu0
        %934 = vmatprep.mubr.bf16.mxu0 %v793
        %935 = vmatmul.mubr.bf16.gmra.mxu0 %v792
        %v936 = vpop.f32.mrf.mxu0
        %v937 = vadd.f32 %v748, %v936
        %v938 = vpop.f32.mrf.mxu0
        %v939 = vpop.f32.mrf.mxu0
        %v940 = vadd.f32 %v748, %v939
        %v941 = vpop.f32.mrf.mxu0
        %942 = vdwg.mxu0
        %v943 = vmax.f32 %v929, 0.0
        %v944 = vmax.f32 %v932, 0.0
        %v945 = vmax.f32 %v937, 0.0
        %v946 = vmax.f32 %v940, 0.0
        %v947 = vpack.c.bf16 %v944, %v943
        %v948 = vpack.c.bf16 %v946, %v945
        %v951 = vcombine.high %v947, %v947
        %v953 = vunpack.c.l.s4 1983009808
        %v954 = vunpack.c.0.s8 %v953
        %v955 = vlaneseq
        %v956 = vshrl.u32 %v955, 7
        %v957 = vsub.s32 %v954, %v956
        %v958 = vrot.slane %v947, %v957
        %v960 = vunpack.c.l.s4 1983009808
        %v961 = vunpack.c.0.s8 %v960
        %v962 = vlaneseq
        %v963 = vshrl.u32 %v962, 7
        %v964 = vsub.s32 %v961, %v963
        %v965 = vrot.slane %v951, %v964
        %v966 = vcombine.high %v958, %v958
        %v967 = vcombine.high %v965, %v965
        %v968 = vcombine.high %v948, %v948
        %v970 = vunpack.c.l.s4 1983009808
        %v971 = vunpack.c.0.s8 %v970
        %v972 = vlaneseq
        %v973 = vshrl.u32 %v972, 7
        %v974 = vsub.s32 %v971, %v973
        %v975 = vrot.slane %v948, %v974
        %v977 = vunpack.c.l.s4 1983009808
        %v978 = vunpack.c.0.s8 %v977
        %v979 = vlaneseq
        %v980 = vshrl.u32 %v979, 7
        %v981 = vsub.s32 %v978, %v980
        %v982 = vrot.slane %v968, %v981
        %v983 = vcombine.high %v975, %v975
        %v984 = vcombine.high %v982, %v982
        %v986 = vunpack.c.l.s4 1983009808
        %v987 = vunpack.c.0.s8 %v986
        %v988 = vlaneseq
        %v989 = vshrl.u32 %v988, 7
        %v990 = vsub.s32 %v987, %v989
        %v991 = vrot.slane %v958, %v990
        %v993 = vunpack.c.l.s4 1983009808
        %v994 = vunpack.c.0.s8 %v993
        %v995 = vlaneseq
        %v996 = vshrl.u32 %v995, 7
        %v997 = vsub.s32 %v994, %v996
        %v998 = vrot.slane %v966, %v997
        %v1000 = vunpack.c.l.s4 1983009808
        %v1001 = vunpack.c.0.s8 %v1000
        %v1002 = vlaneseq
        %v1003 = vshrl.u32 %v1002, 7
        %v1004 = vsub.s32 %v1001, %v1003
        %v1005 = vrot.slane %v965, %v1004
        %v1007 = vunpack.c.l.s4 1983009808
        %v1008 = vunpack.c.0.s8 %v1007
        %v1009 = vlaneseq
        %v1010 = vshrl.u32 %v1009, 7
        %v1011 = vsub.s32 %v1008, %v1010
        %v1012 = vrot.slane %v967, %v1011
        %v1014 = vunpack.c.l.s4 1983009808
        %v1015 = vunpack.c.0.s8 %v1014
        %v1016 = vlaneseq
        %v1017 = vshrl.u32 %v1016, 7
        %v1018 = vsub.s32 %v1015, %v1017
        %v1019 = vrot.slane %v975, %v1018
        %v1021 = vunpack.c.l.s4 1983009808
        %v1022 = vunpack.c.0.s8 %v1021
        %v1023 = vlaneseq
        %v1024 = vshrl.u32 %v1023, 7
        %v1025 = vsub.s32 %v1022, %v1024
        %v1026 = vrot.slane %v983, %v1025
        %v1028 = vunpack.c.l.s4 1983009808
        %v1029 = vunpack.c.0.s8 %v1028
        %v1030 = vlaneseq
        %v1031 = vshrl.u32 %v1030, 7
        %v1032 = vsub.s32 %v1029, %v1031
        %v1033 = vrot.slane %v982, %v1032
        %v1035 = vunpack.c.l.s4 1983009808
        %v1036 = vunpack.c.0.s8 %v1035
        %v1037 = vlaneseq
        %v1038 = vshrl.u32 %v1037, 7
        %v1039 = vsub.s32 %v1036, %v1038
        %v1040 = vrot.slane %v984, %v1039
        %v1041 = vrot.slane %v991, 7
        %v1042 = vrot.slane %v998, 7
        %v1043 = vrot.slane %v1005, 7
        %v1044 = vrot.slane %v1012, 7
        %v1045 = vrot.slane %v1019, 7
        %v1046 = vrot.slane %v1026, 7
        %v1047 = vrot.slane %v1033, 7
        %v1048 = vrot.slane %v1040, 7
        %s1057 = scalar_lea.vmem [#allocation2], 8
        %1058 = vst [vmem:[%s1057] sm:$0x6] %v1041
        %1059 = vst [vmem:[%s1057 + $0x4] sm:$0x6] %v1042
        %1060 = vst [vmem:[%s1057 + $0x8] sm:$0x6] %v1043
        %1061 = vst [vmem:[%s1057 + $0xc] sm:$0x6] %v1044
        %1062 = vst [vmem:[%s1057 + $0x20] sm:$0x6] %v1045
        %1063 = vst [vmem:[%s1057 + $0x24] sm:$0x6] %v1046
        %1064 = vst [vmem:[%s1057 + $0x28] sm:$0x6] %v1047
        %1065 = vst [vmem:[%s1057 + $0x2c] sm:$0x6] %v1048
        %s1066 = scalar_lea.vmem [#allocation2], 4
        %v1067 = vld [vmem:[%s1066] sm:$0x7]
        %v1068 = vld [vmem:[%s1066 + $0x4] sm:$0x7]
        %v1069 = vld [vmem:[%s1066 + $0x8] sm:$0x7]
        %v1070 = vld [vmem:[%s1066 + $0xc] sm:$0x7]
        %v1071 = vld [vmem:[%s1066 + $0x20] sm:$0x7]
        %v1072 = vld [vmem:[%s1066 + $0x24] sm:$0x7]
        %v1073 = vld [vmem:[%s1066 + $0x28] sm:$0x7]
        %v1074 = vld [vmem:[%s1066 + $0x2c] sm:$0x7]
        %v1084 = vunpack.c.l.s4 1983009808
        %v1085 = vunpack.c.0.s8 %v1084
        %v1086 = vlaneseq
        %v1087 = vshrl.u32 %v1086, 7
        %v1088 = vsub.s32 %v1085, %v1087
        %v1089 = vrot.slane %v1067, %v1088
        %v1090 = vcombine.high %v1089, %v1089
        %v1092 = vunpack.c.l.s4 1983009808
        %v1093 = vunpack.c.0.s8 %v1092
        %v1094 = vlaneseq
        %v1095 = vshrl.u32 %v1094, 7
        %v1096 = vsub.s32 %v1093, %v1095
        %v1097 = vrot.slane %v1068, %v1096
        %v1098 = vcombine.high %v1097, %v1097
        %v1100 = vunpack.c.l.s4 1983009808
        %v1101 = vunpack.c.0.s8 %v1100
        %v1102 = vlaneseq
        %v1103 = vshrl.u32 %v1102, 7
        %v1104 = vsub.s32 %v1101, %v1103
        %v1105 = vrot.slane %v1069, %v1104
        %v1106 = vcombine.high %v1105, %v1105
        %v1108 = vunpack.c.l.s4 1983009808
        %v1109 = vunpack.c.0.s8 %v1108
        %v1110 = vlaneseq
        %v1111 = vshrl.u32 %v1110, 7
        %v1112 = vsub.s32 %v1109, %v1111
        %v1113 = vrot.slane %v1070, %v1112
        %v1114 = vcombine.high %v1113, %v1113
        %v1116 = vunpack.c.l.s4 1983009808
        %v1117 = vunpack.c.0.s8 %v1116
        %v1118 = vlaneseq
        %v1119 = vshrl.u32 %v1118, 7
        %v1120 = vsub.s32 %v1117, %v1119
        %v1121 = vrot.slane %v1071, %v1120
        %v1122 = vcombine.high %v1121, %v1121
        %v1124 = vunpack.c.l.s4 1983009808
        %v1125 = vunpack.c.0.s8 %v1124
        %v1126 = vlaneseq
        %v1127 = vshrl.u32 %v1126, 7
        %v1128 = vsub.s32 %v1125, %v1127
        %v1129 = vrot.slane %v1072, %v1128
        %v1130 = vcombine.high %v1129, %v1129
        %v1132 = vunpack.c.l.s4 1983009808
        %v1133 = vunpack.c.0.s8 %v1132
        %v1134 = vlaneseq
        %v1135 = vshrl.u32 %v1134, 7
        %v1136 = vsub.s32 %v1133, %v1135
        %v1137 = vrot.slane %v1073, %v1136
        %v1138 = vcombine.high %v1137, %v1137
        %v1140 = vunpack.c.l.s4 1983009808
        %v1141 = vunpack.c.0.s8 %v1140
        %v1142 = vlaneseq
        %v1143 = vshrl.u32 %v1142, 7
        %v1144 = vsub.s32 %v1141, %v1143
        %v1145 = vrot.slane %v1074, %v1144
        %v1146 = vcombine.high %v1145, %v1145
        %vm1147 = vsmask.f32 1280
        %vm1148 = vsmask.f32 3336
        %vm1149 = vmor %vm1147, %vm1148
        %vm1150 = vsmask.f32 5392
        %vm1151 = vmor %vm1149, %vm1150
        %vm1152 = vsmask.f32 7448
        %vm1153 = vmor %vm1151, %vm1152
        %v1155 = vshrl.u32 %v1089, 16
        %v1157 = vrot.slane %v1155, 6
        %v1158 = vshll.u32 %v1089, 16
        %v1160 = vrot.slane %v1158, 7
        %v1161 = vor.u32 %v1157, %v1160
        %v1162 = vrot.slane %v1161, 2
        %v1164 = vshll.u32 %v1090, 16
        %v1166 = vrot.slane %v1164, 7
        %v1167 = vsel %vm1153, %v1162, %v1166
        %v1169 = vshrl.u32 %v1097, 16
        %v1171 = vrot.slane %v1169, 6
        %v1172 = vshll.u32 %v1097, 16
        %v1174 = vrot.slane %v1172, 7
        %v1175 = vor.u32 %v1171, %v1174
        %v1176 = vrot.slane %v1175, 2
        %v1178 = vshll.u32 %v1098, 16
        %v1180 = vrot.slane %v1178, 7
        %v1181 = vsel %vm1153, %v1176, %v1180
        %v1183 = vshrl.u32 %v1105, 16
        %v1185 = vrot.slane %v1183, 6
        %v1186 = vshll.u32 %v1105, 16
        %v1188 = vrot.slane %v1186, 7
        %v1189 = vor.u32 %v1185, %v1188
        %v1190 = vrot.slane %v1189, 2
        %v1192 = vshll.u32 %v1106, 16
        %v1194 = vrot.slane %v1192, 7
        %v1195 = vsel %vm1153, %v1190, %v1194
        %v1197 = vshrl.u32 %v1113, 16
        %v1199 = vrot.slane %v1197, 6
        %v1200 = vshll.u32 %v1113, 16
        %v1202 = vrot.slane %v1200, 7
        %v1203 = vor.u32 %v1199, %v1202
        %v1204 = vrot.slane %v1203, 2
        %v1206 = vshll.u32 %v1114, 16
        %v1208 = vrot.slane %v1206, 7
        %v1209 = vsel %vm1153, %v1204, %v1208
        %v1211 = vshrl.u32 %v1121, 16
        %v1213 = vrot.slane %v1211, 6
        %v1214 = vshll.u32 %v1121, 16
        %v1216 = vrot.slane %v1214, 7
        %v1217 = vor.u32 %v1213, %v1216
        %v1218 = vrot.slane %v1217, 2
        %v1220 = vshll.u32 %v1122, 16
        %v1222 = vrot.slane %v1220, 7
        %v1223 = vsel %vm1153, %v1218, %v1222
        %v1225 = vshrl.u32 %v1129, 16
        %v1227 = vrot.slane %v1225, 6
        %v1228 = vshll.u32 %v1129, 16
        %v1230 = vrot.slane %v1228, 7
        %v1231 = vor.u32 %v1227, %v1230
        %v1232 = vrot.slane %v1231, 2
        %v1234 = vshll.u32 %v1130, 16
        %v1236 = vrot.slane %v1234, 7
        %v1237 = vsel %vm1153, %v1232, %v1236
        %v1239 = vshrl.u32 %v1137, 16
        %v1241 = vrot.slane %v1239, 6
        %v1242 = vshll.u32 %v1137, 16
        %v1244 = vrot.slane %v1242, 7
        %v1245 = vor.u32 %v1241, %v1244
        %v1246 = vrot.slane %v1245, 2
        %v1248 = vshll.u32 %v1138, 16
        %v1250 = vrot.slane %v1248, 7
        %v1251 = vsel %vm1153, %v1246, %v1250
        %v1253 = vshrl.u32 %v1145, 16
        %v1255 = vrot.slane %v1253, 6
        %v1256 = vshll.u32 %v1145, 16
        %v1258 = vrot.slane %v1256, 7
        %v1259 = vor.u32 %v1255, %v1258
        %v1260 = vrot.slane %v1259, 2
        %v1262 = vshll.u32 %v1146, 16
        %v1264 = vrot.slane %v1262, 7
        %v1265 = vsel %vm1153, %v1260, %v1264
        %1266 = vrot.lane.b32.xlu0 %v1167, 32
        %v1267 = vpop.permute.xlu0 %1266
        %1268 = vrot.lane.b32.xlu0 %v1181, 32
        %v1269 = vpop.permute.xlu0 %1268
        %1270 = vrot.lane.b32.xlu0 %v1195, 32
        %v1271 = vpop.permute.xlu0 %1270
        %1272 = vrot.lane.b32.xlu0 %v1209, 32
        %v1273 = vpop.permute.xlu0 %1272
        %1274 = vrot.lane.b32.xlu0 %v1223, 32
        %v1275 = vpop.permute.xlu0 %1274
        %1276 = vrot.lane.b32.xlu0 %v1237, 32
        %v1277 = vpop.permute.xlu0 %1276
        %1278 = vrot.lane.b32.xlu0 %v1251, 32
        %v1279 = vpop.permute.xlu0 %1278
        %1280 = vrot.lane.b32.xlu0 %v1265, 32
        %v1281 = vpop.permute.xlu0 %1280
        %vm1290 = vcmask 254976
        %1291 = vst.msk [vmem:[#allocation3] sm:$0x3] %vm1290, %v1267
        %1292 = vst.msk [vmem:[#allocation3 + $0x6] sm:$0x3] %vm1290, %v1269
        %1293 = vst.msk [vmem:[#allocation3 + $0xc] sm:$0x3] %vm1290, %v1271
        %1294 = vst.msk [vmem:[#allocation3 + $0x12] sm:$0x3] %vm1290, %v1273
        %1295 = vst.msk [vmem:[#allocation3 + $0x18] sm:$0x3] %vm1290, %v1275
        %1296 = vst.msk [vmem:[#allocation3 + $0x1e] sm:$0x3] %vm1290, %v1277
        %1297 = vst.msk [vmem:[#allocation3 + $0x24] sm:$0x3] %vm1290, %v1279
        %1298 = vst.msk [vmem:[#allocation3 + $0x2a] sm:$0x3] %vm1290, %v1281
        %v1299 = vld [vmem:[%s1066] sm:$0x6]
        %v1300 = vld [vmem:[%s1066 + $0x4] sm:$0x6]
        %v1301 = vld [vmem:[%s1066 + $0x8] sm:$0x6]
        %v1302 = vld [vmem:[%s1066 + $0xc] sm:$0x6]
        %v1303 = vld [vmem:[%s1066 + $0x20] sm:$0x6]
        %v1304 = vld [vmem:[%s1066 + $0x24] sm:$0x6]
        %v1305 = vld [vmem:[%s1066 + $0x28] sm:$0x6]
        %v1306 = vld [vmem:[%s1066 + $0x2c] sm:$0x6]
        %v1316 = vunpack.c.l.s4 1983009808
        %v1317 = vunpack.c.0.s8 %v1316
        %v1318 = vlaneseq
        %v1319 = vshrl.u32 %v1318, 7
        %v1320 = vsub.s32 %v1317, %v1319
        %v1321 = vrot.slane %v1299, %v1320
        %v1322 = vcombine.high %v1321, %v1321
        %v1324 = vunpack.c.l.s4 1983009808
        %v1325 = vunpack.c.0.s8 %v1324
        %v1326 = vlaneseq
        %v1327 = vshrl.u32 %v1326, 7
        %v1328 = vsub.s32 %v1325, %v1327
        %v1329 = vrot.slane %v1300, %v1328
        %v1330 = vcombine.high %v1329, %v1329
        %v1332 = vunpack.c.l.s4 1983009808
        %v1333 = vunpack.c.0.s8 %v1332
        %v1334 = vlaneseq
        %v1335 = vshrl.u32 %v1334, 7
        %v1336 = vsub.s32 %v1333, %v1335
        %v1337 = vrot.slane %v1301, %v1336
        %v1338 = vcombine.high %v1337, %v1337
        %v1340 = vunpack.c.l.s4 1983009808
        %v1341 = vunpack.c.0.s8 %v1340
        %v1342 = vlaneseq
        %v1343 = vshrl.u32 %v1342, 7
        %v1344 = vsub.s32 %v1341, %v1343
        %v1345 = vrot.slane %v1302, %v1344
        %v1346 = vcombine.high %v1345, %v1345
        %v1348 = vunpack.c.l.s4 1983009808
        %v1349 = vunpack.c.0.s8 %v1348
        %v1350 = vlaneseq
        %v1351 = vshrl.u32 %v1350, 7
        %v1352 = vsub.s32 %v1349, %v1351
        %v1353 = vrot.slane %v1303, %v1352
        %v1354 = vcombine.high %v1353, %v1353
        %v1356 = vunpack.c.l.s4 1983009808
        %v1357 = vunpack.c.0.s8 %v1356
        %v1358 = vlaneseq
        %v1359 = vshrl.u32 %v1358, 7
        %v1360 = vsub.s32 %v1357, %v1359
        %v1361 = vrot.slane %v1304, %v1360
        %v1362 = vcombine.high %v1361, %v1361
        %v1364 = vunpack.c.l.s4 1983009808
        %v1365 = vunpack.c.0.s8 %v1364
        %v1366 = vlaneseq
        %v1367 = vshrl.u32 %v1366, 7
        %v1368 = vsub.s32 %v1365, %v1367
        %v1369 = vrot.slane %v1305, %v1368
        %v1370 = vcombine.high %v1369, %v1369
        %v1372 = vunpack.c.l.s4 1983009808
        %v1373 = vunpack.c.0.s8 %v1372
        %v1374 = vlaneseq
        %v1375 = vshrl.u32 %v1374, 7
        %v1376 = vsub.s32 %v1373, %v1375
        %v1377 = vrot.slane %v1306, %v1376
        %v1378 = vcombine.high %v1377, %v1377
        %vm1379 = vcmask 1040384
        %vm1380 = vcmask 1042434
        %vm1381 = vmor %vm1379, %vm1380
        %vm1382 = vcmask 1044484
        %vm1383 = vmor %vm1381, %vm1382
        %vm1384 = vcmask 1046534
        %vm1385 = vmor %vm1383, %vm1384
        %v1386 = vrot.slane %v1321, 7
        %v1387 = vrot.slane %v1386, 2
        %v1388 = vrot.slane %v1322, 7
        %v1389 = vsel %vm1385, %v1387, %v1388
        %v1390 = vrot.slane %v1329, 7
        %v1391 = vrot.slane %v1390, 2
        %v1392 = vrot.slane %v1330, 7
        %v1393 = vsel %vm1385, %v1391, %v1392
        %v1394 = vrot.slane %v1337, 7
        %v1395 = vrot.slane %v1394, 2
        %v1396 = vrot.slane %v1338, 7
        %v1397 = vsel %vm1385, %v1395, %v1396
        %v1398 = vrot.slane %v1345, 7
        %v1399 = vrot.slane %v1398, 2
        %v1400 = vrot.slane %v1346, 7
        %v1401 = vsel %vm1385, %v1399, %v1400
        %v1402 = vrot.slane %v1353, 7
        %v1403 = vrot.slane %v1402, 2
        %v1404 = vrot.slane %v1354, 7
        %v1405 = vsel %vm1385, %v1403, %v1404
        %v1406 = vrot.slane %v1361, 7
        %v1407 = vrot.slane %v1406, 2
        %v1408 = vrot.slane %v1362, 7
        %v1409 = vsel %vm1385, %v1407, %v1408
        %v1410 = vrot.slane %v1369, 7
        %v1411 = vrot.slane %v1410, 2
        %v1412 = vrot.slane %v1370, 7
        %v1413 = vsel %vm1385, %v1411, %v1412
        %v1414 = vrot.slane %v1377, 7
        %v1415 = vrot.slane %v1414, 2
        %v1416 = vrot.slane %v1378, 7
        %v1417 = vsel %vm1385, %v1415, %v1416
        %1418 = vrot.lane.b32.xlu0 %v1389, 96
        %v1419 = vpop.permute.xlu0 %1418
        %1420 = vrot.lane.b32.xlu0 %v1393, 96
        %v1421 = vpop.permute.xlu0 %1420
        %1422 = vrot.lane.b32.xlu0 %v1397, 96
        %v1423 = vpop.permute.xlu0 %1422
        %1424 = vrot.lane.b32.xlu0 %v1401, 96
        %v1425 = vpop.permute.xlu0 %1424
        %1426 = vrot.lane.b32.xlu0 %v1405, 96
        %v1427 = vpop.permute.xlu0 %1426
        %1428 = vrot.lane.b32.xlu0 %v1409, 96
        %v1429 = vpop.permute.xlu0 %1428
        %1430 = vrot.lane.b32.xlu0 %v1413, 96
        %v1431 = vpop.permute.xlu0 %1430
        %1432 = vrot.lane.b32.xlu0 %v1417, 96
        %v1433 = vpop.permute.xlu0 %1432
        %vm1442 = vcmask 517376
        %1443 = vst.msk [vmem:[#allocation3] sm:$0x3] %vm1442, %v1419
        %1444 = vst.msk [vmem:[#allocation3 + $0x6] sm:$0x3] %vm1442, %v1421
        %1445 = vst.msk [vmem:[#allocation3 + $0xc] sm:$0x3] %vm1442, %v1423
        %1446 = vst.msk [vmem:[#allocation3 + $0x12] sm:$0x3] %vm1442, %v1425
        %1447 = vst.msk [vmem:[#allocation3 + $0x18] sm:$0x3] %vm1442, %v1427
        %1448 = vst.msk [vmem:[#allocation3 + $0x1e] sm:$0x3] %vm1442, %v1429
        %1449 = vst.msk [vmem:[#allocation3 + $0x24] sm:$0x3] %vm1442, %v1431
        %1450 = vst.msk [vmem:[#allocation3 + $0x2a] sm:$0x3] %vm1442, %v1433
        %v1451 = vld [vmem:[%s1066] sm:$0x6]
        %v1452 = vld [vmem:[%s1066 + $0x4] sm:$0x6]
        %v1453 = vld [vmem:[%s1066 + $0x8] sm:$0x6]
        %v1454 = vld [vmem:[%s1066 + $0xc] sm:$0x6]
        %v1455 = vld [vmem:[%s1066 + $0x20] sm:$0x6]
        %v1456 = vld [vmem:[%s1066 + $0x24] sm:$0x6]
        %v1457 = vld [vmem:[%s1066 + $0x28] sm:$0x6]
        %v1458 = vld [vmem:[%s1066 + $0x2c] sm:$0x6]
        %v1468 = vunpack.c.l.s4 1983009808
        %v1469 = vunpack.c.0.s8 %v1468
        %v1470 = vlaneseq
        %v1471 = vshrl.u32 %v1470, 7
        %v1472 = vsub.s32 %v1469, %v1471
        %v1473 = vrot.slane %v1451, %v1472
        %v1474 = vcombine.high %v1473, %v1473
        %v1476 = vunpack.c.l.s4 1983009808
        %v1477 = vunpack.c.0.s8 %v1476
        %v1478 = vlaneseq
        %v1479 = vshrl.u32 %v1478, 7
        %v1480 = vsub.s32 %v1477, %v1479
        %v1481 = vrot.slane %v1452, %v1480
        %v1482 = vcombine.high %v1481, %v1481
        %v1484 = vunpack.c.l.s4 1983009808
        %v1485 = vunpack.c.0.s8 %v1484
        %v1486 = vlaneseq
        %v1487 = vshrl.u32 %v1486, 7
        %v1488 = vsub.s32 %v1485, %v1487
        %v1489 = vrot.slane %v1453, %v1488
        %v1490 = vcombine.high %v1489, %v1489
        %v1492 = vunpack.c.l.s4 1983009808
        %v1493 = vunpack.c.0.s8 %v1492
        %v1494 = vlaneseq
        %v1495 = vshrl.u32 %v1494, 7
        %v1496 = vsub.s32 %v1493, %v1495
        %v1497 = vrot.slane %v1454, %v1496
        %v1498 = vcombine.high %v1497, %v1497
        %v1500 = vunpack.c.l.s4 1983009808
        %v1501 = vunpack.c.0.s8 %v1500
        %v1502 = vlaneseq
        %v1503 = vshrl.u32 %v1502, 7
        %v1504 = vsub.s32 %v1501, %v1503
        %v1505 = vrot.slane %v1455, %v1504
        %v1506 = vcombine.high %v1505, %v1505
        %v1508 = vunpack.c.l.s4 1983009808
        %v1509 = vunpack.c.0.s8 %v1508
        %v1510 = vlaneseq
        %v1511 = vshrl.u32 %v1510, 7
        %v1512 = vsub.s32 %v1509, %v1511
        %v1513 = vrot.slane %v1456, %v1512
        %v1514 = vcombine.high %v1513, %v1513
        %v1516 = vunpack.c.l.s4 1983009808
        %v1517 = vunpack.c.0.s8 %v1516
        %v1518 = vlaneseq
        %v1519 = vshrl.u32 %v1518, 7
        %v1520 = vsub.s32 %v1517, %v1519
        %v1521 = vrot.slane %v1457, %v1520
        %v1522 = vcombine.high %v1521, %v1521
        %v1524 = vunpack.c.l.s4 1983009808
        %v1525 = vunpack.c.0.s8 %v1524
        %v1526 = vlaneseq
        %v1527 = vshrl.u32 %v1526, 7
        %v1528 = vsub.s32 %v1525, %v1527
        %v1529 = vrot.slane %v1458, %v1528
        %v1530 = vcombine.high %v1529, %v1529
        %v1531 = vrot.slane %v1473, 7
        %v1532 = vrot.slane %v1531, 2
        %v1533 = vrot.slane %v1474, 7
        %v1534 = vsel %vm1385, %v1532, %v1533
        %v1535 = vrot.slane %v1481, 7
        %v1536 = vrot.slane %v1535, 2
        %v1537 = vrot.slane %v1482, 7
        %v1538 = vsel %vm1385, %v1536, %v1537
        %v1539 = vrot.slane %v1489, 7
        %v1540 = vrot.slane %v1539, 2
        %v1541 = vrot.slane %v1490, 7
        %v1542 = vsel %vm1385, %v1540, %v1541
        %v1543 = vrot.slane %v1497, 7
        %v1544 = vrot.slane %v1543, 2
        %v1545 = vrot.slane %v1498, 7
        %v1546 = vsel %vm1385, %v1544, %v1545
        %v1547 = vrot.slane %v1505, 7
        %v1548 = vrot.slane %v1547, 2
        %v1549 = vrot.slane %v1506, 7
        %v1550 = vsel %vm1385, %v1548, %v1549
        %v1551 = vrot.slane %v1513, 7
        %v1552 = vrot.slane %v1551, 2
        %v1553 = vrot.slane %v1514, 7
        %v1554 = vsel %vm1385, %v1552, %v1553
        %v1555 = vrot.slane %v1521, 7
        %v1556 = vrot.slane %v1555, 2
        %v1557 = vrot.slane %v1522, 7
        %v1558 = vsel %vm1385, %v1556, %v1557
        %v1559 = vrot.slane %v1529, 7
        %v1560 = vrot.slane %v1559, 2
        %v1561 = vrot.slane %v1530, 7
        %v1562 = vsel %vm1385, %v1560, %v1561
        %1563 = vrot.lane.b32.xlu0 %v1534, 96
        %v1564 = vpop.permute.xlu0 %1563
        %1565 = vrot.lane.b32.xlu0 %v1538, 96
        %v1566 = vpop.permute.xlu0 %1565
        %1567 = vrot.lane.b32.xlu0 %v1542, 96
        %v1568 = vpop.permute.xlu0 %1567
        %1569 = vrot.lane.b32.xlu0 %v1546, 96
        %v1570 = vpop.permute.xlu0 %1569
        %1571 = vrot.lane.b32.xlu0 %v1550, 96
        %v1572 = vpop.permute.xlu0 %1571
        %1573 = vrot.lane.b32.xlu0 %v1554, 96
        %v1574 = vpop.permute.xlu0 %1573
        %1575 = vrot.lane.b32.xlu0 %v1558, 96
        %v1576 = vpop.permute.xlu0 %1575
        %1577 = vrot.lane.b32.xlu0 %v1562, 96
        %v1578 = vpop.permute.xlu0 %1577
        %vm1587 = vcmask 779776
        %1588 = vst.msk [vmem:[#allocation3] sm:$0x3] %vm1587, %v1564
        %1589 = vst.msk [vmem:[#allocation3 + $0x6] sm:$0x3] %vm1587, %v1566
        %1590 = vst.msk [vmem:[#allocation3 + $0xc] sm:$0x3] %vm1587, %v1568
        %1591 = vst.msk [vmem:[#allocation3 + $0x12] sm:$0x3] %vm1587, %v1570
        %1592 = vst.msk [vmem:[#allocation3 + $0x18] sm:$0x3] %vm1587, %v1572
        %1593 = vst.msk [vmem:[#allocation3 + $0x1e] sm:$0x3] %vm1587, %v1574
        %1594 = vst.msk [vmem:[#allocation3 + $0x24] sm:$0x3] %vm1587, %v1576
        %1595 = vst.msk [vmem:[#allocation3 + $0x2a] sm:$0x3] %vm1587, %v1578
        %v1596 = vld [vmem:[%s1057] sm:$0x7]
        %v1597 = vld [vmem:[%s1057 + $0x4] sm:$0x7]
        %v1598 = vld [vmem:[%s1057 + $0x8] sm:$0x7]
        %v1599 = vld [vmem:[%s1057 + $0xc] sm:$0x7]
        %v1600 = vld [vmem:[%s1057 + $0x20] sm:$0x7]
        %v1601 = vld [vmem:[%s1057 + $0x24] sm:$0x7]
        %v1602 = vld [vmem:[%s1057 + $0x28] sm:$0x7]
        %v1603 = vld [vmem:[%s1057 + $0x2c] sm:$0x7]
        %v1613 = vunpack.c.l.s4 1983009808
        %v1614 = vunpack.c.0.s8 %v1613
        %v1615 = vlaneseq
        %v1616 = vshrl.u32 %v1615, 7
        %v1617 = vsub.s32 %v1614, %v1616
        %v1618 = vrot.slane %v1596, %v1617
        %v1619 = vcombine.high %v1618, %v1618
        %v1621 = vunpack.c.l.s4 1983009808
        %v1622 = vunpack.c.0.s8 %v1621
        %v1623 = vlaneseq
        %v1624 = vshrl.u32 %v1623, 7
        %v1625 = vsub.s32 %v1622, %v1624
        %v1626 = vrot.slane %v1597, %v1625
        %v1627 = vcombine.high %v1626, %v1626
        %v1629 = vunpack.c.l.s4 1983009808
        %v1630 = vunpack.c.0.s8 %v1629
        %v1631 = vlaneseq
        %v1632 = vshrl.u32 %v1631, 7
        %v1633 = vsub.s32 %v1630, %v1632
        %v1634 = vrot.slane %v1598, %v1633
        %v1635 = vcombine.high %v1634, %v1634
        %v1637 = vunpack.c.l.s4 1983009808
        %v1638 = vunpack.c.0.s8 %v1637
        %v1639 = vlaneseq
        %v1640 = vshrl.u32 %v1639, 7
        %v1641 = vsub.s32 %v1638, %v1640
        %v1642 = vrot.slane %v1599, %v1641
        %v1643 = vcombine.high %v1642, %v1642
        %v1645 = vunpack.c.l.s4 1983009808
        %v1646 = vunpack.c.0.s8 %v1645
        %v1647 = vlaneseq
        %v1648 = vshrl.u32 %v1647, 7
        %v1649 = vsub.s32 %v1646, %v1648
        %v1650 = vrot.slane %v1600, %v1649
        %v1651 = vcombine.high %v1650, %v1650
        %v1653 = vunpack.c.l.s4 1983009808
        %v1654 = vunpack.c.0.s8 %v1653
        %v1655 = vlaneseq
        %v1656 = vshrl.u32 %v1655, 7
        %v1657 = vsub.s32 %v1654, %v1656
        %v1658 = vrot.slane %v1601, %v1657
        %v1659 = vcombine.high %v1658, %v1658
        %v1661 = vunpack.c.l.s4 1983009808
        %v1662 = vunpack.c.0.s8 %v1661
        %v1663 = vlaneseq
        %v1664 = vshrl.u32 %v1663, 7
        %v1665 = vsub.s32 %v1662, %v1664
        %v1666 = vrot.slane %v1602, %v1665
        %v1667 = vcombine.high %v1666, %v1666
        %v1669 = vunpack.c.l.s4 1983009808
        %v1670 = vunpack.c.0.s8 %v1669
        %v1671 = vlaneseq
        %v1672 = vshrl.u32 %v1671, 7
        %v1673 = vsub.s32 %v1670, %v1672
        %v1674 = vrot.slane %v1603, %v1673
        %v1675 = vcombine.high %v1674, %v1674
        %v1677 = vshrl.u32 %v1618, 16
        %v1679 = vrot.slane %v1677, 6
        %v1680 = vshll.u32 %v1618, 16
        %v1682 = vrot.slane %v1680, 7
        %v1683 = vor.u32 %v1679, %v1682
        %v1684 = vrot.slane %v1683, 2
        %v1686 = vshll.u32 %v1619, 16
        %v1688 = vrot.slane %v1686, 7
        %v1689 = vsel %vm1153, %v1684, %v1688
        %v1691 = vshrl.u32 %v1626, 16
        %v1693 = vrot.slane %v1691, 6
        %v1694 = vshll.u32 %v1626, 16
        %v1696 = vrot.slane %v1694, 7
        %v1697 = vor.u32 %v1693, %v1696
        %v1698 = vrot.slane %v1697, 2
        %v1700 = vshll.u32 %v1627, 16
        %v1702 = vrot.slane %v1700, 7
        %v1703 = vsel %vm1153, %v1698, %v1702
        %v1705 = vshrl.u32 %v1634, 16
        %v1707 = vrot.slane %v1705, 6
        %v1708 = vshll.u32 %v1634, 16
        %v1710 = vrot.slane %v1708, 7
        %v1711 = vor.u32 %v1707, %v1710
        %v1712 = vrot.slane %v1711, 2
        %v1714 = vshll.u32 %v1635, 16
        %v1716 = vrot.slane %v1714, 7
        %v1717 = vsel %vm1153, %v1712, %v1716
        %v1719 = vshrl.u32 %v1642, 16
        %v1721 = vrot.slane %v1719, 6
        %v1722 = vshll.u32 %v1642, 16
        %v1724 = vrot.slane %v1722, 7
        %v1725 = vor.u32 %v1721, %v1724
        %v1726 = vrot.slane %v1725, 2
        %v1728 = vshll.u32 %v1643, 16
        %v1730 = vrot.slane %v1728, 7
        %v1731 = vsel %vm1153, %v1726, %v1730
        %v1733 = vshrl.u32 %v1650, 16
        %v1735 = vrot.slane %v1733, 6
        %v1736 = vshll.u32 %v1650, 16
        %v1738 = vrot.slane %v1736, 7
        %v1739 = vor.u32 %v1735, %v1738
        %v1740 = vrot.slane %v1739, 2
        %v1742 = vshll.u32 %v1651, 16
        %v1744 = vrot.slane %v1742, 7
        %v1745 = vsel %vm1153, %v1740, %v1744
        %v1747 = vshrl.u32 %v1658, 16
        %v1749 = vrot.slane %v1747, 6
        %v1750 = vshll.u32 %v1658, 16
        %v1752 = vrot.slane %v1750, 7
        %v1753 = vor.u32 %v1749, %v1752
        %v1754 = vrot.slane %v1753, 2
        %v1756 = vshll.u32 %v1659, 16
        %v1758 = vrot.slane %v1756, 7
        %v1759 = vsel %vm1153, %v1754, %v1758
        %v1761 = vshrl.u32 %v1666, 16
        %v1763 = vrot.slane %v1761, 6
        %v1764 = vshll.u32 %v1666, 16
        %v1766 = vrot.slane %v1764, 7
        %v1767 = vor.u32 %v1763, %v1766
        %v1768 = vrot.slane %v1767, 2
        %v1770 = vshll.u32 %v1667, 16
        %v1772 = vrot.slane %v1770, 7
        %v1773 = vsel %vm1153, %v1768, %v1772
        %v1775 = vshrl.u32 %v1674, 16
        %v1777 = vrot.slane %v1775, 6
        %v1778 = vshll.u32 %v1674, 16
        %v1780 = vrot.slane %v1778, 7
        %v1781 = vor.u32 %v1777, %v1780
        %v1782 = vrot.slane %v1781, 2
        %v1784 = vshll.u32 %v1675, 16
        %v1786 = vrot.slane %v1784, 7
        %v1787 = vsel %vm1153, %v1782, %v1786
        %1788 = vrot.lane.b32.xlu0 %v1689, 64
        %v1789 = vpop.permute.xlu0 %1788
        %1790 = vrot.lane.b32.xlu0 %v1703, 64
        %v1791 = vpop.permute.xlu0 %1790
        %1792 = vrot.lane.b32.xlu0 %v1717, 64
        %v1793 = vpop.permute.xlu0 %1792
        %1794 = vrot.lane.b32.xlu0 %v1731, 64
        %v1795 = vpop.permute.xlu0 %1794
        %1796 = vrot.lane.b32.xlu0 %v1745, 64
        %v1797 = vpop.permute.xlu0 %1796
        %1798 = vrot.lane.b32.xlu0 %v1759, 64
        %v1799 = vpop.permute.xlu0 %1798
        %1800 = vrot.lane.b32.xlu0 %v1773, 64
        %v1801 = vpop.permute.xlu0 %1800
        %1802 = vrot.lane.b32.xlu0 %v1787, 64
        %v1803 = vpop.permute.xlu0 %1802
        %vm1812 = vcmask 1042176
        %1813 = vst.msk [vmem:[#allocation3] sm:$0x3] %vm1812, %v1789
        %1814 = vst.msk [vmem:[#allocation3 + $0x6] sm:$0x3] %vm1812, %v1791
        %1815 = vst.msk [vmem:[#allocation3 + $0xc] sm:$0x3] %vm1812, %v1793
        %1816 = vst.msk [vmem:[#allocation3 + $0x12] sm:$0x3] %vm1812, %v1795
        %1817 = vst.msk [vmem:[#allocation3 + $0x18] sm:$0x3] %vm1812, %v1797
        %1818 = vst.msk [vmem:[#allocation3 + $0x1e] sm:$0x3] %vm1812, %v1799
        %1819 = vst.msk [vmem:[#allocation3 + $0x24] sm:$0x3] %vm1812, %v1801
        %1820 = vst.msk [vmem:[#allocation3 + $0x2a] sm:$0x3] %vm1812, %v1803
        %v1821 = vld [vmem:[%s1057] sm:$0x6]
        %v1822 = vld [vmem:[%s1057 + $0x4] sm:$0x6]
        %v1823 = vld [vmem:[%s1057 + $0x8] sm:$0x6]
        %v1824 = vld [vmem:[%s1057 + $0xc] sm:$0x6]
        %v1825 = vld [vmem:[%s1057 + $0x20] sm:$0x6]
        %v1826 = vld [vmem:[%s1057 + $0x24] sm:$0x6]
        %v1827 = vld [vmem:[%s1057 + $0x28] sm:$0x6]
        %v1828 = vld [vmem:[%s1057 + $0x2c] sm:$0x6]
        %v1838 = vunpack.c.l.s4 1983009808
        %v1839 = vunpack.c.0.s8 %v1838
        %v1840 = vlaneseq
        %v1841 = vshrl.u32 %v1840, 7
        %v1842 = vsub.s32 %v1839, %v1841
        %v1843 = vrot.slane %v1821, %v1842
        %v1844 = vcombine.high %v1843, %v1843
        %v1846 = vunpack.c.l.s4 1983009808
        %v1847 = vunpack.c.0.s8 %v1846
        %v1848 = vlaneseq
        %v1849 = vshrl.u32 %v1848, 7
        %v1850 = vsub.s32 %v1847, %v1849
        %v1851 = vrot.slane %v1822, %v1850
        %v1852 = vcombine.high %v1851, %v1851
        %v1854 = vunpack.c.l.s4 1983009808
        %v1855 = vunpack.c.0.s8 %v1854
        %v1856 = vlaneseq
        %v1857 = vshrl.u32 %v1856, 7
        %v1858 = vsub.s32 %v1855, %v1857
        %v1859 = vrot.slane %v1823, %v1858
        %v1860 = vcombine.high %v1859, %v1859
        %v1862 = vunpack.c.l.s4 1983009808
        %v1863 = vunpack.c.0.s8 %v1862
        %v1864 = vlaneseq
        %v1865 = vshrl.u32 %v1864, 7
        %v1866 = vsub.s32 %v1863, %v1865
        %v1867 = vrot.slane %v1824, %v1866
        %v1868 = vcombine.high %v1867, %v1867
        %v1870 = vunpack.c.l.s4 1983009808
        %v1871 = vunpack.c.0.s8 %v1870
        %v1872 = vlaneseq
        %v1873 = vshrl.u32 %v1872, 7
        %v1874 = vsub.s32 %v1871, %v1873
        %v1875 = vrot.slane %v1825, %v1874
        %v1876 = vcombine.high %v1875, %v1875
        %v1878 = vunpack.c.l.s4 1983009808
        %v1879 = vunpack.c.0.s8 %v1878
        %v1880 = vlaneseq
        %v1881 = vshrl.u32 %v1880, 7
        %v1882 = vsub.s32 %v1879, %v1881
        %v1883 = vrot.slane %v1826, %v1882
        %v1884 = vcombine.high %v1883, %v1883
        %v1886 = vunpack.c.l.s4 1983009808
        %v1887 = vunpack.c.0.s8 %v1886
        %v1888 = vlaneseq
        %v1889 = vshrl.u32 %v1888, 7
        %v1890 = vsub.s32 %v1887, %v1889
        %v1891 = vrot.slane %v1827, %v1890
        %v1892 = vcombine.high %v1891, %v1891
        %v1894 = vunpack.c.l.s4 1983009808
        %v1895 = vunpack.c.0.s8 %v1894
        %v1896 = vlaneseq
        %v1897 = vshrl.u32 %v1896, 7
        %v1898 = vsub.s32 %v1895, %v1897
        %v1899 = vrot.slane %v1828, %v1898
        %v1900 = vcombine.high %v1899, %v1899
        %v1901 = vrot.slane %v1843, 7
        %v1902 = vrot.slane %v1901, 2
        %v1903 = vrot.slane %v1844, 7
        %v1904 = vsel %vm1385, %v1902, %v1903
        %v1905 = vrot.slane %v1851, 7
        %v1906 = vrot.slane %v1905, 2
        %v1907 = vrot.slane %v1852, 7
        %v1908 = vsel %vm1385, %v1906, %v1907
        %v1909 = vrot.slane %v1859, 7
        %v1910 = vrot.slane %v1909, 2
        %v1911 = vrot.slane %v1860, 7
        %v1912 = vsel %vm1385, %v1910, %v1911
        %v1913 = vrot.slane %v1867, 7
        %v1914 = vrot.slane %v1913, 2
        %v1915 = vrot.slane %v1868, 7
        %v1916 = vsel %vm1385, %v1914, %v1915
        %v1917 = vrot.slane %v1875, 7
        %v1918 = vrot.slane %v1917, 2
        %v1919 = vrot.slane %v1876, 7
        %v1920 = vsel %vm1385, %v1918, %v1919
        %v1921 = vrot.slane %v1883, 7
        %v1922 = vrot.slane %v1921, 2
        %v1923 = vrot.slane %v1884, 7
        %v1924 = vsel %vm1385, %v1922, %v1923
        %v1925 = vrot.slane %v1891, 7
        %v1926 = vrot.slane %v1925, 2
        %v1927 = vrot.slane %v1892, 7
        %v1928 = vsel %vm1385, %v1926, %v1927
        %v1929 = vrot.slane %v1899, 7
        %v1930 = vrot.slane %v1929, 2
        %v1931 = vrot.slane %v1900, 7
        %v1932 = vsel %vm1385, %v1930, %v1931
        %1941 = vst.msk [vmem:[#allocation3 + $0x2] sm:$0x3] %vm1290, %v1904
        %1942 = vst.msk [vmem:[#allocation3 + $0x8] sm:$0x3] %vm1290, %v1908
        %1943 = vst.msk [vmem:[#allocation3 + $0xe] sm:$0x3] %vm1290, %v1912
        %1944 = vst.msk [vmem:[#allocation3 + $0x14] sm:$0x3] %vm1290, %v1916
        %1945 = vst.msk [vmem:[#allocation3 + $0x1a] sm:$0x3] %vm1290, %v1920
        %1946 = vst.msk [vmem:[#allocation3 + $0x20] sm:$0x3] %vm1290, %v1924
        %1947 = vst.msk [vmem:[#allocation3 + $0x26] sm:$0x3] %vm1290, %v1928
        %1948 = vst.msk [vmem:[#allocation3 + $0x2c] sm:$0x3] %vm1290, %v1932
        %v1949 = vld [vmem:[%s1057] sm:$0x6]
        %v1950 = vld [vmem:[%s1057 + $0x4] sm:$0x6]
        %v1951 = vld [vmem:[%s1057 + $0x8] sm:$0x6]
        %v1952 = vld [vmem:[%s1057 + $0xc] sm:$0x6]
        %v1953 = vld [vmem:[%s1057 + $0x20] sm:$0x6]
        %v1954 = vld [vmem:[%s1057 + $0x24] sm:$0x6]
        %v1955 = vld [vmem:[%s1057 + $0x28] sm:$0x6]
        %v1956 = vld [vmem:[%s1057 + $0x2c] sm:$0x6]
        %v1966 = vunpack.c.l.s4 1983009808
        %v1967 = vunpack.c.0.s8 %v1966
        %v1968 = vlaneseq
        %v1969 = vshrl.u32 %v1968, 7
        %v1970 = vsub.s32 %v1967, %v1969
        %v1971 = vrot.slane %v1949, %v1970
        %v1972 = vcombine.high %v1971, %v1971
        %v1974 = vunpack.c.l.s4 1983009808
        %v1975 = vunpack.c.0.s8 %v1974
        %v1976 = vlaneseq
        %v1977 = vshrl.u32 %v1976, 7
        %v1978 = vsub.s32 %v1975, %v1977
        %v1979 = vrot.slane %v1950, %v1978
        %v1980 = vcombine.high %v1979, %v1979
        %v1982 = vunpack.c.l.s4 1983009808
        %v1983 = vunpack.c.0.s8 %v1982
        %v1984 = vlaneseq
        %v1985 = vshrl.u32 %v1984, 7
        %v1986 = vsub.s32 %v1983, %v1985
        %v1987 = vrot.slane %v1951, %v1986
        %v1988 = vcombine.high %v1987, %v1987
        %v1990 = vunpack.c.l.s4 1983009808
        %v1991 = vunpack.c.0.s8 %v1990
        %v1992 = vlaneseq
        %v1993 = vshrl.u32 %v1992, 7
        %v1994 = vsub.s32 %v1991, %v1993
        %v1995 = vrot.slane %v1952, %v1994
        %v1996 = vcombine.high %v1995, %v1995
        %v1998 = vunpack.c.l.s4 1983009808
        %v1999 = vunpack.c.0.s8 %v1998
        %v2000 = vlaneseq
        %v2001 = vshrl.u32 %v2000, 7
        %v2002 = vsub.s32 %v1999, %v2001
        %v2003 = vrot.slane %v1953, %v2002
        %v2004 = vcombine.high %v2003, %v2003
        %v2006 = vunpack.c.l.s4 1983009808
        %v2007 = vunpack.c.0.s8 %v2006
        %v2008 = vlaneseq
        %v2009 = vshrl.u32 %v2008, 7
        %v2010 = vsub.s32 %v2007, %v2009
        %v2011 = vrot.slane %v1954, %v2010
        %v2012 = vcombine.high %v2011, %v2011
        %v2014 = vunpack.c.l.s4 1983009808
        %v2015 = vunpack.c.0.s8 %v2014
        %v2016 = vlaneseq
        %v2017 = vshrl.u32 %v2016, 7
        %v2018 = vsub.s32 %v2015, %v2017
        %v2019 = vrot.slane %v1955, %v2018
        %v2020 = vcombine.high %v2019, %v2019
        %v2022 = vunpack.c.l.s4 1983009808
        %v2023 = vunpack.c.0.s8 %v2022
        %v2024 = vlaneseq
        %v2025 = vshrl.u32 %v2024, 7
        %v2026 = vsub.s32 %v2023, %v2025
        %v2027 = vrot.slane %v1956, %v2026
        %v2028 = vcombine.high %v2027, %v2027
        %v2029 = vrot.slane %v1971, 7
        %v2030 = vrot.slane %v2029, 2
        %v2031 = vrot.slane %v1972, 7
        %v2032 = vsel %vm1385, %v2030, %v2031
        %v2033 = vrot.slane %v1979, 7
        %v2034 = vrot.slane %v2033, 2
        %v2035 = vrot.slane %v1980, 7
        %v2036 = vsel %vm1385, %v2034, %v2035
        %v2037 = vrot.slane %v1987, 7
        %v2038 = vrot.slane %v2037, 2
        %v2039 = vrot.slane %v1988, 7
        %v2040 = vsel %vm1385, %v2038, %v2039
        %v2041 = vrot.slane %v1995, 7
        %v2042 = vrot.slane %v2041, 2
        %v2043 = vrot.slane %v1996, 7
        %v2044 = vsel %vm1385, %v2042, %v2043
        %v2045 = vrot.slane %v2003, 7
        %v2046 = vrot.slane %v2045, 2
        %v2047 = vrot.slane %v2004, 7
        %v2048 = vsel %vm1385, %v2046, %v2047
        %v2049 = vrot.slane %v2011, 7
        %v2050 = vrot.slane %v2049, 2
        %v2051 = vrot.slane %v2012, 7
        %v2052 = vsel %vm1385, %v2050, %v2051
        %v2053 = vrot.slane %v2019, 7
        %v2054 = vrot.slane %v2053, 2
        %v2055 = vrot.slane %v2020, 7
        %v2056 = vsel %vm1385, %v2054, %v2055
        %v2057 = vrot.slane %v2027, 7
        %v2058 = vrot.slane %v2057, 2
        %v2059 = vrot.slane %v2028, 7
        %v2060 = vsel %vm1385, %v2058, %v2059
        %2069 = vst.msk [vmem:[#allocation3 + $0x2] sm:$0x3] %vm1442, %v2032
        %2070 = vst.msk [vmem:[#allocation3 + $0x8] sm:$0x3] %vm1442, %v2036
        %2071 = vst.msk [vmem:[#allocation3 + $0xe] sm:$0x3] %vm1442, %v2040
        %2072 = vst.msk [vmem:[#allocation3 + $0x14] sm:$0x3] %vm1442, %v2044
        %2073 = vst.msk [vmem:[#allocation3 + $0x1a] sm:$0x3] %vm1442, %v2048
        %2074 = vst.msk [vmem:[#allocation3 + $0x20] sm:$0x3] %vm1442, %v2052
        %2075 = vst.msk [vmem:[#allocation3 + $0x26] sm:$0x3] %vm1442, %v2056
        %2076 = vst.msk [vmem:[#allocation3 + $0x2c] sm:$0x3] %vm1442, %v2060
        %v2077 = vld [vmem:[%s1057] sm:$0x7]
        %v2078 = vld [vmem:[%s1057 + $0x4] sm:$0x7]
        %v2079 = vld [vmem:[%s1057 + $0x8] sm:$0x7]
        %v2080 = vld [vmem:[%s1057 + $0xc] sm:$0x7]
        %v2081 = vld [vmem:[%s1057 + $0x20] sm:$0x7]
        %v2082 = vld [vmem:[%s1057 + $0x24] sm:$0x7]
        %v2083 = vld [vmem:[%s1057 + $0x28] sm:$0x7]
        %v2084 = vld [vmem:[%s1057 + $0x2c] sm:$0x7]
        %v2094 = vunpack.c.l.s4 1983009808
        %v2095 = vunpack.c.0.s8 %v2094
        %v2096 = vlaneseq
        %v2097 = vshrl.u32 %v2096, 7
        %v2098 = vsub.s32 %v2095, %v2097
        %v2099 = vrot.slane %v2077, %v2098
        %v2100 = vcombine.high %v2099, %v2099
        %v2102 = vunpack.c.l.s4 1983009808
        %v2103 = vunpack.c.0.s8 %v2102
        %v2104 = vlaneseq
        %v2105 = vshrl.u32 %v2104, 7
        %v2106 = vsub.s32 %v2103, %v2105
        %v2107 = vrot.slane %v2078, %v2106
        %v2108 = vcombine.high %v2107, %v2107
        %v2110 = vunpack.c.l.s4 1983009808
        %v2111 = vunpack.c.0.s8 %v2110
        %v2112 = vlaneseq
        %v2113 = vshrl.u32 %v2112, 7
        %v2114 = vsub.s32 %v2111, %v2113
        %v2115 = vrot.slane %v2079, %v2114
        %v2116 = vcombine.high %v2115, %v2115
        %v2118 = vunpack.c.l.s4 1983009808
        %v2119 = vunpack.c.0.s8 %v2118
        %v2120 = vlaneseq
        %v2121 = vshrl.u32 %v2120, 7
        %v2122 = vsub.s32 %v2119, %v2121
        %v2123 = vrot.slane %v2080, %v2122
        %v2124 = vcombine.high %v2123, %v2123
        %v2126 = vunpack.c.l.s4 1983009808
        %v2127 = vunpack.c.0.s8 %v2126
        %v2128 = vlaneseq
        %v2129 = vshrl.u32 %v2128, 7
        %v2130 = vsub.s32 %v2127, %v2129
        %v2131 = vrot.slane %v2081, %v2130
        %v2132 = vcombine.high %v2131, %v2131
        %v2134 = vunpack.c.l.s4 1983009808
        %v2135 = vunpack.c.0.s8 %v2134
        %v2136 = vlaneseq
        %v2137 = vshrl.u32 %v2136, 7
        %v2138 = vsub.s32 %v2135, %v2137
        %v2139 = vrot.slane %v2082, %v2138
        %v2140 = vcombine.high %v2139, %v2139
        %v2142 = vunpack.c.l.s4 1983009808
        %v2143 = vunpack.c.0.s8 %v2142
        %v2144 = vlaneseq
        %v2145 = vshrl.u32 %v2144, 7
        %v2146 = vsub.s32 %v2143, %v2145
        %v2147 = vrot.slane %v2083, %v2146
        %v2148 = vcombine.high %v2147, %v2147
        %v2150 = vunpack.c.l.s4 1983009808
        %v2151 = vunpack.c.0.s8 %v2150
        %v2152 = vlaneseq
        %v2153 = vshrl.u32 %v2152, 7
        %v2154 = vsub.s32 %v2151, %v2153
        %v2155 = vrot.slane %v2084, %v2154
        %v2156 = vcombine.high %v2155, %v2155
        %v2158 = vshrl.u32 %v2099, 16
        %v2160 = vrot.slane %v2158, 6
        %v2161 = vshll.u32 %v2099, 16
        %v2163 = vrot.slane %v2161, 7
        %v2164 = vor.u32 %v2160, %v2163
        %v2165 = vrot.slane %v2164, 2
        %v2167 = vshll.u32 %v2100, 16
        %v2169 = vrot.slane %v2167, 7
        %v2170 = vsel %vm1153, %v2165, %v2169
        %v2172 = vshrl.u32 %v2107, 16
        %v2174 = vrot.slane %v2172, 6
        %v2175 = vshll.u32 %v2107, 16
        %v2177 = vrot.slane %v2175, 7
        %v2178 = vor.u32 %v2174, %v2177
        %v2179 = vrot.slane %v2178, 2
        %v2181 = vshll.u32 %v2108, 16
        %v2183 = vrot.slane %v2181, 7
        %v2184 = vsel %vm1153, %v2179, %v2183
        %v2186 = vshrl.u32 %v2115, 16
        %v2188 = vrot.slane %v2186, 6
        %v2189 = vshll.u32 %v2115, 16
        %v2191 = vrot.slane %v2189, 7
        %v2192 = vor.u32 %v2188, %v2191
        %v2193 = vrot.slane %v2192, 2
        %v2195 = vshll.u32 %v2116, 16
        %v2197 = vrot.slane %v2195, 7
        %v2198 = vsel %vm1153, %v2193, %v2197
        %v2200 = vshrl.u32 %v2123, 16
        %v2202 = vrot.slane %v2200, 6
        %v2203 = vshll.u32 %v2123, 16
        %v2205 = vrot.slane %v2203, 7
        %v2206 = vor.u32 %v2202, %v2205
        %v2207 = vrot.slane %v2206, 2
        %v2209 = vshll.u32 %v2124, 16
        %v2211 = vrot.slane %v2209, 7
        %v2212 = vsel %vm1153, %v2207, %v2211
        %v2214 = vshrl.u32 %v2131, 16
        %v2216 = vrot.slane %v2214, 6
        %v2217 = vshll.u32 %v2131, 16
        %v2219 = vrot.slane %v2217, 7
        %v2220 = vor.u32 %v2216, %v2219
        %v2221 = vrot.slane %v2220, 2
        %v2223 = vshll.u32 %v2132, 16
        %v2225 = vrot.slane %v2223, 7
        %v2226 = vsel %vm1153, %v2221, %v2225
        %v2228 = vshrl.u32 %v2139, 16
        %v2230 = vrot.slane %v2228, 6
        %v2231 = vshll.u32 %v2139, 16
        %v2233 = vrot.slane %v2231, 7
        %v2234 = vor.u32 %v2230, %v2233
        %v2235 = vrot.slane %v2234, 2
        %v2237 = vshll.u32 %v2140, 16
        %v2239 = vrot.slane %v2237, 7
        %v2240 = vsel %vm1153, %v2235, %v2239
        %v2242 = vshrl.u32 %v2147, 16
        %v2244 = vrot.slane %v2242, 6
        %v2245 = vshll.u32 %v2147, 16
        %v2247 = vrot.slane %v2245, 7
        %v2248 = vor.u32 %v2244, %v2247
        %v2249 = vrot.slane %v2248, 2
        %v2251 = vshll.u32 %v2148, 16
        %v2253 = vrot.slane %v2251, 7
        %v2254 = vsel %vm1153, %v2249, %v2253
        %v2256 = vshrl.u32 %v2155, 16
        %v2258 = vrot.slane %v2256, 6
        %v2259 = vshll.u32 %v2155, 16
        %v2261 = vrot.slane %v2259, 7
        %v2262 = vor.u32 %v2258, %v2261
        %v2263 = vrot.slane %v2262, 2
        %v2265 = vshll.u32 %v2156, 16
        %v2267 = vrot.slane %v2265, 7
        %v2268 = vsel %vm1153, %v2263, %v2267
        %2269 = vrot.lane.b32.xlu0 %v2170, 96
        %v2270 = vpop.permute.xlu0 %2269
        %2271 = vrot.lane.b32.xlu0 %v2184, 96
        %v2272 = vpop.permute.xlu0 %2271
        %2273 = vrot.lane.b32.xlu0 %v2198, 96
        %v2274 = vpop.permute.xlu0 %2273
        %2275 = vrot.lane.b32.xlu0 %v2212, 96
        %v2276 = vpop.permute.xlu0 %2275
        %2277 = vrot.lane.b32.xlu0 %v2226, 96
        %v2278 = vpop.permute.xlu0 %2277
        %2279 = vrot.lane.b32.xlu0 %v2240, 96
        %v2280 = vpop.permute.xlu0 %2279
        %2281 = vrot.lane.b32.xlu0 %v2254, 96
        %v2282 = vpop.permute.xlu0 %2281
        %2283 = vrot.lane.b32.xlu0 %v2268, 96
        %v2284 = vpop.permute.xlu0 %2283
        %2293 = vst.msk [vmem:[#allocation3 + $0x2] sm:$0x3] %vm1587, %v2270
        %2294 = vst.msk [vmem:[#allocation3 + $0x8] sm:$0x3] %vm1587, %v2272
        %2295 = vst.msk [vmem:[#allocation3 + $0xe] sm:$0x3] %vm1587, %v2274
        %2296 = vst.msk [vmem:[#allocation3 + $0x14] sm:$0x3] %vm1587, %v2276
        %2297 = vst.msk [vmem:[#allocation3 + $0x1a] sm:$0x3] %vm1587, %v2278
        %2298 = vst.msk [vmem:[#allocation3 + $0x20] sm:$0x3] %vm1587, %v2280
        %2299 = vst.msk [vmem:[#allocation3 + $0x26] sm:$0x3] %vm1587, %v2282
        %2300 = vst.msk [vmem:[#allocation3 + $0x2c] sm:$0x3] %vm1587, %v2284
        %v2301 = vld [vmem:[%s1057] sm:$0x6]
        %v2302 = vld [vmem:[%s1057 + $0x4] sm:$0x6]
        %v2303 = vld [vmem:[%s1057 + $0x8] sm:$0x6]
        %v2304 = vld [vmem:[%s1057 + $0xc] sm:$0x6]
        %v2305 = vld [vmem:[%s1057 + $0x20] sm:$0x6]
        %v2306 = vld [vmem:[%s1057 + $0x24] sm:$0x6]
        %v2307 = vld [vmem:[%s1057 + $0x28] sm:$0x6]
        %v2308 = vld [vmem:[%s1057 + $0x2c] sm:$0x6]
        %v2318 = vunpack.c.l.s4 1983009808
        %v2319 = vunpack.c.0.s8 %v2318
        %v2320 = vlaneseq
        %v2321 = vshrl.u32 %v2320, 7
        %v2322 = vsub.s32 %v2319, %v2321
        %v2323 = vrot.slane %v2301, %v2322
        %v2324 = vcombine.high %v2323, %v2323
        %v2326 = vunpack.c.l.s4 1983009808
        %v2327 = vunpack.c.0.s8 %v2326
        %v2328 = vlaneseq
        %v2329 = vshrl.u32 %v2328, 7
        %v2330 = vsub.s32 %v2327, %v2329
        %v2331 = vrot.slane %v2302, %v2330
        %v2332 = vcombine.high %v2331, %v2331
        %v2334 = vunpack.c.l.s4 1983009808
        %v2335 = vunpack.c.0.s8 %v2334
        %v2336 = vlaneseq
        %v2337 = vshrl.u32 %v2336, 7
        %v2338 = vsub.s32 %v2335, %v2337
        %v2339 = vrot.slane %v2303, %v2338
        %v2340 = vcombine.high %v2339, %v2339
        %v2342 = vunpack.c.l.s4 1983009808
        %v2343 = vunpack.c.0.s8 %v2342
        %v2344 = vlaneseq
        %v2345 = vshrl.u32 %v2344, 7
        %v2346 = vsub.s32 %v2343, %v2345
        %v2347 = vrot.slane %v2304, %v2346
        %v2348 = vcombine.high %v2347, %v2347
        %v2350 = vunpack.c.l.s4 1983009808
        %v2351 = vunpack.c.0.s8 %v2350
        %v2352 = vlaneseq
        %v2353 = vshrl.u32 %v2352, 7
        %v2354 = vsub.s32 %v2351, %v2353
        %v2355 = vrot.slane %v2305, %v2354
        %v2356 = vcombine.high %v2355, %v2355
        %v2358 = vunpack.c.l.s4 1983009808
        %v2359 = vunpack.c.0.s8 %v2358
        %v2360 = vlaneseq
        %v2361 = vshrl.u32 %v2360, 7
        %v2362 = vsub.s32 %v2359, %v2361
        %v2363 = vrot.slane %v2306, %v2362
        %v2364 = vcombine.high %v2363, %v2363
        %v2366 = vunpack.c.l.s4 1983009808
        %v2367 = vunpack.c.0.s8 %v2366
        %v2368 = vlaneseq
        %v2369 = vshrl.u32 %v2368, 7
        %v2370 = vsub.s32 %v2367, %v2369
        %v2371 = vrot.slane %v2307, %v2370
        %v2372 = vcombine.high %v2371, %v2371
        %v2374 = vunpack.c.l.s4 1983009808
        %v2375 = vunpack.c.0.s8 %v2374
        %v2376 = vlaneseq
        %v2377 = vshrl.u32 %v2376, 7
        %v2378 = vsub.s32 %v2375, %v2377
        %v2379 = vrot.slane %v2308, %v2378
        %v2380 = vcombine.high %v2379, %v2379
        %v2381 = vrot.slane %v2323, 7
        %v2382 = vrot.slane %v2381, 2
        %v2383 = vrot.slane %v2324, 7
        %v2384 = vsel %vm1385, %v2382, %v2383
        %v2385 = vrot.slane %v2331, 7
        %v2386 = vrot.slane %v2385, 2
        %v2387 = vrot.slane %v2332, 7
        %v2388 = vsel %vm1385, %v2386, %v2387
        %v2389 = vrot.slane %v2339, 7
        %v2390 = vrot.slane %v2389, 2
        %v2391 = vrot.slane %v2340, 7
        %v2392 = vsel %vm1385, %v2390, %v2391
        %v2393 = vrot.slane %v2347, 7
        %v2394 = vrot.slane %v2393, 2
        %v2395 = vrot.slane %v2348, 7
        %v2396 = vsel %vm1385, %v2394, %v2395
        %v2397 = vrot.slane %v2355, 7
        %v2398 = vrot.slane %v2397, 2
        %v2399 = vrot.slane %v2356, 7
        %v2400 = vsel %vm1385, %v2398, %v2399
        %v2401 = vrot.slane %v2363, 7
        %v2402 = vrot.slane %v2401, 2
        %v2403 = vrot.slane %v2364, 7
        %v2404 = vsel %vm1385, %v2402, %v2403
        %v2405 = vrot.slane %v2371, 7
        %v2406 = vrot.slane %v2405, 2
        %v2407 = vrot.slane %v2372, 7
        %v2408 = vsel %vm1385, %v2406, %v2407
        %v2409 = vrot.slane %v2379, 7
        %v2410 = vrot.slane %v2409, 2
        %v2411 = vrot.slane %v2380, 7
        %v2412 = vsel %vm1385, %v2410, %v2411
        %2413 = vrot.lane.b32.xlu0 %v2384, 32
        %v2414 = vpop.permute.xlu0 %2413
        %2415 = vrot.lane.b32.xlu0 %v2388, 32
        %v2416 = vpop.permute.xlu0 %2415
        %2417 = vrot.lane.b32.xlu0 %v2392, 32
        %v2418 = vpop.permute.xlu0 %2417
        %2419 = vrot.lane.b32.xlu0 %v2396, 32
        %v2420 = vpop.permute.xlu0 %2419
        %2421 = vrot.lane.b32.xlu0 %v2400, 32
        %v2422 = vpop.permute.xlu0 %2421
        %2423 = vrot.lane.b32.xlu0 %v2404, 32
        %v2424 = vpop.permute.xlu0 %2423
        %2425 = vrot.lane.b32.xlu0 %v2408, 32
        %v2426 = vpop.permute.xlu0 %2425
        %2427 = vrot.lane.b32.xlu0 %v2412, 32
        %v2428 = vpop.permute.xlu0 %2427
        %2437 = vst.msk [vmem:[#allocation3 + $0x2] sm:$0x3] %vm1812, %v2414
        %2438 = vst.msk [vmem:[#allocation3 + $0x8] sm:$0x3] %vm1812, %v2416
        %2439 = vst.msk [vmem:[#allocation3 + $0xe] sm:$0x3] %vm1812, %v2418
        %2440 = vst.msk [vmem:[#allocation3 + $0x14] sm:$0x3] %vm1812, %v2420
        %2441 = vst.msk [vmem:[#allocation3 + $0x1a] sm:$0x3] %vm1812, %v2422
        %2442 = vst.msk [vmem:[#allocation3 + $0x20] sm:$0x3] %vm1812, %v2424
        %2443 = vst.msk [vmem:[#allocation3 + $0x26] sm:$0x3] %vm1812, %v2426
        %2444 = vst.msk [vmem:[#allocation3 + $0x2c] sm:$0x3] %vm1812, %v2428
        %v2445 = vld [vmem:[%s1057] sm:$0x6]
        %v2446 = vld [vmem:[%s1057 + $0x4] sm:$0x6]
        %v2447 = vld [vmem:[%s1057 + $0x8] sm:$0x6]
        %v2448 = vld [vmem:[%s1057 + $0xc] sm:$0x6]
        %v2449 = vld [vmem:[%s1057 + $0x20] sm:$0x6]
        %v2450 = vld [vmem:[%s1057 + $0x24] sm:$0x6]
        %v2451 = vld [vmem:[%s1057 + $0x28] sm:$0x6]
        %v2452 = vld [vmem:[%s1057 + $0x2c] sm:$0x6]
        %v2462 = vunpack.c.l.s4 1983009808
        %v2463 = vunpack.c.0.s8 %v2462
        %v2464 = vlaneseq
        %v2465 = vshrl.u32 %v2464, 7
        %v2466 = vsub.s32 %v2463, %v2465
        %v2467 = vrot.slane %v2445, %v2466
        %v2468 = vcombine.high %v2467, %v2467
        %v2470 = vunpack.c.l.s4 1983009808
        %v2471 = vunpack.c.0.s8 %v2470
        %v2472 = vlaneseq
        %v2473 = vshrl.u32 %v2472, 7
        %v2474 = vsub.s32 %v2471, %v2473
        %v2475 = vrot.slane %v2446, %v2474
        %v2476 = vcombine.high %v2475, %v2475
        %v2478 = vunpack.c.l.s4 1983009808
        %v2479 = vunpack.c.0.s8 %v2478
        %v2480 = vlaneseq
        %v2481 = vshrl.u32 %v2480, 7
        %v2482 = vsub.s32 %v2479, %v2481
        %v2483 = vrot.slane %v2447, %v2482
        %v2484 = vcombine.high %v2483, %v2483
        %v2486 = vunpack.c.l.s4 1983009808
        %v2487 = vunpack.c.0.s8 %v2486
        %v2488 = vlaneseq
        %v2489 = vshrl.u32 %v2488, 7
        %v2490 = vsub.s32 %v2487, %v2489
        %v2491 = vrot.slane %v2448, %v2490
        %v2492 = vcombine.high %v2491, %v2491
        %v2494 = vunpack.c.l.s4 1983009808
        %v2495 = vunpack.c.0.s8 %v2494
        %v2496 = vlaneseq
        %v2497 = vshrl.u32 %v2496, 7
        %v2498 = vsub.s32 %v2495, %v2497
        %v2499 = vrot.slane %v2449, %v2498
        %v2500 = vcombine.high %v2499, %v2499
        %v2502 = vunpack.c.l.s4 1983009808
        %v2503 = vunpack.c.0.s8 %v2502
        %v2504 = vlaneseq
        %v2505 = vshrl.u32 %v2504, 7
        %v2506 = vsub.s32 %v2503, %v2505
        %v2507 = vrot.slane %v2450, %v2506
        %v2508 = vcombine.high %v2507, %v2507
        %v2510 = vunpack.c.l.s4 1983009808
        %v2511 = vunpack.c.0.s8 %v2510
        %v2512 = vlaneseq
        %v2513 = vshrl.u32 %v2512, 7
        %v2514 = vsub.s32 %v2511, %v2513
        %v2515 = vrot.slane %v2451, %v2514
        %v2516 = vcombine.high %v2515, %v2515
        %v2518 = vunpack.c.l.s4 1983009808
        %v2519 = vunpack.c.0.s8 %v2518
        %v2520 = vlaneseq
        %v2521 = vshrl.u32 %v2520, 7
        %v2522 = vsub.s32 %v2519, %v2521
        %v2523 = vrot.slane %v2452, %v2522
        %v2524 = vcombine.high %v2523, %v2523
        %v2525 = vrot.slane %v2467, 7
        %v2526 = vrot.slane %v2525, 2
        %v2527 = vrot.slane %v2468, 7
        %v2528 = vsel %vm1385, %v2526, %v2527
        %v2529 = vrot.slane %v2475, 7
        %v2530 = vrot.slane %v2529, 2
        %v2531 = vrot.slane %v2476, 7
        %v2532 = vsel %vm1385, %v2530, %v2531
        %v2533 = vrot.slane %v2483, 7
        %v2534 = vrot.slane %v2533, 2
        %v2535 = vrot.slane %v2484, 7
        %v2536 = vsel %vm1385, %v2534, %v2535
        %v2537 = vrot.slane %v2491, 7
        %v2538 = vrot.slane %v2537, 2
        %v2539 = vrot.slane %v2492, 7
        %v2540 = vsel %vm1385, %v2538, %v2539
        %v2541 = vrot.slane %v2499, 7
        %v2542 = vrot.slane %v2541, 2
        %v2543 = vrot.slane %v2500, 7
        %v2544 = vsel %vm1385, %v2542, %v2543
        %v2545 = vrot.slane %v2507, 7
        %v2546 = vrot.slane %v2545, 2
        %v2547 = vrot.slane %v2508, 7
        %v2548 = vsel %vm1385, %v2546, %v2547
        %v2549 = vrot.slane %v2515, 7
        %v2550 = vrot.slane %v2549, 2
        %v2551 = vrot.slane %v2516, 7
        %v2552 = vsel %vm1385, %v2550, %v2551
        %v2553 = vrot.slane %v2523, 7
        %v2554 = vrot.slane %v2553, 2
        %v2555 = vrot.slane %v2524, 7
        %v2556 = vsel %vm1385, %v2554, %v2555
        %2557 = vrot.lane.b32.xlu0 %v2528, 32
        %v2558 = vpop.permute.xlu0 %2557
        %2559 = vrot.lane.b32.xlu0 %v2532, 32
        %v2560 = vpop.permute.xlu0 %2559
        %2561 = vrot.lane.b32.xlu0 %v2536, 32
        %v2562 = vpop.permute.xlu0 %2561
        %2563 = vrot.lane.b32.xlu0 %v2540, 32
        %v2564 = vpop.permute.xlu0 %2563
        %2565 = vrot.lane.b32.xlu0 %v2544, 32
        %v2566 = vpop.permute.xlu0 %2565
        %2567 = vrot.lane.b32.xlu0 %v2548, 32
        %v2568 = vpop.permute.xlu0 %2567
        %2569 = vrot.lane.b32.xlu0 %v2552, 32
        %v2570 = vpop.permute.xlu0 %2569
        %2571 = vrot.lane.b32.xlu0 %v2556, 32
        %v2572 = vpop.permute.xlu0 %2571
        %2581 = vst.msk [vmem:[#allocation3 + $0x4] sm:$0x3] %vm1290, %v2558
        %2582 = vst.msk [vmem:[#allocation3 + $0xa] sm:$0x3] %vm1290, %v2560
        %2583 = vst.msk [vmem:[#allocation3 + $0x10] sm:$0x3] %vm1290, %v2562
        %2584 = vst.msk [vmem:[#allocation3 + $0x16] sm:$0x3] %vm1290, %v2564
        %2585 = vst.msk [vmem:[#allocation3 + $0x1c] sm:$0x3] %vm1290, %v2566
        %2586 = vst.msk [vmem:[#allocation3 + $0x22] sm:$0x3] %vm1290, %v2568
        %2587 = vst.msk [vmem:[#allocation3 + $0x28] sm:$0x3] %vm1290, %v2570
        %2588 = vst.msk [vmem:[#allocation3 + $0x2e] sm:$0x3] %vm1290, %v2572
        %v2589 = vld [vmem:[#allocation3] sm:$0x3f]
        %v2590 = vld [vmem:[#allocation3 + $0x6] sm:$0x3f]
        %v2591 = vld [vmem:[#allocation3 + $0xc] sm:$0x3f]
        %v2592 = vld [vmem:[#allocation3 + $0x12] sm:$0x3f]
        %v2593 = vld [vmem:[#allocation3 + $0x18] sm:$0x3f]
        %v2594 = vld [vmem:[#allocation3 + $0x1e] sm:$0x3f]
        %v2595 = vld [vmem:[#allocation3 + $0x24] sm:$0x3f]
        %v2596 = vld [vmem:[#allocation3 + $0x2a] sm:$0x3f]
        %v2597 = vld [vmem:[%s3] sm:$0xf]
        %v2598 = vld [vmem:[%s3 + $0x4] sm:$0xf]
        %v2599 = vld [vmem:[%s3 + $0x8] sm:$0xf]
        %v2600 = vld [vmem:[%s3 + $0xc] sm:$0xf]
        %v2601 = vld [vmem:[%s3 + $0x10] sm:$0xf]
        %v2602 = vld [vmem:[%s3 + $0x14] sm:$0xf]
        %v2603 = vld [vmem:[%s3 + $0x18] sm:$0xf]
        %v2604 = vld [vmem:[%s3 + $0x1c] sm:$0xf]
        %v2605 = vld [vmem:[%s3 + $0x20] sm:$0xf]
        %v2606 = vld [vmem:[%s3 + $0x24] sm:$0xf]
        %v2607 = vld [vmem:[%s3 + $0x28] sm:$0xf]
        %v2608 = vld [vmem:[%s3 + $0x2c] sm:$0xf]
        %v2609 = vld [vmem:[%s3 + $0x30] sm:$0xf]
        %v2610 = vld [vmem:[%s3 + $0x34] sm:$0xf]
        %v2611 = vld [vmem:[%s3 + $0x38] sm:$0xf]
        %v2612 = vld [vmem:[%s3 + $0x3c] sm:$0xf]
        %v2613 = vld [vmem:[%s3 + $0x40] sm:$0xf]
        %v2614 = vld [vmem:[%s3 + $0x44] sm:$0xf]
        %v2615 = vld [vmem:[%s3 + $0x48] sm:$0xf]
        %v2616 = vld [vmem:[%s3 + $0x4c] sm:$0xf]
        %v2617 = vld [vmem:[%s3 + $0x50] sm:$0xf]
        %v2618 = vld [vmem:[%s3 + $0x54] sm:$0xf]
        %v2619 = vld [vmem:[%s3 + $0x58] sm:$0xf]
        %v2620 = vld [vmem:[%s3 + $0x5c] sm:$0xf]
        %v2621 = vld [vmem:[%s3 + $0x60] sm:$0xf]
        %v2622 = vld [vmem:[%s3 + $0x64] sm:$0xf]
        %v2623 = vld [vmem:[%s3 + $0x68] sm:$0xf]
        %v2624 = vld [vmem:[%s3 + $0x6c] sm:$0xf]
        %v2625 = vld [vmem:[%s3 + $0x70] sm:$0xf]
        %v2626 = vld [vmem:[%s3 + $0x74] sm:$0xf]
        %v2627 = vld [vmem:[%s3 + $0x78] sm:$0xf]
        %v2628 = vld [vmem:[%s3 + $0x7c] sm:$0xf]
        %v2629 = vld [vmem:[%s3 + $0x80] sm:$0xf]
        %v2630 = vld [vmem:[%s3 + $0x84] sm:$0xf]
        %v2631 = vld [vmem:[%s3 + $0x88] sm:$0xf]
        %v2632 = vld [vmem:[%s3 + $0x8c] sm:$0xf]
        %v2633 = vld [vmem:[%s4] sm:$0x1]
        %v2635 = vlaneseq
        %v2636 = vshrl.u32 %v2635, 7
        %v2637 = vsub.s32 0, %v2636
        %v2638 = vrot.slane %v2633, %v2637
        %v2648 = vcombine.low %v2589, %v2590
        %v2649 = vcombine.high %v2589, %v2590
        %v2650 = vcombine.low %v2591, %v2592
        %v2651 = vcombine.high %v2591, %v2592
        %v2653 = vunpack.c.l.s4 1983009808
        %v2654 = vunpack.c.0.s8 %v2653
        %v2655 = vlaneseq
        %v2656 = vshrl.u32 %v2655, 7
        %v2657 = vsub.s32 %v2654, %v2656
        %v2658 = vrot.slane %v2648, %v2657
        %v2660 = vunpack.c.l.s4 1983009808
        %v2661 = vunpack.c.0.s8 %v2660
        %v2662 = vlaneseq
        %v2663 = vshrl.u32 %v2662, 7
        %v2664 = vsub.s32 %v2661, %v2663
        %v2665 = vrot.slane %v2649, %v2664
        %v2667 = vunpack.c.l.s4 1983009808
        %v2668 = vunpack.c.0.s8 %v2667
        %v2669 = vlaneseq
        %v2670 = vshrl.u32 %v2669, 7
        %v2671 = vsub.s32 %v2668, %v2670
        %v2672 = vrot.slane %v2650, %v2671
        %v2674 = vunpack.c.l.s4 1983009808
        %v2675 = vunpack.c.0.s8 %v2674
        %v2676 = vlaneseq
        %v2677 = vshrl.u32 %v2676, 7
        %v2678 = vsub.s32 %v2675, %v2677
        %v2679 = vrot.slane %v2651, %v2678
        %v2680 = vcombine.low %v2658, %v2672
        %v2681 = vcombine.high %v2658, %v2672
        %v2682 = vcombine.low %v2665, %v2679
        %v2683 = vcombine.low %v2593, %v2594
        %v2684 = vcombine.high %v2593, %v2594
        %v2685 = vcombine.low %v2595, %v2596
        %v2686 = vcombine.high %v2595, %v2596
        %v2688 = vunpack.c.l.s4 1983009808
        %v2689 = vunpack.c.0.s8 %v2688
        %v2690 = vlaneseq
        %v2691 = vshrl.u32 %v2690, 7
        %v2692 = vsub.s32 %v2689, %v2691
        %v2693 = vrot.slane %v2683, %v2692
        %v2695 = vunpack.c.l.s4 1983009808
        %v2696 = vunpack.c.0.s8 %v2695
        %v2697 = vlaneseq
        %v2698 = vshrl.u32 %v2697, 7
        %v2699 = vsub.s32 %v2696, %v2698
        %v2700 = vrot.slane %v2684, %v2699
        %v2702 = vunpack.c.l.s4 1983009808
        %v2703 = vunpack.c.0.s8 %v2702
        %v2704 = vlaneseq
        %v2705 = vshrl.u32 %v2704, 7
        %v2706 = vsub.s32 %v2703, %v2705
        %v2707 = vrot.slane %v2685, %v2706
        %v2709 = vunpack.c.l.s4 1983009808
        %v2710 = vunpack.c.0.s8 %v2709
        %v2711 = vlaneseq
        %v2712 = vshrl.u32 %v2711, 7
        %v2713 = vsub.s32 %v2710, %v2712
        %v2714 = vrot.slane %v2686, %v2713
        %v2715 = vcombine.low %v2693, %v2707
        %v2716 = vcombine.high %v2693, %v2707
        %v2717 = vcombine.low %v2700, %v2714
        %v2758 = vunpack.c.l.b16 %v2597
        %v2759 = vunpack.c.l.b16 %v2598
        %v2760 = vunpack.c.l.b16 %v2599
        %v2761 = vunpack.c.l.b16 %v2600
        %v2762 = vunpack.c.l.b16 %v2601
        %v2763 = vunpack.c.l.b16 %v2602
        %v2764 = vunpack.c.l.b16 %v2603
        %v2765 = vunpack.c.l.b16 %v2604
        %v2766 = vunpack.c.l.b16 %v2605
        %v2767 = vunpack.c.l.b16 %v2606
        %v2768 = vunpack.c.l.b16 %v2607
        %v2769 = vunpack.c.l.b16 %v2608
        %v2770 = vunpack.c.l.b16 %v2609
        %v2771 = vunpack.c.l.b16 %v2610
        %v2772 = vunpack.c.l.b16 %v2611
        %v2773 = vunpack.c.l.b16 %v2612
        %v2774 = vunpack.c.l.b16 %v2613
        %v2775 = vunpack.c.l.b16 %v2614
        %v2776 = vunpack.c.l.b16 %v2615
        %v2777 = vunpack.c.l.b16 %v2616
        %v2778 = vunpack.c.l.b16 %v2617
        %v2779 = vunpack.c.l.b16 %v2618
        %v2780 = vunpack.c.l.b16 %v2619
        %v2781 = vunpack.c.l.b16 %v2620
        %v2782 = vunpack.c.l.b16 %v2621
        %v2783 = vunpack.c.l.b16 %v2622
        %v2784 = vunpack.c.l.b16 %v2623
        %v2785 = vunpack.c.l.b16 %v2624
        %v2786 = vunpack.c.l.b16 %v2625
        %v2787 = vunpack.c.l.b16 %v2626
        %v2788 = vunpack.c.l.b16 %v2627
        %v2789 = vunpack.c.l.b16 %v2628
        %v2790 = vunpack.c.l.b16 %v2629
        %v2791 = vunpack.c.l.b16 %v2630
        %v2792 = vunpack.c.l.b16 %v2631
        %v2793 = vunpack.c.l.b16 %v2632
        %v2794 = vpack.c.b16 %v2759, %v2758
        %v2795 = vpack.c.b16 %v2761, %v2760
        %v2796 = vpack.c.b16 %v2763, %v2762
        %v2797 = vpack.c.b16 %v2765, %v2764
        %v2798 = vpack.c.b16 %v2767, %v2766
        %v2799 = vpack.c.b16 %v2769, %v2768
        %v2800 = vpack.c.b16 %v2771, %v2770
        %v2801 = vpack.c.b16 %v2773, %v2772
        %v2802 = vpack.c.b16 %v2775, %v2774
        %v2803 = vpack.c.b16 %v2777, %v2776
        %v2804 = vpack.c.b16 %v2779, %v2778
        %v2805 = vpack.c.b16 %v2781, %v2780
        %v2806 = vpack.c.b16 %v2783, %v2782
        %v2807 = vpack.c.b16 %v2785, %v2784
        %v2808 = vpack.c.b16 %v2787, %v2786
        %v2809 = vpack.c.b16 %v2789, %v2788
        %v2810 = vpack.c.b16 %v2791, %v2790
        %v2811 = vpack.c.b16 %v2793, %v2792
        %vm2830 = vcmask 261120
        %v2832 = vsel %vm2830, %v2682, 0
        %v2835 = vsel %vm2830, %v2717, 0
        %2837 = vmatprep.subr.bf16.mxu0 0
        %2838 = vmatpush1.bf16.msra.mxu0 %v2801
        %2839 = vmatprep.subr.bf16.mxu0 0
        %2840 = vmatpush1.bf16.msra.mxu0 %v2800
        %2841 = vmatprep.subr.bf16.mxu0 0
        %2842 = vmatpush1.bf16.msra.mxu0 %v2799
        %2843 = vmatprep.subr.bf16.mxu0 0
        %2844 = vmatpush1.bf16.msra.mxu0 %v2798
        %2845 = vmatprep.subr.bf16.mxu0 0
        %2846 = vmatpush1.bf16.msra.mxu0 %v2797
        %2847 = vmatprep.subr.bf16.mxu0 0
        %2848 = vmatpush1.bf16.msra.mxu0 %v2796
        %2849 = vmatprep.subr.bf16.mxu0 0
        %2850 = vmatpush1.bf16.msra.mxu0 %v2795
        %2851 = vmatprep.subr.bf16.mxu0 0
        %2852 = vmatpush1.bf16.msra.mxu0 %v2794
        %2853 = vmatprep.subr.bf16.mxu0 0
        %2854 = vmatpush2.bf16.msra.mxu0 %v2809
        %2855 = vmatprep.subr.bf16.mxu0 0
        %2856 = vmatpush2.bf16.msra.mxu0 %v2808
        %2857 = vmatprep.subr.bf16.mxu0 0
        %2858 = vmatpush2.bf16.msra.mxu0 %v2807
        %2859 = vmatprep.subr.bf16.mxu0 0
        %2860 = vmatpush2.bf16.msra.mxu0 %v2806
        %2861 = vmatprep.subr.bf16.mxu0 0
        %2862 = vmatpush2.bf16.msra.mxu0 %v2805
        %2863 = vmatprep.subr.bf16.mxu0 0
        %2864 = vmatpush2.bf16.msra.mxu0 %v2804
        %2865 = vmatprep.subr.bf16.mxu0 0
        %2866 = vmatpush2.bf16.msra.mxu0 %v2803
        %2867 = vmatprep.subr.bf16.mxu0 0
        %2868 = vmatpush2.bf16.msra.mxu0 %v2802
        %2869 = vmatprep.mubr.bf16.mxu0 %v2681
        %2870 = vmatmul.mubr.bf16.gmra.mxu0 %v2680
        %v2871 = vpop.f32.mrf.mxu0
        %v2872 = vadd.f32 %v2638, %v2871
        %v2873 = vpop.f32.mrf.mxu0
        %v2874 = vpop.f32.mrf.mxu0
        %v2875 = vadd.f32 %v2638, %v2874
        %v2876 = vpop.f32.mrf.mxu0
        %2877 = vmatprep.mubr.bf16.mxu0 %v2716
        %2878 = vmatmul.mubr.bf16.gmra.mxu0 %v2715
        %v2879 = vpop.f32.mrf.mxu0
        %v2880 = vadd.f32 %v2638, %v2879
        %v2881 = vpop.f32.mrf.mxu0
        %v2882 = vpop.f32.mrf.mxu0
        %v2883 = vadd.f32 %v2638, %v2882
        %v2884 = vpop.f32.mrf.mxu0
        %2885 = vdwg.mxu0
        %2886 = vmatprep.subr.bf16.mxu0 0
        %2887 = vmatpush1.bf16.msra.mxu0 0
        %2888 = vmatprep.subr.bf16.mxu0 0
        %2889 = vmatpush1.bf16.msra.mxu0 0
        %2890 = vmatprep.subr.bf16.mxu0 0
        %2891 = vmatpush1.bf16.msra.mxu0 0
        %2892 = vmatprep.subr.bf16.mxu0 0
        %2893 = vmatpush1.bf16.msra.mxu0 0
        %2894 = vmatprep.subr.bf16.mxu0 0
        %2895 = vmatpush1.bf16.msra.mxu0 0
        %2896 = vmatprep.subr.bf16.mxu0 0
        %2897 = vmatpush1.bf16.msra.mxu0 0
        %2898 = vmatprep.subr.bf16.mxu0 0
        %2899 = vmatpush1.bf16.msra.mxu0 %v2811
        %2900 = vmatprep.subr.bf16.mxu0 0
        %2901 = vmatpush1.bf16.msra.mxu0 %v2810
        %2902 = vmatprep.subr.bf16.mxu0 0
        %2903 = vmatpush2.bf16.msra.mxu0 0
        %2904 = vmatprep.subr.bf16.mxu0 0
        %2905 = vmatpush2.bf16.msra.mxu0 0
        %2906 = vmatprep.subr.bf16.mxu0 0
        %2907 = vmatpush2.bf16.msra.mxu0 0
        %2908 = vmatprep.subr.bf16.mxu0 0
        %2909 = vmatpush2.bf16.msra.mxu0 0
        %2910 = vmatprep.subr.bf16.mxu0 0
        %2911 = vmatpush2.bf16.msra.mxu0 0
        %2912 = vmatprep.subr.bf16.mxu0 0
        %2913 = vmatpush2.bf16.msra.mxu0 0
        %2914 = vmatprep.subr.bf16.mxu0 0
        %2915 = vmatpush2.bf16.msra.mxu0 0
        %2916 = vmatprep.subr.bf16.mxu0 0
        %2917 = vmatpush2.bf16.msra.mxu0 0
        %2918 = vmatprep.mubr.bf16.mxu0 0
        %2919 = vmatmul.mubr.bf16.gmra.mxu0 %v2832
        %v2920 = vpop.f32.mrf.mxu0
        %v2921 = vadd.f32 %v2872, %v2920
        %v2922 = vpop.f32.mrf.mxu0
        %v2923 = vpop.f32.mrf.mxu0
        %v2924 = vadd.f32 %v2875, %v2923
        %v2925 = vpop.f32.mrf.mxu0
        %2926 = vmatprep.mubr.bf16.mxu0 0
        %2927 = vmatmul.mubr.bf16.gmra.mxu0 %v2835
        %v2928 = vpop.f32.mrf.mxu0
        %v2929 = vadd.f32 %v2880, %v2928
        %v2930 = vpop.f32.mrf.mxu0
        %v2931 = vpop.f32.mrf.mxu0
        %v2932 = vadd.f32 %v2883, %v2931
        %v2933 = vpop.f32.mrf.mxu0
        %2934 = vdwg.mxu0
        %v2935 = vmax.f32 %v2921, 0.0
        %v2936 = vmax.f32 %v2924, 0.0
        %v2937 = vmax.f32 %v2929, 0.0
        %v2938 = vmax.f32 %v2932, 0.0
        %v2939 = vpack.c.bf16 %v2936, %v2935
        %v2940 = vpack.c.bf16 %v2938, %v2937
        %v2941 = vld [vmem:[%s5] sm:$0xf]
        %v2942 = vld [vmem:[%s5 + $0x4] sm:$0xf]
        %v2943 = vld [vmem:[%s5 + $0x8] sm:$0xf]
        %v2944 = vld [vmem:[%s5 + $0xc] sm:$0xf]
        %v2945 = vld [vmem:[%s6] sm:$0x1]
        %v2947 = vlaneseq
        %v2948 = vshrl.u32 %v2947, 7
        %v2949 = vsub.s32 0, %v2948
        %v2950 = vrot.slane %v2945, %v2949
        %v2956 = vunpack.c.l.b16 %v2941
        %v2957 = vunpack.c.l.b16 %v2942
        %v2958 = vunpack.c.l.b16 %v2943
        %v2959 = vunpack.c.l.b16 %v2944
        %v2960 = vpack.c.b16 %v2957, %v2956
        %v2961 = vpack.c.b16 %v2959, %v2958
        %v2965 = vsel %vm2830, %v2939, 0
        %v2968 = vsel %vm2830, %v2940, 0
        %2970 = vmatprep.subr.bf16.mxu0 0
        %2971 = vmatpush1.bf16.msra.mxu0 0
        %2972 = vmatprep.subr.bf16.mxu0 0
        %2973 = vmatpush1.bf16.msra.mxu0 0
        %2974 = vmatprep.subr.bf16.mxu0 0
        %2975 = vmatpush1.bf16.msra.mxu0 0
        %2976 = vmatprep.subr.bf16.mxu0 0
        %2977 = vmatpush1.bf16.msra.mxu0 0
        %2978 = vmatprep.subr.bf16.mxu0 0
        %2979 = vmatpush1.bf16.msra.mxu0 0
        %2980 = vmatprep.subr.bf16.mxu0 0
        %2981 = vmatpush1.bf16.msra.mxu0 0
        %2982 = vmatprep.subr.bf16.mxu0 0
        %2983 = vmatpush1.bf16.msra.mxu0 %v2961
        %2984 = vmatprep.subr.bf16.mxu0 0
        %2985 = vmatpush1.bf16.msra.mxu0 %v2960
        %2986 = vmatprep.subr.bf16.mxu0 0
        %2987 = vmatpush2.bf16.msra.mxu0 0
        %2988 = vmatprep.subr.bf16.mxu0 0
        %2989 = vmatpush2.bf16.msra.mxu0 0
        %2990 = vmatprep.subr.bf16.mxu0 0
        %2991 = vmatpush2.bf16.msra.mxu0 0
        %2992 = vmatprep.subr.bf16.mxu0 0
        %2993 = vmatpush2.bf16.msra.mxu0 0
        %2994 = vmatprep.subr.bf16.mxu0 0
        %2995 = vmatpush2.bf16.msra.mxu0 0
        %2996 = vmatprep.subr.bf16.mxu0 0
        %2997 = vmatpush2.bf16.msra.mxu0 0
        %2998 = vmatprep.subr.bf16.mxu0 0
        %2999 = vmatpush2.bf16.msra.mxu0 0
        %3000 = vmatprep.subr.bf16.mxu0 0
        %3001 = vmatpush2.bf16.msra.mxu0 0
        %3002 = vmatprep.mubr.bf16.mxu0 0
        %3003 = vmatmul.mubr.bf16.gmra.mxu0 %v2965
        %v3004 = vpop.f32.mrf.mxu0
        %v3005 = vadd.f32 %v2950, %v3004
        %v3006 = vpop.f32.mrf.mxu0
        %v3007 = vpop.f32.mrf.mxu0
        %v3008 = vadd.f32 %v2950, %v3007
        %v3009 = vpop.f32.mrf.mxu0
        %3010 = vmatprep.mubr.bf16.mxu0 0
        %3011 = vmatmul.mubr.bf16.gmra.mxu0 %v2968
        %v3012 = vpop.f32.mrf.mxu0
        %v3013 = vadd.f32 %v2950, %v3012
        %v3014 = vpop.f32.mrf.mxu0
        %v3015 = vpop.f32.mrf.mxu0
        %v3016 = vadd.f32 %v2950, %v3015
        %v3017 = vpop.f32.mrf.mxu0
        %3018 = vdwg.mxu0
        %v3019 = vld [vmem:[%s7] sm:$0xf]
        %v3020 = vld [vmem:[%s7 + $0x4] sm:$0xf]
        %v3021 = vld [vmem:[%s7 + $0x8] sm:$0xf]
        %v3022 = vld [vmem:[%s7 + $0xc] sm:$0xf]
        %v3023 = vld [vmem:[%s7 + $0x10] sm:$0xf]
        %v3024 = vld [vmem:[%s7 + $0x14] sm:$0xf]
        %v3025 = vld [vmem:[%s7 + $0x18] sm:$0xf]
        %v3026 = vld [vmem:[%s7 + $0x1c] sm:$0xf]
        %v3027 = vld [vmem:[%s8] sm:$0x1]
        %v3029 = vlaneseq
        %v3030 = vshrl.u32 %v3029, 7
        %v3031 = vsub.s32 0, %v3030
        %v3032 = vrot.slane %v3027, %v3031
        %v3042 = vunpack.c.l.b16 %v3019
        %v3043 = vunpack.c.l.b16 %v3020
        %v3044 = vunpack.c.l.b16 %v3021
        %v3045 = vunpack.c.l.b16 %v3022
        %v3046 = vunpack.c.l.b16 %v3023
        %v3047 = vunpack.c.l.b16 %v3024
        %v3048 = vunpack.c.l.b16 %v3025
        %v3049 = vunpack.c.l.b16 %v3026
        %v3050 = vpack.c.b16 %v3043, %v3042
        %v3051 = vpack.c.b16 %v3045, %v3044
        %v3052 = vpack.c.b16 %v3047, %v3046
        %v3053 = vpack.c.b16 %v3049, %v3048
        %vm3058 = vcmask 523264
        %v3060 = vsel %vm3058, %v774, 0
        %v3063 = vsel %vm3058, %v792, 0
        %3065 = vmatprep.subr.bf16.mxu0 0
        %3066 = vmatpush1.bf16.msra.mxu0 0
        %3067 = vmatprep.subr.bf16.mxu0 0
        %3068 = vmatpush1.bf16.msra.mxu0 0
        %3069 = vmatprep.subr.bf16.mxu0 0
        %3070 = vmatpush1.bf16.msra.mxu0 0
        %3071 = vmatprep.subr.bf16.mxu0 0
        %3072 = vmatpush1.bf16.msra.mxu0 0
        %3073 = vmatprep.subr.bf16.mxu0 0
        %3074 = vmatpush1.bf16.msra.mxu0 %v3053
        %3075 = vmatprep.subr.bf16.mxu0 0
        %3076 = vmatpush1.bf16.msra.mxu0 %v3052
        %3077 = vmatprep.subr.bf16.mxu0 0
        %3078 = vmatpush1.bf16.msra.mxu0 %v3051
        %3079 = vmatprep.subr.bf16.mxu0 0
        %3080 = vmatpush1.bf16.msra.mxu0 %v3050
        %3081 = vmatprep.subr.bf16.mxu0 0
        %3082 = vmatpush2.bf16.msra.mxu0 0
        %3083 = vmatprep.subr.bf16.mxu0 0
        %3084 = vmatpush2.bf16.msra.mxu0 0
        %3085 = vmatprep.subr.bf16.mxu0 0
        %3086 = vmatpush2.bf16.msra.mxu0 0
        %3087 = vmatprep.subr.bf16.mxu0 0
        %3088 = vmatpush2.bf16.msra.mxu0 0
        %3089 = vmatprep.subr.bf16.mxu0 0
        %3090 = vmatpush2.bf16.msra.mxu0 0
        %3091 = vmatprep.subr.bf16.mxu0 0
        %3092 = vmatpush2.bf16.msra.mxu0 0
        %3093 = vmatprep.subr.bf16.mxu0 0
        %3094 = vmatpush2.bf16.msra.mxu0 0
        %3095 = vmatprep.subr.bf16.mxu0 0
        %3096 = vmatpush2.bf16.msra.mxu0 0
        %3097 = vmatprep.mubr.bf16.mxu0 0
        %3098 = vmatmul.mubr.bf16.gmra.mxu0 %v3060
        %v3099 = vpop.f32.mrf.mxu0
        %v3100 = vadd.f32 %v3032, %v3099
        %v3101 = vpop.f32.mrf.mxu0
        %v3102 = vpop.f32.mrf.mxu0
        %v3103 = vadd.f32 %v3032, %v3102
        %v3104 = vpop.f32.mrf.mxu0
        %3105 = vmatprep.mubr.bf16.mxu0 0
        %3106 = vmatmul.mubr.bf16.gmra.mxu0 %v3063
        %v3107 = vpop.f32.mrf.mxu0
        %v3108 = vadd.f32 %v3032, %v3107
        %v3109 = vpop.f32.mrf.mxu0
        %v3110 = vpop.f32.mrf.mxu0
        %v3111 = vadd.f32 %v3032, %v3110
        %v3112 = vpop.f32.mrf.mxu0
        %3113 = vdwg.mxu0
        %v3114 = vadd.f32 %v3005, %v3100
        %v3115 = vadd.f32 %v3008, %v3103
        %v3116 = vadd.f32 %v3013, %v3108
        %v3117 = vadd.f32 %v3016, %v3111
        %v3118 = vmax.f32 %v3114, 0.0
        %v3119 = vmax.f32 %v3115, 0.0
        %v3120 = vmax.f32 %v3116, 0.0
        %v3121 = vmax.f32 %v3117, 0.0
        %v3122 = vpack.c.bf16 %v3119, %v3118
        %v3123 = vpack.c.bf16 %v3121, %v3120
        %v3124 = vld [vmem:[%s9] sm:$0xf]
        %v3125 = vld [vmem:[%s9 + $0x4] sm:$0xf]
        %v3126 = vld [vmem:[%s9 + $0x8] sm:$0xf]
        %v3127 = vld [vmem:[%s9 + $0xc] sm:$0xf]
        %v3128 = vld [vmem:[%s9 + $0x10] sm:$0xf]
        %v3129 = vld [vmem:[%s9 + $0x14] sm:$0xf]
        %v3130 = vld [vmem:[%s9 + $0x18] sm:$0xf]
        %v3131 = vld [vmem:[%s9 + $0x1c] sm:$0xf]
        %v3132 = vld [vmem:[%s9 + $0x20] sm:$0xf]
        %v3133 = vld [vmem:[%s9 + $0x24] sm:$0xf]
        %v3134 = vld [vmem:[%s9 + $0x28] sm:$0xf]
        %v3135 = vld [vmem:[%s9 + $0x2c] sm:$0xf]
        %v3136 = vld [vmem:[%s9 + $0x30] sm:$0xf]
        %v3137 = vld [vmem:[%s9 + $0x34] sm:$0xf]
        %v3138 = vld [vmem:[%s9 + $0x38] sm:$0xf]
        %v3139 = vld [vmem:[%s9 + $0x3c] sm:$0xf]
        %v3140 = vld [vmem:[%s10] sm:$0x1]
        %v3142 = vlaneseq
        %v3143 = vshrl.u32 %v3142, 7
        %v3144 = vsub.s32 0, %v3143
        %v3145 = vrot.slane %v3140, %v3144
        %v3163 = vunpack.c.l.b16 %v3124
        %v3164 = vunpack.c.l.b16 %v3125
        %v3165 = vunpack.c.l.b16 %v3126
        %v3166 = vunpack.c.l.b16 %v3127
        %v3167 = vunpack.c.l.b16 %v3128
        %v3168 = vunpack.c.l.b16 %v3129
        %v3169 = vunpack.c.l.b16 %v3130
        %v3170 = vunpack.c.l.b16 %v3131
        %v3171 = vunpack.c.l.b16 %v3132
        %v3172 = vunpack.c.l.b16 %v3133
        %v3173 = vunpack.c.l.b16 %v3134
        %v3174 = vunpack.c.l.b16 %v3135
        %v3175 = vunpack.c.l.b16 %v3136
        %v3176 = vunpack.c.l.b16 %v3137
        %v3177 = vunpack.c.l.b16 %v3138
        %v3178 = vunpack.c.l.b16 %v3139
        %v3179 = vpack.c.b16 %v3164, %v3163
        %v3180 = vpack.c.b16 %v3166, %v3165
        %v3181 = vpack.c.b16 %v3168, %v3167
        %v3182 = vpack.c.b16 %v3170, %v3169
        %v3183 = vpack.c.b16 %v3172, %v3171
        %v3184 = vpack.c.b16 %v3174, %v3173
        %v3185 = vpack.c.b16 %v3176, %v3175
        %v3186 = vpack.c.b16 %v3178, %v3177
        %3195 = vmatprep.subr.bf16.mxu0 0
        %3196 = vmatpush1.bf16.msra.mxu0 %v3186
        %3197 = vmatprep.subr.bf16.mxu0 0
        %3198 = vmatpush1.bf16.msra.mxu0 %v3185
        %3199 = vmatprep.subr.bf16.mxu0 0
        %3200 = vmatpush1.bf16.msra.mxu0 %v3184
        %3201 = vmatprep.subr.bf16.mxu0 0
        %3202 = vmatpush1.bf16.msra.mxu0 %v3183
        %3203 = vmatprep.subr.bf16.mxu0 0
        %3204 = vmatpush1.bf16.msra.mxu0 %v3182
        %3205 = vmatprep.subr.bf16.mxu0 0
        %3206 = vmatpush1.bf16.msra.mxu0 %v3181
        %3207 = vmatprep.subr.bf16.mxu0 0
        %3208 = vmatpush1.bf16.msra.mxu0 %v3180
        %3209 = vmatprep.subr.bf16.mxu0 0
        %3210 = vmatpush1.bf16.msra.mxu0 %v3179
        %3211 = vmatprep.subr.bf16.mxu0 0
        %3212 = vmatpush2.bf16.msra.mxu0 0
        %3213 = vmatprep.subr.bf16.mxu0 0
        %3214 = vmatpush2.bf16.msra.mxu0 0
        %3215 = vmatprep.subr.bf16.mxu0 0
        %3216 = vmatpush2.bf16.msra.mxu0 0
        %3217 = vmatprep.subr.bf16.mxu0 0
        %3218 = vmatpush2.bf16.msra.mxu0 0
        %3219 = vmatprep.subr.bf16.mxu0 0
        %3220 = vmatpush2.bf16.msra.mxu0 0
        %3221 = vmatprep.subr.bf16.mxu0 0
        %3222 = vmatpush2.bf16.msra.mxu0 0
        %3223 = vmatprep.subr.bf16.mxu0 0
        %3224 = vmatpush2.bf16.msra.mxu0 0
        %3225 = vmatprep.subr.bf16.mxu0 0
        %3226 = vmatpush2.bf16.msra.mxu0 0
        %3227 = vmatprep.mubr.bf16.mxu0 0
        %3228 = vmatmul.mubr.bf16.gmra.mxu0 %v3122
        %v3229 = vpop.f32.mrf.mxu0
        %v3230 = vadd.f32 %v3145, %v3229
        %v3231 = vpop.f32.mrf.mxu0
        %v3232 = vpop.f32.mrf.mxu0
        %v3233 = vadd.f32 %v3145, %v3232
        %v3234 = vpop.f32.mrf.mxu0
        %3235 = vmatprep.mubr.bf16.mxu0 0
        %3236 = vmatmul.mubr.bf16.gmra.mxu0 %v3123
        %v3237 = vpop.f32.mrf.mxu0
        %v3238 = vadd.f32 %v3145, %v3237
        %v3239 = vpop.f32.mrf.mxu0
        %v3240 = vpop.f32.mrf.mxu0
        %v3241 = vadd.f32 %v3145, %v3240
        %v3242 = vpop.f32.mrf.mxu0
        %3243 = vdwg.mxu0
        %v3244 = vmax.f32 %v3230, 0.0
        %v3245 = vmax.f32 %v3233, 0.0
        %v3246 = vmax.f32 %v3238, 0.0
        %v3247 = vmax.f32 %v3241, 0.0
        %v3248 = vpack.c.bf16 %v3245, %v3244
        %v3249 = vpack.c.bf16 %v3247, %v3246
        %v3252 = vcombine.high %v3248, %v3248
        %v3254 = vunpack.c.l.s4 1983009808
        %v3255 = vunpack.c.0.s8 %v3254
        %v3256 = vlaneseq
        %v3257 = vshrl.u32 %v3256, 7
        %v3258 = vsub.s32 %v3255, %v3257
        %v3259 = vrot.slane %v3248, %v3258
        %v3261 = vunpack.c.l.s4 1983009808
        %v3262 = vunpack.c.0.s8 %v3261
        %v3263 = vlaneseq
        %v3264 = vshrl.u32 %v3263, 7
        %v3265 = vsub.s32 %v3262, %v3264
        %v3266 = vrot.slane %v3252, %v3265
        %v3267 = vcombine.high %v3259, %v3259
        %v3268 = vcombine.high %v3266, %v3266
        %v3269 = vcombine.high %v3249, %v3249
        %v3271 = vunpack.c.l.s4 1983009808
        %v3272 = vunpack.c.0.s8 %v3271
        %v3273 = vlaneseq
        %v3274 = vshrl.u32 %v3273, 7
        %v3275 = vsub.s32 %v3272, %v3274
        %v3276 = vrot.slane %v3249, %v3275
        %v3278 = vunpack.c.l.s4 1983009808
        %v3279 = vunpack.c.0.s8 %v3278
        %v3280 = vlaneseq
        %v3281 = vshrl.u32 %v3280, 7
        %v3282 = vsub.s32 %v3279, %v3281
        %v3283 = vrot.slane %v3269, %v3282
        %v3284 = vcombine.high %v3276, %v3276
        %v3285 = vcombine.high %v3283, %v3283
        %v3287 = vunpack.c.l.s4 1983009808
        %v3288 = vunpack.c.0.s8 %v3287
        %v3289 = vlaneseq
        %v3290 = vshrl.u32 %v3289, 7
        %v3291 = vsub.s32 %v3288, %v3290
        %v3292 = vrot.slane %v3259, %v3291
        %v3294 = vunpack.c.l.s4 1983009808
        %v3295 = vunpack.c.0.s8 %v3294
        %v3296 = vlaneseq
        %v3297 = vshrl.u32 %v3296, 7
        %v3298 = vsub.s32 %v3295, %v3297
        %v3299 = vrot.slane %v3267, %v3298
        %v3301 = vunpack.c.l.s4 1983009808
        %v3302 = vunpack.c.0.s8 %v3301
        %v3303 = vlaneseq
        %v3304 = vshrl.u32 %v3303, 7
        %v3305 = vsub.s32 %v3302, %v3304
        %v3306 = vrot.slane %v3266, %v3305
        %v3308 = vunpack.c.l.s4 1983009808
        %v3309 = vunpack.c.0.s8 %v3308
        %v3310 = vlaneseq
        %v3311 = vshrl.u32 %v3310, 7
        %v3312 = vsub.s32 %v3309, %v3311
        %v3313 = vrot.slane %v3268, %v3312
        %v3315 = vunpack.c.l.s4 1983009808
        %v3316 = vunpack.c.0.s8 %v3315
        %v3317 = vlaneseq
        %v3318 = vshrl.u32 %v3317, 7
        %v3319 = vsub.s32 %v3316, %v3318
        %v3320 = vrot.slane %v3276, %v3319
        %v3322 = vunpack.c.l.s4 1983009808
        %v3323 = vunpack.c.0.s8 %v3322
        %v3324 = vlaneseq
        %v3325 = vshrl.u32 %v3324, 7
        %v3326 = vsub.s32 %v3323, %v3325
        %v3327 = vrot.slane %v3284, %v3326
        %v3329 = vunpack.c.l.s4 1983009808
        %v3330 = vunpack.c.0.s8 %v3329
        %v3331 = vlaneseq
        %v3332 = vshrl.u32 %v3331, 7
        %v3333 = vsub.s32 %v3330, %v3332
        %v3334 = vrot.slane %v3283, %v3333
        %v3336 = vunpack.c.l.s4 1983009808
        %v3337 = vunpack.c.0.s8 %v3336
        %v3338 = vlaneseq
        %v3339 = vshrl.u32 %v3338, 7
        %v3340 = vsub.s32 %v3337, %v3339
        %v3341 = vrot.slane %v3285, %v3340
        %v3342 = vrot.slane %v3292, 7
        %v3343 = vrot.slane %v3299, 7
        %v3344 = vrot.slane %v3306, 7
        %v3345 = vrot.slane %v3313, 7
        %v3346 = vrot.slane %v3320, 7
        %v3347 = vrot.slane %v3327, 7
        %v3348 = vrot.slane %v3334, 7
        %v3349 = vrot.slane %v3341, 7
        %vm3358 = vcmask 256001
        %3359 = vst.msk [vmem:[%s1057] sm:$0x6] %vm3358, %v3342
        %3360 = vst.msk [vmem:[%s1057 + $0x4] sm:$0x6] %vm3358, %v3343
        %3361 = vst.msk [vmem:[%s1057 + $0x8] sm:$0x6] %vm3358, %v3344
        %3362 = vst.msk [vmem:[%s1057 + $0xc] sm:$0x6] %vm3358, %v3345
        %3363 = vst.msk [vmem:[%s1057 + $0x20] sm:$0x6] %vm3358, %v3346
        %3364 = vst.msk [vmem:[%s1057 + $0x24] sm:$0x6] %vm3358, %v3347
        %3365 = vst.msk [vmem:[%s1057 + $0x28] sm:$0x6] %vm3358, %v3348
        %3366 = vst.msk [vmem:[%s1057 + $0x2c] sm:$0x6] %vm3358, %v3349
        %v3367 = vld [vmem:[%s1066] sm:$0x7]
        %v3368 = vld [vmem:[%s1066 + $0x4] sm:$0x7]
        %v3369 = vld [vmem:[%s1066 + $0x8] sm:$0x7]
        %v3370 = vld [vmem:[%s1066 + $0xc] sm:$0x7]
        %v3371 = vld [vmem:[%s1066 + $0x20] sm:$0x7]
        %v3372 = vld [vmem:[%s1066 + $0x24] sm:$0x7]
        %v3373 = vld [vmem:[%s1066 + $0x28] sm:$0x7]
        %v3374 = vld [vmem:[%s1066 + $0x2c] sm:$0x7]
        %v3384 = vunpack.c.l.s4 1983009808
        %v3385 = vunpack.c.0.s8 %v3384
        %v3386 = vlaneseq
        %v3387 = vshrl.u32 %v3386, 7
        %v3388 = vsub.s32 %v3385, %v3387
        %v3389 = vrot.slane %v3367, %v3388
        %v3390 = vcombine.high %v3389, %v3389
        %v3392 = vunpack.c.l.s4 1983009808
        %v3393 = vunpack.c.0.s8 %v3392
        %v3394 = vlaneseq
        %v3395 = vshrl.u32 %v3394, 7
        %v3396 = vsub.s32 %v3393, %v3395
        %v3397 = vrot.slane %v3368, %v3396
        %v3398 = vcombine.high %v3397, %v3397
        %v3400 = vunpack.c.l.s4 1983009808
        %v3401 = vunpack.c.0.s8 %v3400
        %v3402 = vlaneseq
        %v3403 = vshrl.u32 %v3402, 7
        %v3404 = vsub.s32 %v3401, %v3403
        %v3405 = vrot.slane %v3369, %v3404
        %v3406 = vcombine.high %v3405, %v3405
        %v3408 = vunpack.c.l.s4 1983009808
        %v3409 = vunpack.c.0.s8 %v3408
        %v3410 = vlaneseq
        %v3411 = vshrl.u32 %v3410, 7
        %v3412 = vsub.s32 %v3409, %v3411
        %v3413 = vrot.slane %v3370, %v3412
        %v3414 = vcombine.high %v3413, %v3413
        %v3416 = vunpack.c.l.s4 1983009808
        %v3417 = vunpack.c.0.s8 %v3416
        %v3418 = vlaneseq
        %v3419 = vshrl.u32 %v3418, 7
        %v3420 = vsub.s32 %v3417, %v3419
        %v3421 = vrot.slane %v3371, %v3420
        %v3422 = vcombine.high %v3421, %v3421
        %v3424 = vunpack.c.l.s4 1983009808
        %v3425 = vunpack.c.0.s8 %v3424
        %v3426 = vlaneseq
        %v3427 = vshrl.u32 %v3426, 7
        %v3428 = vsub.s32 %v3425, %v3427
        %v3429 = vrot.slane %v3372, %v3428
        %v3430 = vcombine.high %v3429, %v3429
        %v3432 = vunpack.c.l.s4 1983009808
        %v3433 = vunpack.c.0.s8 %v3432
        %v3434 = vlaneseq
        %v3435 = vshrl.u32 %v3434, 7
        %v3436 = vsub.s32 %v3433, %v3435
        %v3437 = vrot.slane %v3373, %v3436
        %v3438 = vcombine.high %v3437, %v3437
        %v3440 = vunpack.c.l.s4 1983009808
        %v3441 = vunpack.c.0.s8 %v3440
        %v3442 = vlaneseq
        %v3443 = vshrl.u32 %v3442, 7
        %v3444 = vsub.s32 %v3441, %v3443
        %v3445 = vrot.slane %v3374, %v3444
        %v3446 = vcombine.high %v3445, %v3445
        %v3448 = vshrl.u32 %v3389, 16
        %v3450 = vrot.slane %v3448, 6
        %v3451 = vshll.u32 %v3389, 16
        %v3453 = vrot.slane %v3451, 7
        %v3454 = vor.u32 %v3450, %v3453
        %v3455 = vrot.slane %v3454, 2
        %v3457 = vshll.u32 %v3390, 16
        %v3459 = vrot.slane %v3457, 7
        %v3460 = vsel %vm1153, %v3455, %v3459
        %v3462 = vshrl.u32 %v3397, 16
        %v3464 = vrot.slane %v3462, 6
        %v3465 = vshll.u32 %v3397, 16
        %v3467 = vrot.slane %v3465, 7
        %v3468 = vor.u32 %v3464, %v3467
        %v3469 = vrot.slane %v3468, 2
        %v3471 = vshll.u32 %v3398, 16
        %v3473 = vrot.slane %v3471, 7
        %v3474 = vsel %vm1153, %v3469, %v3473
        %v3476 = vshrl.u32 %v3405, 16
        %v3478 = vrot.slane %v3476, 6
        %v3479 = vshll.u32 %v3405, 16
        %v3481 = vrot.slane %v3479, 7
        %v3482 = vor.u32 %v3478, %v3481
        %v3483 = vrot.slane %v3482, 2
        %v3485 = vshll.u32 %v3406, 16
        %v3487 = vrot.slane %v3485, 7
        %v3488 = vsel %vm1153, %v3483, %v3487
        %v3490 = vshrl.u32 %v3413, 16
        %v3492 = vrot.slane %v3490, 6
        %v3493 = vshll.u32 %v3413, 16
        %v3495 = vrot.slane %v3493, 7
        %v3496 = vor.u32 %v3492, %v3495
        %v3497 = vrot.slane %v3496, 2
        %v3499 = vshll.u32 %v3414, 16
        %v3501 = vrot.slane %v3499, 7
        %v3502 = vsel %vm1153, %v3497, %v3501
        %v3504 = vshrl.u32 %v3421, 16
        %v3506 = vrot.slane %v3504, 6
        %v3507 = vshll.u32 %v3421, 16
        %v3509 = vrot.slane %v3507, 7
        %v3510 = vor.u32 %v3506, %v3509
        %v3511 = vrot.slane %v3510, 2
        %v3513 = vshll.u32 %v3422, 16
        %v3515 = vrot.slane %v3513, 7
        %v3516 = vsel %vm1153, %v3511, %v3515
        %v3518 = vshrl.u32 %v3429, 16
        %v3520 = vrot.slane %v3518, 6
        %v3521 = vshll.u32 %v3429, 16
        %v3523 = vrot.slane %v3521, 7
        %v3524 = vor.u32 %v3520, %v3523
        %v3525 = vrot.slane %v3524, 2
        %v3527 = vshll.u32 %v3430, 16
        %v3529 = vrot.slane %v3527, 7
        %v3530 = vsel %vm1153, %v3525, %v3529
        %v3532 = vshrl.u32 %v3437, 16
        %v3534 = vrot.slane %v3532, 6
        %v3535 = vshll.u32 %v3437, 16
        %v3537 = vrot.slane %v3535, 7
        %v3538 = vor.u32 %v3534, %v3537
        %v3539 = vrot.slane %v3538, 2
        %v3541 = vshll.u32 %v3438, 16
        %v3543 = vrot.slane %v3541, 7
        %v3544 = vsel %vm1153, %v3539, %v3543
        %v3546 = vshrl.u32 %v3445, 16
        %v3548 = vrot.slane %v3546, 6
        %v3549 = vshll.u32 %v3445, 16
        %v3551 = vrot.slane %v3549, 7
        %v3552 = vor.u32 %v3548, %v3551
        %v3553 = vrot.slane %v3552, 2
        %v3555 = vshll.u32 %v3446, 16
        %v3557 = vrot.slane %v3555, 7
        %v3558 = vsel %vm1153, %v3553, %v3557
        %3567 = vst.msk [vmem:[#allocation3] sm:$0x3] %vm1290, %v3460
        %3568 = vst.msk [vmem:[#allocation3 + $0x6] sm:$0x3] %vm1290, %v3474
        %3569 = vst.msk [vmem:[#allocation3 + $0xc] sm:$0x3] %vm1290, %v3488
        %3570 = vst.msk [vmem:[#allocation3 + $0x12] sm:$0x3] %vm1290, %v3502
        %3571 = vst.msk [vmem:[#allocation3 + $0x18] sm:$0x3] %vm1290, %v3516
        %3572 = vst.msk [vmem:[#allocation3 + $0x1e] sm:$0x3] %vm1290, %v3530
        %3573 = vst.msk [vmem:[#allocation3 + $0x24] sm:$0x3] %vm1290, %v3544
        %3574 = vst.msk [vmem:[#allocation3 + $0x2a] sm:$0x3] %vm1290, %v3558
        %v3575 = vld [vmem:[%s1066] sm:$0x6]
        %v3576 = vld [vmem:[%s1066 + $0x4] sm:$0x6]
        %v3577 = vld [vmem:[%s1066 + $0x8] sm:$0x6]
        %v3578 = vld [vmem:[%s1066 + $0xc] sm:$0x6]
        %v3579 = vld [vmem:[%s1066 + $0x20] sm:$0x6]
        %v3580 = vld [vmem:[%s1066 + $0x24] sm:$0x6]
        %v3581 = vld [vmem:[%s1066 + $0x28] sm:$0x6]
        %v3582 = vld [vmem:[%s1066 + $0x2c] sm:$0x6]
        %v3592 = vunpack.c.l.s4 1983009808
        %v3593 = vunpack.c.0.s8 %v3592
        %v3594 = vlaneseq
        %v3595 = vshrl.u32 %v3594, 7
        %v3596 = vsub.s32 %v3593, %v3595
        %v3597 = vrot.slane %v3575, %v3596
        %v3598 = vcombine.high %v3597, %v3597
        %v3600 = vunpack.c.l.s4 1983009808
        %v3601 = vunpack.c.0.s8 %v3600
        %v3602 = vlaneseq
        %v3603 = vshrl.u32 %v3602, 7
        %v3604 = vsub.s32 %v3601, %v3603
        %v3605 = vrot.slane %v3576, %v3604
        %v3606 = vcombine.high %v3605, %v3605
        %v3608 = vunpack.c.l.s4 1983009808
        %v3609 = vunpack.c.0.s8 %v3608
        %v3610 = vlaneseq
        %v3611 = vshrl.u32 %v3610, 7
        %v3612 = vsub.s32 %v3609, %v3611
        %v3613 = vrot.slane %v3577, %v3612
        %v3614 = vcombine.high %v3613, %v3613
        %v3616 = vunpack.c.l.s4 1983009808
        %v3617 = vunpack.c.0.s8 %v3616
        %v3618 = vlaneseq
        %v3619 = vshrl.u32 %v3618, 7
        %v3620 = vsub.s32 %v3617, %v3619
        %v3621 = vrot.slane %v3578, %v3620
        %v3622 = vcombine.high %v3621, %v3621
        %v3624 = vunpack.c.l.s4 1983009808
        %v3625 = vunpack.c.0.s8 %v3624
        %v3626 = vlaneseq
        %v3627 = vshrl.u32 %v3626, 7
        %v3628 = vsub.s32 %v3625, %v3627
        %v3629 = vrot.slane %v3579, %v3628
        %v3630 = vcombine.high %v3629, %v3629
        %v3632 = vunpack.c.l.s4 1983009808
        %v3633 = vunpack.c.0.s8 %v3632
        %v3634 = vlaneseq
        %v3635 = vshrl.u32 %v3634, 7
        %v3636 = vsub.s32 %v3633, %v3635
        %v3637 = vrot.slane %v3580, %v3636
        %v3638 = vcombine.high %v3637, %v3637
        %v3640 = vunpack.c.l.s4 1983009808
        %v3641 = vunpack.c.0.s8 %v3640
        %v3642 = vlaneseq
        %v3643 = vshrl.u32 %v3642, 7
        %v3644 = vsub.s32 %v3641, %v3643
        %v3645 = vrot.slane %v3581, %v3644
        %v3646 = vcombine.high %v3645, %v3645
        %v3648 = vunpack.c.l.s4 1983009808
        %v3649 = vunpack.c.0.s8 %v3648
        %v3650 = vlaneseq
        %v3651 = vshrl.u32 %v3650, 7
        %v3652 = vsub.s32 %v3649, %v3651
        %v3653 = vrot.slane %v3582, %v3652
        %v3654 = vcombine.high %v3653, %v3653
        %v3655 = vrot.slane %v3597, 7
        %v3656 = vrot.slane %v3655, 2
        %v3657 = vrot.slane %v3598, 7
        %v3658 = vsel %vm1385, %v3656, %v3657
        %v3659 = vrot.slane %v3605, 7
        %v3660 = vrot.slane %v3659, 2
        %v3661 = vrot.slane %v3606, 7
        %v3662 = vsel %vm1385, %v3660, %v3661
        %v3663 = vrot.slane %v3613, 7
        %v3664 = vrot.slane %v3663, 2
        %v3665 = vrot.slane %v3614, 7
        %v3666 = vsel %vm1385, %v3664, %v3665
        %v3667 = vrot.slane %v3621, 7
        %v3668 = vrot.slane %v3667, 2
        %v3669 = vrot.slane %v3622, 7
        %v3670 = vsel %vm1385, %v3668, %v3669
        %v3671 = vrot.slane %v3629, 7
        %v3672 = vrot.slane %v3671, 2
        %v3673 = vrot.slane %v3630, 7
        %v3674 = vsel %vm1385, %v3672, %v3673
        %v3675 = vrot.slane %v3637, 7
        %v3676 = vrot.slane %v3675, 2
        %v3677 = vrot.slane %v3638, 7
        %v3678 = vsel %vm1385, %v3676, %v3677
        %v3679 = vrot.slane %v3645, 7
        %v3680 = vrot.slane %v3679, 2
        %v3681 = vrot.slane %v3646, 7
        %v3682 = vsel %vm1385, %v3680, %v3681
        %v3683 = vrot.slane %v3653, 7
        %v3684 = vrot.slane %v3683, 2
        %v3685 = vrot.slane %v3654, 7
        %v3686 = vsel %vm1385, %v3684, %v3685
        %3687 = vrot.lane.b32.xlu0 %v3658, 32
        %v3688 = vpop.permute.xlu0 %3687
        %3689 = vrot.lane.b32.xlu0 %v3662, 32
        %v3690 = vpop.permute.xlu0 %3689
        %3691 = vrot.lane.b32.xlu0 %v3666, 32
        %v3692 = vpop.permute.xlu0 %3691
        %3693 = vrot.lane.b32.xlu0 %v3670, 32
        %v3694 = vpop.permute.xlu0 %3693
        %3695 = vrot.lane.b32.xlu0 %v3674, 32
        %v3696 = vpop.permute.xlu0 %3695
        %3697 = vrot.lane.b32.xlu0 %v3678, 32
        %v3698 = vpop.permute.xlu0 %3697
        %3699 = vrot.lane.b32.xlu0 %v3682, 32
        %v3700 = vpop.permute.xlu0 %3699
        %3701 = vrot.lane.b32.xlu0 %v3686, 32
        %v3702 = vpop.permute.xlu0 %3701
        %3711 = vst.msk [vmem:[#allocation3] sm:$0x3] %vm1442, %v3688
        %3712 = vst.msk [vmem:[#allocation3 + $0x6] sm:$0x3] %vm1442, %v3690
        %3713 = vst.msk [vmem:[#allocation3 + $0xc] sm:$0x3] %vm1442, %v3692
        %3714 = vst.msk [vmem:[#allocation3 + $0x12] sm:$0x3] %vm1442, %v3694
        %3715 = vst.msk [vmem:[#allocation3 + $0x18] sm:$0x3] %vm1442, %v3696
        %3716 = vst.msk [vmem:[#allocation3 + $0x1e] sm:$0x3] %vm1442, %v3698
        %3717 = vst.msk [vmem:[#allocation3 + $0x24] sm:$0x3] %vm1442, %v3700
        %3718 = vst.msk [vmem:[#allocation3 + $0x2a] sm:$0x3] %vm1442, %v3702
        %v3719 = vld [vmem:[%s1066] sm:$0xe]
        %v3720 = vld [vmem:[%s1066 + $0x4] sm:$0xe]
        %v3721 = vld [vmem:[%s1066 + $0x8] sm:$0xe]
        %v3722 = vld [vmem:[%s1066 + $0xc] sm:$0xe]
        %v3723 = vld [vmem:[%s1066 + $0x20] sm:$0xe]
        %v3724 = vld [vmem:[%s1066 + $0x24] sm:$0xe]
        %v3725 = vld [vmem:[%s1066 + $0x28] sm:$0xe]
        %v3726 = vld [vmem:[%s1066 + $0x2c] sm:$0xe]
        %v3736 = vunpack.c.l.s4 1983009808
        %v3737 = vunpack.c.0.s8 %v3736
        %v3738 = vlaneseq
        %v3739 = vshrl.u32 %v3738, 7
        %v3740 = vsub.s32 %v3737, %v3739
        %v3741 = vrot.slane %v3719, %v3740
        %v3742 = vcombine.high %v3741, %v3741
        %v3744 = vunpack.c.l.s4 1983009808
        %v3745 = vunpack.c.0.s8 %v3744
        %v3746 = vlaneseq
        %v3747 = vshrl.u32 %v3746, 7
        %v3748 = vsub.s32 %v3745, %v3747
        %v3749 = vrot.slane %v3720, %v3748
        %v3750 = vcombine.high %v3749, %v3749
        %v3752 = vunpack.c.l.s4 1983009808
        %v3753 = vunpack.c.0.s8 %v3752
        %v3754 = vlaneseq
        %v3755 = vshrl.u32 %v3754, 7
        %v3756 = vsub.s32 %v3753, %v3755
        %v3757 = vrot.slane %v3721, %v3756
        %v3758 = vcombine.high %v3757, %v3757
        %v3760 = vunpack.c.l.s4 1983009808
        %v3761 = vunpack.c.0.s8 %v3760
        %v3762 = vlaneseq
        %v3763 = vshrl.u32 %v3762, 7
        %v3764 = vsub.s32 %v3761, %v3763
        %v3765 = vrot.slane %v3722, %v3764
        %v3766 = vcombine.high %v3765, %v3765
        %v3768 = vunpack.c.l.s4 1983009808
        %v3769 = vunpack.c.0.s8 %v3768
        %v3770 = vlaneseq
        %v3771 = vshrl.u32 %v3770, 7
        %v3772 = vsub.s32 %v3769, %v3771
        %v3773 = vrot.slane %v3723, %v3772
        %v3774 = vcombine.high %v3773, %v3773
        %v3776 = vunpack.c.l.s4 1983009808
        %v3777 = vunpack.c.0.s8 %v3776
        %v3778 = vlaneseq
        %v3779 = vshrl.u32 %v3778, 7
        %v3780 = vsub.s32 %v3777, %v3779
        %v3781 = vrot.slane %v3724, %v3780
        %v3782 = vcombine.high %v3781, %v3781
        %v3784 = vunpack.c.l.s4 1983009808
        %v3785 = vunpack.c.0.s8 %v3784
        %v3786 = vlaneseq
        %v3787 = vshrl.u32 %v3786, 7
        %v3788 = vsub.s32 %v3785, %v3787
        %v3789 = vrot.slane %v3725, %v3788
        %v3790 = vcombine.high %v3789, %v3789
        %v3792 = vunpack.c.l.s4 1983009808
        %v3793 = vunpack.c.0.s8 %v3792
        %v3794 = vlaneseq
        %v3795 = vshrl.u32 %v3794, 7
        %v3796 = vsub.s32 %v3793, %v3795
        %v3797 = vrot.slane %v3726, %v3796
        %v3798 = vcombine.high %v3797, %v3797
        %vm3799 = vsmask.f32 256
        %vm3800 = vsmask.f32 2312
        %vm3801 = vmor %vm3799, %vm3800
        %vm3802 = vsmask.f32 4368
        %vm3803 = vmor %vm3801, %vm3802
        %vm3804 = vsmask.f32 6424
        %vm3805 = vmor %vm3803, %vm3804
        %v3807 = vshrl.u32 %v3741, 16
        %v3809 = vrot.slane %v3807, 7
        %v3810 = vrot.slane %v3809, 2
        %v3812 = vshrl.u32 %v3742, 16
        %v3814 = vrot.slane %v3812, 7
        %v3815 = vshll.u32 %v3742, 16
        %v3817 = vor.u32 %v3814, %v3815
        %v3818 = vsel %vm3805, %v3810, %v3817
        %v3820 = vshrl.u32 %v3749, 16
        %v3822 = vrot.slane %v3820, 7
        %v3823 = vrot.slane %v3822, 2
        %v3825 = vshrl.u32 %v3750, 16
        %v3827 = vrot.slane %v3825, 7
        %v3828 = vshll.u32 %v3750, 16
        %v3830 = vor.u32 %v3827, %v3828
        %v3831 = vsel %vm3805, %v3823, %v3830
        %v3833 = vshrl.u32 %v3757, 16
        %v3835 = vrot.slane %v3833, 7
        %v3836 = vrot.slane %v3835, 2
        %v3838 = vshrl.u32 %v3758, 16
        %v3840 = vrot.slane %v3838, 7
        %v3841 = vshll.u32 %v3758, 16
        %v3843 = vor.u32 %v3840, %v3841
        %v3844 = vsel %vm3805, %v3836, %v3843
        %v3846 = vshrl.u32 %v3765, 16
        %v3848 = vrot.slane %v3846, 7
        %v3849 = vrot.slane %v3848, 2
        %v3851 = vshrl.u32 %v3766, 16
        %v3853 = vrot.slane %v3851, 7
        %v3854 = vshll.u32 %v3766, 16
        %v3856 = vor.u32 %v3853, %v3854
        %v3857 = vsel %vm3805, %v3849, %v3856
        %v3859 = vshrl.u32 %v3773, 16
        %v3861 = vrot.slane %v3859, 7
        %v3862 = vrot.slane %v3861, 2
        %v3864 = vshrl.u32 %v3774, 16
        %v3866 = vrot.slane %v3864, 7
        %v3867 = vshll.u32 %v3774, 16
        %v3869 = vor.u32 %v3866, %v3867
        %v3870 = vsel %vm3805, %v3862, %v3869
        %v3872 = vshrl.u32 %v3781, 16
        %v3874 = vrot.slane %v3872, 7
        %v3875 = vrot.slane %v3874, 2
        %v3877 = vshrl.u32 %v3782, 16
        %v3879 = vrot.slane %v3877, 7
        %v3880 = vshll.u32 %v3782, 16
        %v3882 = vor.u32 %v3879, %v3880
        %v3883 = vsel %vm3805, %v3875, %v3882
        %v3885 = vshrl.u32 %v3789, 16
        %v3887 = vrot.slane %v3885, 7
        %v3888 = vrot.slane %v3887, 2
        %v3890 = vshrl.u32 %v3790, 16
        %v3892 = vrot.slane %v3890, 7
        %v3893 = vshll.u32 %v3790, 16
        %v3895 = vor.u32 %v3892, %v3893
        %v3896 = vsel %vm3805, %v3888, %v3895
        %v3898 = vshrl.u32 %v3797, 16
        %v3900 = vrot.slane %v3898, 7
        %v3901 = vrot.slane %v3900, 2
        %v3903 = vshrl.u32 %v3798, 16
        %v3905 = vrot.slane %v3903, 7
        %v3906 = vshll.u32 %v3798, 16
        %v3908 = vor.u32 %v3905, %v3906
        %v3909 = vsel %vm3805, %v3901, %v3908
        %3910 = vrot.lane.b32.xlu0 %v3818, 64
        %v3911 = vpop.permute.xlu0 %3910
        %3912 = vrot.lane.b32.xlu0 %v3831, 64
        %v3913 = vpop.permute.xlu0 %3912
        %3914 = vrot.lane.b32.xlu0 %v3844, 64
        %v3915 = vpop.permute.xlu0 %3914
        %3916 = vrot.lane.b32.xlu0 %v3857, 64
        %v3917 = vpop.permute.xlu0 %3916
        %3918 = vrot.lane.b32.xlu0 %v3870, 64
        %v3919 = vpop.permute.xlu0 %3918
        %3920 = vrot.lane.b32.xlu0 %v3883, 64
        %v3921 = vpop.permute.xlu0 %3920
        %3922 = vrot.lane.b32.xlu0 %v3896, 64
        %v3923 = vpop.permute.xlu0 %3922
        %3924 = vrot.lane.b32.xlu0 %v3909, 64
        %v3925 = vpop.permute.xlu0 %3924
        %3934 = vst.msk [vmem:[#allocation3] sm:$0x3] %vm1587, %v3911
        %3935 = vst.msk [vmem:[#allocation3 + $0x6] sm:$0x3] %vm1587, %v3913
        %3936 = vst.msk [vmem:[#allocation3 + $0xc] sm:$0x3] %vm1587, %v3915
        %3937 = vst.msk [vmem:[#allocation3 + $0x12] sm:$0x3] %vm1587, %v3917
        %3938 = vst.msk [vmem:[#allocation3 + $0x18] sm:$0x3] %vm1587, %v3919
        %3939 = vst.msk [vmem:[#allocation3 + $0x1e] sm:$0x3] %vm1587, %v3921
        %3940 = vst.msk [vmem:[#allocation3 + $0x24] sm:$0x3] %vm1587, %v3923
        %3941 = vst.msk [vmem:[#allocation3 + $0x2a] sm:$0x3] %vm1587, %v3925
        %v3942 = vld [vmem:[%s1057] sm:$0x7]
        %v3943 = vld [vmem:[%s1057 + $0x4] sm:$0x7]
        %v3944 = vld [vmem:[%s1057 + $0x8] sm:$0x7]
        %v3945 = vld [vmem:[%s1057 + $0xc] sm:$0x7]
        %v3946 = vld [vmem:[%s1057 + $0x20] sm:$0x7]
        %v3947 = vld [vmem:[%s1057 + $0x24] sm:$0x7]
        %v3948 = vld [vmem:[%s1057 + $0x28] sm:$0x7]
        %v3949 = vld [vmem:[%s1057 + $0x2c] sm:$0x7]
        %v3959 = vunpack.c.l.s4 1983009808
        %v3960 = vunpack.c.0.s8 %v3959
        %v3961 = vlaneseq
        %v3962 = vshrl.u32 %v3961, 7
        %v3963 = vsub.s32 %v3960, %v3962
        %v3964 = vrot.slane %v3942, %v3963
        %v3965 = vcombine.high %v3964, %v3964
        %v3967 = vunpack.c.l.s4 1983009808
        %v3968 = vunpack.c.0.s8 %v3967
        %v3969 = vlaneseq
        %v3970 = vshrl.u32 %v3969, 7
        %v3971 = vsub.s32 %v3968, %v3970
        %v3972 = vrot.slane %v3943, %v3971
        %v3973 = vcombine.high %v3972, %v3972
        %v3975 = vunpack.c.l.s4 1983009808
        %v3976 = vunpack.c.0.s8 %v3975
        %v3977 = vlaneseq
        %v3978 = vshrl.u32 %v3977, 7
        %v3979 = vsub.s32 %v3976, %v3978
        %v3980 = vrot.slane %v3944, %v3979
        %v3981 = vcombine.high %v3980, %v3980
        %v3983 = vunpack.c.l.s4 1983009808
        %v3984 = vunpack.c.0.s8 %v3983
        %v3985 = vlaneseq
        %v3986 = vshrl.u32 %v3985, 7
        %v3987 = vsub.s32 %v3984, %v3986
        %v3988 = vrot.slane %v3945, %v3987
        %v3989 = vcombine.high %v3988, %v3988
        %v3991 = vunpack.c.l.s4 1983009808
        %v3992 = vunpack.c.0.s8 %v3991
        %v3993 = vlaneseq
        %v3994 = vshrl.u32 %v3993, 7
        %v3995 = vsub.s32 %v3992, %v3994
        %v3996 = vrot.slane %v3946, %v3995
        %v3997 = vcombine.high %v3996, %v3996
        %v3999 = vunpack.c.l.s4 1983009808
        %v4000 = vunpack.c.0.s8 %v3999
        %v4001 = vlaneseq
        %v4002 = vshrl.u32 %v4001, 7
        %v4003 = vsub.s32 %v4000, %v4002
        %v4004 = vrot.slane %v3947, %v4003
        %v4005 = vcombine.high %v4004, %v4004
        %v4007 = vunpack.c.l.s4 1983009808
        %v4008 = vunpack.c.0.s8 %v4007
        %v4009 = vlaneseq
        %v4010 = vshrl.u32 %v4009, 7
        %v4011 = vsub.s32 %v4008, %v4010
        %v4012 = vrot.slane %v3948, %v4011
        %v4013 = vcombine.high %v4012, %v4012
        %v4015 = vunpack.c.l.s4 1983009808
        %v4016 = vunpack.c.0.s8 %v4015
        %v4017 = vlaneseq
        %v4018 = vshrl.u32 %v4017, 7
        %v4019 = vsub.s32 %v4016, %v4018
        %v4020 = vrot.slane %v3949, %v4019
        %v4021 = vcombine.high %v4020, %v4020
        %v4023 = vshrl.u32 %v3964, 16
        %v4025 = vrot.slane %v4023, 6
        %v4026 = vshll.u32 %v3964, 16
        %v4028 = vrot.slane %v4026, 7
        %v4029 = vor.u32 %v4025, %v4028
        %v4030 = vrot.slane %v4029, 2
        %v4032 = vshll.u32 %v3965, 16
        %v4034 = vrot.slane %v4032, 7
        %v4035 = vsel %vm1153, %v4030, %v4034
        %v4037 = vshrl.u32 %v3972, 16
        %v4039 = vrot.slane %v4037, 6
        %v4040 = vshll.u32 %v3972, 16
        %v4042 = vrot.slane %v4040, 7
        %v4043 = vor.u32 %v4039, %v4042
        %v4044 = vrot.slane %v4043, 2
        %v4046 = vshll.u32 %v3973, 16
        %v4048 = vrot.slane %v4046, 7
        %v4049 = vsel %vm1153, %v4044, %v4048
        %v4051 = vshrl.u32 %v3980, 16
        %v4053 = vrot.slane %v4051, 6
        %v4054 = vshll.u32 %v3980, 16
        %v4056 = vrot.slane %v4054, 7
        %v4057 = vor.u32 %v4053, %v4056
        %v4058 = vrot.slane %v4057, 2
        %v4060 = vshll.u32 %v3981, 16
        %v4062 = vrot.slane %v4060, 7
        %v4063 = vsel %vm1153, %v4058, %v4062
        %v4065 = vshrl.u32 %v3988, 16
        %v4067 = vrot.slane %v4065, 6
        %v4068 = vshll.u32 %v3988, 16
        %v4070 = vrot.slane %v4068, 7
        %v4071 = vor.u32 %v4067, %v4070
        %v4072 = vrot.slane %v4071, 2
        %v4074 = vshll.u32 %v3989, 16
        %v4076 = vrot.slane %v4074, 7
        %v4077 = vsel %vm1153, %v4072, %v4076
        %v4079 = vshrl.u32 %v3996, 16
        %v4081 = vrot.slane %v4079, 6
        %v4082 = vshll.u32 %v3996, 16
        %v4084 = vrot.slane %v4082, 7
        %v4085 = vor.u32 %v4081, %v4084
        %v4086 = vrot.slane %v4085, 2
        %v4088 = vshll.u32 %v3997, 16
        %v4090 = vrot.slane %v4088, 7
        %v4091 = vsel %vm1153, %v4086, %v4090
        %v4093 = vshrl.u32 %v4004, 16
        %v4095 = vrot.slane %v4093, 6
        %v4096 = vshll.u32 %v4004, 16
        %v4098 = vrot.slane %v4096, 7
        %v4099 = vor.u32 %v4095, %v4098
        %v4100 = vrot.slane %v4099, 2
        %v4102 = vshll.u32 %v4005, 16
        %v4104 = vrot.slane %v4102, 7
        %v4105 = vsel %vm1153, %v4100, %v4104
        %v4107 = vshrl.u32 %v4012, 16
        %v4109 = vrot.slane %v4107, 6
        %v4110 = vshll.u32 %v4012, 16
        %v4112 = vrot.slane %v4110, 7
        %v4113 = vor.u32 %v4109, %v4112
        %v4114 = vrot.slane %v4113, 2
        %v4116 = vshll.u32 %v4013, 16
        %v4118 = vrot.slane %v4116, 7
        %v4119 = vsel %vm1153, %v4114, %v4118
        %v4121 = vshrl.u32 %v4020, 16
        %v4123 = vrot.slane %v4121, 6
        %v4124 = vshll.u32 %v4020, 16
        %v4126 = vrot.slane %v4124, 7
        %v4127 = vor.u32 %v4123, %v4126
        %v4128 = vrot.slane %v4127, 2
        %v4130 = vshll.u32 %v4021, 16
        %v4132 = vrot.slane %v4130, 7
        %v4133 = vsel %vm1153, %v4128, %v4132
        %4134 = vrot.lane.b32.xlu0 %v4035, 96
        %v4135 = vpop.permute.xlu0 %4134
        %4136 = vrot.lane.b32.xlu0 %v4049, 96
        %v4137 = vpop.permute.xlu0 %4136
        %4138 = vrot.lane.b32.xlu0 %v4063, 96
        %v4139 = vpop.permute.xlu0 %4138
        %4140 = vrot.lane.b32.xlu0 %v4077, 96
        %v4141 = vpop.permute.xlu0 %4140
        %4142 = vrot.lane.b32.xlu0 %v4091, 96
        %v4143 = vpop.permute.xlu0 %4142
        %4144 = vrot.lane.b32.xlu0 %v4105, 96
        %v4145 = vpop.permute.xlu0 %4144
        %4146 = vrot.lane.b32.xlu0 %v4119, 96
        %v4147 = vpop.permute.xlu0 %4146
        %4148 = vrot.lane.b32.xlu0 %v4133, 96
        %v4149 = vpop.permute.xlu0 %4148
        %4158 = vst.msk [vmem:[#allocation3] sm:$0x3] %vm1812, %v4135
        %4159 = vst.msk [vmem:[#allocation3 + $0x6] sm:$0x3] %vm1812, %v4137
        %4160 = vst.msk [vmem:[#allocation3 + $0xc] sm:$0x3] %vm1812, %v4139
        %4161 = vst.msk [vmem:[#allocation3 + $0x12] sm:$0x3] %vm1812, %v4141
        %4162 = vst.msk [vmem:[#allocation3 + $0x18] sm:$0x3] %vm1812, %v4143
        %4163 = vst.msk [vmem:[#allocation3 + $0x1e] sm:$0x3] %vm1812, %v4145
        %4164 = vst.msk [vmem:[#allocation3 + $0x24] sm:$0x3] %vm1812, %v4147
        %4165 = vst.msk [vmem:[#allocation3 + $0x2a] sm:$0x3] %vm1812, %v4149
        %v4166 = vld [vmem:[%s1057] sm:$0x6]
        %v4167 = vld [vmem:[%s1057 + $0x4] sm:$0x6]
        %v4168 = vld [vmem:[%s1057 + $0x8] sm:$0x6]
        %v4169 = vld [vmem:[%s1057 + $0xc] sm:$0x6]
        %v4170 = vld [vmem:[%s1057 + $0x20] sm:$0x6]
        %v4171 = vld [vmem:[%s1057 + $0x24] sm:$0x6]
        %v4172 = vld [vmem:[%s1057 + $0x28] sm:$0x6]
        %v4173 = vld [vmem:[%s1057 + $0x2c] sm:$0x6]
        %v4183 = vunpack.c.l.s4 1983009808
        %v4184 = vunpack.c.0.s8 %v4183
        %v4185 = vlaneseq
        %v4186 = vshrl.u32 %v4185, 7
        %v4187 = vsub.s32 %v4184, %v4186
        %v4188 = vrot.slane %v4166, %v4187
        %v4189 = vcombine.high %v4188, %v4188
        %v4191 = vunpack.c.l.s4 1983009808
        %v4192 = vunpack.c.0.s8 %v4191
        %v4193 = vlaneseq
        %v4194 = vshrl.u32 %v4193, 7
        %v4195 = vsub.s32 %v4192, %v4194
        %v4196 = vrot.slane %v4167, %v4195
        %v4197 = vcombine.high %v4196, %v4196
        %v4199 = vunpack.c.l.s4 1983009808
        %v4200 = vunpack.c.0.s8 %v4199
        %v4201 = vlaneseq
        %v4202 = vshrl.u32 %v4201, 7
        %v4203 = vsub.s32 %v4200, %v4202
        %v4204 = vrot.slane %v4168, %v4203
        %v4205 = vcombine.high %v4204, %v4204
        %v4207 = vunpack.c.l.s4 1983009808
        %v4208 = vunpack.c.0.s8 %v4207
        %v4209 = vlaneseq
        %v4210 = vshrl.u32 %v4209, 7
        %v4211 = vsub.s32 %v4208, %v4210
        %v4212 = vrot.slane %v4169, %v4211
        %v4213 = vcombine.high %v4212, %v4212
        %v4215 = vunpack.c.l.s4 1983009808
        %v4216 = vunpack.c.0.s8 %v4215
        %v4217 = vlaneseq
        %v4218 = vshrl.u32 %v4217, 7
        %v4219 = vsub.s32 %v4216, %v4218
        %v4220 = vrot.slane %v4170, %v4219
        %v4221 = vcombine.high %v4220, %v4220
        %v4223 = vunpack.c.l.s4 1983009808
        %v4224 = vunpack.c.0.s8 %v4223
        %v4225 = vlaneseq
        %v4226 = vshrl.u32 %v4225, 7
        %v4227 = vsub.s32 %v4224, %v4226
        %v4228 = vrot.slane %v4171, %v4227
        %v4229 = vcombine.high %v4228, %v4228
        %v4231 = vunpack.c.l.s4 1983009808
        %v4232 = vunpack.c.0.s8 %v4231
        %v4233 = vlaneseq
        %v4234 = vshrl.u32 %v4233, 7
        %v4235 = vsub.s32 %v4232, %v4234
        %v4236 = vrot.slane %v4172, %v4235
        %v4237 = vcombine.high %v4236, %v4236
        %v4239 = vunpack.c.l.s4 1983009808
        %v4240 = vunpack.c.0.s8 %v4239
        %v4241 = vlaneseq
        %v4242 = vshrl.u32 %v4241, 7
        %v4243 = vsub.s32 %v4240, %v4242
        %v4244 = vrot.slane %v4173, %v4243
        %v4245 = vcombine.high %v4244, %v4244
        %v4246 = vrot.slane %v4188, 7
        %v4247 = vrot.slane %v4246, 2
        %v4248 = vrot.slane %v4189, 7
        %v4249 = vsel %vm1385, %v4247, %v4248
        %v4250 = vrot.slane %v4196, 7
        %v4251 = vrot.slane %v4250, 2
        %v4252 = vrot.slane %v4197, 7
        %v4253 = vsel %vm1385, %v4251, %v4252
        %v4254 = vrot.slane %v4204, 7
        %v4255 = vrot.slane %v4254, 2
        %v4256 = vrot.slane %v4205, 7
        %v4257 = vsel %vm1385, %v4255, %v4256
        %v4258 = vrot.slane %v4212, 7
        %v4259 = vrot.slane %v4258, 2
        %v4260 = vrot.slane %v4213, 7
        %v4261 = vsel %vm1385, %v4259, %v4260
        %v4262 = vrot.slane %v4220, 7
        %v4263 = vrot.slane %v4262, 2
        %v4264 = vrot.slane %v4221, 7
        %v4265 = vsel %vm1385, %v4263, %v4264
        %v4266 = vrot.slane %v4228, 7
        %v4267 = vrot.slane %v4266, 2
        %v4268 = vrot.slane %v4229, 7
        %v4269 = vsel %vm1385, %v4267, %v4268
        %v4270 = vrot.slane %v4236, 7
        %v4271 = vrot.slane %v4270, 2
        %v4272 = vrot.slane %v4237, 7
        %v4273 = vsel %vm1385, %v4271, %v4272
        %v4274 = vrot.slane %v4244, 7
        %v4275 = vrot.slane %v4274, 2
        %v4276 = vrot.slane %v4245, 7
        %v4277 = vsel %vm1385, %v4275, %v4276
        %4286 = vst.msk [vmem:[#allocation3 + $0x2] sm:$0x3] %vm1290, %v4249
        %4287 = vst.msk [vmem:[#allocation3 + $0x8] sm:$0x3] %vm1290, %v4253
        %4288 = vst.msk [vmem:[#allocation3 + $0xe] sm:$0x3] %vm1290, %v4257
        %4289 = vst.msk [vmem:[#allocation3 + $0x14] sm:$0x3] %vm1290, %v4261
        %4290 = vst.msk [vmem:[#allocation3 + $0x1a] sm:$0x3] %vm1290, %v4265
        %4291 = vst.msk [vmem:[#allocation3 + $0x20] sm:$0x3] %vm1290, %v4269
        %4292 = vst.msk [vmem:[#allocation3 + $0x26] sm:$0x3] %vm1290, %v4273
        %4293 = vst.msk [vmem:[#allocation3 + $0x2c] sm:$0x3] %vm1290, %v4277
        %v4294 = vld [vmem:[%s1057] sm:$0xe]
        %v4295 = vld [vmem:[%s1057 + $0x4] sm:$0xe]
        %v4296 = vld [vmem:[%s1057 + $0x8] sm:$0xe]
        %v4297 = vld [vmem:[%s1057 + $0xc] sm:$0xe]
        %v4298 = vld [vmem:[%s1057 + $0x20] sm:$0xe]
        %v4299 = vld [vmem:[%s1057 + $0x24] sm:$0xe]
        %v4300 = vld [vmem:[%s1057 + $0x28] sm:$0xe]
        %v4301 = vld [vmem:[%s1057 + $0x2c] sm:$0xe]
        %v4311 = vunpack.c.l.s4 1983009808
        %v4312 = vunpack.c.0.s8 %v4311
        %v4313 = vlaneseq
        %v4314 = vshrl.u32 %v4313, 7
        %v4315 = vsub.s32 %v4312, %v4314
        %v4316 = vrot.slane %v4294, %v4315
        %v4317 = vcombine.high %v4316, %v4316
        %v4319 = vunpack.c.l.s4 1983009808
        %v4320 = vunpack.c.0.s8 %v4319
        %v4321 = vlaneseq
        %v4322 = vshrl.u32 %v4321, 7
        %v4323 = vsub.s32 %v4320, %v4322
        %v4324 = vrot.slane %v4295, %v4323
        %v4325 = vcombine.high %v4324, %v4324
        %v4327 = vunpack.c.l.s4 1983009808
        %v4328 = vunpack.c.0.s8 %v4327
        %v4329 = vlaneseq
        %v4330 = vshrl.u32 %v4329, 7
        %v4331 = vsub.s32 %v4328, %v4330
        %v4332 = vrot.slane %v4296, %v4331
        %v4333 = vcombine.high %v4332, %v4332
        %v4335 = vunpack.c.l.s4 1983009808
        %v4336 = vunpack.c.0.s8 %v4335
        %v4337 = vlaneseq
        %v4338 = vshrl.u32 %v4337, 7
        %v4339 = vsub.s32 %v4336, %v4338
        %v4340 = vrot.slane %v4297, %v4339
        %v4341 = vcombine.high %v4340, %v4340
        %v4343 = vunpack.c.l.s4 1983009808
        %v4344 = vunpack.c.0.s8 %v4343
        %v4345 = vlaneseq
        %v4346 = vshrl.u32 %v4345, 7
        %v4347 = vsub.s32 %v4344, %v4346
        %v4348 = vrot.slane %v4298, %v4347
        %v4349 = vcombine.high %v4348, %v4348
        %v4351 = vunpack.c.l.s4 1983009808
        %v4352 = vunpack.c.0.s8 %v4351
        %v4353 = vlaneseq
        %v4354 = vshrl.u32 %v4353, 7
        %v4355 = vsub.s32 %v4352, %v4354
        %v4356 = vrot.slane %v4299, %v4355
        %v4357 = vcombine.high %v4356, %v4356
        %v4359 = vunpack.c.l.s4 1983009808
        %v4360 = vunpack.c.0.s8 %v4359
        %v4361 = vlaneseq
        %v4362 = vshrl.u32 %v4361, 7
        %v4363 = vsub.s32 %v4360, %v4362
        %v4364 = vrot.slane %v4300, %v4363
        %v4365 = vcombine.high %v4364, %v4364
        %v4367 = vunpack.c.l.s4 1983009808
        %v4368 = vunpack.c.0.s8 %v4367
        %v4369 = vlaneseq
        %v4370 = vshrl.u32 %v4369, 7
        %v4371 = vsub.s32 %v4368, %v4370
        %v4372 = vrot.slane %v4301, %v4371
        %v4373 = vcombine.high %v4372, %v4372
        %v4375 = vshrl.u32 %v4316, 16
        %v4377 = vrot.slane %v4375, 7
        %v4378 = vrot.slane %v4377, 2
        %v4380 = vshrl.u32 %v4317, 16
        %v4382 = vrot.slane %v4380, 7
        %v4383 = vshll.u32 %v4317, 16
        %v4385 = vor.u32 %v4382, %v4383
        %v4386 = vsel %vm3805, %v4378, %v4385
        %v4388 = vshrl.u32 %v4324, 16
        %v4390 = vrot.slane %v4388, 7
        %v4391 = vrot.slane %v4390, 2
        %v4393 = vshrl.u32 %v4325, 16
        %v4395 = vrot.slane %v4393, 7
        %v4396 = vshll.u32 %v4325, 16
        %v4398 = vor.u32 %v4395, %v4396
        %v4399 = vsel %vm3805, %v4391, %v4398
        %v4401 = vshrl.u32 %v4332, 16
        %v4403 = vrot.slane %v4401, 7
        %v4404 = vrot.slane %v4403, 2
        %v4406 = vshrl.u32 %v4333, 16
        %v4408 = vrot.slane %v4406, 7
        %v4409 = vshll.u32 %v4333, 16
        %v4411 = vor.u32 %v4408, %v4409
        %v4412 = vsel %vm3805, %v4404, %v4411
        %v4414 = vshrl.u32 %v4340, 16
        %v4416 = vrot.slane %v4414, 7
        %v4417 = vrot.slane %v4416, 2
        %v4419 = vshrl.u32 %v4341, 16
        %v4421 = vrot.slane %v4419, 7
        %v4422 = vshll.u32 %v4341, 16
        %v4424 = vor.u32 %v4421, %v4422
        %v4425 = vsel %vm3805, %v4417, %v4424
        %v4427 = vshrl.u32 %v4348, 16
        %v4429 = vrot.slane %v4427, 7
        %v4430 = vrot.slane %v4429, 2
        %v4432 = vshrl.u32 %v4349, 16
        %v4434 = vrot.slane %v4432, 7
        %v4435 = vshll.u32 %v4349, 16
        %v4437 = vor.u32 %v4434, %v4435
        %v4438 = vsel %vm3805, %v4430, %v4437
        %v4440 = vshrl.u32 %v4356, 16
        %v4442 = vrot.slane %v4440, 7
        %v4443 = vrot.slane %v4442, 2
        %v4445 = vshrl.u32 %v4357, 16
        %v4447 = vrot.slane %v4445, 7
        %v4448 = vshll.u32 %v4357, 16
        %v4450 = vor.u32 %v4447, %v4448
        %v4451 = vsel %vm3805, %v4443, %v4450
        %v4453 = vshrl.u32 %v4364, 16
        %v4455 = vrot.slane %v4453, 7
        %v4456 = vrot.slane %v4455, 2
        %v4458 = vshrl.u32 %v4365, 16
        %v4460 = vrot.slane %v4458, 7
        %v4461 = vshll.u32 %v4365, 16
        %v4463 = vor.u32 %v4460, %v4461
        %v4464 = vsel %vm3805, %v4456, %v4463
        %v4466 = vshrl.u32 %v4372, 16
        %v4468 = vrot.slane %v4466, 7
        %v4469 = vrot.slane %v4468, 2
        %v4471 = vshrl.u32 %v4373, 16
        %v4473 = vrot.slane %v4471, 7
        %v4474 = vshll.u32 %v4373, 16
        %v4476 = vor.u32 %v4473, %v4474
        %v4477 = vsel %vm3805, %v4469, %v4476
        %4478 = vrot.lane.b32.xlu0 %v4386, 32
        %v4479 = vpop.permute.xlu0 %4478
        %4480 = vrot.lane.b32.xlu0 %v4399, 32
        %v4481 = vpop.permute.xlu0 %4480
        %4482 = vrot.lane.b32.xlu0 %v4412, 32
        %v4483 = vpop.permute.xlu0 %4482
        %4484 = vrot.lane.b32.xlu0 %v4425, 32
        %v4485 = vpop.permute.xlu0 %4484
        %4486 = vrot.lane.b32.xlu0 %v4438, 32
        %v4487 = vpop.permute.xlu0 %4486
        %4488 = vrot.lane.b32.xlu0 %v4451, 32
        %v4489 = vpop.permute.xlu0 %4488
        %4490 = vrot.lane.b32.xlu0 %v4464, 32
        %v4491 = vpop.permute.xlu0 %4490
        %4492 = vrot.lane.b32.xlu0 %v4477, 32
        %v4493 = vpop.permute.xlu0 %4492
        %4502 = vst.msk [vmem:[#allocation3 + $0x2] sm:$0x3] %vm1442, %v4479
        %4503 = vst.msk [vmem:[#allocation3 + $0x8] sm:$0x3] %vm1442, %v4481
        %4504 = vst.msk [vmem:[#allocation3 + $0xe] sm:$0x3] %vm1442, %v4483
        %4505 = vst.msk [vmem:[#allocation3 + $0x14] sm:$0x3] %vm1442, %v4485
        %4506 = vst.msk [vmem:[#allocation3 + $0x1a] sm:$0x3] %vm1442, %v4487
        %4507 = vst.msk [vmem:[#allocation3 + $0x20] sm:$0x3] %vm1442, %v4489
        %4508 = vst.msk [vmem:[#allocation3 + $0x26] sm:$0x3] %vm1442, %v4491
        %4509 = vst.msk [vmem:[#allocation3 + $0x2c] sm:$0x3] %vm1442, %v4493
        %s4510 = scalar_lea.vmem [#allocation2], 12
        %v4511 = vld [vmem:[%s4510] sm:$0x7]
        %v4512 = vld [vmem:[%s4510 + $0x4] sm:$0x7]
        %v4513 = vld [vmem:[%s4510 + $0x8] sm:$0x7]
        %v4514 = vld [vmem:[%s4510 + $0xc] sm:$0x7]
        %v4515 = vld [vmem:[%s4510 + $0x20] sm:$0x7]
        %v4516 = vld [vmem:[%s4510 + $0x24] sm:$0x7]
        %v4517 = vld [vmem:[%s4510 + $0x28] sm:$0x7]
        %v4518 = vld [vmem:[%s4510 + $0x2c] sm:$0x7]
        %v4528 = vunpack.c.l.s4 1983009808
        %v4529 = vunpack.c.0.s8 %v4528
        %v4530 = vlaneseq
        %v4531 = vshrl.u32 %v4530, 7
        %v4532 = vsub.s32 %v4529, %v4531
        %v4533 = vrot.slane %v4511, %v4532
        %v4534 = vcombine.high %v4533, %v4533
        %v4536 = vunpack.c.l.s4 1983009808
        %v4537 = vunpack.c.0.s8 %v4536
        %v4538 = vlaneseq
        %v4539 = vshrl.u32 %v4538, 7
        %v4540 = vsub.s32 %v4537, %v4539
        %v4541 = vrot.slane %v4512, %v4540
        %v4542 = vcombine.high %v4541, %v4541
        %v4544 = vunpack.c.l.s4 1983009808
        %v4545 = vunpack.c.0.s8 %v4544
        %v4546 = vlaneseq
        %v4547 = vshrl.u32 %v4546, 7
        %v4548 = vsub.s32 %v4545, %v4547
        %v4549 = vrot.slane %v4513, %v4548
        %v4550 = vcombine.high %v4549, %v4549
        %v4552 = vunpack.c.l.s4 1983009808
        %v4553 = vunpack.c.0.s8 %v4552
        %v4554 = vlaneseq
        %v4555 = vshrl.u32 %v4554, 7
        %v4556 = vsub.s32 %v4553, %v4555
        %v4557 = vrot.slane %v4514, %v4556
        %v4558 = vcombine.high %v4557, %v4557
        %v4560 = vunpack.c.l.s4 1983009808
        %v4561 = vunpack.c.0.s8 %v4560
        %v4562 = vlaneseq
        %v4563 = vshrl.u32 %v4562, 7
        %v4564 = vsub.s32 %v4561, %v4563
        %v4565 = vrot.slane %v4515, %v4564
        %v4566 = vcombine.high %v4565, %v4565
        %v4568 = vunpack.c.l.s4 1983009808
        %v4569 = vunpack.c.0.s8 %v4568
        %v4570 = vlaneseq
        %v4571 = vshrl.u32 %v4570, 7
        %v4572 = vsub.s32 %v4569, %v4571
        %v4573 = vrot.slane %v4516, %v4572
        %v4574 = vcombine.high %v4573, %v4573
        %v4576 = vunpack.c.l.s4 1983009808
        %v4577 = vunpack.c.0.s8 %v4576
        %v4578 = vlaneseq
        %v4579 = vshrl.u32 %v4578, 7
        %v4580 = vsub.s32 %v4577, %v4579
        %v4581 = vrot.slane %v4517, %v4580
        %v4582 = vcombine.high %v4581, %v4581
        %v4584 = vunpack.c.l.s4 1983009808
        %v4585 = vunpack.c.0.s8 %v4584
        %v4586 = vlaneseq
        %v4587 = vshrl.u32 %v4586, 7
        %v4588 = vsub.s32 %v4585, %v4587
        %v4589 = vrot.slane %v4518, %v4588
        %v4590 = vcombine.high %v4589, %v4589
        %v4592 = vshrl.u32 %v4533, 16
        %v4594 = vrot.slane %v4592, 6
        %v4595 = vshll.u32 %v4533, 16
        %v4597 = vrot.slane %v4595, 7
        %v4598 = vor.u32 %v4594, %v4597
        %v4599 = vrot.slane %v4598, 2
        %v4601 = vshll.u32 %v4534, 16
        %v4603 = vrot.slane %v4601, 7
        %v4604 = vsel %vm1153, %v4599, %v4603
        %v4606 = vshrl.u32 %v4541, 16
        %v4608 = vrot.slane %v4606, 6
        %v4609 = vshll.u32 %v4541, 16
        %v4611 = vrot.slane %v4609, 7
        %v4612 = vor.u32 %v4608, %v4611
        %v4613 = vrot.slane %v4612, 2
        %v4615 = vshll.u32 %v4542, 16
        %v4617 = vrot.slane %v4615, 7
        %v4618 = vsel %vm1153, %v4613, %v4617
        %v4620 = vshrl.u32 %v4549, 16
        %v4622 = vrot.slane %v4620, 6
        %v4623 = vshll.u32 %v4549, 16
        %v4625 = vrot.slane %v4623, 7
        %v4626 = vor.u32 %v4622, %v4625
        %v4627 = vrot.slane %v4626, 2
        %v4629 = vshll.u32 %v4550, 16
        %v4631 = vrot.slane %v4629, 7
        %v4632 = vsel %vm1153, %v4627, %v4631
        %v4634 = vshrl.u32 %v4557, 16
        %v4636 = vrot.slane %v4634, 6
        %v4637 = vshll.u32 %v4557, 16
        %v4639 = vrot.slane %v4637, 7
        %v4640 = vor.u32 %v4636, %v4639
        %v4641 = vrot.slane %v4640, 2
        %v4643 = vshll.u32 %v4558, 16
        %v4645 = vrot.slane %v4643, 7
        %v4646 = vsel %vm1153, %v4641, %v4645
        %v4648 = vshrl.u32 %v4565, 16
        %v4650 = vrot.slane %v4648, 6
        %v4651 = vshll.u32 %v4565, 16
        %v4653 = vrot.slane %v4651, 7
        %v4654 = vor.u32 %v4650, %v4653
        %v4655 = vrot.slane %v4654, 2
        %v4657 = vshll.u32 %v4566, 16
        %v4659 = vrot.slane %v4657, 7
        %v4660 = vsel %vm1153, %v4655, %v4659
        %v4662 = vshrl.u32 %v4573, 16
        %v4664 = vrot.slane %v4662, 6
        %v4665 = vshll.u32 %v4573, 16
        %v4667 = vrot.slane %v4665, 7
        %v4668 = vor.u32 %v4664, %v4667
        %v4669 = vrot.slane %v4668, 2
        %v4671 = vshll.u32 %v4574, 16
        %v4673 = vrot.slane %v4671, 7
        %v4674 = vsel %vm1153, %v4669, %v4673
        %v4676 = vshrl.u32 %v4581, 16
        %v4678 = vrot.slane %v4676, 6
        %v4679 = vshll.u32 %v4581, 16
        %v4681 = vrot.slane %v4679, 7
        %v4682 = vor.u32 %v4678, %v4681
        %v4683 = vrot.slane %v4682, 2
        %v4685 = vshll.u32 %v4582, 16
        %v4687 = vrot.slane %v4685, 7
        %v4688 = vsel %vm1153, %v4683, %v4687
        %v4690 = vshrl.u32 %v4589, 16
        %v4692 = vrot.slane %v4690, 6
        %v4693 = vshll.u32 %v4589, 16
        %v4695 = vrot.slane %v4693, 7
        %v4696 = vor.u32 %v4692, %v4695
        %v4697 = vrot.slane %v4696, 2
        %v4699 = vshll.u32 %v4590, 16
        %v4701 = vrot.slane %v4699, 7
        %v4702 = vsel %vm1153, %v4697, %v4701
        %4703 = vrot.lane.b32.xlu0 %v4604, 64
        %v4704 = vpop.permute.xlu0 %4703
        %4705 = vrot.lane.b32.xlu0 %v4618, 64
        %v4706 = vpop.permute.xlu0 %4705
        %4707 = vrot.lane.b32.xlu0 %v4632, 64
        %v4708 = vpop.permute.xlu0 %4707
        %4709 = vrot.lane.b32.xlu0 %v4646, 64
        %v4710 = vpop.permute.xlu0 %4709
        %4711 = vrot.lane.b32.xlu0 %v4660, 64
        %v4712 = vpop.permute.xlu0 %4711
        %4713 = vrot.lane.b32.xlu0 %v4674, 64
        %v4714 = vpop.permute.xlu0 %4713
        %4715 = vrot.lane.b32.xlu0 %v4688, 64
        %v4716 = vpop.permute.xlu0 %4715
        %4717 = vrot.lane.b32.xlu0 %v4702, 64
        %v4718 = vpop.permute.xlu0 %4717
        %4727 = vst.msk [vmem:[#allocation3 + $0x2] sm:$0x3] %vm1587, %v4704
        %4728 = vst.msk [vmem:[#allocation3 + $0x8] sm:$0x3] %vm1587, %v4706
        %4729 = vst.msk [vmem:[#allocation3 + $0xe] sm:$0x3] %vm1587, %v4708
        %4730 = vst.msk [vmem:[#allocation3 + $0x14] sm:$0x3] %vm1587, %v4710
        %4731 = vst.msk [vmem:[#allocation3 + $0x1a] sm:$0x3] %vm1587, %v4712
        %4732 = vst.msk [vmem:[#allocation3 + $0x20] sm:$0x3] %vm1587, %v4714
        %4733 = vst.msk [vmem:[#allocation3 + $0x26] sm:$0x3] %vm1587, %v4716
        %4734 = vst.msk [vmem:[#allocation3 + $0x2c] sm:$0x3] %vm1587, %v4718
        %v4735 = vld [vmem:[%s4510] sm:$0x6]
        %v4736 = vld [vmem:[%s4510 + $0x4] sm:$0x6]
        %v4737 = vld [vmem:[%s4510 + $0x8] sm:$0x6]
        %v4738 = vld [vmem:[%s4510 + $0xc] sm:$0x6]
        %v4739 = vld [vmem:[%s4510 + $0x20] sm:$0x6]
        %v4740 = vld [vmem:[%s4510 + $0x24] sm:$0x6]
        %v4741 = vld [vmem:[%s4510 + $0x28] sm:$0x6]
        %v4742 = vld [vmem:[%s4510 + $0x2c] sm:$0x6]
        %v4752 = vunpack.c.l.s4 1983009808
        %v4753 = vunpack.c.0.s8 %v4752
        %v4754 = vlaneseq
        %v4755 = vshrl.u32 %v4754, 7
        %v4756 = vsub.s32 %v4753, %v4755
        %v4757 = vrot.slane %v4735, %v4756
        %v4758 = vcombine.high %v4757, %v4757
        %v4760 = vunpack.c.l.s4 1983009808
        %v4761 = vunpack.c.0.s8 %v4760
        %v4762 = vlaneseq
        %v4763 = vshrl.u32 %v4762, 7
        %v4764 = vsub.s32 %v4761, %v4763
        %v4765 = vrot.slane %v4736, %v4764
        %v4766 = vcombine.high %v4765, %v4765
        %v4768 = vunpack.c.l.s4 1983009808
        %v4769 = vunpack.c.0.s8 %v4768
        %v4770 = vlaneseq
        %v4771 = vshrl.u32 %v4770, 7
        %v4772 = vsub.s32 %v4769, %v4771
        %v4773 = vrot.slane %v4737, %v4772
        %v4774 = vcombine.high %v4773, %v4773
        %v4776 = vunpack.c.l.s4 1983009808
        %v4777 = vunpack.c.0.s8 %v4776
        %v4778 = vlaneseq
        %v4779 = vshrl.u32 %v4778, 7
        %v4780 = vsub.s32 %v4777, %v4779
        %v4781 = vrot.slane %v4738, %v4780
        %v4782 = vcombine.high %v4781, %v4781
        %v4784 = vunpack.c.l.s4 1983009808
        %v4785 = vunpack.c.0.s8 %v4784
        %v4786 = vlaneseq
        %v4787 = vshrl.u32 %v4786, 7
        %v4788 = vsub.s32 %v4785, %v4787
        %v4789 = vrot.slane %v4739, %v4788
        %v4790 = vcombine.high %v4789, %v4789
        %v4792 = vunpack.c.l.s4 1983009808
        %v4793 = vunpack.c.0.s8 %v4792
        %v4794 = vlaneseq
        %v4795 = vshrl.u32 %v4794, 7
        %v4796 = vsub.s32 %v4793, %v4795
        %v4797 = vrot.slane %v4740, %v4796
        %v4798 = vcombine.high %v4797, %v4797
        %v4800 = vunpack.c.l.s4 1983009808
        %v4801 = vunpack.c.0.s8 %v4800
        %v4802 = vlaneseq
        %v4803 = vshrl.u32 %v4802, 7
        %v4804 = vsub.s32 %v4801, %v4803
        %v4805 = vrot.slane %v4741, %v4804
        %v4806 = vcombine.high %v4805, %v4805
        %v4808 = vunpack.c.l.s4 1983009808
        %v4809 = vunpack.c.0.s8 %v4808
        %v4810 = vlaneseq
        %v4811 = vshrl.u32 %v4810, 7
        %v4812 = vsub.s32 %v4809, %v4811
        %v4813 = vrot.slane %v4742, %v4812
        %v4814 = vcombine.high %v4813, %v4813
        %v4815 = vrot.slane %v4757, 7
        %v4816 = vrot.slane %v4815, 2
        %v4817 = vrot.slane %v4758, 7
        %v4818 = vsel %vm1385, %v4816, %v4817
        %v4819 = vrot.slane %v4765, 7
        %v4820 = vrot.slane %v4819, 2
        %v4821 = vrot.slane %v4766, 7
        %v4822 = vsel %vm1385, %v4820, %v4821
        %v4823 = vrot.slane %v4773, 7
        %v4824 = vrot.slane %v4823, 2
        %v4825 = vrot.slane %v4774, 7
        %v4826 = vsel %vm1385, %v4824, %v4825
        %v4827 = vrot.slane %v4781, 7
        %v4828 = vrot.slane %v4827, 2
        %v4829 = vrot.slane %v4782, 7
        %v4830 = vsel %vm1385, %v4828, %v4829
        %v4831 = vrot.slane %v4789, 7
        %v4832 = vrot.slane %v4831, 2
        %v4833 = vrot.slane %v4790, 7
        %v4834 = vsel %vm1385, %v4832, %v4833
        %v4835 = vrot.slane %v4797, 7
        %v4836 = vrot.slane %v4835, 2
        %v4837 = vrot.slane %v4798, 7
        %v4838 = vsel %vm1385, %v4836, %v4837
        %v4839 = vrot.slane %v4805, 7
        %v4840 = vrot.slane %v4839, 2
        %v4841 = vrot.slane %v4806, 7
        %v4842 = vsel %vm1385, %v4840, %v4841
        %v4843 = vrot.slane %v4813, 7
        %v4844 = vrot.slane %v4843, 2
        %v4845 = vrot.slane %v4814, 7
        %v4846 = vsel %vm1385, %v4844, %v4845
        %4847 = vrot.lane.b32.xlu0 %v4818, 96
        %v4848 = vpop.permute.xlu0 %4847
        %4849 = vrot.lane.b32.xlu0 %v4822, 96
        %v4850 = vpop.permute.xlu0 %4849
        %4851 = vrot.lane.b32.xlu0 %v4826, 96
        %v4852 = vpop.permute.xlu0 %4851
        %4853 = vrot.lane.b32.xlu0 %v4830, 96
        %v4854 = vpop.permute.xlu0 %4853
        %4855 = vrot.lane.b32.xlu0 %v4834, 96
        %v4856 = vpop.permute.xlu0 %4855
        %4857 = vrot.lane.b32.xlu0 %v4838, 96
        %v4858 = vpop.permute.xlu0 %4857
        %4859 = vrot.lane.b32.xlu0 %v4842, 96
        %v4860 = vpop.permute.xlu0 %4859
        %4861 = vrot.lane.b32.xlu0 %v4846, 96
        %v4862 = vpop.permute.xlu0 %4861
        %4871 = vst.msk [vmem:[#allocation3 + $0x2] sm:$0x3] %vm1812, %v4848
        %4872 = vst.msk [vmem:[#allocation3 + $0x8] sm:$0x3] %vm1812, %v4850
        %4873 = vst.msk [vmem:[#allocation3 + $0xe] sm:$0x3] %vm1812, %v4852
        %4874 = vst.msk [vmem:[#allocation3 + $0x14] sm:$0x3] %vm1812, %v4854
        %4875 = vst.msk [vmem:[#allocation3 + $0x1a] sm:$0x3] %vm1812, %v4856
        %4876 = vst.msk [vmem:[#allocation3 + $0x20] sm:$0x3] %vm1812, %v4858
        %4877 = vst.msk [vmem:[#allocation3 + $0x26] sm:$0x3] %vm1812, %v4860
        %4878 = vst.msk [vmem:[#allocation3 + $0x2c] sm:$0x3] %vm1812, %v4862
        %v4879 = vld [vmem:[%s4510] sm:$0xe]
        %v4880 = vld [vmem:[%s4510 + $0x4] sm:$0xe]
        %v4881 = vld [vmem:[%s4510 + $0x8] sm:$0xe]
        %v4882 = vld [vmem:[%s4510 + $0xc] sm:$0xe]
        %v4883 = vld [vmem:[%s4510 + $0x20] sm:$0xe]
        %v4884 = vld [vmem:[%s4510 + $0x24] sm:$0xe]
        %v4885 = vld [vmem:[%s4510 + $0x28] sm:$0xe]
        %v4886 = vld [vmem:[%s4510 + $0x2c] sm:$0xe]
        %v4896 = vunpack.c.l.s4 1983009808
        %v4897 = vunpack.c.0.s8 %v4896
        %v4898 = vlaneseq
        %v4899 = vshrl.u32 %v4898, 7
        %v4900 = vsub.s32 %v4897, %v4899
        %v4901 = vrot.slane %v4879, %v4900
        %v4902 = vcombine.high %v4901, %v4901
        %v4904 = vunpack.c.l.s4 1983009808
        %v4905 = vunpack.c.0.s8 %v4904
        %v4906 = vlaneseq
        %v4907 = vshrl.u32 %v4906, 7
        %v4908 = vsub.s32 %v4905, %v4907
        %v4909 = vrot.slane %v4880, %v4908
        %v4910 = vcombine.high %v4909, %v4909
        %v4912 = vunpack.c.l.s4 1983009808
        %v4913 = vunpack.c.0.s8 %v4912
        %v4914 = vlaneseq
        %v4915 = vshrl.u32 %v4914, 7
        %v4916 = vsub.s32 %v4913, %v4915
        %v4917 = vrot.slane %v4881, %v4916
        %v4918 = vcombine.high %v4917, %v4917
        %v4920 = vunpack.c.l.s4 1983009808
        %v4921 = vunpack.c.0.s8 %v4920
        %v4922 = vlaneseq
        %v4923 = vshrl.u32 %v4922, 7
        %v4924 = vsub.s32 %v4921, %v4923
        %v4925 = vrot.slane %v4882, %v4924
        %v4926 = vcombine.high %v4925, %v4925
        %v4928 = vunpack.c.l.s4 1983009808
        %v4929 = vunpack.c.0.s8 %v4928
        %v4930 = vlaneseq
        %v4931 = vshrl.u32 %v4930, 7
        %v4932 = vsub.s32 %v4929, %v4931
        %v4933 = vrot.slane %v4883, %v4932
        %v4934 = vcombine.high %v4933, %v4933
        %v4936 = vunpack.c.l.s4 1983009808
        %v4937 = vunpack.c.0.s8 %v4936
        %v4938 = vlaneseq
        %v4939 = vshrl.u32 %v4938, 7
        %v4940 = vsub.s32 %v4937, %v4939
        %v4941 = vrot.slane %v4884, %v4940
        %v4942 = vcombine.high %v4941, %v4941
        %v4944 = vunpack.c.l.s4 1983009808
        %v4945 = vunpack.c.0.s8 %v4944
        %v4946 = vlaneseq
        %v4947 = vshrl.u32 %v4946, 7
        %v4948 = vsub.s32 %v4945, %v4947
        %v4949 = vrot.slane %v4885, %v4948
        %v4950 = vcombine.high %v4949, %v4949
        %v4952 = vunpack.c.l.s4 1983009808
        %v4953 = vunpack.c.0.s8 %v4952
        %v4954 = vlaneseq
        %v4955 = vshrl.u32 %v4954, 7
        %v4956 = vsub.s32 %v4953, %v4955
        %v4957 = vrot.slane %v4886, %v4956
        %v4958 = vcombine.high %v4957, %v4957
        %v4960 = vshrl.u32 %v4901, 16
        %v4962 = vrot.slane %v4960, 7
        %v4963 = vrot.slane %v4962, 2
        %v4965 = vshrl.u32 %v4902, 16
        %v4967 = vrot.slane %v4965, 7
        %v4968 = vshll.u32 %v4902, 16
        %v4970 = vor.u32 %v4967, %v4968
        %v4971 = vsel %vm3805, %v4963, %v4970
        %v4973 = vshrl.u32 %v4909, 16
        %v4975 = vrot.slane %v4973, 7
        %v4976 = vrot.slane %v4975, 2
        %v4978 = vshrl.u32 %v4910, 16
        %v4980 = vrot.slane %v4978, 7
        %v4981 = vshll.u32 %v4910, 16
        %v4983 = vor.u32 %v4980, %v4981
        %v4984 = vsel %vm3805, %v4976, %v4983
        %v4986 = vshrl.u32 %v4917, 16
        %v4988 = vrot.slane %v4986, 7
        %v4989 = vrot.slane %v4988, 2
        %v4991 = vshrl.u32 %v4918, 16
        %v4993 = vrot.slane %v4991, 7
        %v4994 = vshll.u32 %v4918, 16
        %v4996 = vor.u32 %v4993, %v4994
        %v4997 = vsel %vm3805, %v4989, %v4996
        %v4999 = vshrl.u32 %v4925, 16
        %v5001 = vrot.slane %v4999, 7
        %v5002 = vrot.slane %v5001, 2
        %v5004 = vshrl.u32 %v4926, 16
        %v5006 = vrot.slane %v5004, 7
        %v5007 = vshll.u32 %v4926, 16
        %v5009 = vor.u32 %v5006, %v5007
        %v5010 = vsel %vm3805, %v5002, %v5009
        %v5012 = vshrl.u32 %v4933, 16
        %v5014 = vrot.slane %v5012, 7
        %v5015 = vrot.slane %v5014, 2
        %v5017 = vshrl.u32 %v4934, 16
        %v5019 = vrot.slane %v5017, 7
        %v5020 = vshll.u32 %v4934, 16
        %v5022 = vor.u32 %v5019, %v5020
        %v5023 = vsel %vm3805, %v5015, %v5022
        %v5025 = vshrl.u32 %v4941, 16
        %v5027 = vrot.slane %v5025, 7
        %v5028 = vrot.slane %v5027, 2
        %v5030 = vshrl.u32 %v4942, 16
        %v5032 = vrot.slane %v5030, 7
        %v5033 = vshll.u32 %v4942, 16
        %v5035 = vor.u32 %v5032, %v5033
        %v5036 = vsel %vm3805, %v5028, %v5035
        %v5038 = vshrl.u32 %v4949, 16
        %v5040 = vrot.slane %v5038, 7
        %v5041 = vrot.slane %v5040, 2
        %v5043 = vshrl.u32 %v4950, 16
        %v5045 = vrot.slane %v5043, 7
        %v5046 = vshll.u32 %v4950, 16
        %v5048 = vor.u32 %v5045, %v5046
        %v5049 = vsel %vm3805, %v5041, %v5048
        %v5051 = vshrl.u32 %v4957, 16
        %v5053 = vrot.slane %v5051, 7
        %v5054 = vrot.slane %v5053, 2
        %v5056 = vshrl.u32 %v4958, 16
        %v5058 = vrot.slane %v5056, 7
        %v5059 = vshll.u32 %v4958, 16
        %v5061 = vor.u32 %v5058, %v5059
        %v5062 = vsel %vm3805, %v5054, %v5061
        %5071 = vst.msk [vmem:[#allocation3 + $0x4] sm:$0x3] %vm1290, %v4971
        %5072 = vst.msk [vmem:[#allocation3 + $0xa] sm:$0x3] %vm1290, %v4984
        %5073 = vst.msk [vmem:[#allocation3 + $0x10] sm:$0x3] %vm1290, %v4997
        %5074 = vst.msk [vmem:[#allocation3 + $0x16] sm:$0x3] %vm1290, %v5010
        %5075 = vst.msk [vmem:[#allocation3 + $0x1c] sm:$0x3] %vm1290, %v5023
        %5076 = vst.msk [vmem:[#allocation3 + $0x22] sm:$0x3] %vm1290, %v5036
        %5077 = vst.msk [vmem:[#allocation3 + $0x28] sm:$0x3] %vm1290, %v5049
        %5078 = vst.msk [vmem:[#allocation3 + $0x2e] sm:$0x3] %vm1290, %v5062
        %v5079 = vld [vmem:[#allocation3] sm:$0x3f]
        %v5080 = vld [vmem:[#allocation3 + $0x6] sm:$0x3f]
        %v5081 = vld [vmem:[#allocation3 + $0xc] sm:$0x3f]
        %v5082 = vld [vmem:[#allocation3 + $0x12] sm:$0x3f]
        %v5083 = vld [vmem:[#allocation3 + $0x18] sm:$0x3f]
        %v5084 = vld [vmem:[#allocation3 + $0x1e] sm:$0x3f]
        %v5085 = vld [vmem:[#allocation3 + $0x24] sm:$0x3f]
        %v5086 = vld [vmem:[#allocation3 + $0x2a] sm:$0x3f]
        %v5087 = vld [vmem:[%s11] sm:$0xf]
        %v5088 = vld [vmem:[%s11 + $0x4] sm:$0xf]
        %v5089 = vld [vmem:[%s11 + $0x8] sm:$0xf]
        %v5090 = vld [vmem:[%s11 + $0xc] sm:$0xf]
        %v5091 = vld [vmem:[%s11 + $0x10] sm:$0xf]
        %v5092 = vld [vmem:[%s11 + $0x14] sm:$0xf]
        %v5093 = vld [vmem:[%s11 + $0x18] sm:$0xf]
        %v5094 = vld [vmem:[%s11 + $0x1c] sm:$0xf]
        %v5095 = vld [vmem:[%s11 + $0x20] sm:$0xf]
        %v5096 = vld [vmem:[%s11 + $0x24] sm:$0xf]
        %v5097 = vld [vmem:[%s11 + $0x28] sm:$0xf]
        %v5098 = vld [vmem:[%s11 + $0x2c] sm:$0xf]
        %v5099 = vld [vmem:[%s11 + $0x30] sm:$0xf]
        %v5100 = vld [vmem:[%s11 + $0x34] sm:$0xf]
        %v5101 = vld [vmem:[%s11 + $0x38] sm:$0xf]
        %v5102 = vld [vmem:[%s11 + $0x3c] sm:$0xf]
        %v5103 = vld [vmem:[%s11 + $0x40] sm:$0xf]
        %v5104 = vld [vmem:[%s11 + $0x44] sm:$0xf]
        %v5105 = vld [vmem:[%s11 + $0x48] sm:$0xf]
        %v5106 = vld [vmem:[%s11 + $0x4c] sm:$0xf]
        %v5107 = vld [vmem:[%s11 + $0x50] sm:$0xf]
        %v5108 = vld [vmem:[%s11 + $0x54] sm:$0xf]
        %v5109 = vld [vmem:[%s11 + $0x58] sm:$0xf]
        %v5110 = vld [vmem:[%s11 + $0x5c] sm:$0xf]
        %v5111 = vld [vmem:[%s11 + $0x60] sm:$0xf]
        %v5112 = vld [vmem:[%s11 + $0x64] sm:$0xf]
        %v5113 = vld [vmem:[%s11 + $0x68] sm:$0xf]
        %v5114 = vld [vmem:[%s11 + $0x6c] sm:$0xf]
        %v5115 = vld [vmem:[%s11 + $0x70] sm:$0xf]
        %v5116 = vld [vmem:[%s11 + $0x74] sm:$0xf]
        %v5117 = vld [vmem:[%s11 + $0x78] sm:$0xf]
        %v5118 = vld [vmem:[%s11 + $0x7c] sm:$0xf]
        %v5119 = vld [vmem:[%s11 + $0x80] sm:$0xf]
        %v5120 = vld [vmem:[%s11 + $0x84] sm:$0xf]
        %v5121 = vld [vmem:[%s11 + $0x88] sm:$0xf]
        %v5122 = vld [vmem:[%s11 + $0x8c] sm:$0xf]
        %v5123 = vld [vmem:[%s12] sm:$0x1]
        %v5125 = vlaneseq
        %v5126 = vshrl.u32 %v5125, 7
        %v5127 = vsub.s32 0, %v5126
        %v5128 = vrot.slane %v5123, %v5127
        %v5138 = vcombine.low %v5079, %v5080
        %v5139 = vcombine.high %v5079, %v5080
        %v5140 = vcombine.low %v5081, %v5082
        %v5141 = vcombine.high %v5081, %v5082
        %v5143 = vunpack.c.l.s4 1983009808
        %v5144 = vunpack.c.0.s8 %v5143
        %v5145 = vlaneseq
        %v5146 = vshrl.u32 %v5145, 7
        %v5147 = vsub.s32 %v5144, %v5146
        %v5148 = vrot.slane %v5138, %v5147
        %v5150 = vunpack.c.l.s4 1983009808
        %v5151 = vunpack.c.0.s8 %v5150
        %v5152 = vlaneseq
        %v5153 = vshrl.u32 %v5152, 7
        %v5154 = vsub.s32 %v5151, %v5153
        %v5155 = vrot.slane %v5139, %v5154
        %v5157 = vunpack.c.l.s4 1983009808
        %v5158 = vunpack.c.0.s8 %v5157
        %v5159 = vlaneseq
        %v5160 = vshrl.u32 %v5159, 7
        %v5161 = vsub.s32 %v5158, %v5160
        %v5162 = vrot.slane %v5140, %v5161
        %v5164 = vunpack.c.l.s4 1983009808
        %v5165 = vunpack.c.0.s8 %v5164
        %v5166 = vlaneseq
        %v5167 = vshrl.u32 %v5166, 7
        %v5168 = vsub.s32 %v5165, %v5167
        %v5169 = vrot.slane %v5141, %v5168
        %v5170 = vcombine.low %v5148, %v5162
        %v5171 = vcombine.high %v5148, %v5162
        %v5172 = vcombine.low %v5155, %v5169
        %v5173 = vcombine.low %v5083, %v5084
        %v5174 = vcombine.high %v5083, %v5084
        %v5175 = vcombine.low %v5085, %v5086
        %v5176 = vcombine.high %v5085, %v5086
        %v5178 = vunpack.c.l.s4 1983009808
        %v5179 = vunpack.c.0.s8 %v5178
        %v5180 = vlaneseq
        %v5181 = vshrl.u32 %v5180, 7
        %v5182 = vsub.s32 %v5179, %v5181
        %v5183 = vrot.slane %v5173, %v5182
        %v5185 = vunpack.c.l.s4 1983009808
        %v5186 = vunpack.c.0.s8 %v5185
        %v5187 = vlaneseq
        %v5188 = vshrl.u32 %v5187, 7
        %v5189 = vsub.s32 %v5186, %v5188
        %v5190 = vrot.slane %v5174, %v5189
        %v5192 = vunpack.c.l.s4 1983009808
        %v5193 = vunpack.c.0.s8 %v5192
        %v5194 = vlaneseq
        %v5195 = vshrl.u32 %v5194, 7
        %v5196 = vsub.s32 %v5193, %v5195
        %v5197 = vrot.slane %v5175, %v5196
        %v5199 = vunpack.c.l.s4 1983009808
        %v5200 = vunpack.c.0.s8 %v5199
        %v5201 = vlaneseq
        %v5202 = vshrl.u32 %v5201, 7
        %v5203 = vsub.s32 %v5200, %v5202
        %v5204 = vrot.slane %v5176, %v5203
        %v5205 = vcombine.low %v5183, %v5197
        %v5206 = vcombine.high %v5183, %v5197
        %v5207 = vcombine.low %v5190, %v5204
        %v5248 = vunpack.c.l.b16 %v5087
        %v5249 = vunpack.c.l.b16 %v5088
        %v5250 = vunpack.c.l.b16 %v5089
        %v5251 = vunpack.c.l.b16 %v5090
        %v5252 = vunpack.c.l.b16 %v5091
        %v5253 = vunpack.c.l.b16 %v5092
        %v5254 = vunpack.c.l.b16 %v5093
        %v5255 = vunpack.c.l.b16 %v5094
        %v5256 = vunpack.c.l.b16 %v5095
        %v5257 = vunpack.c.l.b16 %v5096
        %v5258 = vunpack.c.l.b16 %v5097
        %v5259 = vunpack.c.l.b16 %v5098
        %v5260 = vunpack.c.l.b16 %v5099
        %v5261 = vunpack.c.l.b16 %v5100
        %v5262 = vunpack.c.l.b16 %v5101
        %v5263 = vunpack.c.l.b16 %v5102
        %v5264 = vunpack.c.l.b16 %v5103
        %v5265 = vunpack.c.l.b16 %v5104
        %v5266 = vunpack.c.l.b16 %v5105
        %v5267 = vunpack.c.l.b16 %v5106
        %v5268 = vunpack.c.l.b16 %v5107
        %v5269 = vunpack.c.l.b16 %v5108
        %v5270 = vunpack.c.l.b16 %v5109
        %v5271 = vunpack.c.l.b16 %v5110
        %v5272 = vunpack.c.l.b16 %v5111
        %v5273 = vunpack.c.l.b16 %v5112
        %v5274 = vunpack.c.l.b16 %v5113
        %v5275 = vunpack.c.l.b16 %v5114
        %v5276 = vunpack.c.l.b16 %v5115
        %v5277 = vunpack.c.l.b16 %v5116
        %v5278 = vunpack.c.l.b16 %v5117
        %v5279 = vunpack.c.l.b16 %v5118
        %v5280 = vunpack.c.l.b16 %v5119
        %v5281 = vunpack.c.l.b16 %v5120
        %v5282 = vunpack.c.l.b16 %v5121
        %v5283 = vunpack.c.l.b16 %v5122
        %v5284 = vpack.c.b16 %v5249, %v5248
        %v5285 = vpack.c.b16 %v5251, %v5250
        %v5286 = vpack.c.b16 %v5253, %v5252
        %v5287 = vpack.c.b16 %v5255, %v5254
        %v5288 = vpack.c.b16 %v5257, %v5256
        %v5289 = vpack.c.b16 %v5259, %v5258
        %v5290 = vpack.c.b16 %v5261, %v5260
        %v5291 = vpack.c.b16 %v5263, %v5262
        %v5292 = vpack.c.b16 %v5265, %v5264
        %v5293 = vpack.c.b16 %v5267, %v5266
        %v5294 = vpack.c.b16 %v5269, %v5268
        %v5295 = vpack.c.b16 %v5271, %v5270
        %v5296 = vpack.c.b16 %v5273, %v5272
        %v5297 = vpack.c.b16 %v5275, %v5274
        %v5298 = vpack.c.b16 %v5277, %v5276
        %v5299 = vpack.c.b16 %v5279, %v5278
        %v5300 = vpack.c.b16 %v5281, %v5280
        %v5301 = vpack.c.b16 %v5283, %v5282
        %v5321 = vsel %vm2830, %v5172, 0
        %v5324 = vsel %vm2830, %v5207, 0
        %5326 = vmatprep.subr.bf16.mxu0 0
        %5327 = vmatpush1.bf16.msra.mxu0 %v5291
        %5328 = vmatprep.subr.bf16.mxu0 0
        %5329 = vmatpush1.bf16.msra.mxu0 %v5290
        %5330 = vmatprep.subr.bf16.mxu0 0
        %5331 = vmatpush1.bf16.msra.mxu0 %v5289
        %5332 = vmatprep.subr.bf16.mxu0 0
        %5333 = vmatpush1.bf16.msra.mxu0 %v5288
        %5334 = vmatprep.subr.bf16.mxu0 0
        %5335 = vmatpush1.bf16.msra.mxu0 %v5287
        %5336 = vmatprep.subr.bf16.mxu0 0
        %5337 = vmatpush1.bf16.msra.mxu0 %v5286
        %5338 = vmatprep.subr.bf16.mxu0 0
        %5339 = vmatpush1.bf16.msra.mxu0 %v5285
        %5340 = vmatprep.subr.bf16.mxu0 0
        %5341 = vmatpush1.bf16.msra.mxu0 %v5284
        %5342 = vmatprep.subr.bf16.mxu0 0
        %5343 = vmatpush2.bf16.msra.mxu0 %v5299
        %5344 = vmatprep.subr.bf16.mxu0 0
        %5345 = vmatpush2.bf16.msra.mxu0 %v5298
        %5346 = vmatprep.subr.bf16.mxu0 0
        %5347 = vmatpush2.bf16.msra.mxu0 %v5297
        %5348 = vmatprep.subr.bf16.mxu0 0
        %5349 = vmatpush2.bf16.msra.mxu0 %v5296
        %5350 = vmatprep.subr.bf16.mxu0 0
        %5351 = vmatpush2.bf16.msra.mxu0 %v5295
        %5352 = vmatprep.subr.bf16.mxu0 0
        %5353 = vmatpush2.bf16.msra.mxu0 %v5294
        %5354 = vmatprep.subr.bf16.mxu0 0
        %5355 = vmatpush2.bf16.msra.mxu0 %v5293
        %5356 = vmatprep.subr.bf16.mxu0 0
        %5357 = vmatpush2.bf16.msra.mxu0 %v5292
        %5358 = vmatprep.mubr.bf16.mxu0 %v5171
        %5359 = vmatmul.mubr.bf16.gmra.mxu0 %v5170
        %v5360 = vpop.f32.mrf.mxu0
        %v5361 = vadd.f32 %v5128, %v5360
        %v5362 = vpop.f32.mrf.mxu0
        %v5363 = vpop.f32.mrf.mxu0
        %v5364 = vadd.f32 %v5128, %v5363
        %v5365 = vpop.f32.mrf.mxu0
        %5366 = vmatprep.mubr.bf16.mxu0 %v5206
        %5367 = vmatmul.mubr.bf16.gmra.mxu0 %v5205
        %v5368 = vpop.f32.mrf.mxu0
        %v5369 = vadd.f32 %v5128, %v5368
        %v5370 = vpop.f32.mrf.mxu0
        %v5371 = vpop.f32.mrf.mxu0
        %v5372 = vadd.f32 %v5128, %v5371
        %v5373 = vpop.f32.mrf.mxu0
        %5374 = vdwg.mxu0
        %5375 = vmatprep.subr.bf16.mxu0 0
        %5376 = vmatpush1.bf16.msra.mxu0 0
        %5377 = vmatprep.subr.bf16.mxu0 0
        %5378 = vmatpush1.bf16.msra.mxu0 0
        %5379 = vmatprep.subr.bf16.mxu0 0
        %5380 = vmatpush1.bf16.msra.mxu0 0
        %5381 = vmatprep.subr.bf16.mxu0 0
        %5382 = vmatpush1.bf16.msra.mxu0 0
        %5383 = vmatprep.subr.bf16.mxu0 0
        %5384 = vmatpush1.bf16.msra.mxu0 0
        %5385 = vmatprep.subr.bf16.mxu0 0
        %5386 = vmatpush1.bf16.msra.mxu0 0
        %5387 = vmatprep.subr.bf16.mxu0 0
        %5388 = vmatpush1.bf16.msra.mxu0 %v5301
        %5389 = vmatprep.subr.bf16.mxu0 0
        %5390 = vmatpush1.bf16.msra.mxu0 %v5300
        %5391 = vmatprep.subr.bf16.mxu0 0
        %5392 = vmatpush2.bf16.msra.mxu0 0
        %5393 = vmatprep.subr.bf16.mxu0 0
        %5394 = vmatpush2.bf16.msra.mxu0 0
        %5395 = vmatprep.subr.bf16.mxu0 0
        %5396 = vmatpush2.bf16.msra.mxu0 0
        %5397 = vmatprep.subr.bf16.mxu0 0
        %5398 = vmatpush2.bf16.msra.mxu0 0
        %5399 = vmatprep.subr.bf16.mxu0 0
        %5400 = vmatpush2.bf16.msra.mxu0 0
        %5401 = vmatprep.subr.bf16.mxu0 0
        %5402 = vmatpush2.bf16.msra.mxu0 0
        %5403 = vmatprep.subr.bf16.mxu0 0
        %5404 = vmatpush2.bf16.msra.mxu0 0
        %5405 = vmatprep.subr.bf16.mxu0 0
        %5406 = vmatpush2.bf16.msra.mxu0 0
        %5407 = vmatprep.mubr.bf16.mxu0 0
        %5408 = vmatmul.mubr.bf16.gmra.mxu0 %v5321
        %v5409 = vpop.f32.mrf.mxu0
        %v5410 = vadd.f32 %v5361, %v5409
        %v5411 = vpop.f32.mrf.mxu0
        %v5412 = vpop.f32.mrf.mxu0
        %v5413 = vadd.f32 %v5364, %v5412
        %v5414 = vpop.f32.mrf.mxu0
        %5415 = vmatprep.mubr.bf16.mxu0 0
        %5416 = vmatmul.mubr.bf16.gmra.mxu0 %v5324
        %v5417 = vpop.f32.mrf.mxu0
        %v5418 = vadd.f32 %v5369, %v5417
        %v5419 = vpop.f32.mrf.mxu0
        %v5420 = vpop.f32.mrf.mxu0
        %v5421 = vadd.f32 %v5372, %v5420
        %v5422 = vpop.f32.mrf.mxu0
        %5423 = vdwg.mxu0
        %v5424 = vmax.f32 %v5410, 0.0
        %v5425 = vmax.f32 %v5413, 0.0
        %v5426 = vmax.f32 %v5418, 0.0
        %v5427 = vmax.f32 %v5421, 0.0
        %v5428 = vpack.c.bf16 %v5425, %v5424
        %v5429 = vpack.c.bf16 %v5427, %v5426
        %v5430 = vld [vmem:[%s13] sm:$0xf]
        %v5431 = vld [vmem:[%s13 + $0x4] sm:$0xf]
        %v5432 = vld [vmem:[%s13 + $0x8] sm:$0xf]
        %v5433 = vld [vmem:[%s13 + $0xc] sm:$0xf]
        %v5434 = vld [vmem:[%s14] sm:$0x1]
        %v5436 = vlaneseq
        %v5437 = vshrl.u32 %v5436, 7
        %v5438 = vsub.s32 0, %v5437
        %v5439 = vrot.slane %v5434, %v5438
        %v5445 = vunpack.c.l.b16 %v5430
        %v5446 = vunpack.c.l.b16 %v5431
        %v5447 = vunpack.c.l.b16 %v5432
        %v5448 = vunpack.c.l.b16 %v5433
        %v5449 = vpack.c.b16 %v5446, %v5445
        %v5450 = vpack.c.b16 %v5448, %v5447
        %v5454 = vsel %vm2830, %v5428, 0
        %v5457 = vsel %vm2830, %v5429, 0
        %5459 = vmatprep.subr.bf16.mxu0 0
        %5460 = vmatpush1.bf16.msra.mxu0 0
        %5461 = vmatprep.subr.bf16.mxu0 0
        %5462 = vmatpush1.bf16.msra.mxu0 0
        %5463 = vmatprep.subr.bf16.mxu0 0
        %5464 = vmatpush1.bf16.msra.mxu0 0
        %5465 = vmatprep.subr.bf16.mxu0 0
        %5466 = vmatpush1.bf16.msra.mxu0 0
        %5467 = vmatprep.subr.bf16.mxu0 0
        %5468 = vmatpush1.bf16.msra.mxu0 0
        %5469 = vmatprep.subr.bf16.mxu0 0
        %5470 = vmatpush1.bf16.msra.mxu0 0
        %5471 = vmatprep.subr.bf16.mxu0 0
        %5472 = vmatpush1.bf16.msra.mxu0 %v5450
        %5473 = vmatprep.subr.bf16.mxu0 0
        %5474 = vmatpush1.bf16.msra.mxu0 %v5449
        %5475 = vmatprep.subr.bf16.mxu0 0
        %5476 = vmatpush2.bf16.msra.mxu0 0
        %5477 = vmatprep.subr.bf16.mxu0 0
        %5478 = vmatpush2.bf16.msra.mxu0 0
        %5479 = vmatprep.subr.bf16.mxu0 0
        %5480 = vmatpush2.bf16.msra.mxu0 0
        %5481 = vmatprep.subr.bf16.mxu0 0
        %5482 = vmatpush2.bf16.msra.mxu0 0
        %5483 = vmatprep.subr.bf16.mxu0 0
        %5484 = vmatpush2.bf16.msra.mxu0 0
        %5485 = vmatprep.subr.bf16.mxu0 0
        %5486 = vmatpush2.bf16.msra.mxu0 0
        %5487 = vmatprep.subr.bf16.mxu0 0
        %5488 = vmatpush2.bf16.msra.mxu0 0
        %5489 = vmatprep.subr.bf16.mxu0 0
        %5490 = vmatpush2.bf16.msra.mxu0 0
        %5491 = vmatprep.mubr.bf16.mxu0 0
        %5492 = vmatmul.mubr.bf16.gmra.mxu0 %v5454
        %v5493 = vpop.f32.mrf.mxu0
        %v5494 = vadd.f32 %v5439, %v5493
        %v5495 = vpop.f32.mrf.mxu0
        %v5496 = vpop.f32.mrf.mxu0
        %v5497 = vadd.f32 %v5439, %v5496
        %v5498 = vpop.f32.mrf.mxu0
        %5499 = vmatprep.mubr.bf16.mxu0 0
        %5500 = vmatmul.mubr.bf16.gmra.mxu0 %v5457
        %v5501 = vpop.f32.mrf.mxu0
        %v5502 = vadd.f32 %v5439, %v5501
        %v5503 = vpop.f32.mrf.mxu0
        %v5504 = vpop.f32.mrf.mxu0
        %v5505 = vadd.f32 %v5439, %v5504
        %v5506 = vpop.f32.mrf.mxu0
        %5507 = vdwg.mxu0
        %v5508 = vadd.f32 %v5494, %v3118
        %v5509 = vadd.f32 %v5497, %v3119
        %v5510 = vadd.f32 %v5502, %v3120
        %v5511 = vadd.f32 %v5505, %v3121
        %v5512 = vmax.f32 %v5508, 0.0
        %v5513 = vmax.f32 %v5509, 0.0
        %v5514 = vmax.f32 %v5510, 0.0
        %v5515 = vmax.f32 %v5511, 0.0
        %v5516 = vpack.c.bf16 %v5513, %v5512
        %v5517 = vpack.c.bf16 %v5515, %v5514
        %v5518 = vld [vmem:[%s15] sm:$0xf]
        %v5519 = vld [vmem:[%s15 + $0x4] sm:$0xf]
        %v5520 = vld [vmem:[%s15 + $0x8] sm:$0xf]
        %v5521 = vld [vmem:[%s15 + $0xc] sm:$0xf]
        %v5522 = vld [vmem:[%s15 + $0x10] sm:$0xf]
        %v5523 = vld [vmem:[%s15 + $0x14] sm:$0xf]
        %v5524 = vld [vmem:[%s15 + $0x18] sm:$0xf]
        %v5525 = vld [vmem:[%s15 + $0x1c] sm:$0xf]
        %v5526 = vld [vmem:[%s15 + $0x20] sm:$0xf]
        %v5527 = vld [vmem:[%s15 + $0x24] sm:$0xf]
        %v5528 = vld [vmem:[%s15 + $0x28] sm:$0xf]
        %v5529 = vld [vmem:[%s15 + $0x2c] sm:$0xf]
        %v5530 = vld [vmem:[%s15 + $0x30] sm:$0xf]
        %v5531 = vld [vmem:[%s15 + $0x34] sm:$0xf]
        %v5532 = vld [vmem:[%s15 + $0x38] sm:$0xf]
        %v5533 = vld [vmem:[%s15 + $0x3c] sm:$0xf]
        %v5534 = vld [vmem:[%s16] sm:$0x1]
        %v5536 = vlaneseq
        %v5537 = vshrl.u32 %v5536, 7
        %v5538 = vsub.s32 0, %v5537
        %v5539 = vrot.slane %v5534, %v5538
        %v5557 = vunpack.c.l.b16 %v5518
        %v5558 = vunpack.c.l.b16 %v5519
        %v5559 = vunpack.c.l.b16 %v5520
        %v5560 = vunpack.c.l.b16 %v5521
        %v5561 = vunpack.c.l.b16 %v5522
        %v5562 = vunpack.c.l.b16 %v5523
        %v5563 = vunpack.c.l.b16 %v5524
        %v5564 = vunpack.c.l.b16 %v5525
        %v5565 = vunpack.c.l.b16 %v5526
        %v5566 = vunpack.c.l.b16 %v5527
        %v5567 = vunpack.c.l.b16 %v5528
        %v5568 = vunpack.c.l.b16 %v5529
        %v5569 = vunpack.c.l.b16 %v5530
        %v5570 = vunpack.c.l.b16 %v5531
        %v5571 = vunpack.c.l.b16 %v5532
        %v5572 = vunpack.c.l.b16 %v5533
        %v5573 = vpack.c.b16 %v5558, %v5557
        %v5574 = vpack.c.b16 %v5560, %v5559
        %v5575 = vpack.c.b16 %v5562, %v5561
        %v5576 = vpack.c.b16 %v5564, %v5563
        %v5577 = vpack.c.b16 %v5566, %v5565
        %v5578 = vpack.c.b16 %v5568, %v5567
        %v5579 = vpack.c.b16 %v5570, %v5569
        %v5580 = vpack.c.b16 %v5572, %v5571
        %5589 = vmatprep.subr.bf16.mxu0 0
        %5590 = vmatpush1.bf16.msra.mxu0 %v5580
        %5591 = vmatprep.subr.bf16.mxu0 0
        %5592 = vmatpush1.bf16.msra.mxu0 %v5579
        %5593 = vmatprep.subr.bf16.mxu0 0
        %5594 = vmatpush1.bf16.msra.mxu0 %v5578
        %5595 = vmatprep.subr.bf16.mxu0 0
        %5596 = vmatpush1.bf16.msra.mxu0 %v5577
        %5597 = vmatprep.subr.bf16.mxu0 0
        %5598 = vmatpush1.bf16.msra.mxu0 %v5576
        %5599 = vmatprep.subr.bf16.mxu0 0
        %5600 = vmatpush1.bf16.msra.mxu0 %v5575
        %5601 = vmatprep.subr.bf16.mxu0 0
        %5602 = vmatpush1.bf16.msra.mxu0 %v5574
        %5603 = vmatprep.subr.bf16.mxu0 0
        %5604 = vmatpush1.bf16.msra.mxu0 %v5573
        %5605 = vmatprep.subr.bf16.mxu0 0
        %5606 = vmatpush2.bf16.msra.mxu0 0
        %5607 = vmatprep.subr.bf16.mxu0 0
        %5608 = vmatpush2.bf16.msra.mxu0 0
        %5609 = vmatprep.subr.bf16.mxu0 0
        %5610 = vmatpush2.bf16.msra.mxu0 0
        %5611 = vmatprep.subr.bf16.mxu0 0
        %5612 = vmatpush2.bf16.msra.mxu0 0
        %5613 = vmatprep.subr.bf16.mxu0 0
        %5614 = vmatpush2.bf16.msra.mxu0 0
        %5615 = vmatprep.subr.bf16.mxu0 0
        %5616 = vmatpush2.bf16.msra.mxu0 0
        %5617 = vmatprep.subr.bf16.mxu0 0
        %5618 = vmatpush2.bf16.msra.mxu0 0
        %5619 = vmatprep.subr.bf16.mxu0 0
        %5620 = vmatpush2.bf16.msra.mxu0 0
        %5621 = vmatprep.mubr.bf16.mxu0 0
        %5622 = vmatmul.mubr.bf16.gmra.mxu0 %v5516
        %v5623 = vpop.f32.mrf.mxu0
        %v5624 = vadd.f32 %v5539, %v5623
        %v5625 = vpop.f32.mrf.mxu0
        %v5626 = vpop.f32.mrf.mxu0
        %v5627 = vadd.f32 %v5539, %v5626
        %v5628 = vpop.f32.mrf.mxu0
        %5629 = vmatprep.mubr.bf16.mxu0 0
        %5630 = vmatmul.mubr.bf16.gmra.mxu0 %v5517
        %v5631 = vpop.f32.mrf.mxu0
        %v5632 = vadd.f32 %v5539, %v5631
        %v5633 = vpop.f32.mrf.mxu0
        %v5634 = vpop.f32.mrf.mxu0
        %v5635 = vadd.f32 %v5539, %v5634
        %v5636 = vpop.f32.mrf.mxu0
        %5637 = vdwg.mxu0
        %v5638 = vmax.f32 %v5624, 0.0
        %v5639 = vmax.f32 %v5627, 0.0
        %v5640 = vmax.f32 %v5632, 0.0
        %v5641 = vmax.f32 %v5635, 0.0
        %v5642 = vpack.c.bf16 %v5639, %v5638
        %v5643 = vpack.c.bf16 %v5641, %v5640
        %v5646 = vcombine.high %v5642, %v5642
        %v5648 = vunpack.c.l.s4 1983009808
        %v5649 = vunpack.c.0.s8 %v5648
        %v5650 = vlaneseq
        %v5651 = vshrl.u32 %v5650, 7
        %v5652 = vsub.s32 %v5649, %v5651
        %v5653 = vrot.slane %v5642, %v5652
        %v5655 = vunpack.c.l.s4 1983009808
        %v5656 = vunpack.c.0.s8 %v5655
        %v5657 = vlaneseq
        %v5658 = vshrl.u32 %v5657, 7
        %v5659 = vsub.s32 %v5656, %v5658
        %v5660 = vrot.slane %v5646, %v5659
        %v5661 = vcombine.high %v5653, %v5653
        %v5662 = vcombine.high %v5660, %v5660
        %v5663 = vcombine.high %v5643, %v5643
        %v5665 = vunpack.c.l.s4 1983009808
        %v5666 = vunpack.c.0.s8 %v5665
        %v5667 = vlaneseq
        %v5668 = vshrl.u32 %v5667, 7
        %v5669 = vsub.s32 %v5666, %v5668
        %v5670 = vrot.slane %v5643, %v5669
        %v5672 = vunpack.c.l.s4 1983009808
        %v5673 = vunpack.c.0.s8 %v5672
        %v5674 = vlaneseq
        %v5675 = vshrl.u32 %v5674, 7
        %v5676 = vsub.s32 %v5673, %v5675
        %v5677 = vrot.slane %v5663, %v5676
        %v5678 = vcombine.high %v5670, %v5670
        %v5679 = vcombine.high %v5677, %v5677
        %v5681 = vunpack.c.l.s4 1983009808
        %v5682 = vunpack.c.0.s8 %v5681
        %v5683 = vlaneseq
        %v5684 = vshrl.u32 %v5683, 7
        %v5685 = vsub.s32 %v5682, %v5684
        %v5686 = vrot.slane %v5653, %v5685
        %v5688 = vunpack.c.l.s4 1983009808
        %v5689 = vunpack.c.0.s8 %v5688
        %v5690 = vlaneseq
        %v5691 = vshrl.u32 %v5690, 7
        %v5692 = vsub.s32 %v5689, %v5691
        %v5693 = vrot.slane %v5661, %v5692
        %v5695 = vunpack.c.l.s4 1983009808
        %v5696 = vunpack.c.0.s8 %v5695
        %v5697 = vlaneseq
        %v5698 = vshrl.u32 %v5697, 7
        %v5699 = vsub.s32 %v5696, %v5698
        %v5700 = vrot.slane %v5660, %v5699
        %v5702 = vunpack.c.l.s4 1983009808
        %v5703 = vunpack.c.0.s8 %v5702
        %v5704 = vlaneseq
        %v5705 = vshrl.u32 %v5704, 7
        %v5706 = vsub.s32 %v5703, %v5705
        %v5707 = vrot.slane %v5662, %v5706
        %v5709 = vunpack.c.l.s4 1983009808
        %v5710 = vunpack.c.0.s8 %v5709
        %v5711 = vlaneseq
        %v5712 = vshrl.u32 %v5711, 7
        %v5713 = vsub.s32 %v5710, %v5712
        %v5714 = vrot.slane %v5670, %v5713
        %v5716 = vunpack.c.l.s4 1983009808
        %v5717 = vunpack.c.0.s8 %v5716
        %v5718 = vlaneseq
        %v5719 = vshrl.u32 %v5718, 7
        %v5720 = vsub.s32 %v5717, %v5719
        %v5721 = vrot.slane %v5678, %v5720
        %v5723 = vunpack.c.l.s4 1983009808
        %v5724 = vunpack.c.0.s8 %v5723
        %v5725 = vlaneseq
        %v5726 = vshrl.u32 %v5725, 7
        %v5727 = vsub.s32 %v5724, %v5726
        %v5728 = vrot.slane %v5677, %v5727
        %v5730 = vunpack.c.l.s4 1983009808
        %v5731 = vunpack.c.0.s8 %v5730
        %v5732 = vlaneseq
        %v5733 = vshrl.u32 %v5732, 7
        %v5734 = vsub.s32 %v5731, %v5733
        %v5735 = vrot.slane %v5679, %v5734
        %v5736 = vrot.slane %v5686, 7
        %v5737 = vrot.slane %v5693, 7
        %v5738 = vrot.slane %v5700, 7
        %v5739 = vrot.slane %v5707, 7
        %v5740 = vrot.slane %v5714, 7
        %v5741 = vrot.slane %v5721, 7
        %v5742 = vrot.slane %v5728, 7
        %v5743 = vrot.slane %v5735, 7
        %5752 = vst.msk [vmem:[%s1057] sm:$0x6] %vm3358, %v5736
        %5753 = vst.msk [vmem:[%s1057 + $0x4] sm:$0x6] %vm3358, %v5737
        %5754 = vst.msk [vmem:[%s1057 + $0x8] sm:$0x6] %vm3358, %v5738
        %5755 = vst.msk [vmem:[%s1057 + $0xc] sm:$0x6] %vm3358, %v5739
        %5756 = vst.msk [vmem:[%s1057 + $0x20] sm:$0x6] %vm3358, %v5740
        %5757 = vst.msk [vmem:[%s1057 + $0x24] sm:$0x6] %vm3358, %v5741
        %5758 = vst.msk [vmem:[%s1057 + $0x28] sm:$0x6] %vm3358, %v5742
        %5759 = vst.msk [vmem:[%s1057 + $0x2c] sm:$0x6] %vm3358, %v5743
        %v5760 = vld [vmem:[%s1066] sm:$0x7]
        %v5761 = vld [vmem:[%s1066 + $0x4] sm:$0x7]
        %v5762 = vld [vmem:[%s1066 + $0x8] sm:$0x7]
        %v5763 = vld [vmem:[%s1066 + $0xc] sm:$0x7]
        %v5764 = vld [vmem:[%s1066 + $0x20] sm:$0x7]
        %v5765 = vld [vmem:[%s1066 + $0x24] sm:$0x7]
        %v5766 = vld [vmem:[%s1066 + $0x28] sm:$0x7]
        %v5767 = vld [vmem:[%s1066 + $0x2c] sm:$0x7]
        %v5777 = vunpack.c.l.s4 1983009808
        %v5778 = vunpack.c.0.s8 %v5777
        %v5779 = vlaneseq
        %v5780 = vshrl.u32 %v5779, 7
        %v5781 = vsub.s32 %v5778, %v5780
        %v5782 = vrot.slane %v5760, %v5781
        %v5783 = vcombine.high %v5782, %v5782
        %v5785 = vunpack.c.l.s4 1983009808
        %v5786 = vunpack.c.0.s8 %v5785
        %v5787 = vlaneseq
        %v5788 = vshrl.u32 %v5787, 7
        %v5789 = vsub.s32 %v5786, %v5788
        %v5790 = vrot.slane %v5761, %v5789
        %v5791 = vcombine.high %v5790, %v5790
        %v5793 = vunpack.c.l.s4 1983009808
        %v5794 = vunpack.c.0.s8 %v5793
        %v5795 = vlaneseq
        %v5796 = vshrl.u32 %v5795, 7
        %v5797 = vsub.s32 %v5794, %v5796
        %v5798 = vrot.slane %v5762, %v5797
        %v5799 = vcombine.high %v5798, %v5798
        %v5801 = vunpack.c.l.s4 1983009808
        %v5802 = vunpack.c.0.s8 %v5801
        %v5803 = vlaneseq
        %v5804 = vshrl.u32 %v5803, 7
        %v5805 = vsub.s32 %v5802, %v5804
        %v5806 = vrot.slane %v5763, %v5805
        %v5807 = vcombine.high %v5806, %v5806
        %v5809 = vunpack.c.l.s4 1983009808
        %v5810 = vunpack.c.0.s8 %v5809
        %v5811 = vlaneseq
        %v5812 = vshrl.u32 %v5811, 7
        %v5813 = vsub.s32 %v5810, %v5812
        %v5814 = vrot.slane %v5764, %v5813
        %v5815 = vcombine.high %v5814, %v5814
        %v5817 = vunpack.c.l.s4 1983009808
        %v5818 = vunpack.c.0.s8 %v5817
        %v5819 = vlaneseq
        %v5820 = vshrl.u32 %v5819, 7
        %v5821 = vsub.s32 %v5818, %v5820
        %v5822 = vrot.slane %v5765, %v5821
        %v5823 = vcombine.high %v5822, %v5822
        %v5825 = vunpack.c.l.s4 1983009808
        %v5826 = vunpack.c.0.s8 %v5825
        %v5827 = vlaneseq
        %v5828 = vshrl.u32 %v5827, 7
        %v5829 = vsub.s32 %v5826, %v5828
        %v5830 = vrot.slane %v5766, %v5829
        %v5831 = vcombine.high %v5830, %v5830
        %v5833 = vunpack.c.l.s4 1983009808
        %v5834 = vunpack.c.0.s8 %v5833
        %v5835 = vlaneseq
        %v5836 = vshrl.u32 %v5835, 7
        %v5837 = vsub.s32 %v5834, %v5836
        %v5838 = vrot.slane %v5767, %v5837
        %v5839 = vcombine.high %v5838, %v5838
        %v5841 = vshrl.u32 %v5782, 16
        %v5843 = vrot.slane %v5841, 6
        %v5844 = vshll.u32 %v5782, 16
        %v5846 = vrot.slane %v5844, 7
        %v5847 = vor.u32 %v5843, %v5846
        %v5848 = vrot.slane %v5847, 2
        %v5850 = vshll.u32 %v5783, 16
        %v5852 = vrot.slane %v5850, 7
        %v5853 = vsel %vm1153, %v5848, %v5852
        %v5855 = vshrl.u32 %v5790, 16
        %v5857 = vrot.slane %v5855, 6
        %v5858 = vshll.u32 %v5790, 16
        %v5860 = vrot.slane %v5858, 7
        %v5861 = vor.u32 %v5857, %v5860
        %v5862 = vrot.slane %v5861, 2
        %v5864 = vshll.u32 %v5791, 16
        %v5866 = vrot.slane %v5864, 7
        %v5867 = vsel %vm1153, %v5862, %v5866
        %v5869 = vshrl.u32 %v5798, 16
        %v5871 = vrot.slane %v5869, 6
        %v5872 = vshll.u32 %v5798, 16
        %v5874 = vrot.slane %v5872, 7
        %v5875 = vor.u32 %v5871, %v5874
        %v5876 = vrot.slane %v5875, 2
        %v5878 = vshll.u32 %v5799, 16
        %v5880 = vrot.slane %v5878, 7
        %v5881 = vsel %vm1153, %v5876, %v5880
        %v5883 = vshrl.u32 %v5806, 16
        %v5885 = vrot.slane %v5883, 6
        %v5886 = vshll.u32 %v5806, 16
        %v5888 = vrot.slane %v5886, 7
        %v5889 = vor.u32 %v5885, %v5888
        %v5890 = vrot.slane %v5889, 2
        %v5892 = vshll.u32 %v5807, 16
        %v5894 = vrot.slane %v5892, 7
        %v5895 = vsel %vm1153, %v5890, %v5894
        %v5897 = vshrl.u32 %v5814, 16
        %v5899 = vrot.slane %v5897, 6
        %v5900 = vshll.u32 %v5814, 16
        %v5902 = vrot.slane %v5900, 7
        %v5903 = vor.u32 %v5899, %v5902
        %v5904 = vrot.slane %v5903, 2
        %v5906 = vshll.u32 %v5815, 16
        %v5908 = vrot.slane %v5906, 7
        %v5909 = vsel %vm1153, %v5904, %v5908
        %v5911 = vshrl.u32 %v5822, 16
        %v5913 = vrot.slane %v5911, 6
        %v5914 = vshll.u32 %v5822, 16
        %v5916 = vrot.slane %v5914, 7
        %v5917 = vor.u32 %v5913, %v5916
        %v5918 = vrot.slane %v5917, 2
        %v5920 = vshll.u32 %v5823, 16
        %v5922 = vrot.slane %v5920, 7
        %v5923 = vsel %vm1153, %v5918, %v5922
        %v5925 = vshrl.u32 %v5830, 16
        %v5927 = vrot.slane %v5925, 6
        %v5928 = vshll.u32 %v5830, 16
        %v5930 = vrot.slane %v5928, 7
        %v5931 = vor.u32 %v5927, %v5930
        %v5932 = vrot.slane %v5931, 2
        %v5934 = vshll.u32 %v5831, 16
        %v5936 = vrot.slane %v5934, 7
        %v5937 = vsel %vm1153, %v5932, %v5936
        %v5939 = vshrl.u32 %v5838, 16
        %v5941 = vrot.slane %v5939, 6
        %v5942 = vshll.u32 %v5838, 16
        %v5944 = vrot.slane %v5942, 7
        %v5945 = vor.u32 %v5941, %v5944
        %v5946 = vrot.slane %v5945, 2
        %v5948 = vshll.u32 %v5839, 16
        %v5950 = vrot.slane %v5948, 7
        %v5951 = vsel %vm1153, %v5946, %v5950
        %5960 = vst.msk [vmem:[#allocation3] sm:$0x3] %vm1290, %v5853
        %5961 = vst.msk [vmem:[#allocation3 + $0x6] sm:$0x3] %vm1290, %v5867
        %5962 = vst.msk [vmem:[#allocation3 + $0xc] sm:$0x3] %vm1290, %v5881
        %5963 = vst.msk [vmem:[#allocation3 + $0x12] sm:$0x3] %vm1290, %v5895
        %5964 = vst.msk [vmem:[#allocation3 + $0x18] sm:$0x3] %vm1290, %v5909
        %5965 = vst.msk [vmem:[#allocation3 + $0x1e] sm:$0x3] %vm1290, %v5923
        %5966 = vst.msk [vmem:[#allocation3 + $0x24] sm:$0x3] %vm1290, %v5937
        %5967 = vst.msk [vmem:[#allocation3 + $0x2a] sm:$0x3] %vm1290, %v5951
        %v5968 = vld [vmem:[%s1066] sm:$0x6]
        %v5969 = vld [vmem:[%s1066 + $0x4] sm:$0x6]
        %v5970 = vld [vmem:[%s1066 + $0x8] sm:$0x6]
        %v5971 = vld [vmem:[%s1066 + $0xc] sm:$0x6]
        %v5972 = vld [vmem:[%s1066 + $0x20] sm:$0x6]
        %v5973 = vld [vmem:[%s1066 + $0x24] sm:$0x6]
        %v5974 = vld [vmem:[%s1066 + $0x28] sm:$0x6]
        %v5975 = vld [vmem:[%s1066 + $0x2c] sm:$0x6]
        %v5985 = vunpack.c.l.s4 1983009808
        %v5986 = vunpack.c.0.s8 %v5985
        %v5987 = vlaneseq
        %v5988 = vshrl.u32 %v5987, 7
        %v5989 = vsub.s32 %v5986, %v5988
        %v5990 = vrot.slane %v5968, %v5989
        %v5991 = vcombine.high %v5990, %v5990
        %v5993 = vunpack.c.l.s4 1983009808
        %v5994 = vunpack.c.0.s8 %v5993
        %v5995 = vlaneseq
        %v5996 = vshrl.u32 %v5995, 7
        %v5997 = vsub.s32 %v5994, %v5996
        %v5998 = vrot.slane %v5969, %v5997
        %v5999 = vcombine.high %v5998, %v5998
        %v6001 = vunpack.c.l.s4 1983009808
        %v6002 = vunpack.c.0.s8 %v6001
        %v6003 = vlaneseq
        %v6004 = vshrl.u32 %v6003, 7
        %v6005 = vsub.s32 %v6002, %v6004
        %v6006 = vrot.slane %v5970, %v6005
        %v6007 = vcombine.high %v6006, %v6006
        %v6009 = vunpack.c.l.s4 1983009808
        %v6010 = vunpack.c.0.s8 %v6009
        %v6011 = vlaneseq
        %v6012 = vshrl.u32 %v6011, 7
        %v6013 = vsub.s32 %v6010, %v6012
        %v6014 = vrot.slane %v5971, %v6013
        %v6015 = vcombine.high %v6014, %v6014
        %v6017 = vunpack.c.l.s4 1983009808
        %v6018 = vunpack.c.0.s8 %v6017
        %v6019 = vlaneseq
        %v6020 = vshrl.u32 %v6019, 7
        %v6021 = vsub.s32 %v6018, %v6020
        %v6022 = vrot.slane %v5972, %v6021
        %v6023 = vcombine.high %v6022, %v6022
        %v6025 = vunpack.c.l.s4 1983009808
        %v6026 = vunpack.c.0.s8 %v6025
        %v6027 = vlaneseq
        %v6028 = vshrl.u32 %v6027, 7
        %v6029 = vsub.s32 %v6026, %v6028
        %v6030 = vrot.slane %v5973, %v6029
        %v6031 = vcombine.high %v6030, %v6030
        %v6033 = vunpack.c.l.s4 1983009808
        %v6034 = vunpack.c.0.s8 %v6033
        %v6035 = vlaneseq
        %v6036 = vshrl.u32 %v6035, 7
        %v6037 = vsub.s32 %v6034, %v6036
        %v6038 = vrot.slane %v5974, %v6037
        %v6039 = vcombine.high %v6038, %v6038
        %v6041 = vunpack.c.l.s4 1983009808
        %v6042 = vunpack.c.0.s8 %v6041
        %v6043 = vlaneseq
        %v6044 = vshrl.u32 %v6043, 7
        %v6045 = vsub.s32 %v6042, %v6044
        %v6046 = vrot.slane %v5975, %v6045
        %v6047 = vcombine.high %v6046, %v6046
        %v6048 = vrot.slane %v5990, 7
        %v6049 = vrot.slane %v6048, 2
        %v6050 = vrot.slane %v5991, 7
        %v6051 = vsel %vm1385, %v6049, %v6050
        %v6052 = vrot.slane %v5998, 7
        %v6053 = vrot.slane %v6052, 2
        %v6054 = vrot.slane %v5999, 7
        %v6055 = vsel %vm1385, %v6053, %v6054
        %v6056 = vrot.slane %v6006, 7
        %v6057 = vrot.slane %v6056, 2
        %v6058 = vrot.slane %v6007, 7
        %v6059 = vsel %vm1385, %v6057, %v6058
        %v6060 = vrot.slane %v6014, 7
        %v6061 = vrot.slane %v6060, 2
        %v6062 = vrot.slane %v6015, 7
        %v6063 = vsel %vm1385, %v6061, %v6062
        %v6064 = vrot.slane %v6022, 7
        %v6065 = vrot.slane %v6064, 2
        %v6066 = vrot.slane %v6023, 7
        %v6067 = vsel %vm1385, %v6065, %v6066
        %v6068 = vrot.slane %v6030, 7
        %v6069 = vrot.slane %v6068, 2
        %v6070 = vrot.slane %v6031, 7
        %v6071 = vsel %vm1385, %v6069, %v6070
        %v6072 = vrot.slane %v6038, 7
        %v6073 = vrot.slane %v6072, 2
        %v6074 = vrot.slane %v6039, 7
        %v6075 = vsel %vm1385, %v6073, %v6074
        %v6076 = vrot.slane %v6046, 7
        %v6077 = vrot.slane %v6076, 2
        %v6078 = vrot.slane %v6047, 7
        %v6079 = vsel %vm1385, %v6077, %v6078
        %6080 = vrot.lane.b32.xlu0 %v6051, 32
        %v6081 = vpop.permute.xlu0 %6080
        %6082 = vrot.lane.b32.xlu0 %v6055, 32
        %v6083 = vpop.permute.xlu0 %6082
        %6084 = vrot.lane.b32.xlu0 %v6059, 32
        %v6085 = vpop.permute.xlu0 %6084
        %6086 = vrot.lane.b32.xlu0 %v6063, 32
        %v6087 = vpop.permute.xlu0 %6086
        %6088 = vrot.lane.b32.xlu0 %v6067, 32
        %v6089 = vpop.permute.xlu0 %6088
        %6090 = vrot.lane.b32.xlu0 %v6071, 32
        %v6091 = vpop.permute.xlu0 %6090
        %6092 = vrot.lane.b32.xlu0 %v6075, 32
        %v6093 = vpop.permute.xlu0 %6092
        %6094 = vrot.lane.b32.xlu0 %v6079, 32
        %v6095 = vpop.permute.xlu0 %6094
        %6104 = vst.msk [vmem:[#allocation3] sm:$0x3] %vm1442, %v6081
        %6105 = vst.msk [vmem:[#allocation3 + $0x6] sm:$0x3] %vm1442, %v6083
        %6106 = vst.msk [vmem:[#allocation3 + $0xc] sm:$0x3] %vm1442, %v6085
        %6107 = vst.msk [vmem:[#allocation3 + $0x12] sm:$0x3] %vm1442, %v6087
        %6108 = vst.msk [vmem:[#allocation3 + $0x18] sm:$0x3] %vm1442, %v6089
        %6109 = vst.msk [vmem:[#allocation3 + $0x1e] sm:$0x3] %vm1442, %v6091
        %6110 = vst.msk [vmem:[#allocation3 + $0x24] sm:$0x3] %vm1442, %v6093
        %6111 = vst.msk [vmem:[#allocation3 + $0x2a] sm:$0x3] %vm1442, %v6095
        %v6112 = vld [vmem:[%s1066] sm:$0xe]
        %v6113 = vld [vmem:[%s1066 + $0x4] sm:$0xe]
        %v6114 = vld [vmem:[%s1066 + $0x8] sm:$0xe]
        %v6115 = vld [vmem:[%s1066 + $0xc] sm:$0xe]
        %v6116 = vld [vmem:[%s1066 + $0x20] sm:$0xe]
        %v6117 = vld [vmem:[%s1066 + $0x24] sm:$0xe]
        %v6118 = vld [vmem:[%s1066 + $0x28] sm:$0xe]
        %v6119 = vld [vmem:[%s1066 + $0x2c] sm:$0xe]
        %v6129 = vunpack.c.l.s4 1983009808
        %v6130 = vunpack.c.0.s8 %v6129
        %v6131 = vlaneseq
        %v6132 = vshrl.u32 %v6131, 7
        %v6133 = vsub.s32 %v6130, %v6132
        %v6134 = vrot.slane %v6112, %v6133
        %v6135 = vcombine.high %v6134, %v6134
        %v6137 = vunpack.c.l.s4 1983009808
        %v6138 = vunpack.c.0.s8 %v6137
        %v6139 = vlaneseq
        %v6140 = vshrl.u32 %v6139, 7
        %v6141 = vsub.s32 %v6138, %v6140
        %v6142 = vrot.slane %v6113, %v6141
        %v6143 = vcombine.high %v6142, %v6142
        %v6145 = vunpack.c.l.s4 1983009808
        %v6146 = vunpack.c.0.s8 %v6145
        %v6147 = vlaneseq
        %v6148 = vshrl.u32 %v6147, 7
        %v6149 = vsub.s32 %v6146, %v6148
        %v6150 = vrot.slane %v6114, %v6149
        %v6151 = vcombine.high %v6150, %v6150
        %v6153 = vunpack.c.l.s4 1983009808
        %v6154 = vunpack.c.0.s8 %v6153
        %v6155 = vlaneseq
        %v6156 = vshrl.u32 %v6155, 7
        %v6157 = vsub.s32 %v6154, %v6156
        %v6158 = vrot.slane %v6115, %v6157
        %v6159 = vcombine.high %v6158, %v6158
        %v6161 = vunpack.c.l.s4 1983009808
        %v6162 = vunpack.c.0.s8 %v6161
        %v6163 = vlaneseq
        %v6164 = vshrl.u32 %v6163, 7
        %v6165 = vsub.s32 %v6162, %v6164
        %v6166 = vrot.slane %v6116, %v6165
        %v6167 = vcombine.high %v6166, %v6166
        %v6169 = vunpack.c.l.s4 1983009808
        %v6170 = vunpack.c.0.s8 %v6169
        %v6171 = vlaneseq
        %v6172 = vshrl.u32 %v6171, 7
        %v6173 = vsub.s32 %v6170, %v6172
        %v6174 = vrot.slane %v6117, %v6173
        %v6175 = vcombine.high %v6174, %v6174
        %v6177 = vunpack.c.l.s4 1983009808
        %v6178 = vunpack.c.0.s8 %v6177
        %v6179 = vlaneseq
        %v6180 = vshrl.u32 %v6179, 7
        %v6181 = vsub.s32 %v6178, %v6180
        %v6182 = vrot.slane %v6118, %v6181
        %v6183 = vcombine.high %v6182, %v6182
        %v6185 = vunpack.c.l.s4 1983009808
        %v6186 = vunpack.c.0.s8 %v6185
        %v6187 = vlaneseq
        %v6188 = vshrl.u32 %v6187, 7
        %v6189 = vsub.s32 %v6186, %v6188
        %v6190 = vrot.slane %v6119, %v6189
        %v6191 = vcombine.high %v6190, %v6190
        %v6193 = vshrl.u32 %v6134, 16
        %v6195 = vrot.slane %v6193, 7
        %v6196 = vrot.slane %v6195, 2
        %v6198 = vshrl.u32 %v6135, 16
        %v6200 = vrot.slane %v6198, 7
        %v6201 = vshll.u32 %v6135, 16
        %v6203 = vor.u32 %v6200, %v6201
        %v6204 = vsel %vm3805, %v6196, %v6203
        %v6206 = vshrl.u32 %v6142, 16
        %v6208 = vrot.slane %v6206, 7
        %v6209 = vrot.slane %v6208, 2
        %v6211 = vshrl.u32 %v6143, 16
        %v6213 = vrot.slane %v6211, 7
        %v6214 = vshll.u32 %v6143, 16
        %v6216 = vor.u32 %v6213, %v6214
        %v6217 = vsel %vm3805, %v6209, %v6216
        %v6219 = vshrl.u32 %v6150, 16
        %v6221 = vrot.slane %v6219, 7
        %v6222 = vrot.slane %v6221, 2
        %v6224 = vshrl.u32 %v6151, 16
        %v6226 = vrot.slane %v6224, 7
        %v6227 = vshll.u32 %v6151, 16
        %v6229 = vor.u32 %v6226, %v6227
        %v6230 = vsel %vm3805, %v6222, %v6229
        %v6232 = vshrl.u32 %v6158, 16
        %v6234 = vrot.slane %v6232, 7
        %v6235 = vrot.slane %v6234, 2
        %v6237 = vshrl.u32 %v6159, 16
        %v6239 = vrot.slane %v6237, 7
        %v6240 = vshll.u32 %v6159, 16
        %v6242 = vor.u32 %v6239, %v6240
        %v6243 = vsel %vm3805, %v6235, %v6242
        %v6245 = vshrl.u32 %v6166, 16
        %v6247 = vrot.slane %v6245, 7
        %v6248 = vrot.slane %v6247, 2
        %v6250 = vshrl.u32 %v6167, 16
        %v6252 = vrot.slane %v6250, 7
        %v6253 = vshll.u32 %v6167, 16
        %v6255 = vor.u32 %v6252, %v6253
        %v6256 = vsel %vm3805, %v6248, %v6255
        %v6258 = vshrl.u32 %v6174, 16
        %v6260 = vrot.slane %v6258, 7
        %v6261 = vrot.slane %v6260, 2
        %v6263 = vshrl.u32 %v6175, 16
        %v6265 = vrot.slane %v6263, 7
        %v6266 = vshll.u32 %v6175, 16
        %v6268 = vor.u32 %v6265, %v6266
        %v6269 = vsel %vm3805, %v6261, %v6268
        %v6271 = vshrl.u32 %v6182, 16
        %v6273 = vrot.slane %v6271, 7
        %v6274 = vrot.slane %v6273, 2
        %v6276 = vshrl.u32 %v6183, 16
        %v6278 = vrot.slane %v6276, 7
        %v6279 = vshll.u32 %v6183, 16
        %v6281 = vor.u32 %v6278, %v6279
        %v6282 = vsel %vm3805, %v6274, %v6281
        %v6284 = vshrl.u32 %v6190, 16
        %v6286 = vrot.slane %v6284, 7
        %v6287 = vrot.slane %v6286, 2
        %v6289 = vshrl.u32 %v6191, 16
        %v6291 = vrot.slane %v6289, 7
        %v6292 = vshll.u32 %v6191, 16
        %v6294 = vor.u32 %v6291, %v6292
        %v6295 = vsel %vm3805, %v6287, %v6294
        %6296 = vrot.lane.b32.xlu0 %v6204, 64
        %v6297 = vpop.permute.xlu0 %6296
        %6298 = vrot.lane.b32.xlu0 %v6217, 64
        %v6299 = vpop.permute.xlu0 %6298
        %6300 = vrot.lane.b32.xlu0 %v6230, 64
        %v6301 = vpop.permute.xlu0 %6300
        %6302 = vrot.lane.b32.xlu0 %v6243, 64
        %v6303 = vpop.permute.xlu0 %6302
        %6304 = vrot.lane.b32.xlu0 %v6256, 64
        %v6305 = vpop.permute.xlu0 %6304
        %6306 = vrot.lane.b32.xlu0 %v6269, 64
        %v6307 = vpop.permute.xlu0 %6306
        %6308 = vrot.lane.b32.xlu0 %v6282, 64
        %v6309 = vpop.permute.xlu0 %6308
        %6310 = vrot.lane.b32.xlu0 %v6295, 64
        %v6311 = vpop.permute.xlu0 %6310
        %6320 = vst.msk [vmem:[#allocation3] sm:$0x3] %vm1587, %v6297
        %6321 = vst.msk [vmem:[#allocation3 + $0x6] sm:$0x3] %vm1587, %v6299
        %6322 = vst.msk [vmem:[#allocation3 + $0xc] sm:$0x3] %vm1587, %v6301
        %6323 = vst.msk [vmem:[#allocation3 + $0x12] sm:$0x3] %vm1587, %v6303
        %6324 = vst.msk [vmem:[#allocation3 + $0x18] sm:$0x3] %vm1587, %v6305
        %6325 = vst.msk [vmem:[#allocation3 + $0x1e] sm:$0x3] %vm1587, %v6307
        %6326 = vst.msk [vmem:[#allocation3 + $0x24] sm:$0x3] %vm1587, %v6309
        %6327 = vst.msk [vmem:[#allocation3 + $0x2a] sm:$0x3] %vm1587, %v6311
        %v6328 = vld [vmem:[%s1057] sm:$0x7]
        %v6329 = vld [vmem:[%s1057 + $0x4] sm:$0x7]
        %v6330 = vld [vmem:[%s1057 + $0x8] sm:$0x7]
        %v6331 = vld [vmem:[%s1057 + $0xc] sm:$0x7]
        %v6332 = vld [vmem:[%s1057 + $0x20] sm:$0x7]
        %v6333 = vld [vmem:[%s1057 + $0x24] sm:$0x7]
        %v6334 = vld [vmem:[%s1057 + $0x28] sm:$0x7]
        %v6335 = vld [vmem:[%s1057 + $0x2c] sm:$0x7]
        %v6345 = vunpack.c.l.s4 1983009808
        %v6346 = vunpack.c.0.s8 %v6345
        %v6347 = vlaneseq
        %v6348 = vshrl.u32 %v6347, 7
        %v6349 = vsub.s32 %v6346, %v6348
        %v6350 = vrot.slane %v6328, %v6349
        %v6351 = vcombine.high %v6350, %v6350
        %v6353 = vunpack.c.l.s4 1983009808
        %v6354 = vunpack.c.0.s8 %v6353
        %v6355 = vlaneseq
        %v6356 = vshrl.u32 %v6355, 7
        %v6357 = vsub.s32 %v6354, %v6356
        %v6358 = vrot.slane %v6329, %v6357
        %v6359 = vcombine.high %v6358, %v6358
        %v6361 = vunpack.c.l.s4 1983009808
        %v6362 = vunpack.c.0.s8 %v6361
        %v6363 = vlaneseq
        %v6364 = vshrl.u32 %v6363, 7
        %v6365 = vsub.s32 %v6362, %v6364
        %v6366 = vrot.slane %v6330, %v6365
        %v6367 = vcombine.high %v6366, %v6366
        %v6369 = vunpack.c.l.s4 1983009808
        %v6370 = vunpack.c.0.s8 %v6369
        %v6371 = vlaneseq
        %v6372 = vshrl.u32 %v6371, 7
        %v6373 = vsub.s32 %v6370, %v6372
        %v6374 = vrot.slane %v6331, %v6373
        %v6375 = vcombine.high %v6374, %v6374
        %v6377 = vunpack.c.l.s4 1983009808
        %v6378 = vunpack.c.0.s8 %v6377
        %v6379 = vlaneseq
        %v6380 = vshrl.u32 %v6379, 7
        %v6381 = vsub.s32 %v6378, %v6380
        %v6382 = vrot.slane %v6332, %v6381
        %v6383 = vcombine.high %v6382, %v6382
        %v6385 = vunpack.c.l.s4 1983009808
        %v6386 = vunpack.c.0.s8 %v6385
        %v6387 = vlaneseq
        %v6388 = vshrl.u32 %v6387, 7
        %v6389 = vsub.s32 %v6386, %v6388
        %v6390 = vrot.slane %v6333, %v6389
        %v6391 = vcombine.high %v6390, %v6390
        %v6393 = vunpack.c.l.s4 1983009808
        %v6394 = vunpack.c.0.s8 %v6393
        %v6395 = vlaneseq
        %v6396 = vshrl.u32 %v6395, 7
        %v6397 = vsub.s32 %v6394, %v6396
        %v6398 = vrot.slane %v6334, %v6397
        %v6399 = vcombine.high %v6398, %v6398
        %v6401 = vunpack.c.l.s4 1983009808
        %v6402 = vunpack.c.0.s8 %v6401
        %v6403 = vlaneseq
        %v6404 = vshrl.u32 %v6403, 7
        %v6405 = vsub.s32 %v6402, %v6404
        %v6406 = vrot.slane %v6335, %v6405
        %v6407 = vcombine.high %v6406, %v6406
        %v6409 = vshrl.u32 %v6350, 16
        %v6411 = vrot.slane %v6409, 6
        %v6412 = vshll.u32 %v6350, 16
        %v6414 = vrot.slane %v6412, 7
        %v6415 = vor.u32 %v6411, %v6414
        %v6416 = vrot.slane %v6415, 2
        %v6418 = vshll.u32 %v6351, 16
        %v6420 = vrot.slane %v6418, 7
        %v6421 = vsel %vm1153, %v6416, %v6420
        %v6423 = vshrl.u32 %v6358, 16
        %v6425 = vrot.slane %v6423, 6
        %v6426 = vshll.u32 %v6358, 16
        %v6428 = vrot.slane %v6426, 7
        %v6429 = vor.u32 %v6425, %v6428
        %v6430 = vrot.slane %v6429, 2
        %v6432 = vshll.u32 %v6359, 16
        %v6434 = vrot.slane %v6432, 7
        %v6435 = vsel %vm1153, %v6430, %v6434
        %v6437 = vshrl.u32 %v6366, 16
        %v6439 = vrot.slane %v6437, 6
        %v6440 = vshll.u32 %v6366, 16
        %v6442 = vrot.slane %v6440, 7
        %v6443 = vor.u32 %v6439, %v6442
        %v6444 = vrot.slane %v6443, 2
        %v6446 = vshll.u32 %v6367, 16
        %v6448 = vrot.slane %v6446, 7
        %v6449 = vsel %vm1153, %v6444, %v6448
        %v6451 = vshrl.u32 %v6374, 16
        %v6453 = vrot.slane %v6451, 6
        %v6454 = vshll.u32 %v6374, 16
        %v6456 = vrot.slane %v6454, 7
        %v6457 = vor.u32 %v6453, %v6456
        %v6458 = vrot.slane %v6457, 2
        %v6460 = vshll.u32 %v6375, 16
        %v6462 = vrot.slane %v6460, 7
        %v6463 = vsel %vm1153, %v6458, %v6462
        %v6465 = vshrl.u32 %v6382, 16
        %v6467 = vrot.slane %v6465, 6
        %v6468 = vshll.u32 %v6382, 16
        %v6470 = vrot.slane %v6468, 7
        %v6471 = vor.u32 %v6467, %v6470
        %v6472 = vrot.slane %v6471, 2
        %v6474 = vshll.u32 %v6383, 16
        %v6476 = vrot.slane %v6474, 7
        %v6477 = vsel %vm1153, %v6472, %v6476
        %v6479 = vshrl.u32 %v6390, 16
        %v6481 = vrot.slane %v6479, 6
        %v6482 = vshll.u32 %v6390, 16
        %v6484 = vrot.slane %v6482, 7
        %v6485 = vor.u32 %v6481, %v6484
        %v6486 = vrot.slane %v6485, 2
        %v6488 = vshll.u32 %v6391, 16
        %v6490 = vrot.slane %v6488, 7
        %v6491 = vsel %vm1153, %v6486, %v6490
        %v6493 = vshrl.u32 %v6398, 16
        %v6495 = vrot.slane %v6493, 6
        %v6496 = vshll.u32 %v6398, 16
        %v6498 = vrot.slane %v6496, 7
        %v6499 = vor.u32 %v6495, %v6498
        %v6500 = vrot.slane %v6499, 2
        %v6502 = vshll.u32 %v6399, 16
        %v6504 = vrot.slane %v6502, 7
        %v6505 = vsel %vm1153, %v6500, %v6504
        %v6507 = vshrl.u32 %v6406, 16
        %v6509 = vrot.slane %v6507, 6
        %v6510 = vshll.u32 %v6406, 16
        %v6512 = vrot.slane %v6510, 7
        %v6513 = vor.u32 %v6509, %v6512
        %v6514 = vrot.slane %v6513, 2
        %v6516 = vshll.u32 %v6407, 16
        %v6518 = vrot.slane %v6516, 7
        %v6519 = vsel %vm1153, %v6514, %v6518
        %6520 = vrot.lane.b32.xlu0 %v6421, 96
        %v6521 = vpop.permute.xlu0 %6520
        %6522 = vrot.lane.b32.xlu0 %v6435, 96
        %v6523 = vpop.permute.xlu0 %6522
        %6524 = vrot.lane.b32.xlu0 %v6449, 96
        %v6525 = vpop.permute.xlu0 %6524
        %6526 = vrot.lane.b32.xlu0 %v6463, 96
        %v6527 = vpop.permute.xlu0 %6526
        %6528 = vrot.lane.b32.xlu0 %v6477, 96
        %v6529 = vpop.permute.xlu0 %6528
        %6530 = vrot.lane.b32.xlu0 %v6491, 96
        %v6531 = vpop.permute.xlu0 %6530
        %6532 = vrot.lane.b32.xlu0 %v6505, 96
        %v6533 = vpop.permute.xlu0 %6532
        %6534 = vrot.lane.b32.xlu0 %v6519, 96
        %v6535 = vpop.permute.xlu0 %6534
        %6544 = vst.msk [vmem:[#allocation3] sm:$0x3] %vm1812, %v6521
        %6545 = vst.msk [vmem:[#allocation3 + $0x6] sm:$0x3] %vm1812, %v6523
        %6546 = vst.msk [vmem:[#allocation3 + $0xc] sm:$0x3] %vm1812, %v6525
        %6547 = vst.msk [vmem:[#allocation3 + $0x12] sm:$0x3] %vm1812, %v6527
        %6548 = vst.msk [vmem:[#allocation3 + $0x18] sm:$0x3] %vm1812, %v6529
        %6549 = vst.msk [vmem:[#allocation3 + $0x1e] sm:$0x3] %vm1812, %v6531
        %6550 = vst.msk [vmem:[#allocation3 + $0x24] sm:$0x3] %vm1812, %v6533
        %6551 = vst.msk [vmem:[#allocation3 + $0x2a] sm:$0x3] %vm1812, %v6535
        %v6552 = vld [vmem:[%s1057] sm:$0x6]
        %v6553 = vld [vmem:[%s1057 + $0x4] sm:$0x6]
        %v6554 = vld [vmem:[%s1057 + $0x8] sm:$0x6]
        %v6555 = vld [vmem:[%s1057 + $0xc] sm:$0x6]
        %v6556 = vld [vmem:[%s1057 + $0x20] sm:$0x6]
        %v6557 = vld [vmem:[%s1057 + $0x24] sm:$0x6]
        %v6558 = vld [vmem:[%s1057 + $0x28] sm:$0x6]
        %v6559 = vld [vmem:[%s1057 + $0x2c] sm:$0x6]
        %v6569 = vunpack.c.l.s4 1983009808
        %v6570 = vunpack.c.0.s8 %v6569
        %v6571 = vlaneseq
        %v6572 = vshrl.u32 %v6571, 7
        %v6573 = vsub.s32 %v6570, %v6572
        %v6574 = vrot.slane %v6552, %v6573
        %v6575 = vcombine.high %v6574, %v6574
        %v6577 = vunpack.c.l.s4 1983009808
        %v6578 = vunpack.c.0.s8 %v6577
        %v6579 = vlaneseq
        %v6580 = vshrl.u32 %v6579, 7
        %v6581 = vsub.s32 %v6578, %v6580
        %v6582 = vrot.slane %v6553, %v6581
        %v6583 = vcombine.high %v6582, %v6582
        %v6585 = vunpack.c.l.s4 1983009808
        %v6586 = vunpack.c.0.s8 %v6585
        %v6587 = vlaneseq
        %v6588 = vshrl.u32 %v6587, 7
        %v6589 = vsub.s32 %v6586, %v6588
        %v6590 = vrot.slane %v6554, %v6589
        %v6591 = vcombine.high %v6590, %v6590
        %v6593 = vunpack.c.l.s4 1983009808
        %v6594 = vunpack.c.0.s8 %v6593
        %v6595 = vlaneseq
        %v6596 = vshrl.u32 %v6595, 7
        %v6597 = vsub.s32 %v6594, %v6596
        %v6598 = vrot.slane %v6555, %v6597
        %v6599 = vcombine.high %v6598, %v6598
        %v6601 = vunpack.c.l.s4 1983009808
        %v6602 = vunpack.c.0.s8 %v6601
        %v6603 = vlaneseq
        %v6604 = vshrl.u32 %v6603, 7
        %v6605 = vsub.s32 %v6602, %v6604
        %v6606 = vrot.slane %v6556, %v6605
        %v6607 = vcombine.high %v6606, %v6606
        %v6609 = vunpack.c.l.s4 1983009808
        %v6610 = vunpack.c.0.s8 %v6609
        %v6611 = vlaneseq
        %v6612 = vshrl.u32 %v6611, 7
        %v6613 = vsub.s32 %v6610, %v6612
        %v6614 = vrot.slane %v6557, %v6613
        %v6615 = vcombine.high %v6614, %v6614
        %v6617 = vunpack.c.l.s4 1983009808
        %v6618 = vunpack.c.0.s8 %v6617
        %v6619 = vlaneseq
        %v6620 = vshrl.u32 %v6619, 7
        %v6621 = vsub.s32 %v6618, %v6620
        %v6622 = vrot.slane %v6558, %v6621
        %v6623 = vcombine.high %v6622, %v6622
        %v6625 = vunpack.c.l.s4 1983009808
        %v6626 = vunpack.c.0.s8 %v6625
        %v6627 = vlaneseq
        %v6628 = vshrl.u32 %v6627, 7
        %v6629 = vsub.s32 %v6626, %v6628
        %v6630 = vrot.slane %v6559, %v6629
        %v6631 = vcombine.high %v6630, %v6630
        %v6632 = vrot.slane %v6574, 7
        %v6633 = vrot.slane %v6632, 2
        %v6634 = vrot.slane %v6575, 7
        %v6635 = vsel %vm1385, %v6633, %v6634
        %v6636 = vrot.slane %v6582, 7
        %v6637 = vrot.slane %v6636, 2
        %v6638 = vrot.slane %v6583, 7
        %v6639 = vsel %vm1385, %v6637, %v6638
        %v6640 = vrot.slane %v6590, 7
        %v6641 = vrot.slane %v6640, 2
        %v6642 = vrot.slane %v6591, 7
        %v6643 = vsel %vm1385, %v6641, %v6642
        %v6644 = vrot.slane %v6598, 7
        %v6645 = vrot.slane %v6644, 2
        %v6646 = vrot.slane %v6599, 7
        %v6647 = vsel %vm1385, %v6645, %v6646
        %v6648 = vrot.slane %v6606, 7
        %v6649 = vrot.slane %v6648, 2
        %v6650 = vrot.slane %v6607, 7
        %v6651 = vsel %vm1385, %v6649, %v6650
        %v6652 = vrot.slane %v6614, 7
        %v6653 = vrot.slane %v6652, 2
        %v6654 = vrot.slane %v6615, 7
        %v6655 = vsel %vm1385, %v6653, %v6654
        %v6656 = vrot.slane %v6622, 7
        %v6657 = vrot.slane %v6656, 2
        %v6658 = vrot.slane %v6623, 7
        %v6659 = vsel %vm1385, %v6657, %v6658
        %v6660 = vrot.slane %v6630, 7
        %v6661 = vrot.slane %v6660, 2
        %v6662 = vrot.slane %v6631, 7
        %v6663 = vsel %vm1385, %v6661, %v6662
        %6672 = vst.msk [vmem:[#allocation3 + $0x2] sm:$0x3] %vm1290, %v6635
        %6673 = vst.msk [vmem:[#allocation3 + $0x8] sm:$0x3] %vm1290, %v6639
        %6674 = vst.msk [vmem:[#allocation3 + $0xe] sm:$0x3] %vm1290, %v6643
        %6675 = vst.msk [vmem:[#allocation3 + $0x14] sm:$0x3] %vm1290, %v6647
        %6676 = vst.msk [vmem:[#allocation3 + $0x1a] sm:$0x3] %vm1290, %v6651
        %6677 = vst.msk [vmem:[#allocation3 + $0x20] sm:$0x3] %vm1290, %v6655
        %6678 = vst.msk [vmem:[#allocation3 + $0x26] sm:$0x3] %vm1290, %v6659
        %6679 = vst.msk [vmem:[#allocation3 + $0x2c] sm:$0x3] %vm1290, %v6663
        %v6680 = vld [vmem:[%s1057] sm:$0xe]
        %v6681 = vld [vmem:[%s1057 + $0x4] sm:$0xe]
        %v6682 = vld [vmem:[%s1057 + $0x8] sm:$0xe]
        %v6683 = vld [vmem:[%s1057 + $0xc] sm:$0xe]
        %v6684 = vld [vmem:[%s1057 + $0x20] sm:$0xe]
        %v6685 = vld [vmem:[%s1057 + $0x24] sm:$0xe]
        %v6686 = vld [vmem:[%s1057 + $0x28] sm:$0xe]
        %v6687 = vld [vmem:[%s1057 + $0x2c] sm:$0xe]
        %v6697 = vunpack.c.l.s4 1983009808
        %v6698 = vunpack.c.0.s8 %v6697
        %v6699 = vlaneseq
        %v6700 = vshrl.u32 %v6699, 7
        %v6701 = vsub.s32 %v6698, %v6700
        %v6702 = vrot.slane %v6680, %v6701
        %v6703 = vcombine.high %v6702, %v6702
        %v6705 = vunpack.c.l.s4 1983009808
        %v6706 = vunpack.c.0.s8 %v6705
        %v6707 = vlaneseq
        %v6708 = vshrl.u32 %v6707, 7
        %v6709 = vsub.s32 %v6706, %v6708
        %v6710 = vrot.slane %v6681, %v6709
        %v6711 = vcombine.high %v6710, %v6710
        %v6713 = vunpack.c.l.s4 1983009808
        %v6714 = vunpack.c.0.s8 %v6713
        %v6715 = vlaneseq
        %v6716 = vshrl.u32 %v6715, 7
        %v6717 = vsub.s32 %v6714, %v6716
        %v6718 = vrot.slane %v6682, %v6717
        %v6719 = vcombine.high %v6718, %v6718
        %v6721 = vunpack.c.l.s4 1983009808
        %v6722 = vunpack.c.0.s8 %v6721
        %v6723 = vlaneseq
        %v6724 = vshrl.u32 %v6723, 7
        %v6725 = vsub.s32 %v6722, %v6724
        %v6726 = vrot.slane %v6683, %v6725
        %v6727 = vcombine.high %v6726, %v6726
        %v6729 = vunpack.c.l.s4 1983009808
        %v6730 = vunpack.c.0.s8 %v6729
        %v6731 = vlaneseq
        %v6732 = vshrl.u32 %v6731, 7
        %v6733 = vsub.s32 %v6730, %v6732
        %v6734 = vrot.slane %v6684, %v6733
        %v6735 = vcombine.high %v6734, %v6734
        %v6737 = vunpack.c.l.s4 1983009808
        %v6738 = vunpack.c.0.s8 %v6737
        %v6739 = vlaneseq
        %v6740 = vshrl.u32 %v6739, 7
        %v6741 = vsub.s32 %v6738, %v6740
        %v6742 = vrot.slane %v6685, %v6741
        %v6743 = vcombine.high %v6742, %v6742
        %v6745 = vunpack.c.l.s4 1983009808
        %v6746 = vunpack.c.0.s8 %v6745
        %v6747 = vlaneseq
        %v6748 = vshrl.u32 %v6747, 7
        %v6749 = vsub.s32 %v6746, %v6748
        %v6750 = vrot.slane %v6686, %v6749
        %v6751 = vcombine.high %v6750, %v6750
        %v6753 = vunpack.c.l.s4 1983009808
        %v6754 = vunpack.c.0.s8 %v6753
        %v6755 = vlaneseq
        %v6756 = vshrl.u32 %v6755, 7
        %v6757 = vsub.s32 %v6754, %v6756
        %v6758 = vrot.slane %v6687, %v6757
        %v6759 = vcombine.high %v6758, %v6758
        %v6761 = vshrl.u32 %v6702, 16
        %v6763 = vrot.slane %v6761, 7
        %v6764 = vrot.slane %v6763, 2
        %v6766 = vshrl.u32 %v6703, 16
        %v6768 = vrot.slane %v6766, 7
        %v6769 = vshll.u32 %v6703, 16
        %v6771 = vor.u32 %v6768, %v6769
        %v6772 = vsel %vm3805, %v6764, %v6771
        %v6774 = vshrl.u32 %v6710, 16
        %v6776 = vrot.slane %v6774, 7
        %v6777 = vrot.slane %v6776, 2
        %v6779 = vshrl.u32 %v6711, 16
        %v6781 = vrot.slane %v6779, 7
        %v6782 = vshll.u32 %v6711, 16
        %v6784 = vor.u32 %v6781, %v6782
        %v6785 = vsel %vm3805, %v6777, %v6784
        %v6787 = vshrl.u32 %v6718, 16
        %v6789 = vrot.slane %v6787, 7
        %v6790 = vrot.slane %v6789, 2
        %v6792 = vshrl.u32 %v6719, 16
        %v6794 = vrot.slane %v6792, 7
        %v6795 = vshll.u32 %v6719, 16
        %v6797 = vor.u32 %v6794, %v6795
        %v6798 = vsel %vm3805, %v6790, %v6797
        %v6800 = vshrl.u32 %v6726, 16
        %v6802 = vrot.slane %v6800, 7
        %v6803 = vrot.slane %v6802, 2
        %v6805 = vshrl.u32 %v6727, 16
        %v6807 = vrot.slane %v6805, 7
        %v6808 = vshll.u32 %v6727, 16
        %v6810 = vor.u32 %v6807, %v6808
        %v6811 = vsel %vm3805, %v6803, %v6810
        %v6813 = vshrl.u32 %v6734, 16
        %v6815 = vrot.slane %v6813, 7
        %v6816 = vrot.slane %v6815, 2
        %v6818 = vshrl.u32 %v6735, 16
        %v6820 = vrot.slane %v6818, 7
        %v6821 = vshll.u32 %v6735, 16
        %v6823 = vor.u32 %v6820, %v6821
        %v6824 = vsel %vm3805, %v6816, %v6823
        %v6826 = vshrl.u32 %v6742, 16
        %v6828 = vrot.slane %v6826, 7
        %v6829 = vrot.slane %v6828, 2
        %v6831 = vshrl.u32 %v6743, 16
        %v6833 = vrot.slane %v6831, 7
        %v6834 = vshll.u32 %v6743, 16
        %v6836 = vor.u32 %v6833, %v6834
        %v6837 = vsel %vm3805, %v6829, %v6836
        %v6839 = vshrl.u32 %v6750, 16
        %v6841 = vrot.slane %v6839, 7
        %v6842 = vrot.slane %v6841, 2
        %v6844 = vshrl.u32 %v6751, 16
        %v6846 = vrot.slane %v6844, 7
        %v6847 = vshll.u32 %v6751, 16
        %v6849 = vor.u32 %v6846, %v6847
        %v6850 = vsel %vm3805, %v6842, %v6849
        %v6852 = vshrl.u32 %v6758, 16
        %v6854 = vrot.slane %v6852, 7
        %v6855 = vrot.slane %v6854, 2
        %v6857 = vshrl.u32 %v6759, 16
        %v6859 = vrot.slane %v6857, 7
        %v6860 = vshll.u32 %v6759, 16
        %v6862 = vor.u32 %v6859, %v6860
        %v6863 = vsel %vm3805, %v6855, %v6862
        %6864 = vrot.lane.b32.xlu0 %v6772, 32
        %v6865 = vpop.permute.xlu0 %6864
        %6866 = vrot.lane.b32.xlu0 %v6785, 32
        %v6867 = vpop.permute.xlu0 %6866
        %6868 = vrot.lane.b32.xlu0 %v6798, 32
        %v6869 = vpop.permute.xlu0 %6868
        %6870 = vrot.lane.b32.xlu0 %v6811, 32
        %v6871 = vpop.permute.xlu0 %6870
        %6872 = vrot.lane.b32.xlu0 %v6824, 32
        %v6873 = vpop.permute.xlu0 %6872
        %6874 = vrot.lane.b32.xlu0 %v6837, 32
        %v6875 = vpop.permute.xlu0 %6874
        %6876 = vrot.lane.b32.xlu0 %v6850, 32
        %v6877 = vpop.permute.xlu0 %6876
        %6878 = vrot.lane.b32.xlu0 %v6863, 32
        %v6879 = vpop.permute.xlu0 %6878
        %6888 = vst.msk [vmem:[#allocation3 + $0x2] sm:$0x3] %vm1442, %v6865
        %6889 = vst.msk [vmem:[#allocation3 + $0x8] sm:$0x3] %vm1442, %v6867
        %6890 = vst.msk [vmem:[#allocation3 + $0xe] sm:$0x3] %vm1442, %v6869
        %6891 = vst.msk [vmem:[#allocation3 + $0x14] sm:$0x3] %vm1442, %v6871
        %6892 = vst.msk [vmem:[#allocation3 + $0x1a] sm:$0x3] %vm1442, %v6873
        %6893 = vst.msk [vmem:[#allocation3 + $0x20] sm:$0x3] %vm1442, %v6875
        %6894 = vst.msk [vmem:[#allocation3 + $0x26] sm:$0x3] %vm1442, %v6877
        %6895 = vst.msk [vmem:[#allocation3 + $0x2c] sm:$0x3] %vm1442, %v6879
        %v6896 = vld [vmem:[%s4510] sm:$0x7]
        %v6897 = vld [vmem:[%s4510 + $0x4] sm:$0x7]
        %v6898 = vld [vmem:[%s4510 + $0x8] sm:$0x7]
        %v6899 = vld [vmem:[%s4510 + $0xc] sm:$0x7]
        %v6900 = vld [vmem:[%s4510 + $0x20] sm:$0x7]
        %v6901 = vld [vmem:[%s4510 + $0x24] sm:$0x7]
        %v6902 = vld [vmem:[%s4510 + $0x28] sm:$0x7]
        %v6903 = vld [vmem:[%s4510 + $0x2c] sm:$0x7]
        %v6913 = vunpack.c.l.s4 1983009808
        %v6914 = vunpack.c.0.s8 %v6913
        %v6915 = vlaneseq
        %v6916 = vshrl.u32 %v6915, 7
        %v6917 = vsub.s32 %v6914, %v6916
        %v6918 = vrot.slane %v6896, %v6917
        %v6919 = vcombine.high %v6918, %v6918
        %v6921 = vunpack.c.l.s4 1983009808
        %v6922 = vunpack.c.0.s8 %v6921
        %v6923 = vlaneseq
        %v6924 = vshrl.u32 %v6923, 7
        %v6925 = vsub.s32 %v6922, %v6924
        %v6926 = vrot.slane %v6897, %v6925
        %v6927 = vcombine.high %v6926, %v6926
        %v6929 = vunpack.c.l.s4 1983009808
        %v6930 = vunpack.c.0.s8 %v6929
        %v6931 = vlaneseq
        %v6932 = vshrl.u32 %v6931, 7
        %v6933 = vsub.s32 %v6930, %v6932
        %v6934 = vrot.slane %v6898, %v6933
        %v6935 = vcombine.high %v6934, %v6934
        %v6937 = vunpack.c.l.s4 1983009808
        %v6938 = vunpack.c.0.s8 %v6937
        %v6939 = vlaneseq
        %v6940 = vshrl.u32 %v6939, 7
        %v6941 = vsub.s32 %v6938, %v6940
        %v6942 = vrot.slane %v6899, %v6941
        %v6943 = vcombine.high %v6942, %v6942
        %v6945 = vunpack.c.l.s4 1983009808
        %v6946 = vunpack.c.0.s8 %v6945
        %v6947 = vlaneseq
        %v6948 = vshrl.u32 %v6947, 7
        %v6949 = vsub.s32 %v6946, %v6948
        %v6950 = vrot.slane %v6900, %v6949
        %v6951 = vcombine.high %v6950, %v6950
        %v6953 = vunpack.c.l.s4 1983009808
        %v6954 = vunpack.c.0.s8 %v6953
        %v6955 = vlaneseq
        %v6956 = vshrl.u32 %v6955, 7
        %v6957 = vsub.s32 %v6954, %v6956
        %v6958 = vrot.slane %v6901, %v6957
        %v6959 = vcombine.high %v6958, %v6958
        %v6961 = vunpack.c.l.s4 1983009808
        %v6962 = vunpack.c.0.s8 %v6961
        %v6963 = vlaneseq
        %v6964 = vshrl.u32 %v6963, 7
        %v6965 = vsub.s32 %v6962, %v6964
        %v6966 = vrot.slane %v6902, %v6965
        %v6967 = vcombine.high %v6966, %v6966
        %v6969 = vunpack.c.l.s4 1983009808
        %v6970 = vunpack.c.0.s8 %v6969
        %v6971 = vlaneseq
        %v6972 = vshrl.u32 %v6971, 7
        %v6973 = vsub.s32 %v6970, %v6972
        %v6974 = vrot.slane %v6903, %v6973
        %v6975 = vcombine.high %v6974, %v6974
        %v6977 = vshrl.u32 %v6918, 16
        %v6979 = vrot.slane %v6977, 6
        %v6980 = vshll.u32 %v6918, 16
        %v6982 = vrot.slane %v6980, 7
        %v6983 = vor.u32 %v6979, %v6982
        %v6984 = vrot.slane %v6983, 2
        %v6986 = vshll.u32 %v6919, 16
        %v6988 = vrot.slane %v6986, 7
        %v6989 = vsel %vm1153, %v6984, %v6988
        %v6991 = vshrl.u32 %v6926, 16
        %v6993 = vrot.slane %v6991, 6
        %v6994 = vshll.u32 %v6926, 16
        %v6996 = vrot.slane %v6994, 7
        %v6997 = vor.u32 %v6993, %v6996
        %v6998 = vrot.slane %v6997, 2
        %v7000 = vshll.u32 %v6927, 16
        %v7002 = vrot.slane %v7000, 7
        %v7003 = vsel %vm1153, %v6998, %v7002
        %v7005 = vshrl.u32 %v6934, 16
        %v7007 = vrot.slane %v7005, 6
        %v7008 = vshll.u32 %v6934, 16
        %v7010 = vrot.slane %v7008, 7
        %v7011 = vor.u32 %v7007, %v7010
        %v7012 = vrot.slane %v7011, 2
        %v7014 = vshll.u32 %v6935, 16
        %v7016 = vrot.slane %v7014, 7
        %v7017 = vsel %vm1153, %v7012, %v7016
        %v7019 = vshrl.u32 %v6942, 16
        %v7021 = vrot.slane %v7019, 6
        %v7022 = vshll.u32 %v6942, 16
        %v7024 = vrot.slane %v7022, 7
        %v7025 = vor.u32 %v7021, %v7024
        %v7026 = vrot.slane %v7025, 2
        %v7028 = vshll.u32 %v6943, 16
        %v7030 = vrot.slane %v7028, 7
        %v7031 = vsel %vm1153, %v7026, %v7030
        %v7033 = vshrl.u32 %v6950, 16
        %v7035 = vrot.slane %v7033, 6
        %v7036 = vshll.u32 %v6950, 16
        %v7038 = vrot.slane %v7036, 7
        %v7039 = vor.u32 %v7035, %v7038
        %v7040 = vrot.slane %v7039, 2
        %v7042 = vshll.u32 %v6951, 16
        %v7044 = vrot.slane %v7042, 7
        %v7045 = vsel %vm1153, %v7040, %v7044
        %v7047 = vshrl.u32 %v6958, 16
        %v7049 = vrot.slane %v7047, 6
        %v7050 = vshll.u32 %v6958, 16
        %v7052 = vrot.slane %v7050, 7
        %v7053 = vor.u32 %v7049, %v7052
        %v7054 = vrot.slane %v7053, 2
        %v7056 = vshll.u32 %v6959, 16
        %v7058 = vrot.slane %v7056, 7
        %v7059 = vsel %vm1153, %v7054, %v7058
        %v7061 = vshrl.u32 %v6966, 16
        %v7063 = vrot.slane %v7061, 6
        %v7064 = vshll.u32 %v6966, 16
        %v7066 = vrot.slane %v7064, 7
        %v7067 = vor.u32 %v7063, %v7066
        %v7068 = vrot.slane %v7067, 2
        %v7070 = vshll.u32 %v6967, 16
        %v7072 = vrot.slane %v7070, 7
        %v7073 = vsel %vm1153, %v7068, %v7072
        %v7075 = vshrl.u32 %v6974, 16
        %v7077 = vrot.slane %v7075, 6
        %v7078 = vshll.u32 %v6974, 16
        %v7080 = vrot.slane %v7078, 7
        %v7081 = vor.u32 %v7077, %v7080
        %v7082 = vrot.slane %v7081, 2
        %v7084 = vshll.u32 %v6975, 16
        %v7086 = vrot.slane %v7084, 7
        %v7087 = vsel %vm1153, %v7082, %v7086
        %7088 = vrot.lane.b32.xlu0 %v6989, 64
        %v7089 = vpop.permute.xlu0 %7088
        %7090 = vrot.lane.b32.xlu0 %v7003, 64
        %v7091 = vpop.permute.xlu0 %7090
        %7092 = vrot.lane.b32.xlu0 %v7017, 64
        %v7093 = vpop.permute.xlu0 %7092
        %7094 = vrot.lane.b32.xlu0 %v7031, 64
        %v7095 = vpop.permute.xlu0 %7094
        %7096 = vrot.lane.b32.xlu0 %v7045, 64
        %v7097 = vpop.permute.xlu0 %7096
        %7098 = vrot.lane.b32.xlu0 %v7059, 64
        %v7099 = vpop.permute.xlu0 %7098
        %7100 = vrot.lane.b32.xlu0 %v7073, 64
        %v7101 = vpop.permute.xlu0 %7100
        %7102 = vrot.lane.b32.xlu0 %v7087, 64
        %v7103 = vpop.permute.xlu0 %7102
        %7112 = vst.msk [vmem:[#allocation3 + $0x2] sm:$0x3] %vm1587, %v7089
        %7113 = vst.msk [vmem:[#allocation3 + $0x8] sm:$0x3] %vm1587, %v7091
        %7114 = vst.msk [vmem:[#allocation3 + $0xe] sm:$0x3] %vm1587, %v7093
        %7115 = vst.msk [vmem:[#allocation3 + $0x14] sm:$0x3] %vm1587, %v7095
        %7116 = vst.msk [vmem:[#allocation3 + $0x1a] sm:$0x3] %vm1587, %v7097
        %7117 = vst.msk [vmem:[#allocation3 + $0x20] sm:$0x3] %vm1587, %v7099
        %7118 = vst.msk [vmem:[#allocation3 + $0x26] sm:$0x3] %vm1587, %v7101
        %7119 = vst.msk [vmem:[#allocation3 + $0x2c] sm:$0x3] %vm1587, %v7103
        %v7120 = vld [vmem:[%s4510] sm:$0x6]
        %v7121 = vld [vmem:[%s4510 + $0x4] sm:$0x6]
        %v7122 = vld [vmem:[%s4510 + $0x8] sm:$0x6]
        %v7123 = vld [vmem:[%s4510 + $0xc] sm:$0x6]
        %v7124 = vld [vmem:[%s4510 + $0x20] sm:$0x6]
        %v7125 = vld [vmem:[%s4510 + $0x24] sm:$0x6]
        %v7126 = vld [vmem:[%s4510 + $0x28] sm:$0x6]
        %v7127 = vld [vmem:[%s4510 + $0x2c] sm:$0x6]
        %v7137 = vunpack.c.l.s4 1983009808
        %v7138 = vunpack.c.0.s8 %v7137
        %v7139 = vlaneseq
        %v7140 = vshrl.u32 %v7139, 7
        %v7141 = vsub.s32 %v7138, %v7140
        %v7142 = vrot.slane %v7120, %v7141
        %v7143 = vcombine.high %v7142, %v7142
        %v7145 = vunpack.c.l.s4 1983009808
        %v7146 = vunpack.c.0.s8 %v7145
        %v7147 = vlaneseq
        %v7148 = vshrl.u32 %v7147, 7
        %v7149 = vsub.s32 %v7146, %v7148
        %v7150 = vrot.slane %v7121, %v7149
        %v7151 = vcombine.high %v7150, %v7150
        %v7153 = vunpack.c.l.s4 1983009808
        %v7154 = vunpack.c.0.s8 %v7153
        %v7155 = vlaneseq
        %v7156 = vshrl.u32 %v7155, 7
        %v7157 = vsub.s32 %v7154, %v7156
        %v7158 = vrot.slane %v7122, %v7157
        %v7159 = vcombine.high %v7158, %v7158
        %v7161 = vunpack.c.l.s4 1983009808
        %v7162 = vunpack.c.0.s8 %v7161
        %v7163 = vlaneseq
        %v7164 = vshrl.u32 %v7163, 7
        %v7165 = vsub.s32 %v7162, %v7164
        %v7166 = vrot.slane %v7123, %v7165
        %v7167 = vcombine.high %v7166, %v7166
        %v7169 = vunpack.c.l.s4 1983009808
        %v7170 = vunpack.c.0.s8 %v7169
        %v7171 = vlaneseq
        %v7172 = vshrl.u32 %v7171, 7
        %v7173 = vsub.s32 %v7170, %v7172
        %v7174 = vrot.slane %v7124, %v7173
        %v7175 = vcombine.high %v7174, %v7174
        %v7177 = vunpack.c.l.s4 1983009808
        %v7178 = vunpack.c.0.s8 %v7177
        %v7179 = vlaneseq
        %v7180 = vshrl.u32 %v7179, 7
        %v7181 = vsub.s32 %v7178, %v7180
        %v7182 = vrot.slane %v7125, %v7181
        %v7183 = vcombine.high %v7182, %v7182
        %v7185 = vunpack.c.l.s4 1983009808
        %v7186 = vunpack.c.0.s8 %v7185
        %v7187 = vlaneseq
        %v7188 = vshrl.u32 %v7187, 7
        %v7189 = vsub.s32 %v7186, %v7188
        %v7190 = vrot.slane %v7126, %v7189
        %v7191 = vcombine.high %v7190, %v7190
        %v7193 = vunpack.c.l.s4 1983009808
        %v7194 = vunpack.c.0.s8 %v7193
        %v7195 = vlaneseq
        %v7196 = vshrl.u32 %v7195, 7
        %v7197 = vsub.s32 %v7194, %v7196
        %v7198 = vrot.slane %v7127, %v7197
        %v7199 = vcombine.high %v7198, %v7198
        %v7200 = vrot.slane %v7142, 7
        %v7201 = vrot.slane %v7200, 2
        %v7202 = vrot.slane %v7143, 7
        %v7203 = vsel %vm1385, %v7201, %v7202
        %v7204 = vrot.slane %v7150, 7
        %v7205 = vrot.slane %v7204, 2
        %v7206 = vrot.slane %v7151, 7
        %v7207 = vsel %vm1385, %v7205, %v7206
        %v7208 = vrot.slane %v7158, 7
        %v7209 = vrot.slane %v7208, 2
        %v7210 = vrot.slane %v7159, 7
        %v7211 = vsel %vm1385, %v7209, %v7210
        %v7212 = vrot.slane %v7166, 7
        %v7213 = vrot.slane %v7212, 2
        %v7214 = vrot.slane %v7167, 7
        %v7215 = vsel %vm1385, %v7213, %v7214
        %v7216 = vrot.slane %v7174, 7
        %v7217 = vrot.slane %v7216, 2
        %v7218 = vrot.slane %v7175, 7
        %v7219 = vsel %vm1385, %v7217, %v7218
        %v7220 = vrot.slane %v7182, 7
        %v7221 = vrot.slane %v7220, 2
        %v7222 = vrot.slane %v7183, 7
        %v7223 = vsel %vm1385, %v7221, %v7222
        %v7224 = vrot.slane %v7190, 7
        %v7225 = vrot.slane %v7224, 2
        %v7226 = vrot.slane %v7191, 7
        %v7227 = vsel %vm1385, %v7225, %v7226
        %v7228 = vrot.slane %v7198, 7
        %v7229 = vrot.slane %v7228, 2
        %v7230 = vrot.slane %v7199, 7
        %v7231 = vsel %vm1385, %v7229, %v7230
        %7232 = vrot.lane.b32.xlu0 %v7203, 96
        %v7233 = vpop.permute.xlu0 %7232
        %7234 = vrot.lane.b32.xlu0 %v7207, 96
        %v7235 = vpop.permute.xlu0 %7234
        %7236 = vrot.lane.b32.xlu0 %v7211, 96
        %v7237 = vpop.permute.xlu0 %7236
        %7238 = vrot.lane.b32.xlu0 %v7215, 96
        %v7239 = vpop.permute.xlu0 %7238
        %7240 = vrot.lane.b32.xlu0 %v7219, 96
        %v7241 = vpop.permute.xlu0 %7240
        %7242 = vrot.lane.b32.xlu0 %v7223, 96
        %v7243 = vpop.permute.xlu0 %7242
        %7244 = vrot.lane.b32.xlu0 %v7227, 96
        %v7245 = vpop.permute.xlu0 %7244
        %7246 = vrot.lane.b32.xlu0 %v7231, 96
        %v7247 = vpop.permute.xlu0 %7246
        %7256 = vst.msk [vmem:[#allocation3 + $0x2] sm:$0x3] %vm1812, %v7233
        %7257 = vst.msk [vmem:[#allocation3 + $0x8] sm:$0x3] %vm1812, %v7235
        %7258 = vst.msk [vmem:[#allocation3 + $0xe] sm:$0x3] %vm1812, %v7237
        %7259 = vst.msk [vmem:[#allocation3 + $0x14] sm:$0x3] %vm1812, %v7239
        %7260 = vst.msk [vmem:[#allocation3 + $0x1a] sm:$0x3] %vm1812, %v7241
        %7261 = vst.msk [vmem:[#allocation3 + $0x20] sm:$0x3] %vm1812, %v7243
        %7262 = vst.msk [vmem:[#allocation3 + $0x26] sm:$0x3] %vm1812, %v7245
        %7263 = vst.msk [vmem:[#allocation3 + $0x2c] sm:$0x3] %vm1812, %v7247
        %v7264 = vld [vmem:[%s4510] sm:$0xe]
        %v7265 = vld [vmem:[%s4510 + $0x4] sm:$0xe]
        %v7266 = vld [vmem:[%s4510 + $0x8] sm:$0xe]
        %v7267 = vld [vmem:[%s4510 + $0xc] sm:$0xe]
        %v7268 = vld [vmem:[%s4510 + $0x20] sm:$0xe]
        %v7269 = vld [vmem:[%s4510 + $0x24] sm:$0xe]
        %v7270 = vld [vmem:[%s4510 + $0x28] sm:$0xe]
        %v7271 = vld [vmem:[%s4510 + $0x2c] sm:$0xe]
        %v7281 = vunpack.c.l.s4 1983009808
        %v7282 = vunpack.c.0.s8 %v7281
        %v7283 = vlaneseq
        %v7284 = vshrl.u32 %v7283, 7
        %v7285 = vsub.s32 %v7282, %v7284
        %v7286 = vrot.slane %v7264, %v7285
        %v7287 = vcombine.high %v7286, %v7286
        %v7289 = vunpack.c.l.s4 1983009808
        %v7290 = vunpack.c.0.s8 %v7289
        %v7291 = vlaneseq
        %v7292 = vshrl.u32 %v7291, 7
        %v7293 = vsub.s32 %v7290, %v7292
        %v7294 = vrot.slane %v7265, %v7293
        %v7295 = vcombine.high %v7294, %v7294
        %v7297 = vunpack.c.l.s4 1983009808
        %v7298 = vunpack.c.0.s8 %v7297
        %v7299 = vlaneseq
        %v7300 = vshrl.u32 %v7299, 7
        %v7301 = vsub.s32 %v7298, %v7300
        %v7302 = vrot.slane %v7266, %v7301
        %v7303 = vcombine.high %v7302, %v7302
        %v7305 = vunpack.c.l.s4 1983009808
        %v7306 = vunpack.c.0.s8 %v7305
        %v7307 = vlaneseq
        %v7308 = vshrl.u32 %v7307, 7
        %v7309 = vsub.s32 %v7306, %v7308
        %v7310 = vrot.slane %v7267, %v7309
        %v7311 = vcombine.high %v7310, %v7310
        %v7313 = vunpack.c.l.s4 1983009808
        %v7314 = vunpack.c.0.s8 %v7313
        %v7315 = vlaneseq
        %v7316 = vshrl.u32 %v7315, 7
        %v7317 = vsub.s32 %v7314, %v7316
        %v7318 = vrot.slane %v7268, %v7317
        %v7319 = vcombine.high %v7318, %v7318
        %v7321 = vunpack.c.l.s4 1983009808
        %v7322 = vunpack.c.0.s8 %v7321
        %v7323 = vlaneseq
        %v7324 = vshrl.u32 %v7323, 7
        %v7325 = vsub.s32 %v7322, %v7324
        %v7326 = vrot.slane %v7269, %v7325
        %v7327 = vcombine.high %v7326, %v7326
        %v7329 = vunpack.c.l.s4 1983009808
        %v7330 = vunpack.c.0.s8 %v7329
        %v7331 = vlaneseq
        %v7332 = vshrl.u32 %v7331, 7
        %v7333 = vsub.s32 %v7330, %v7332
        %v7334 = vrot.slane %v7270, %v7333
        %v7335 = vcombine.high %v7334, %v7334
        %v7337 = vunpack.c.l.s4 1983009808
        %v7338 = vunpack.c.0.s8 %v7337
        %v7339 = vlaneseq
        %v7340 = vshrl.u32 %v7339, 7
        %v7341 = vsub.s32 %v7338, %v7340
        %v7342 = vrot.slane %v7271, %v7341
        %v7343 = vcombine.high %v7342, %v7342
        %v7345 = vshrl.u32 %v7286, 16
        %v7347 = vrot.slane %v7345, 7
        %v7348 = vrot.slane %v7347, 2
        %v7350 = vshrl.u32 %v7287, 16
        %v7352 = vrot.slane %v7350, 7
        %v7353 = vshll.u32 %v7287, 16
        %v7355 = vor.u32 %v7352, %v7353
        %v7356 = vsel %vm3805, %v7348, %v7355
        %v7358 = vshrl.u32 %v7294, 16
        %v7360 = vrot.slane %v7358, 7
        %v7361 = vrot.slane %v7360, 2
        %v7363 = vshrl.u32 %v7295, 16
        %v7365 = vrot.slane %v7363, 7
        %v7366 = vshll.u32 %v7295, 16
        %v7368 = vor.u32 %v7365, %v7366
        %v7369 = vsel %vm3805, %v7361, %v7368
        %v7371 = vshrl.u32 %v7302, 16
        %v7373 = vrot.slane %v7371, 7
        %v7374 = vrot.slane %v7373, 2
        %v7376 = vshrl.u32 %v7303, 16
        %v7378 = vrot.slane %v7376, 7
        %v7379 = vshll.u32 %v7303, 16
        %v7381 = vor.u32 %v7378, %v7379
        %v7382 = vsel %vm3805, %v7374, %v7381
        %v7384 = vshrl.u32 %v7310, 16
        %v7386 = vrot.slane %v7384, 7
        %v7387 = vrot.slane %v7386, 2
        %v7389 = vshrl.u32 %v7311, 16
        %v7391 = vrot.slane %v7389, 7
        %v7392 = vshll.u32 %v7311, 16
        %v7394 = vor.u32 %v7391, %v7392
        %v7395 = vsel %vm3805, %v7387, %v7394
        %v7397 = vshrl.u32 %v7318, 16
        %v7399 = vrot.slane %v7397, 7
        %v7400 = vrot.slane %v7399, 2
        %v7402 = vshrl.u32 %v7319, 16
        %v7404 = vrot.slane %v7402, 7
        %v7405 = vshll.u32 %v7319, 16
        %v7407 = vor.u32 %v7404, %v7405
        %v7408 = vsel %vm3805, %v7400, %v7407
        %v7410 = vshrl.u32 %v7326, 16
        %v7412 = vrot.slane %v7410, 7
        %v7413 = vrot.slane %v7412, 2
        %v7415 = vshrl.u32 %v7327, 16
        %v7417 = vrot.slane %v7415, 7
        %v7418 = vshll.u32 %v7327, 16
        %v7420 = vor.u32 %v7417, %v7418
        %v7421 = vsel %vm3805, %v7413, %v7420
        %v7423 = vshrl.u32 %v7334, 16
        %v7425 = vrot.slane %v7423, 7
        %v7426 = vrot.slane %v7425, 2
        %v7428 = vshrl.u32 %v7335, 16
        %v7430 = vrot.slane %v7428, 7
        %v7431 = vshll.u32 %v7335, 16
        %v7433 = vor.u32 %v7430, %v7431
        %v7434 = vsel %vm3805, %v7426, %v7433
        %v7436 = vshrl.u32 %v7342, 16
        %v7438 = vrot.slane %v7436, 7
        %v7439 = vrot.slane %v7438, 2
        %v7441 = vshrl.u32 %v7343, 16
        %v7443 = vrot.slane %v7441, 7
        %v7444 = vshll.u32 %v7343, 16
        %v7446 = vor.u32 %v7443, %v7444
        %v7447 = vsel %vm3805, %v7439, %v7446
        %7456 = vst.msk [vmem:[#allocation3 + $0x4] sm:$0x3] %vm1290, %v7356
        %7457 = vst.msk [vmem:[#allocation3 + $0xa] sm:$0x3] %vm1290, %v7369
        %7458 = vst.msk [vmem:[#allocation3 + $0x10] sm:$0x3] %vm1290, %v7382
        %7459 = vst.msk [vmem:[#allocation3 + $0x16] sm:$0x3] %vm1290, %v7395
        %7460 = vst.msk [vmem:[#allocation3 + $0x1c] sm:$0x3] %vm1290, %v7408
        %7461 = vst.msk [vmem:[#allocation3 + $0x22] sm:$0x3] %vm1290, %v7421
        %7462 = vst.msk [vmem:[#allocation3 + $0x28] sm:$0x3] %vm1290, %v7434
        %7463 = vst.msk [vmem:[#allocation3 + $0x2e] sm:$0x3] %vm1290, %v7447
        %v7464 = vld [vmem:[#allocation3] sm:$0x3f]
        %v7465 = vld [vmem:[#allocation3 + $0x6] sm:$0x3f]
        %v7466 = vld [vmem:[#allocation3 + $0xc] sm:$0x3f]
        %v7467 = vld [vmem:[#allocation3 + $0x12] sm:$0x3f]
        %v7468 = vld [vmem:[#allocation3 + $0x18] sm:$0x3f]
        %v7469 = vld [vmem:[#allocation3 + $0x1e] sm:$0x3f]
        %v7470 = vld [vmem:[#allocation3 + $0x24] sm:$0x3f]
        %v7471 = vld [vmem:[#allocation3 + $0x2a] sm:$0x3f]
        %v7472 = vld [vmem:[%s17] sm:$0xf]
        %v7473 = vld [vmem:[%s17 + $0x4] sm:$0xf]
        %v7474 = vld [vmem:[%s17 + $0x8] sm:$0xf]
        %v7475 = vld [vmem:[%s17 + $0xc] sm:$0xf]
        %v7476 = vld [vmem:[%s17 + $0x10] sm:$0xf]
        %v7477 = vld [vmem:[%s17 + $0x14] sm:$0xf]
        %v7478 = vld [vmem:[%s17 + $0x18] sm:$0xf]
        %v7479 = vld [vmem:[%s17 + $0x1c] sm:$0xf]
        %v7480 = vld [vmem:[%s17 + $0x20] sm:$0xf]
        %v7481 = vld [vmem:[%s17 + $0x24] sm:$0xf]
        %v7482 = vld [vmem:[%s17 + $0x28] sm:$0xf]
        %v7483 = vld [vmem:[%s17 + $0x2c] sm:$0xf]
        %v7484 = vld [vmem:[%s17 + $0x30] sm:$0xf]
        %v7485 = vld [vmem:[%s17 + $0x34] sm:$0xf]
        %v7486 = vld [vmem:[%s17 + $0x38] sm:$0xf]
        %v7487 = vld [vmem:[%s17 + $0x3c] sm:$0xf]
        %v7488 = vld [vmem:[%s17 + $0x40] sm:$0xf]
        %v7489 = vld [vmem:[%s17 + $0x44] sm:$0xf]
        %v7490 = vld [vmem:[%s17 + $0x48] sm:$0xf]
        %v7491 = vld [vmem:[%s17 + $0x4c] sm:$0xf]
        %v7492 = vld [vmem:[%s17 + $0x50] sm:$0xf]
        %v7493 = vld [vmem:[%s17 + $0x54] sm:$0xf]
        %v7494 = vld [vmem:[%s17 + $0x58] sm:$0xf]
        %v7495 = vld [vmem:[%s17 + $0x5c] sm:$0xf]
        %v7496 = vld [vmem:[%s17 + $0x60] sm:$0xf]
        %v7497 = vld [vmem:[%s17 + $0x64] sm:$0xf]
        %v7498 = vld [vmem:[%s17 + $0x68] sm:$0xf]
        %v7499 = vld [vmem:[%s17 + $0x6c] sm:$0xf]
        %v7500 = vld [vmem:[%s17 + $0x70] sm:$0xf]
        %v7501 = vld [vmem:[%s17 + $0x74] sm:$0xf]
        %v7502 = vld [vmem:[%s17 + $0x78] sm:$0xf]
        %v7503 = vld [vmem:[%s17 + $0x7c] sm:$0xf]
        %v7504 = vld [vmem:[%s17 + $0x80] sm:$0xf]
        %v7505 = vld [vmem:[%s17 + $0x84] sm:$0xf]
        %v7506 = vld [vmem:[%s17 + $0x88] sm:$0xf]
        %v7507 = vld [vmem:[%s17 + $0x8c] sm:$0xf]
        %v7508 = vld [vmem:[%s18] sm:$0x1]
        %v7510 = vlaneseq
        %v7511 = vshrl.u32 %v7510, 7
        %v7512 = vsub.s32 0, %v7511
        %v7513 = vrot.slane %v7508, %v7512
        %v7523 = vcombine.low %v7464, %v7465
        %v7524 = vcombine.high %v7464, %v7465
        %v7525 = vcombine.low %v7466, %v7467
        %v7526 = vcombine.high %v7466, %v7467
        %v7528 = vunpack.c.l.s4 1983009808
        %v7529 = vunpack.c.0.s8 %v7528
        %v7530 = vlaneseq
        %v7531 = vshrl.u32 %v7530, 7
        %v7532 = vsub.s32 %v7529, %v7531
        %v7533 = vrot.slane %v7523, %v7532
        %v7535 = vunpack.c.l.s4 1983009808
        %v7536 = vunpack.c.0.s8 %v7535
        %v7537 = vlaneseq
        %v7538 = vshrl.u32 %v7537, 7
        %v7539 = vsub.s32 %v7536, %v7538
        %v7540 = vrot.slane %v7524, %v7539
        %v7542 = vunpack.c.l.s4 1983009808
        %v7543 = vunpack.c.0.s8 %v7542
        %v7544 = vlaneseq
        %v7545 = vshrl.u32 %v7544, 7
        %v7546 = vsub.s32 %v7543, %v7545
        %v7547 = vrot.slane %v7525, %v7546
        %v7549 = vunpack.c.l.s4 1983009808
        %v7550 = vunpack.c.0.s8 %v7549
        %v7551 = vlaneseq
        %v7552 = vshrl.u32 %v7551, 7
        %v7553 = vsub.s32 %v7550, %v7552
        %v7554 = vrot.slane %v7526, %v7553
        %v7555 = vcombine.low %v7533, %v7547
        %v7556 = vcombine.high %v7533, %v7547
        %v7557 = vcombine.low %v7540, %v7554
        %v7558 = vcombine.low %v7468, %v7469
        %v7559 = vcombine.high %v7468, %v7469
        %v7560 = vcombine.low %v7470, %v7471
        %v7561 = vcombine.high %v7470, %v7471
        %v7563 = vunpack.c.l.s4 1983009808
        %v7564 = vunpack.c.0.s8 %v7563
        %v7565 = vlaneseq
        %v7566 = vshrl.u32 %v7565, 7
        %v7567 = vsub.s32 %v7564, %v7566
        %v7568 = vrot.slane %v7558, %v7567
        %v7570 = vunpack.c.l.s4 1983009808
        %v7571 = vunpack.c.0.s8 %v7570
        %v7572 = vlaneseq
        %v7573 = vshrl.u32 %v7572, 7
        %v7574 = vsub.s32 %v7571, %v7573
        %v7575 = vrot.slane %v7559, %v7574
        %v7577 = vunpack.c.l.s4 1983009808
        %v7578 = vunpack.c.0.s8 %v7577
        %v7579 = vlaneseq
        %v7580 = vshrl.u32 %v7579, 7
        %v7581 = vsub.s32 %v7578, %v7580
        %v7582 = vrot.slane %v7560, %v7581
        %v7584 = vunpack.c.l.s4 1983009808
        %v7585 = vunpack.c.0.s8 %v7584
        %v7586 = vlaneseq
        %v7587 = vshrl.u32 %v7586, 7
        %v7588 = vsub.s32 %v7585, %v7587
        %v7589 = vrot.slane %v7561, %v7588
        %v7590 = vcombine.low %v7568, %v7582
        %v7591 = vcombine.high %v7568, %v7582
        %v7592 = vcombine.low %v7575, %v7589
        %v7633 = vunpack.c.l.b16 %v7472
        %v7634 = vunpack.c.l.b16 %v7473
        %v7635 = vunpack.c.l.b16 %v7474
        %v7636 = vunpack.c.l.b16 %v7475
        %v7637 = vunpack.c.l.b16 %v7476
        %v7638 = vunpack.c.l.b16 %v7477
        %v7639 = vunpack.c.l.b16 %v7478
        %v7640 = vunpack.c.l.b16 %v7479
        %v7641 = vunpack.c.l.b16 %v7480
        %v7642 = vunpack.c.l.b16 %v7481
        %v7643 = vunpack.c.l.b16 %v7482
        %v7644 = vunpack.c.l.b16 %v7483
        %v7645 = vunpack.c.l.b16 %v7484
        %v7646 = vunpack.c.l.b16 %v7485
        %v7647 = vunpack.c.l.b16 %v7486
        %v7648 = vunpack.c.l.b16 %v7487
        %v7649 = vunpack.c.l.b16 %v7488
        %v7650 = vunpack.c.l.b16 %v7489
        %v7651 = vunpack.c.l.b16 %v7490
        %v7652 = vunpack.c.l.b16 %v7491
        %v7653 = vunpack.c.l.b16 %v7492
        %v7654 = vunpack.c.l.b16 %v7493
        %v7655 = vunpack.c.l.b16 %v7494
        %v7656 = vunpack.c.l.b16 %v7495
        %v7657 = vunpack.c.l.b16 %v7496
        %v7658 = vunpack.c.l.b16 %v7497
        %v7659 = vunpack.c.l.b16 %v7498
        %v7660 = vunpack.c.l.b16 %v7499
        %v7661 = vunpack.c.l.b16 %v7500
        %v7662 = vunpack.c.l.b16 %v7501
        %v7663 = vunpack.c.l.b16 %v7502
        %v7664 = vunpack.c.l.b16 %v7503
        %v7665 = vunpack.c.l.b16 %v7504
        %v7666 = vunpack.c.l.b16 %v7505
        %v7667 = vunpack.c.l.b16 %v7506
        %v7668 = vunpack.c.l.b16 %v7507
        %v7669 = vpack.c.b16 %v7634, %v7633
        %v7670 = vpack.c.b16 %v7636, %v7635
        %v7671 = vpack.c.b16 %v7638, %v7637
        %v7672 = vpack.c.b16 %v7640, %v7639
        %v7673 = vpack.c.b16 %v7642, %v7641
        %v7674 = vpack.c.b16 %v7644, %v7643
        %v7675 = vpack.c.b16 %v7646, %v7645
        %v7676 = vpack.c.b16 %v7648, %v7647
        %v7677 = vpack.c.b16 %v7650, %v7649
        %v7678 = vpack.c.b16 %v7652, %v7651
        %v7679 = vpack.c.b16 %v7654, %v7653
        %v7680 = vpack.c.b16 %v7656, %v7655
        %v7681 = vpack.c.b16 %v7658, %v7657
        %v7682 = vpack.c.b16 %v7660, %v7659
        %v7683 = vpack.c.b16 %v7662, %v7661
        %v7684 = vpack.c.b16 %v7664, %v7663
        %v7685 = vpack.c.b16 %v7666, %v7665
        %v7686 = vpack.c.b16 %v7668, %v7667
        %v7706 = vsel %vm2830, %v7557, 0
        %v7709 = vsel %vm2830, %v7592, 0
        %7711 = vmatprep.subr.bf16.mxu0 0
        %7712 = vmatpush1.bf16.msra.mxu0 %v7676
        %7713 = vmatprep.subr.bf16.mxu0 0
        %7714 = vmatpush1.bf16.msra.mxu0 %v7675
        %7715 = vmatprep.subr.bf16.mxu0 0
        %7716 = vmatpush1.bf16.msra.mxu0 %v7674
        %7717 = vmatprep.subr.bf16.mxu0 0
        %7718 = vmatpush1.bf16.msra.mxu0 %v7673
        %7719 = vmatprep.subr.bf16.mxu0 0
        %7720 = vmatpush1.bf16.msra.mxu0 %v7672
        %7721 = vmatprep.subr.bf16.mxu0 0
        %7722 = vmatpush1.bf16.msra.mxu0 %v7671
        %7723 = vmatprep.subr.bf16.mxu0 0
        %7724 = vmatpush1.bf16.msra.mxu0 %v7670
        %7725 = vmatprep.subr.bf16.mxu0 0
        %7726 = vmatpush1.bf16.msra.mxu0 %v7669
        %7727 = vmatprep.subr.bf16.mxu0 0
        %7728 = vmatpush2.bf16.msra.mxu0 %v7684
        %7729 = vmatprep.subr.bf16.mxu0 0
        %7730 = vmatpush2.bf16.msra.mxu0 %v7683
        %7731 = vmatprep.subr.bf16.mxu0 0
        %7732 = vmatpush2.bf16.msra.mxu0 %v7682
        %7733 = vmatprep.subr.bf16.mxu0 0
        %7734 = vmatpush2.bf16.msra.mxu0 %v7681
        %7735 = vmatprep.subr.bf16.mxu0 0
        %7736 = vmatpush2.bf16.msra.mxu0 %v7680
        %7737 = vmatprep.subr.bf16.mxu0 0
        %7738 = vmatpush2.bf16.msra.mxu0 %v7679
        %7739 = vmatprep.subr.bf16.mxu0 0
        %7740 = vmatpush2.bf16.msra.mxu0 %v7678
        %7741 = vmatprep.subr.bf16.mxu0 0
        %7742 = vmatpush2.bf16.msra.mxu0 %v7677
        %7743 = vmatprep.mubr.bf16.mxu0 %v7556
        %7744 = vmatmul.mubr.bf16.gmra.mxu0 %v7555
        %v7745 = vpop.f32.mrf.mxu0
        %v7746 = vadd.f32 %v7513, %v7745
        %v7747 = vpop.f32.mrf.mxu0
        %v7748 = vpop.f32.mrf.mxu0
        %v7749 = vadd.f32 %v7513, %v7748
        %v7750 = vpop.f32.mrf.mxu0
        %7751 = vmatprep.mubr.bf16.mxu0 %v7591
        %7752 = vmatmul.mubr.bf16.gmra.mxu0 %v7590
        %v7753 = vpop.f32.mrf.mxu0
        %v7754 = vadd.f32 %v7513, %v7753
        %v7755 = vpop.f32.mrf.mxu0
        %v7756 = vpop.f32.mrf.mxu0
        %v7757 = vadd.f32 %v7513, %v7756
        %v7758 = vpop.f32.mrf.mxu0
        %7759 = vdwg.mxu0
        %7760 = vmatprep.subr.bf16.mxu0 0
        %7761 = vmatpush1.bf16.msra.mxu0 0
        %7762 = vmatprep.subr.bf16.mxu0 0
        %7763 = vmatpush1.bf16.msra.mxu0 0
        %7764 = vmatprep.subr.bf16.mxu0 0
        %7765 = vmatpush1.bf16.msra.mxu0 0
        %7766 = vmatprep.subr.bf16.mxu0 0
        %7767 = vmatpush1.bf16.msra.mxu0 0
        %7768 = vmatprep.subr.bf16.mxu0 0
        %7769 = vmatpush1.bf16.msra.mxu0 0
        %7770 = vmatprep.subr.bf16.mxu0 0
        %7771 = vmatpush1.bf16.msra.mxu0 0
        %7772 = vmatprep.subr.bf16.mxu0 0
        %7773 = vmatpush1.bf16.msra.mxu0 %v7686
        %7774 = vmatprep.subr.bf16.mxu0 0
        %7775 = vmatpush1.bf16.msra.mxu0 %v7685
        %7776 = vmatprep.subr.bf16.mxu0 0
        %7777 = vmatpush2.bf16.msra.mxu0 0
        %7778 = vmatprep.subr.bf16.mxu0 0
        %7779 = vmatpush2.bf16.msra.mxu0 0
        %7780 = vmatprep.subr.bf16.mxu0 0
        %7781 = vmatpush2.bf16.msra.mxu0 0
        %7782 = vmatprep.subr.bf16.mxu0 0
        %7783 = vmatpush2.bf16.msra.mxu0 0
        %7784 = vmatprep.subr.bf16.mxu0 0
        %7785 = vmatpush2.bf16.msra.mxu0 0
        %7786 = vmatprep.subr.bf16.mxu0 0
        %7787 = vmatpush2.bf16.msra.mxu0 0
        %7788 = vmatprep.subr.bf16.mxu0 0
        %7789 = vmatpush2.bf16.msra.mxu0 0
        %7790 = vmatprep.subr.bf16.mxu0 0
        %7791 = vmatpush2.bf16.msra.mxu0 0
        %7792 = vmatprep.mubr.bf16.mxu0 0
        %7793 = vmatmul.mubr.bf16.gmra.mxu0 %v7706
        %v7794 = vpop.f32.mrf.mxu0
        %v7795 = vadd.f32 %v7746, %v7794
        %v7796 = vpop.f32.mrf.mxu0
        %v7797 = vpop.f32.mrf.mxu0
        %v7798 = vadd.f32 %v7749, %v7797
        %v7799 = vpop.f32.mrf.mxu0
        %7800 = vmatprep.mubr.bf16.mxu0 0
        %7801 = vmatmul.mubr.bf16.gmra.mxu0 %v7709
        %v7802 = vpop.f32.mrf.mxu0
        %v7803 = vadd.f32 %v7754, %v7802
        %v7804 = vpop.f32.mrf.mxu0
        %v7805 = vpop.f32.mrf.mxu0
        %v7806 = vadd.f32 %v7757, %v7805
        %v7807 = vpop.f32.mrf.mxu0
        %7808 = vdwg.mxu0
        %v7809 = vmax.f32 %v7795, 0.0
        %v7810 = vmax.f32 %v7798, 0.0
        %v7811 = vmax.f32 %v7803, 0.0
        %v7812 = vmax.f32 %v7806, 0.0
        %v7813 = vpack.c.bf16 %v7810, %v7809
        %v7814 = vpack.c.bf16 %v7812, %v7811
        %v7815 = vld [vmem:[%s19] sm:$0xf]
        %v7816 = vld [vmem:[%s19 + $0x4] sm:$0xf]
        %v7817 = vld [vmem:[%s19 + $0x8] sm:$0xf]
        %v7818 = vld [vmem:[%s19 + $0xc] sm:$0xf]
        %v7819 = vld [vmem:[%s20] sm:$0x1]
        %v7821 = vlaneseq
        %v7822 = vshrl.u32 %v7821, 7
        %v7823 = vsub.s32 0, %v7822
        %v7824 = vrot.slane %v7819, %v7823
        %v7830 = vunpack.c.l.b16 %v7815
        %v7831 = vunpack.c.l.b16 %v7816
        %v7832 = vunpack.c.l.b16 %v7817
        %v7833 = vunpack.c.l.b16 %v7818
        %v7834 = vpack.c.b16 %v7831, %v7830
        %v7835 = vpack.c.b16 %v7833, %v7832
        %v7839 = vsel %vm2830, %v7813, 0
        %v7842 = vsel %vm2830, %v7814, 0
        %7844 = vmatprep.subr.bf16.mxu0 0
        %7845 = vmatpush1.bf16.msra.mxu0 0
        %7846 = vmatprep.subr.bf16.mxu0 0
        %7847 = vmatpush1.bf16.msra.mxu0 0
        %7848 = vmatprep.subr.bf16.mxu0 0
        %7849 = vmatpush1.bf16.msra.mxu0 0
        %7850 = vmatprep.subr.bf16.mxu0 0
        %7851 = vmatpush1.bf16.msra.mxu0 0
        %7852 = vmatprep.subr.bf16.mxu0 0
        %7853 = vmatpush1.bf16.msra.mxu0 0
        %7854 = vmatprep.subr.bf16.mxu0 0
        %7855 = vmatpush1.bf16.msra.mxu0 0
        %7856 = vmatprep.subr.bf16.mxu0 0
        %7857 = vmatpush1.bf16.msra.mxu0 %v7835
        %7858 = vmatprep.subr.bf16.mxu0 0
        %7859 = vmatpush1.bf16.msra.mxu0 %v7834
        %7860 = vmatprep.subr.bf16.mxu0 0
        %7861 = vmatpush2.bf16.msra.mxu0 0
        %7862 = vmatprep.subr.bf16.mxu0 0
        %7863 = vmatpush2.bf16.msra.mxu0 0
        %7864 = vmatprep.subr.bf16.mxu0 0
        %7865 = vmatpush2.bf16.msra.mxu0 0
        %7866 = vmatprep.subr.bf16.mxu0 0
        %7867 = vmatpush2.bf16.msra.mxu0 0
        %7868 = vmatprep.subr.bf16.mxu0 0
        %7869 = vmatpush2.bf16.msra.mxu0 0
        %7870 = vmatprep.subr.bf16.mxu0 0
        %7871 = vmatpush2.bf16.msra.mxu0 0
        %7872 = vmatprep.subr.bf16.mxu0 0
        %7873 = vmatpush2.bf16.msra.mxu0 0
        %7874 = vmatprep.subr.bf16.mxu0 0
        %7875 = vmatpush2.bf16.msra.mxu0 0
        %7876 = vmatprep.mubr.bf16.mxu0 0
        %7877 = vmatmul.mubr.bf16.gmra.mxu0 %v7839
        %v7878 = vpop.f32.mrf.mxu0
        %v7879 = vadd.f32 %v7824, %v7878
        %v7880 = vpop.f32.mrf.mxu0
        %v7881 = vpop.f32.mrf.mxu0
        %v7882 = vadd.f32 %v7824, %v7881
        %v7883 = vpop.f32.mrf.mxu0
        %7884 = vmatprep.mubr.bf16.mxu0 0
        %7885 = vmatmul.mubr.bf16.gmra.mxu0 %v7842
        %v7886 = vpop.f32.mrf.mxu0
        %v7887 = vadd.f32 %v7824, %v7886
        %v7888 = vpop.f32.mrf.mxu0
        %v7889 = vpop.f32.mrf.mxu0
        %v7890 = vadd.f32 %v7824, %v7889
        %v7891 = vpop.f32.mrf.mxu0
        %7892 = vdwg.mxu0
        %v7893 = vadd.f32 %v7879, %v5512
        %v7894 = vadd.f32 %v7882, %v5513
        %v7895 = vadd.f32 %v7887, %v5514
        %v7896 = vadd.f32 %v7890, %v5515
        %v7897 = vmax.f32 %v7893, 0.0
        %v7898 = vmax.f32 %v7894, 0.0
        %v7899 = vmax.f32 %v7895, 0.0
        %v7900 = vmax.f32 %v7896, 0.0
        %v7905 = vcombine.high %v7897, %v7897
        %v7906 = vcombine.high %v7898, %v7898
        %v7907 = vcombine.high %v7899, %v7899
        %v7908 = vcombine.high %v7900, %v7900
        %7913 = vst [vmem:[%s652] sm:$0xf] %v7897
        %7914 = vst [vmem:[%s652 + $0x4] sm:$0xf] %v7905
        %7915 = vst [vmem:[%s652 + $0x8] sm:$0xf] %v7898
        %7916 = vst [vmem:[%s652 + $0xc] sm:$0xf] %v7906
        %7917 = vst [vmem:[%s652 + $0x10] sm:$0xf] %v7899
        %7918 = vst [vmem:[%s652 + $0x14] sm:$0xf] %v7907
        %7919 = vst [vmem:[%s652 + $0x18] sm:$0xf] %v7900
        %7920 = vst [vmem:[%s652 + $0x1c] sm:$0xf] %v7908
        %s7921 = sand.u32 %s489, 1
        %s7922 = scalar_lea.sflag [#allocation5], %s7921
        %s7923 = sand.u32 %s489, 1
        %s7924 = smul.addr %s7923, 32
        %s7925 = scalar_lea.vmem [#allocation4], %s7924
        // Predicated region
        $region105: #{_lambda_.1} parent=103 // pred_check
          %p7926 = pneg %p499
        $region106: #{_lambda_.1} parent=103 // pred_check_branch
          %7928 = sbr.rel (%p7926) target = $region108
        $region107: #{_lambda_.1} parent=103 // pred_region
          %s7929 = smul.u32 2, %s35
          %s7931 = ssub.s32 512, 512
          %7932 = vsyncadd %s7922, %s7931
          %s7933 = smul.addr %s7929, 4
          %s7934 = smul.addr %s7933, 64
          %s7935 = scalar_lea.hbm %s21, %s7934
          %s7936 = sshll.u32 %s7925, 4
          %s7937 = int_to_ptr.vmem [resolvable:$true] %s7936
          %7942 = dma.vmem_to_hbm [thread:$0]  %s7937, 512, %s7935, %s7922, 64, 64, 4
        $region108: #{_lambda_.1} parent=103 // pred_fallthru
          _
      $region104: #{_lambda_.1} parent=5 // pred_fallthru
        _
      %p7943 = scmp.le.s32.totalorder 2, %s30
      // Predicated region
      $region109: #{_lambda_.1} parent=5 // pred_check
        %p7944 = pneg %p7943
      $region110: #{_lambda_.1} parent=5 // pred_check_branch
        %7946 = sbr.rel (%p7944) target = $region112
      $region111: #{_lambda_.1} parent=5 // pred_region
        %s7947 = ssub.s32 %s30, 2
        // Predicated region
        $region113: #{_lambda_.1} parent=111 // pred_check
          %p7948 = pneg %p505
        $region114: #{_lambda_.1} parent=111 // pred_check_branch
          %7950 = sbr.rel (%p7948) target = $region116
        $region115: #{_lambda_.1} parent=111 // pred_region
          %s7951 = sand.u32 %s490, 1
          %s7952 = scalar_lea.sflag [#allocation5], %s7951
          %s7953 = sand.u32 %s490, 1
          %s7954 = smul.addr %s7953, 32
          %s7955 = scalar_lea.vmem [#allocation4], %s7954
          %7956 = dma.done %s7952, 512
        $region116: #{_lambda_.1} parent=111 // pred_fallthru
          _
      $region112: #{_lambda_.1} parent=5 // pred_fallthru
        _
    $region6: #{_lambda_.1} parent=1 // loop_footer
      %s34 = sadd.s32 1, %s30
    $region7: #{_lambda_.1} parent=1 // loop_footer_branch
      %29 = sbr.rel target = $region3
    $region8: #{_lambda_.1} parent=1 // loop_exit
      _
    %7957 = vsyncpa [#allocation5], 1
    %s7958 = scalar_lea.sflag [#allocation5], 1
    %7959 = vsyncpa %s7958, 1

</llo_original>
